<compile_context>
chip_gen: v6e
topology: v6e:2x2x1
jax: 0.10.0
libtpu: 0.0.40
codegen_flags: <defaults>
</compile_context>

<pallas_src>
import math

import jax
import jax.numpy as jnp
from jax.experimental import pallas as pl
from jax.experimental.pallas import tpu as pltpu

# Module hyperparameters (from bigram8.py)
BLOCK_SIZE = 8      # sequence length T
HEAD_SIZE = 8
NUM_HEADS = 4
EMBED_SIZE = 32     # == NUM_HEADS * HEAD_SIZE


def mha_kernel(x_ref, wqkv_ref, wp_ref, bp_ref, o_ref):
    # x_ref:    (T, E, Bt)  bf16  -- batch on the lane axis
    # wqkv_ref: (3*HS, E)   bf16  -- rows [q_h0..q_h3 | k_h0.. | v_h0..], Q pre-scaled
    # wp_ref:   (E, HS)     bf16
    # bp_ref:   (E, 1)      f32
    # o_ref:    (T, E, Bt)  f32
    T, E, Bt = x_ref.shape
    HS = NUM_HEADS * HEAD_SIZE

    w_qkv = wqkv_ref[...]
    # Fused QKV projection, one MXU matmul per token position:
    #   (3*HS, E) @ (E, Bt) -> (3*HS, Bt), bf16 operands, f32 accumulation,
    #   lane-dense (Bt-wide) output.  T is tiny (8) so the loop is unrolled.
    qkv = jnp.stack(
        [jnp.dot(w_qkv, x_ref[t], preferred_element_type=jnp.float32)
         for t in range(T)],
        axis=0)                                    # (T, 3*HS, Bt) f32

    # Causal mask, broadcast over the Bt lanes (TPU needs >= 2-D iota).
    row = jax.lax.broadcasted_iota(jnp.int32, (T, T, 1), 0)
    col = jax.lax.broadcasted_iota(jnp.int32, (T, T, 1), 1)
    causal = col <= row                            # (T_q, T_s, 1)

    head_outs = []
    for h in range(NUM_HEADS):                     # 4 heads, unrolled
        q0 = h * HEAD_SIZE
        k0 = HS + h * HEAD_SIZE
        v0 = 2 * HS + h * HEAD_SIZE
        # Sublane-tile-aligned slices (offsets are multiples of 8) -> no copy.
        q_h = qkv[:, q0:q0 + HEAD_SIZE, :]         # (T, hs, Bt)
        k_h = qkv[:, k0:k0 + HEAD_SIZE, :]
        v_h = qkv[:, v0:v0 + HEAD_SIZE, :]

        # Scores: wei[tq, ts, b] = sum_d q[tq, d, b] * k[ts, d, b]
        # (1/sqrt(hs) already folded into the Q weight).  Pure VPU work on
        # 128-lane-dense vregs; the d-reduction is an 8-sublane reduce.
        sc = jnp.sum(q_h[:, None, :, :] * k_h[None, :, :, :], axis=2)   # (T, T, Bt)
        sc = jnp.where(causal, sc, -1e30)          # finite mask: no NaN on padded lanes

        # Numerically stable softmax over the key axis; reciprocal on the EUP slot.
        sc = sc - jnp.max(sc, axis=1, keepdims=True)
        e = jnp.exp(sc)
        p = e * pl.reciprocal(jnp.sum(e, axis=1, keepdims=True), approx=True)

        # out[tq, d, b] = sum_ts p[tq, ts, b] * v[ts, d, b]  (VPU, lane-dense)
        out_h = jnp.sum(p[:, :, None, :] * v_h[None, :, :, :], axis=1)  # (T, hs, Bt)
        head_outs.append(out_h)

    # Concatenate heads in registers along the (8-aligned) sublane axis —
    # no VMEM scratch round-trip.
    cat = jnp.concatenate(head_outs, axis=1).astype(jnp.bfloat16)       # (T, HS, Bt)

    w_p = wp_ref[...]                              # (E, HS) bf16
    bias = bp_ref[...]                             # (E, 1)  f32
    for t in range(T):
        # Output projection: (E, HS) @ (HS, Bt) -> (E, Bt), + bias.
        y_t = jnp.dot(w_p, cat[t], preferred_element_type=jnp.float32) + bias
        o_ref[t] = y_t.astype(o_ref.dtype)         # lane-dense (Bt-wide) store


def _round_up(v, m):
    return ((v + m - 1) // m) * m


def multi_head_attention(x, wq, wk, wv, wp, bp, *, block_b=512):
    """x: (B, T, E) f32; wq/wk/wv: (H, E, hs); wp: (H*hs, E); bp: (1, E)."""
    B, T, E = x.shape
    HS = NUM_HEADS * HEAD_SIZE
    scale = 1.0 / math.sqrt(HEAD_SIZE)

    # Pack per-head weights into one (3*HS, E) matrix with rows ordered
    # [q_h0..q_h3 | k_h0..k_h3 | v_h0..v_h3]; fold the attention scale into Q.
    def pack(w):                                   # (H, E, hs) -> (H*hs, E)
        return jnp.transpose(w, (0, 2, 1)).reshape(HS, E)

    w_qkv_t = jnp.concatenate([pack(wq) * scale, pack(wk), pack(wv)],
                              axis=0).astype(jnp.bfloat16)     # (3*HS, E)
    w_p_t = jnp.transpose(wp, (1, 0)).astype(jnp.bfloat16)     # (E, HS)
    b_col = jnp.reshape(bp, (E, 1)).astype(jnp.float32)        # (E, 1)

    # Batch lives on the lane axis -> the tile must be a multiple of 128.
    # Cap the tile near ceil(B/2) so there are >= 2 grid steps when possible
    # (keeps both v7x TensorCores busy); pad B up to a whole number of tiles.
    half = _round_up(max(1, -(-B // 2)), 128)
    Bt = _round_up(max(128, min(block_b, half)), 128)
    Bp = _round_up(B, Bt)
    grid_b = Bp // Bt

    # (B, T, E) -> (T, E, B) once in XLA (memory-bound, one pass); bf16 input
    # halves HBM traffic into the kernel, matmuls still accumulate in f32.
    xt = jnp.transpose(x, (1, 2, 0)).astype(jnp.bfloat16)
    if Bp != B:
        xt = jnp.pad(xt, ((0, 0), (0, 0), (0, Bp - B)))

    out_t = pl.pallas_call(
        mha_kernel,
        out_shape=jax.ShapeDtypeStruct((T, E, Bp), jnp.float32),
        grid=(grid_b,),
        in_specs=[
            pl.BlockSpec((T, E, Bt), lambda b: (0, 0, b)),
            pl.BlockSpec((3 * HS, E), lambda b: (0, 0)),
            pl.BlockSpec((E, HS), lambda b: (0, 0)),
            pl.BlockSpec((E, 1), lambda b: (0, 0)),
        ],
        out_specs=pl.BlockSpec((T, E, Bt), lambda b: (0, 0, b)),
        compiler_params=pltpu.CompilerParams(
            dimension_semantics=("parallel",)),
    )(xt, w_qkv_t, w_p_t, b_col)

    # (T, E, Bp) -> (B, T, E)
    return jnp.transpose(out_t, (2, 0, 1))[:B]


def reference(x, wq, wk, wv, wp, bp):
    """Pure-JAX f32 reference mirroring the PyTorch forward."""
    T = x.shape[1]
    outs = []
    for h in range(NUM_HEADS):
        q = x @ wq[h]
        k = x @ wk[h]
        v = x @ wv[h]
        wei = (q @ jnp.swapaxes(k, -2, -1)) / math.sqrt(HEAD_SIZE)
        mask = jnp.tril(jnp.ones((T, T)))
        wei = jnp.where(mask == 0, -jnp.inf, wei)
        wei = jax.nn.softmax(wei, axis=-1)
        outs.append(wei @ v)
    out = jnp.concatenate(outs, axis=-1)
    return out @ wp + bp


if __name__ == "__main__":
    key = jax.random.PRNGKey(0)
    kx, kq, kk, kv, kp, kb, kx2 = jax.random.split(key, 7)

    # deterministic synthetic parameters (shapes from the module's __init__)
    wq = 0.05 * jax.random.normal(kq, (NUM_HEADS, EMBED_SIZE, HEAD_SIZE), jnp.float32)
    wk = 0.05 * jax.random.normal(kk, (NUM_HEADS, EMBED_SIZE, HEAD_SIZE), jnp.float32)
    wv = 0.05 * jax.random.normal(kv, (NUM_HEADS, EMBED_SIZE, HEAD_SIZE), jnp.float32)
    wp = 0.05 * jax.random.normal(kp, (NUM_HEADS * HEAD_SIZE, EMBED_SIZE), jnp.float32)
    bp = 0.05 * jax.random.normal(kb, (1, EMBED_SIZE), jnp.float32)

    # Test 1: tiny batch (padded up to one 128-lane tile, single grid step).
    B = 6
    x = jax.random.normal(kx, (B, BLOCK_SIZE, EMBED_SIZE), dtype=jnp.float32)
    y = jax.block_until_ready(multi_head_attention(x, wq, wk, wv, wp, bp))
    y_ref = reference(x, wq, wk, wv, wp, bp)
    assert y.shape == (B, BLOCK_SIZE, EMBED_SIZE)
    assert jnp.allclose(y, y_ref, atol=2e-3, rtol=2e-3), "mismatch vs reference (test 1)"

    # Test 2: larger batch with padding and a multi-step "parallel" grid.
    B2 = 300
    x2 = jax.random.normal(kx2, (B2, BLOCK_SIZE, EMBED_SIZE), dtype=jnp.float32)
    y2 = jax.block_until_ready(
        multi_head_attention(x2, wq, wk, wv, wp, bp, block_b=128))
    y2_ref = reference(x2, wq, wk, wv, wp, bp)
    assert y2.shape == (B2, BLOCK_SIZE, EMBED_SIZE)
    assert jnp.allclose(y2, y2_ref, atol=2e-3, rtol=2e-3), "mismatch vs reference (test 2)"

    print("KERNEL_OK")
</pallas_src>

<mosaic_0001>
module attributes {stable_mosaic.version = 11 : i64} {
  func.func @mha_kernel(%arg0: i32, %arg1: memref<8x32x128xbf16, #tpu.memory_space<vmem>>, %arg2: memref<96x32xbf16, #tpu.memory_space<vmem>>, %arg3: memref<32x32xbf16, #tpu.memory_space<vmem>>, %arg4: memref<32x1xf32, #tpu.memory_space<vmem>>, %arg5: memref<8x32x128xf32, #tpu.memory_space<vmem>>) attributes {dimension_semantics = [#tpu.dimension_semantics<parallel>], iteration_bounds = array<i64: 1>, scalar_prefetch = 0 : i64, scratch_operands = 0 : i64, tpu.core_type = #tpu.core_type<tc>, window_params = [{transform_indices = @transform_0, window_bounds = array<i64: 8, 32, 128>}, {pipeline_mode = #tpu.pipeline_mode<synchronous>, transform_indices = @transform_1, window_bounds = array<i64: 96, 32>}, {pipeline_mode = #tpu.pipeline_mode<synchronous>, transform_indices = @transform_2, window_bounds = array<i64: 32, 32>}, {pipeline_mode = #tpu.pipeline_mode<synchronous>, transform_indices = @transform_3, window_bounds = array<i64: 32, 1>}, {transform_indices = @transform_4, window_bounds = array<i64: 8, 32, 128>}]} {
    %c0 = arith.constant 0 : index
    %c0_0 = arith.constant 0 : index
    %0 = vector.load %arg2[%c0, %c0_0] : memref<96x32xbf16, #tpu.memory_space<vmem>>, vector<96x32xbf16>
    %c0_1 = arith.constant 0 : index
    %c0_2 = arith.constant 0 : index
    %c0_3 = arith.constant 0 : index
    %1 = vector.load %arg1[%c0_1, %c0_2, %c0_3] : memref<8x32x128xbf16, #tpu.memory_space<vmem>>, vector<1x32x128xbf16>
    %2 = vector.shape_cast %1 : vector<1x32x128xbf16> to vector<32x128xbf16>
    %cst = arith.constant dense<0.000000e+00> : vector<96x128xf32>
    %3 = tpu.matmul %0, %2, %cst {dimension_numbers = #tpu.dot_dimension_numbers<[1], [0], [0], [1], [0, 0, 1, 1], [], []>} : vector<96x32xbf16>, vector<32x128xbf16>, vector<96x128xf32> -> vector<96x128xf32>
    %c1 = arith.constant 1 : index
    %c0_4 = arith.constant 0 : index
    %c0_5 = arith.constant 0 : index
    %4 = vector.load %arg1[%c1, %c0_4, %c0_5] : memref<8x32x128xbf16, #tpu.memory_space<vmem>>, vector<1x32x128xbf16>
    %5 = vector.shape_cast %4 : vector<1x32x128xbf16> to vector<32x128xbf16>
    %cst_6 = arith.constant dense<0.000000e+00> : vector<96x128xf32>
    %6 = tpu.matmul %0, %5, %cst_6 {dimension_numbers = #tpu.dot_dimension_numbers<[1], [0], [0], [1], [0, 0, 1, 1], [], []>} : vector<96x32xbf16>, vector<32x128xbf16>, vector<96x128xf32> -> vector<96x128xf32>
    %c2 = arith.constant 2 : index
    %c0_7 = arith.constant 0 : index
    %c0_8 = arith.constant 0 : index
    %7 = vector.load %arg1[%c2, %c0_7, %c0_8] : memref<8x32x128xbf16, #tpu.memory_space<vmem>>, vector<1x32x128xbf16>
    %8 = vector.shape_cast %7 : vector<1x32x128xbf16> to vector<32x128xbf16>
    %cst_9 = arith.constant dense<0.000000e+00> : vector<96x128xf32>
    %9 = tpu.matmul %0, %8, %cst_9 {dimension_numbers = #tpu.dot_dimension_numbers<[1], [0], [0], [1], [0, 0, 1, 1], [], []>} : vector<96x32xbf16>, vector<32x128xbf16>, vector<96x128xf32> -> vector<96x128xf32>
    %c3 = arith.constant 3 : index
    %c0_10 = arith.constant 0 : index
    %c0_11 = arith.constant 0 : index
    %10 = vector.load %arg1[%c3, %c0_10, %c0_11] : memref<8x32x128xbf16, #tpu.memory_space<vmem>>, vector<1x32x128xbf16>
    %11 = vector.shape_cast %10 : vector<1x32x128xbf16> to vector<32x128xbf16>
    %cst_12 = arith.constant dense<0.000000e+00> : vector<96x128xf32>
    %12 = tpu.matmul %0, %11, %cst_12 {dimension_numbers = #tpu.dot_dimension_numbers<[1], [0], [0], [1], [0, 0, 1, 1], [], []>} : vector<96x32xbf16>, vector<32x128xbf16>, vector<96x128xf32> -> vector<96x128xf32>
    %c4 = arith.constant 4 : index
    %c0_13 = arith.constant 0 : index
    %c0_14 = arith.constant 0 : index
    %13 = vector.load %arg1[%c4, %c0_13, %c0_14] : memref<8x32x128xbf16, #tpu.memory_space<vmem>>, vector<1x32x128xbf16>
    %14 = vector.shape_cast %13 : vector<1x32x128xbf16> to vector<32x128xbf16>
    %cst_15 = arith.constant dense<0.000000e+00> : vector<96x128xf32>
    %15 = tpu.matmul %0, %14, %cst_15 {dimension_numbers = #tpu.dot_dimension_numbers<[1], [0], [0], [1], [0, 0, 1, 1], [], []>} : vector<96x32xbf16>, vector<32x128xbf16>, vector<96x128xf32> -> vector<96x128xf32>
    %c5 = arith.constant 5 : index
    %c0_16 = arith.constant 0 : index
    %c0_17 = arith.constant 0 : index
    %16 = vector.load %arg1[%c5, %c0_16, %c0_17] : memref<8x32x128xbf16, #tpu.memory_space<vmem>>, vector<1x32x128xbf16>
    %17 = vector.shape_cast %16 : vector<1x32x128xbf16> to vector<32x128xbf16>
    %cst_18 = arith.constant dense<0.000000e+00> : vector<96x128xf32>
    %18 = tpu.matmul %0, %17, %cst_18 {dimension_numbers = #tpu.dot_dimension_numbers<[1], [0], [0], [1], [0, 0, 1, 1], [], []>} : vector<96x32xbf16>, vector<32x128xbf16>, vector<96x128xf32> -> vector<96x128xf32>
    %c6 = arith.constant 6 : index
    %c0_19 = arith.constant 0 : index
    %c0_20 = arith.constant 0 : index
    %19 = vector.load %arg1[%c6, %c0_19, %c0_20] : memref<8x32x128xbf16, #tpu.memory_space<vmem>>, vector<1x32x128xbf16>
    %20 = vector.shape_cast %19 : vector<1x32x128xbf16> to vector<32x128xbf16>
    %cst_21 = arith.constant dense<0.000000e+00> : vector<96x128xf32>
    %21 = tpu.matmul %0, %20, %cst_21 {dimension_numbers = #tpu.dot_dimension_numbers<[1], [0], [0], [1], [0, 0, 1, 1], [], []>} : vector<96x32xbf16>, vector<32x128xbf16>, vector<96x128xf32> -> vector<96x128xf32>
    %c7 = arith.constant 7 : index
    %c0_22 = arith.constant 0 : index
    %c0_23 = arith.constant 0 : index
    %22 = vector.load %arg1[%c7, %c0_22, %c0_23] : memref<8x32x128xbf16, #tpu.memory_space<vmem>>, vector<1x32x128xbf16>
    %23 = vector.shape_cast %22 : vector<1x32x128xbf16> to vector<32x128xbf16>
    %cst_24 = arith.constant dense<0.000000e+00> : vector<96x128xf32>
    %24 = tpu.matmul %0, %23, %cst_24 {dimension_numbers = #tpu.dot_dimension_numbers<[1], [0], [0], [1], [0, 0, 1, 1], [], []>} : vector<96x32xbf16>, vector<32x128xbf16>, vector<96x128xf32> -> vector<96x128xf32>
    %25 = vector.shape_cast %3 : vector<96x128xf32> to vector<1x96x128xf32>
    %26 = vector.shape_cast %6 : vector<96x128xf32> to vector<1x96x128xf32>
    %27 = vector.shape_cast %9 : vector<96x128xf32> to vector<1x96x128xf32>
    %28 = vector.shape_cast %12 : vector<96x128xf32> to vector<1x96x128xf32>
    %29 = vector.shape_cast %15 : vector<96x128xf32> to vector<1x96x128xf32>
    %30 = vector.shape_cast %18 : vector<96x128xf32> to vector<1x96x128xf32>
    %31 = vector.shape_cast %21 : vector<96x128xf32> to vector<1x96x128xf32>
    %32 = vector.shape_cast %24 : vector<96x128xf32> to vector<1x96x128xf32>
    %33 = tpu.concatenate %25, %26, %27, %28, %29, %30, %31, %32 in 0 : vector<1x96x128xf32>, vector<1x96x128xf32>, vector<1x96x128xf32>, vector<1x96x128xf32>, vector<1x96x128xf32>, vector<1x96x128xf32>, vector<1x96x128xf32>, vector<1x96x128xf32> -> vector<8x96x128xf32>
    %34 = tpu.iota {dimensions = array<i32: 0>} : vector<8x8x1xi32>
    %35 = tpu.iota {dimensions = array<i32: 1>} : vector<8x8x1xi32>
    %36 = arith.cmpi sle, %35, %34 : vector<8x8x1xi32>
    %37 = vector.extract_strided_slice %33 {offsets = [0, 0, 0], sizes = [8, 8, 128], strides = [1, 1, 1]} : vector<8x96x128xf32> to vector<8x8x128xf32>
    %38 = vector.extract_strided_slice %33 {offsets = [0, 32, 0], sizes = [8, 8, 128], strides = [1, 1, 1]} : vector<8x96x128xf32> to vector<8x8x128xf32>
    %39 = vector.extract_strided_slice %33 {offsets = [0, 64, 0], sizes = [8, 8, 128], strides = [1, 1, 1]} : vector<8x96x128xf32> to vector<8x8x128xf32>
    %40 = vector.shape_cast %37 : vector<8x8x128xf32> to vector<8x1x8x128xf32>
    %41 = vector.shape_cast %38 : vector<8x8x128xf32> to vector<1x8x8x128xf32>
    %42 = vector.broadcast %40 : vector<8x1x8x128xf32> to vector<8x8x8x128xf32>
    %43 = vector.broadcast %41 : vector<1x8x8x128xf32> to vector<8x8x8x128xf32>
    %44 = arith.mulf %42, %43 : vector<8x8x8x128xf32>
    %cst_25 = arith.constant dense<0.000000e+00> : vector<8x8x128xf32>
    %45 = vector.multi_reduction <add>, %44, %cst_25 [2] : vector<8x8x8x128xf32> to vector<8x8x128xf32>
    %cst_26 = arith.constant -1.000000e+30 : f32
    %46 = vector.shape_cast %36 : vector<8x8x1xi1> to vector<8x8x1xi1>
    %47 = vector.broadcast %46 : vector<8x8x1xi1> to vector<8x8x128xi1>
    %48 = vector.broadcast %cst_26 : f32 to vector<8x8x128xf32>
    %49 = arith.select %47, %45, %48 : vector<8x8x128xi1>, vector<8x8x128xf32>
    %cst_27 = arith.constant dense<0xFF800000> : vector<8x128xf32>
    %50 = vector.multi_reduction <maximumf>, %49, %cst_27 [1] : vector<8x8x128xf32> to vector<8x128xf32>
    %51 = vector.shape_cast %50 : vector<8x128xf32> to vector<8x1x128xf32>
    %52 = vector.broadcast %51 : vector<8x1x128xf32> to vector<8x8x128xf32>
    %53 = arith.subf %49, %52 : vector<8x8x128xf32>
    %54 = math.exp %53 : vector<8x8x128xf32>
    %cst_28 = arith.constant dense<0.000000e+00> : vector<8x128xf32>
    %55 = vector.multi_reduction <add>, %54, %cst_28 [1] : vector<8x8x128xf32> to vector<8x128xf32>
    %56 = vector.shape_cast %55 : vector<8x128xf32> to vector<8x1x128xf32>
    %57 = tpu.reciprocal %56 {approx = true} : vector<8x1x128xf32> -> vector<8x1x128xf32>
    %58 = vector.broadcast %57 : vector<8x1x128xf32> to vector<8x8x128xf32>
    %59 = arith.mulf %54, %58 : vector<8x8x128xf32>
    %60 = vector.shape_cast %59 : vector<8x8x128xf32> to vector<8x8x1x128xf32>
    %61 = vector.shape_cast %39 : vector<8x8x128xf32> to vector<1x8x8x128xf32>
    %62 = vector.broadcast %60 : vector<8x8x1x128xf32> to vector<8x8x8x128xf32>
    %63 = vector.broadcast %61 : vector<1x8x8x128xf32> to vector<8x8x8x128xf32>
    %64 = arith.mulf %62, %63 : vector<8x8x8x128xf32>
    %cst_29 = arith.constant dense<0.000000e+00> : vector<8x8x128xf32>
    %65 = vector.multi_reduction <add>, %64, %cst_29 [1] : vector<8x8x8x128xf32> to vector<8x8x128xf32>
    %66 = vector.extract_strided_slice %33 {offsets = [0, 8, 0], sizes = [8, 8, 128], strides = [1, 1, 1]} : vector<8x96x128xf32> to vector<8x8x128xf32>
    %67 = vector.extract_strided_slice %33 {offsets = [0, 40, 0], sizes = [8, 8, 128], strides = [1, 1, 1]} : vector<8x96x128xf32> to vector<8x8x128xf32>
    %68 = vector.extract_strided_slice %33 {offsets = [0, 72, 0], sizes = [8, 8, 128], strides = [1, 1, 1]} : vector<8x96x128xf32> to vector<8x8x128xf32>
    %69 = vector.shape_cast %66 : vector<8x8x128xf32> to vector<8x1x8x128xf32>
    %70 = vector.shape_cast %67 : vector<8x8x128xf32> to vector<1x8x8x128xf32>
    %71 = vector.broadcast %69 : vector<8x1x8x128xf32> to vector<8x8x8x128xf32>
    %72 = vector.broadcast %70 : vector<1x8x8x128xf32> to vector<8x8x8x128xf32>
    %73 = arith.mulf %71, %72 : vector<8x8x8x128xf32>
    %cst_30 = arith.constant dense<0.000000e+00> : vector<8x8x128xf32>
    %74 = vector.multi_reduction <add>, %73, %cst_30 [2] : vector<8x8x8x128xf32> to vector<8x8x128xf32>
    %cst_31 = arith.constant -1.000000e+30 : f32
    %75 = vector.shape_cast %36 : vector<8x8x1xi1> to vector<8x8x1xi1>
    %76 = vector.broadcast %75 : vector<8x8x1xi1> to vector<8x8x128xi1>
    %77 = vector.broadcast %cst_31 : f32 to vector<8x8x128xf32>
    %78 = arith.select %76, %74, %77 : vector<8x8x128xi1>, vector<8x8x128xf32>
    %cst_32 = arith.constant dense<0xFF800000> : vector<8x128xf32>
    %79 = vector.multi_reduction <maximumf>, %78, %cst_32 [1] : vector<8x8x128xf32> to vector<8x128xf32>
    %80 = vector.shape_cast %79 : vector<8x128xf32> to vector<8x1x128xf32>
    %81 = vector.broadcast %80 : vector<8x1x128xf32> to vector<8x8x128xf32>
    %82 = arith.subf %78, %81 : vector<8x8x128xf32>
    %83 = math.exp %82 : vector<8x8x128xf32>
    %cst_33 = arith.constant dense<0.000000e+00> : vector<8x128xf32>
    %84 = vector.multi_reduction <add>, %83, %cst_33 [1] : vector<8x8x128xf32> to vector<8x128xf32>
    %85 = vector.shape_cast %84 : vector<8x128xf32> to vector<8x1x128xf32>
    %86 = tpu.reciprocal %85 {approx = true} : vector<8x1x128xf32> -> vector<8x1x128xf32>
    %87 = vector.broadcast %86 : vector<8x1x128xf32> to vector<8x8x128xf32>
    %88 = arith.mulf %83, %87 : vector<8x8x128xf32>
    %89 = vector.shape_cast %88 : vector<8x8x128xf32> to vector<8x8x1x128xf32>
    %90 = vector.shape_cast %68 : vector<8x8x128xf32> to vector<1x8x8x128xf32>
    %91 = vector.broadcast %89 : vector<8x8x1x128xf32> to vector<8x8x8x128xf32>
    %92 = vector.broadcast %90 : vector<1x8x8x128xf32> to vector<8x8x8x128xf32>
    %93 = arith.mulf %91, %92 : vector<8x8x8x128xf32>
    %cst_34 = arith.constant dense<0.000000e+00> : vector<8x8x128xf32>
    %94 = vector.multi_reduction <add>, %93, %cst_34 [1] : vector<8x8x8x128xf32> to vector<8x8x128xf32>
    %95 = vector.extract_strided_slice %33 {offsets = [0, 16, 0], sizes = [8, 8, 128], strides = [1, 1, 1]} : vector<8x96x128xf32> to vector<8x8x128xf32>
    %96 = vector.extract_strided_slice %33 {offsets = [0, 48, 0], sizes = [8, 8, 128], strides = [1, 1, 1]} : vector<8x96x128xf32> to vector<8x8x128xf32>
    %97 = vector.extract_strided_slice %33 {offsets = [0, 80, 0], sizes = [8, 8, 128], strides = [1, 1, 1]} : vector<8x96x128xf32> to vector<8x8x128xf32>
    %98 = vector.shape_cast %95 : vector<8x8x128xf32> to vector<8x1x8x128xf32>
    %99 = vector.shape_cast %96 : vector<8x8x128xf32> to vector<1x8x8x128xf32>
    %100 = vector.broadcast %98 : vector<8x1x8x128xf32> to vector<8x8x8x128xf32>
    %101 = vector.broadcast %99 : vector<1x8x8x128xf32> to vector<8x8x8x128xf32>
    %102 = arith.mulf %100, %101 : vector<8x8x8x128xf32>
    %cst_35 = arith.constant dense<0.000000e+00> : vector<8x8x128xf32>
    %103 = vector.multi_reduction <add>, %102, %cst_35 [2] : vector<8x8x8x128xf32> to vector<8x8x128xf32>
    %cst_36 = arith.constant -1.000000e+30 : f32
    %104 = vector.shape_cast %36 : vector<8x8x1xi1> to vector<8x8x1xi1>
    %105 = vector.broadcast %104 : vector<8x8x1xi1> to vector<8x8x128xi1>
    %106 = vector.broadcast %cst_36 : f32 to vector<8x8x128xf32>
    %107 = arith.select %105, %103, %106 : vector<8x8x128xi1>, vector<8x8x128xf32>
    %cst_37 = arith.constant dense<0xFF800000> : vector<8x128xf32>
    %108 = vector.multi_reduction <maximumf>, %107, %cst_37 [1] : vector<8x8x128xf32> to vector<8x128xf32>
    %109 = vector.shape_cast %108 : vector<8x128xf32> to vector<8x1x128xf32>
    %110 = vector.broadcast %109 : vector<8x1x128xf32> to vector<8x8x128xf32>
    %111 = arith.subf %107, %110 : vector<8x8x128xf32>
    %112 = math.exp %111 : vector<8x8x128xf32>
    %cst_38 = arith.constant dense<0.000000e+00> : vector<8x128xf32>
    %113 = vector.multi_reduction <add>, %112, %cst_38 [1] : vector<8x8x128xf32> to vector<8x128xf32>
    %114 = vector.shape_cast %113 : vector<8x128xf32> to vector<8x1x128xf32>
    %115 = tpu.reciprocal %114 {approx = true} : vector<8x1x128xf32> -> vector<8x1x128xf32>
    %116 = vector.broadcast %115 : vector<8x1x128xf32> to vector<8x8x128xf32>
    %117 = arith.mulf %112, %116 : vector<8x8x128xf32>
    %118 = vector.shape_cast %117 : vector<8x8x128xf32> to vector<8x8x1x128xf32>
    %119 = vector.shape_cast %97 : vector<8x8x128xf32> to vector<1x8x8x128xf32>
    %120 = vector.broadcast %118 : vector<8x8x1x128xf32> to vector<8x8x8x128xf32>
    %121 = vector.broadcast %119 : vector<1x8x8x128xf32> to vector<8x8x8x128xf32>
    %122 = arith.mulf %120, %121 : vector<8x8x8x128xf32>
    %cst_39 = arith.constant dense<0.000000e+00> : vector<8x8x128xf32>
    %123 = vector.multi_reduction <add>, %122, %cst_39 [1] : vector<8x8x8x128xf32> to vector<8x8x128xf32>
    %124 = vector.extract_strided_slice %33 {offsets = [0, 24, 0], sizes = [8, 8, 128], strides = [1, 1, 1]} : vector<8x96x128xf32> to vector<8x8x128xf32>
    %125 = vector.extract_strided_slice %33 {offsets = [0, 56, 0], sizes = [8, 8, 128], strides = [1, 1, 1]} : vector<8x96x128xf32> to vector<8x8x128xf32>
    %126 = vector.extract_strided_slice %33 {offsets = [0, 88, 0], sizes = [8, 8, 128], strides = [1, 1, 1]} : vector<8x96x128xf32> to vector<8x8x128xf32>
    %127 = vector.shape_cast %124 : vector<8x8x128xf32> to vector<8x1x8x128xf32>
    %128 = vector.shape_cast %125 : vector<8x8x128xf32> to vector<1x8x8x128xf32>
    %129 = vector.broadcast %127 : vector<8x1x8x128xf32> to vector<8x8x8x128xf32>
    %130 = vector.broadcast %128 : vector<1x8x8x128xf32> to vector<8x8x8x128xf32>
    %131 = arith.mulf %129, %130 : vector<8x8x8x128xf32>
    %cst_40 = arith.constant dense<0.000000e+00> : vector<8x8x128xf32>
    %132 = vector.multi_reduction <add>, %131, %cst_40 [2] : vector<8x8x8x128xf32> to vector<8x8x128xf32>
    %cst_41 = arith.constant -1.000000e+30 : f32
    %133 = vector.shape_cast %36 : vector<8x8x1xi1> to vector<8x8x1xi1>
    %134 = vector.broadcast %133 : vector<8x8x1xi1> to vector<8x8x128xi1>
    %135 = vector.broadcast %cst_41 : f32 to vector<8x8x128xf32>
    %136 = arith.select %134, %132, %135 : vector<8x8x128xi1>, vector<8x8x128xf32>
    %cst_42 = arith.constant dense<0xFF800000> : vector<8x128xf32>
    %137 = vector.multi_reduction <maximumf>, %136, %cst_42 [1] : vector<8x8x128xf32> to vector<8x128xf32>
    %138 = vector.shape_cast %137 : vector<8x128xf32> to vector<8x1x128xf32>
    %139 = vector.broadcast %138 : vector<8x1x128xf32> to vector<8x8x128xf32>
    %140 = arith.subf %136, %139 : vector<8x8x128xf32>
    %141 = math.exp %140 : vector<8x8x128xf32>
    %cst_43 = arith.constant dense<0.000000e+00> : vector<8x128xf32>
    %142 = vector.multi_reduction <add>, %141, %cst_43 [1] : vector<8x8x128xf32> to vector<8x128xf32>
    %143 = vector.shape_cast %142 : vector<8x128xf32> to vector<8x1x128xf32>
    %144 = tpu.reciprocal %143 {approx = true} : vector<8x1x128xf32> -> vector<8x1x128xf32>
    %145 = vector.broadcast %144 : vector<8x1x128xf32> to vector<8x8x128xf32>
    %146 = arith.mulf %141, %145 : vector<8x8x128xf32>
    %147 = vector.shape_cast %146 : vector<8x8x128xf32> to vector<8x8x1x128xf32>
    %148 = vector.shape_cast %126 : vector<8x8x128xf32> to vector<1x8x8x128xf32>
    %149 = vector.broadcast %147 : vector<8x8x1x128xf32> to vector<8x8x8x128xf32>
    %150 = vector.broadcast %148 : vector<1x8x8x128xf32> to vector<8x8x8x128xf32>
    %151 = arith.mulf %149, %150 : vector<8x8x8x128xf32>
    %cst_44 = arith.constant dense<0.000000e+00> : vector<8x8x128xf32>
    %152 = vector.multi_reduction <add>, %151, %cst_44 [1] : vector<8x8x8x128xf32> to vector<8x8x128xf32>
    %153 = tpu.concatenate %65, %94, %123, %152 in 1 : vector<8x8x128xf32>, vector<8x8x128xf32>, vector<8x8x128xf32>, vector<8x8x128xf32> -> vector<8x32x128xf32>
    %154 = arith.truncf %153 : vector<8x32x128xf32> to vector<8x32x128xbf16>
    %c0_45 = arith.constant 0 : index
    %c0_46 = arith.constant 0 : index
    %155 = vector.load %arg3[%c0_45, %c0_46] : memref<32x32xbf16, #tpu.memory_space<vmem>>, vector<32x32xbf16>
    %c0_47 = arith.constant 0 : index
    %c0_48 = arith.constant 0 : index
    %156 = vector.load %arg4[%c0_47, %c0_48] : memref<32x1xf32, #tpu.memory_space<vmem>>, vector<32x1xf32>
    %157 = vector.extract_strided_slice %154 {offsets = [0, 0, 0], sizes = [1, 32, 128], strides = [1, 1, 1]} : vector<8x32x128xbf16> to vector<1x32x128xbf16>
    %158 = vector.shape_cast %157 : vector<1x32x128xbf16> to vector<32x128xbf16>
    %cst_49 = arith.constant dense<0.000000e+00> : vector<32x128xf32>
    %159 = tpu.matmul %155, %158, %cst_49 {dimension_numbers = #tpu.dot_dimension_numbers<[1], [0], [0], [1], [0, 0, 1, 1], [], []>} : vector<32x32xbf16>, vector<32x128xbf16>, vector<32x128xf32> -> vector<32x128xf32>
    %160 = vector.broadcast %156 : vector<32x1xf32> to vector<32x128xf32>
    %161 = arith.addf %159, %160 : vector<32x128xf32>
    %c0_50 = arith.constant 0 : index
    %c0_51 = arith.constant 0 : index
    %c0_52 = arith.constant 0 : index
    %162 = vector.load %arg5[%c0_50, %c0_51, %c0_52] : memref<8x32x128xf32, #tpu.memory_space<vmem>>, vector<1x32x128xf32>
    %163 = vector.shape_cast %162 : vector<1x32x128xf32> to vector<32x128xf32>
    %164 = vector.shape_cast %161 : vector<32x128xf32> to vector<1x32x128xf32>
    tpu.vector_store %arg5[%c0_50, %c0_51, %c0_52], %164 {strides = array<i32>} : memref<8x32x128xf32, #tpu.memory_space<vmem>>, vector<1x32x128xf32>,
    %165 = vector.extract_strided_slice %154 {offsets = [1, 0, 0], sizes = [1, 32, 128], strides = [1, 1, 1]} : vector<8x32x128xbf16> to vector<1x32x128xbf16>
    %166 = vector.shape_cast %165 : vector<1x32x128xbf16> to vector<32x128xbf16>
    %cst_53 = arith.constant dense<0.000000e+00> : vector<32x128xf32>
    %167 = tpu.matmul %155, %166, %cst_53 {dimension_numbers = #tpu.dot_dimension_numbers<[1], [0], [0], [1], [0, 0, 1, 1], [], []>} : vector<32x32xbf16>, vector<32x128xbf16>, vector<32x128xf32> -> vector<32x128xf32>
    %168 = vector.broadcast %156 : vector<32x1xf32> to vector<32x128xf32>
    %169 = arith.addf %167, %168 : vector<32x128xf32>
    %c1_54 = arith.constant 1 : index
    %c0_55 = arith.constant 0 : index
    %c0_56 = arith.constant 0 : index
    %170 = vector.load %arg5[%c1_54, %c0_55, %c0_56] : memref<8x32x128xf32, #tpu.memory_space<vmem>>, vector<1x32x128xf32>
    %171 = vector.shape_cast %170 : vector<1x32x128xf32> to vector<32x128xf32>
    %172 = vector.shape_cast %169 : vector<32x128xf32> to vector<1x32x128xf32>
    tpu.vector_store %arg5[%c1_54, %c0_55, %c0_56], %172 {strides = array<i32>} : memref<8x32x128xf32, #tpu.memory_space<vmem>>, vector<1x32x128xf32>,
    %173 = vector.extract_strided_slice %154 {offsets = [2, 0, 0], sizes = [1, 32, 128], strides = [1, 1, 1]} : vector<8x32x128xbf16> to vector<1x32x128xbf16>
    %174 = vector.shape_cast %173 : vector<1x32x128xbf16> to vector<32x128xbf16>
    %cst_57 = arith.constant dense<0.000000e+00> : vector<32x128xf32>
    %175 = tpu.matmul %155, %174, %cst_57 {dimension_numbers = #tpu.dot_dimension_numbers<[1], [0], [0], [1], [0, 0, 1, 1], [], []>} : vector<32x32xbf16>, vector<32x128xbf16>, vector<32x128xf32> -> vector<32x128xf32>
    %176 = vector.broadcast %156 : vector<32x1xf32> to vector<32x128xf32>
    %177 = arith.addf %175, %176 : vector<32x128xf32>
    %c2_58 = arith.constant 2 : index
    %c0_59 = arith.constant 0 : index
    %c0_60 = arith.constant 0 : index
    %178 = vector.load %arg5[%c2_58, %c0_59, %c0_60] : memref<8x32x128xf32, #tpu.memory_space<vmem>>, vector<1x32x128xf32>
    %179 = vector.shape_cast %178 : vector<1x32x128xf32> to vector<32x128xf32>
    %180 = vector.shape_cast %177 : vector<32x128xf32> to vector<1x32x128xf32>
    tpu.vector_store %arg5[%c2_58, %c0_59, %c0_60], %180 {strides = array<i32>} : memref<8x32x128xf32, #tpu.memory_space<vmem>>, vector<1x32x128xf32>,
    %181 = vector.extract_strided_slice %154 {offsets = [3, 0, 0], sizes = [1, 32, 128], strides = [1, 1, 1]} : vector<8x32x128xbf16> to vector<1x32x128xbf16>
    %182 = vector.shape_cast %181 : vector<1x32x128xbf16> to vector<32x128xbf16>
    %cst_61 = arith.constant dense<0.000000e+00> : vector<32x128xf32>
    %183 = tpu.matmul %155, %182, %cst_61 {dimension_numbers = #tpu.dot_dimension_numbers<[1], [0], [0], [1], [0, 0, 1, 1], [], []>} : vector<32x32xbf16>, vector<32x128xbf16>, vector<32x128xf32> -> vector<32x128xf32>
    %184 = vector.broadcast %156 : vector<32x1xf32> to vector<32x128xf32>
    %185 = arith.addf %183, %184 : vector<32x128xf32>
    %c3_62 = arith.constant 3 : index
    %c0_63 = arith.constant 0 : index
    %c0_64 = arith.constant 0 : index
    %186 = vector.load %arg5[%c3_62, %c0_63, %c0_64] : memref<8x32x128xf32, #tpu.memory_space<vmem>>, vector<1x32x128xf32>
    %187 = vector.shape_cast %186 : vector<1x32x128xf32> to vector<32x128xf32>
    %188 = vector.shape_cast %185 : vector<32x128xf32> to vector<1x32x128xf32>
    tpu.vector_store %arg5[%c3_62, %c0_63, %c0_64], %188 {strides = array<i32>} : memref<8x32x128xf32, #tpu.memory_space<vmem>>, vector<1x32x128xf32>,
    %189 = vector.extract_strided_slice %154 {offsets = [4, 0, 0], sizes = [1, 32, 128], strides = [1, 1, 1]} : vector<8x32x128xbf16> to vector<1x32x128xbf16>
    %190 = vector.shape_cast %189 : vector<1x32x128xbf16> to vector<32x128xbf16>
    %cst_65 = arith.constant dense<0.000000e+00> : vector<32x128xf32>
    %191 = tpu.matmul %155, %190, %cst_65 {dimension_numbers = #tpu.dot_dimension_numbers<[1], [0], [0], [1], [0, 0, 1, 1], [], []>} : vector<32x32xbf16>, vector<32x128xbf16>, vector<32x128xf32> -> vector<32x128xf32>
    %192 = vector.broadcast %156 : vector<32x1xf32> to vector<32x128xf32>
    %193 = arith.addf %191, %192 : vector<32x128xf32>
    %c4_66 = arith.constant 4 : index
    %c0_67 = arith.constant 0 : index
    %c0_68 = arith.constant 0 : index
    %194 = vector.load %arg5[%c4_66, %c0_67, %c0_68] : memref<8x32x128xf32, #tpu.memory_space<vmem>>, vector<1x32x128xf32>
    %195 = vector.shape_cast %194 : vector<1x32x128xf32> to vector<32x128xf32>
    %196 = vector.shape_cast %193 : vector<32x128xf32> to vector<1x32x128xf32>
    tpu.vector_store %arg5[%c4_66, %c0_67, %c0_68], %196 {strides = array<i32>} : memref<8x32x128xf32, #tpu.memory_space<vmem>>, vector<1x32x128xf32>,
    %197 = vector.extract_strided_slice %154 {offsets = [5, 0, 0], sizes = [1, 32, 128], strides = [1, 1, 1]} : vector<8x32x128xbf16> to vector<1x32x128xbf16>
    %198 = vector.shape_cast %197 : vector<1x32x128xbf16> to vector<32x128xbf16>
    %cst_69 = arith.constant dense<0.000000e+00> : vector<32x128xf32>
    %199 = tpu.matmul %155, %198, %cst_69 {dimension_numbers = #tpu.dot_dimension_numbers<[1], [0], [0], [1], [0, 0, 1, 1], [], []>} : vector<32x32xbf16>, vector<32x128xbf16>, vector<32x128xf32> -> vector<32x128xf32>
    %200 = vector.broadcast %156 : vector<32x1xf32> to vector<32x128xf32>
    %201 = arith.addf %199, %200 : vector<32x128xf32>
    %c5_70 = arith.constant 5 : index
    %c0_71 = arith.constant 0 : index
    %c0_72 = arith.constant 0 : index
    %202 = vector.load %arg5[%c5_70, %c0_71, %c0_72] : memref<8x32x128xf32, #tpu.memory_space<vmem>>, vector<1x32x128xf32>
    %203 = vector.shape_cast %202 : vector<1x32x128xf32> to vector<32x128xf32>
    %204 = vector.shape_cast %201 : vector<32x128xf32> to vector<1x32x128xf32>
    tpu.vector_store %arg5[%c5_70, %c0_71, %c0_72], %204 {strides = array<i32>} : memref<8x32x128xf32, #tpu.memory_space<vmem>>, vector<1x32x128xf32>,
    %205 = vector.extract_strided_slice %154 {offsets = [6, 0, 0], sizes = [1, 32, 128], strides = [1, 1, 1]} : vector<8x32x128xbf16> to vector<1x32x128xbf16>
    %206 = vector.shape_cast %205 : vector<1x32x128xbf16> to vector<32x128xbf16>
    %cst_73 = arith.constant dense<0.000000e+00> : vector<32x128xf32>
    %207 = tpu.matmul %155, %206, %cst_73 {dimension_numbers = #tpu.dot_dimension_numbers<[1], [0], [0], [1], [0, 0, 1, 1], [], []>} : vector<32x32xbf16>, vector<32x128xbf16>, vector<32x128xf32> -> vector<32x128xf32>
    %208 = vector.broadcast %156 : vector<32x1xf32> to vector<32x128xf32>
    %209 = arith.addf %207, %208 : vector<32x128xf32>
    %c6_74 = arith.constant 6 : index
    %c0_75 = arith.constant 0 : index
    %c0_76 = arith.constant 0 : index
    %210 = vector.load %arg5[%c6_74, %c0_75, %c0_76] : memref<8x32x128xf32, #tpu.memory_space<vmem>>, vector<1x32x128xf32>
    %211 = vector.shape_cast %210 : vector<1x32x128xf32> to vector<32x128xf32>
    %212 = vector.shape_cast %209 : vector<32x128xf32> to vector<1x32x128xf32>
    tpu.vector_store %arg5[%c6_74, %c0_75, %c0_76], %212 {strides = array<i32>} : memref<8x32x128xf32, #tpu.memory_space<vmem>>, vector<1x32x128xf32>,
    %213 = vector.extract_strided_slice %154 {offsets = [7, 0, 0], sizes = [1, 32, 128], strides = [1, 1, 1]} : vector<8x32x128xbf16> to vector<1x32x128xbf16>
    %214 = vector.shape_cast %213 : vector<1x32x128xbf16> to vector<32x128xbf16>
    %cst_77 = arith.constant dense<0.000000e+00> : vector<32x128xf32>
    %215 = tpu.matmul %155, %214, %cst_77 {dimension_numbers = #tpu.dot_dimension_numbers<[1], [0], [0], [1], [0, 0, 1, 1], [], []>} : vector<32x32xbf16>, vector<32x128xbf16>, vector<32x128xf32> -> vector<32x128xf32>
    %216 = vector.broadcast %156 : vector<32x1xf32> to vector<32x128xf32>
    %217 = arith.addf %215, %216 : vector<32x128xf32>
    %c7_78 = arith.constant 7 : index
    %c0_79 = arith.constant 0 : index
    %c0_80 = arith.constant 0 : index
    %218 = vector.load %arg5[%c7_78, %c0_79, %c0_80] : memref<8x32x128xf32, #tpu.memory_space<vmem>>, vector<1x32x128xf32>
    %219 = vector.shape_cast %218 : vector<1x32x128xf32> to vector<32x128xf32>
    %220 = vector.shape_cast %217 : vector<32x128xf32> to vector<1x32x128xf32>
    tpu.vector_store %arg5[%c7_78, %c0_79, %c0_80], %220 {strides = array<i32>} : memref<8x32x128xf32, #tpu.memory_space<vmem>>, vector<1x32x128xf32>,
    return
  }
  func.func @transform_0(%arg0: i32) -> (i32, i32, i32) {
    %c0_i32 = arith.constant 0 : i32
    %c0_i32_0 = arith.constant 0 : i32
    %c0_i32_1 = arith.constant 0 : i32
    return %c0_i32, %c0_i32_0, %arg0 : i32, i32, i32
  }
  func.func @transform_1(%arg0: i32) -> (i32, i32) {
    %c0_i32 = arith.constant 0 : i32
    %c0_i32_0 = arith.constant 0 : i32
    %c0_i32_1 = arith.constant 0 : i32
    return %c0_i32, %c0_i32_0 : i32, i32
  }
  func.func @transform_2(%arg0: i32) -> (i32, i32) {
    %c0_i32 = arith.constant 0 : i32
    %c0_i32_0 = arith.constant 0 : i32
    %c0_i32_1 = arith.constant 0 : i32
    return %c0_i32, %c0_i32_0 : i32, i32
  }
  func.func @transform_3(%arg0: i32) -> (i32, i32) {
    %c0_i32 = arith.constant 0 : i32
    %c0_i32_0 = arith.constant 0 : i32
    %c0_i32_1 = arith.constant 0 : i32
    return %c0_i32, %c0_i32_0 : i32, i32
  }
  func.func @transform_4(%arg0: i32) -> (i32, i32, i32) {
    %c0_i32 = arith.constant 0 : i32
    %c0_i32_0 = arith.constant 0 : i32
    %c0_i32_1 = arith.constant 0 : i32
    return %c0_i32, %c0_i32_0, %arg0 : i32, i32, i32
  }
}

</mosaic_0001>

<llo_original>
// kernel: tpu_custom_call.1
$region0: #{tpu_custom_call.1}
  #allocation0 [shape = 'u32[]', space=smem, size = 0x4, offset = 0x4, fixed_abs, tag = 'smem constant byte address 0x4 - core index']
  #allocation1 [shape = 'u32[144,128]{1,0:T(1,128)}', space=vmem, size = 0x12000, scoped, tag = 'internal scratch']
  %s0 = inlined_call_operand.hbm [shape: bf16[8,32,128], index: 0, kind: input, shape index: {}]
  %s1 = inlined_call_operand.vmem [shape: bf16[96,32], index: 1, kind: input, shape index: {}]
  %s2 = inlined_call_operand.vmem [shape: bf16[32,32], index: 2, kind: input, shape index: {}]
  %s3 = inlined_call_operand.vmem [shape: f32[32,1], index: 3, kind: input, shape index: {}]
  %s4 = inlined_call_operand.hbm [shape: f32[8,32,128], index: 4, kind: output, shape index: {}]
  %s5 = sld [smem:[#allocation0]]
  $region30: #{tpu_custom_call.1} parent=0
    _
  %s7 = ssub.s32 1, %s5
  %s8 = scalar_select 0, %s7, %s5
  $region1: #{tpu_custom_call.1} parent=0
    #allocation2 [shape = 'u8[65536]{0}', space=vmem, size = 0x10000, scoped, tag = 'input window, operand 0, single buffered']
    #allocation3 [shape = 's32[1]{0}', space=sflag, size = 0x4, scoped, tag = 'scoped memory for tpu_custom_call.1']
    #allocation4 [shape = 's32[1]{0}', space=sflag, size = 0x4, scoped, tag = 'scoped memory for tpu_custom_call.1']
    #allocation5 [shape = 'u8[131072]{0}', space=vmem, size = 0x20000, scoped, tag = 'output window, operand 0, single buffered']
    %9 = vsyncpa [#allocation3], 0
    %10 = vsyncpa [#allocation4], 0
    // Predicated region
    $region2: #{tpu_custom_call.1} parent=1 // pred_check
      _
    $region3: #{tpu_custom_call.1} parent=1 // pred_check_branch
      %12 = sbr.rel (0) target = $region5
    $region4: #{tpu_custom_call.1} parent=1 // pred_region
      %s14 = ssub.s32 2048, 2048
      %15 = vsyncadd [#allocation3], %s14
      %s16 = sshll.u32 [#allocation2], 4
      %s17 = int_to_ptr.vmem [resolvable:$true] %s16
      %22 = dma.hbm_to_vmem [thread:$0]  %s0, 2048, %s17, [#allocation3], 64, 64, 4
    $region5: #{tpu_custom_call.1} parent=1 // pred_fallthru
      _
    // Predicated region
    $region6: #{tpu_custom_call.1} parent=1 // pred_check
      _
    $region7: #{tpu_custom_call.1} parent=1 // pred_check_branch
      %24 = sbr.rel (0) target = $region9
    $region8: #{tpu_custom_call.1} parent=1 // pred_region
      _
    $region9: #{tpu_custom_call.1} parent=1 // pred_fallthru
      _
    // Predicated region
    $region10: #{tpu_custom_call.1} parent=1 // pred_check
      _
    $region11: #{tpu_custom_call.1} parent=1 // pred_check_branch
      %26 = sbr.rel (0) target = $region13
    $region12: #{tpu_custom_call.1} parent=1 // pred_region
      _
    $region13: #{tpu_custom_call.1} parent=1 // pred_fallthru
      _
    // Predicated region
    $region14: #{tpu_custom_call.1} parent=1 // pred_check
      _
    $region15: #{tpu_custom_call.1} parent=1 // pred_check_branch
      %28 = sbr.rel (0) target = $region17
    $region16: #{tpu_custom_call.1} parent=1 // pred_region
      _
    $region17: #{tpu_custom_call.1} parent=1 // pred_fallthru
      _
    // Predicated region
    $region18: #{tpu_custom_call.1} parent=1 // pred_check
      _
    $region19: #{tpu_custom_call.1} parent=1 // pred_check_branch
      %30 = sbr.rel (0) target = $region21
    $region20: #{tpu_custom_call.1} parent=1 // pred_region
      %31 = dma.done [#allocation3], 2048
    $region21: #{tpu_custom_call.1} parent=1 // pred_fallthru
      _
    %v33 = vld [vmem:[%s1] sm:$0xf]
    %v34 = vld [vmem:[%s1 + $0x4] sm:$0xf]
    %v35 = vld [vmem:[%s1 + $0x8] sm:$0xf]
    %v36 = vld [vmem:[%s1 + $0xc] sm:$0xf]
    %v37 = vld [vmem:[%s1 + $0x10] sm:$0xf]
    %v38 = vld [vmem:[%s1 + $0x14] sm:$0xf]
    %v39 = vld [vmem:[%s1 + $0x18] sm:$0xf]
    %v40 = vld [vmem:[%s1 + $0x1c] sm:$0xf]
    %v41 = vld [vmem:[%s1 + $0x20] sm:$0xf]
    %v42 = vld [vmem:[%s1 + $0x24] sm:$0xf]
    %v43 = vld [vmem:[%s1 + $0x28] sm:$0xf]
    %v44 = vld [vmem:[%s1 + $0x2c] sm:$0xf]
    %v45 = vld [vmem:[#allocation2] sm:$0xf]
    %v46 = vld [vmem:[#allocation2 + $0x4] sm:$0xf]
    %v47 = vld [vmem:[#allocation2 + $0x8] sm:$0xf]
    %v48 = vld [vmem:[#allocation2 + $0xc] sm:$0xf]
    %v61 = vunpack.c.l.b16 %v33
    %v62 = vunpack.c.l.b16 %v34
    %v63 = vunpack.c.l.b16 %v35
    %v64 = vunpack.c.l.b16 %v36
    %v65 = vunpack.c.l.b16 %v37
    %v66 = vunpack.c.l.b16 %v38
    %v67 = vunpack.c.l.b16 %v39
    %v68 = vunpack.c.l.b16 %v40
    %v69 = vunpack.c.l.b16 %v41
    %v70 = vunpack.c.l.b16 %v42
    %v71 = vunpack.c.l.b16 %v43
    %v72 = vunpack.c.l.b16 %v44
    %v73 = vpack.c.b16 %v62, %v61
    %v74 = vpack.c.b16 %v64, %v63
    %v75 = vpack.c.b16 %v66, %v65
    %v76 = vpack.c.b16 %v68, %v67
    %v77 = vpack.c.b16 %v70, %v69
    %v78 = vpack.c.b16 %v72, %v71
    %v83 = vunpack.c.l.b16 %v45
    %v84 = vunpack.c.l.b16 %v46
    %v85 = vunpack.c.l.b16 %v47
    %v86 = vunpack.c.l.b16 %v48
    %v87 = vpack.c.b16 %v84, %v83
    %v88 = vpack.c.b16 %v86, %v85
    %vm91 = vcmask 261120
    %v93 = vsel %vm91, %v73, 0
    %v96 = vsel %vm91, %v74, 0
    %v99 = vsel %vm91, %v75, 0
    %v102 = vsel %vm91, %v76, 0
    %v105 = vsel %vm91, %v77, 0
    %v108 = vsel %vm91, %v78, 0
    %110 = vmatprep.subr.bf16.mxu0 0
    %111 = vmatpush1.bf16.msra.mxu0 0
    %112 = vmatprep.subr.bf16.mxu0 0
    %113 = vmatpush1.bf16.msra.mxu0 0
    %114 = vmatprep.subr.bf16.mxu0 0
    %115 = vmatpush1.bf16.msra.mxu0 0
    %116 = vmatprep.subr.bf16.mxu0 0
    %117 = vmatpush1.bf16.msra.mxu0 0
    %118 = vmatprep.subr.bf16.mxu0 0
    %119 = vmatpush1.bf16.msra.mxu0 0
    %120 = vmatprep.subr.bf16.mxu0 0
    %121 = vmatpush1.bf16.msra.mxu0 0
    %122 = vmatprep.subr.bf16.mxu0 0
    %123 = vmatpush1.bf16.msra.mxu0 %v88
    %124 = vmatprep.subr.bf16.mxu0 0
    %125 = vmatpush1.bf16.msra.mxu0 %v87
    %126 = vmatprep.subr.bf16.mxu0 0
    %127 = vmatpush2.bf16.msra.mxu0 0
    %128 = vmatprep.subr.bf16.mxu0 0
    %129 = vmatpush2.bf16.msra.mxu0 0
    %130 = vmatprep.subr.bf16.mxu0 0
    %131 = vmatpush2.bf16.msra.mxu0 0
    %132 = vmatprep.subr.bf16.mxu0 0
    %133 = vmatpush2.bf16.msra.mxu0 0
    %134 = vmatprep.subr.bf16.mxu0 0
    %135 = vmatpush2.bf16.msra.mxu0 0
    %136 = vmatprep.subr.bf16.mxu0 0
    %137 = vmatpush2.bf16.msra.mxu0 0
    %138 = vmatprep.subr.bf16.mxu0 0
    %139 = vmatpush2.bf16.msra.mxu0 0
    %140 = vmatprep.subr.bf16.mxu0 0
    %141 = vmatpush2.bf16.msra.mxu0 0
    %142 = vmatprep.mubr.bf16.mxu0 0
    %143 = vmatmul.mubr.bf16.gmra.mxu0 %v93
    %v144 = vpop.f32.mrf.mxu0
    %v145 = vadd.f32 0.0, %v144
    %v146 = vpop.f32.mrf.mxu0
    %v147 = vpop.f32.mrf.mxu0
    %v148 = vadd.f32 0.0, %v147
    %v149 = vpop.f32.mrf.mxu0
    %150 = vmatprep.mubr.bf16.mxu0 0
    %151 = vmatmul.mubr.bf16.gmra.mxu0 %v96
    %v152 = vpop.f32.mrf.mxu0
    %v153 = vadd.f32 0.0, %v152
    %v154 = vpop.f32.mrf.mxu0
    %v155 = vpop.f32.mrf.mxu0
    %v156 = vadd.f32 0.0, %v155
    %v157 = vpop.f32.mrf.mxu0
    %158 = vmatprep.mubr.bf16.mxu0 0
    %159 = vmatmul.mubr.bf16.gmra.mxu0 %v99
    %v160 = vpop.f32.mrf.mxu0
    %v161 = vadd.f32 0.0, %v160
    %v162 = vpop.f32.mrf.mxu0
    %v163 = vpop.f32.mrf.mxu0
    %v164 = vadd.f32 0.0, %v163
    %v165 = vpop.f32.mrf.mxu0
    %166 = vmatprep.mubr.bf16.mxu0 0
    %167 = vmatmul.mubr.bf16.gmra.mxu0 %v102
    %v168 = vpop.f32.mrf.mxu0
    %v169 = vadd.f32 0.0, %v168
    %v170 = vpop.f32.mrf.mxu0
    %v171 = vpop.f32.mrf.mxu0
    %v172 = vadd.f32 0.0, %v171
    %v173 = vpop.f32.mrf.mxu0
    %174 = vmatprep.mubr.bf16.mxu0 0
    %175 = vmatmul.mubr.bf16.gmra.mxu0 %v105
    %v176 = vpop.f32.mrf.mxu0
    %v177 = vadd.f32 0.0, %v176
    %v178 = vpop.f32.mrf.mxu0
    %v179 = vpop.f32.mrf.mxu0
    %v180 = vadd.f32 0.0, %v179
    %v181 = vpop.f32.mrf.mxu0
    %182 = vmatprep.mubr.bf16.mxu0 0
    %183 = vmatmul.mubr.bf16.gmra.mxu0 %v108
    %v184 = vpop.f32.mrf.mxu0
    %v185 = vadd.f32 0.0, %v184
    %v186 = vpop.f32.mrf.mxu0
    %v187 = vpop.f32.mrf.mxu0
    %v188 = vadd.f32 0.0, %v187
    %v189 = vpop.f32.mrf.mxu0
    %190 = vdwg.mxu0
    %s191 = scalar_lea.vmem [#allocation2], 16
    %v192 = vld [vmem:[%s191] sm:$0xf]
    %v193 = vld [vmem:[%s191 + $0x4] sm:$0xf]
    %v194 = vld [vmem:[%s191 + $0x8] sm:$0xf]
    %v195 = vld [vmem:[%s191 + $0xc] sm:$0xf]
    %v200 = vunpack.c.l.b16 %v192
    %v201 = vunpack.c.l.b16 %v193
    %v202 = vunpack.c.l.b16 %v194
    %v203 = vunpack.c.l.b16 %v195
    %v204 = vpack.c.b16 %v201, %v200
    %v205 = vpack.c.b16 %v203, %v202
    %208 = vmatprep.subr.bf16.mxu0 0
    %209 = vmatpush1.bf16.msra.mxu0 0
    %210 = vmatprep.subr.bf16.mxu0 0
    %211 = vmatpush1.bf16.msra.mxu0 0
    %212 = vmatprep.subr.bf16.mxu0 0
    %213 = vmatpush1.bf16.msra.mxu0 0
    %214 = vmatprep.subr.bf16.mxu0 0
    %215 = vmatpush1.bf16.msra.mxu0 0
    %216 = vmatprep.subr.bf16.mxu0 0
    %217 = vmatpush1.bf16.msra.mxu0 0
    %218 = vmatprep.subr.bf16.mxu0 0
    %219 = vmatpush1.bf16.msra.mxu0 0
    %220 = vmatprep.subr.bf16.mxu0 0
    %221 = vmatpush1.bf16.msra.mxu0 %v205
    %222 = vmatprep.subr.bf16.mxu0 0
    %223 = vmatpush1.bf16.msra.mxu0 %v204
    %224 = vmatprep.subr.bf16.mxu0 0
    %225 = vmatpush2.bf16.msra.mxu0 0
    %226 = vmatprep.subr.bf16.mxu0 0
    %227 = vmatpush2.bf16.msra.mxu0 0
    %228 = vmatprep.subr.bf16.mxu0 0
    %229 = vmatpush2.bf16.msra.mxu0 0
    %230 = vmatprep.subr.bf16.mxu0 0
    %231 = vmatpush2.bf16.msra.mxu0 0
    %232 = vmatprep.subr.bf16.mxu0 0
    %233 = vmatpush2.bf16.msra.mxu0 0
    %234 = vmatprep.subr.bf16.mxu0 0
    %235 = vmatpush2.bf16.msra.mxu0 0
    %236 = vmatprep.subr.bf16.mxu0 0
    %237 = vmatpush2.bf16.msra.mxu0 0
    %238 = vmatprep.subr.bf16.mxu0 0
    %239 = vmatpush2.bf16.msra.mxu0 0
    %240 = vmatprep.mubr.bf16.mxu0 0
    %241 = vmatmul.mubr.bf16.gmra.mxu0 %v93
    %v242 = vpop.f32.mrf.mxu0
    %v243 = vadd.f32 0.0, %v242
    %v244 = vpop.f32.mrf.mxu0
    %v245 = vpop.f32.mrf.mxu0
    %v246 = vadd.f32 0.0, %v245
    %v247 = vpop.f32.mrf.mxu0
    %248 = vmatprep.mubr.bf16.mxu0 0
    %249 = vmatmul.mubr.bf16.gmra.mxu0 %v96
    %v250 = vpop.f32.mrf.mxu0
    %v251 = vadd.f32 0.0, %v250
    %v252 = vpop.f32.mrf.mxu0
    %v253 = vpop.f32.mrf.mxu0
    %v254 = vadd.f32 0.0, %v253
    %v255 = vpop.f32.mrf.mxu0
    %256 = vmatprep.mubr.bf16.mxu0 0
    %257 = vmatmul.mubr.bf16.gmra.mxu0 %v99
    %v258 = vpop.f32.mrf.mxu0
    %v259 = vadd.f32 0.0, %v258
    %v260 = vpop.f32.mrf.mxu0
    %v261 = vpop.f32.mrf.mxu0
    %v262 = vadd.f32 0.0, %v261
    %v263 = vpop.f32.mrf.mxu0
    %264 = vmatprep.mubr.bf16.mxu0 0
    %265 = vmatmul.mubr.bf16.gmra.mxu0 %v102
    %v266 = vpop.f32.mrf.mxu0
    %v267 = vadd.f32 0.0, %v266
    %v268 = vpop.f32.mrf.mxu0
    %v269 = vpop.f32.mrf.mxu0
    %v270 = vadd.f32 0.0, %v269
    %v271 = vpop.f32.mrf.mxu0
    %272 = vmatprep.mubr.bf16.mxu0 0
    %273 = vmatmul.mubr.bf16.gmra.mxu0 %v105
    %v274 = vpop.f32.mrf.mxu0
    %v275 = vadd.f32 0.0, %v274
    %v276 = vpop.f32.mrf.mxu0
    %v277 = vpop.f32.mrf.mxu0
    %v278 = vadd.f32 0.0, %v277
    %v279 = vpop.f32.mrf.mxu0
    %280 = vmatprep.mubr.bf16.mxu0 0
    %281 = vmatmul.mubr.bf16.gmra.mxu0 %v108
    %v282 = vpop.f32.mrf.mxu0
    %v283 = vadd.f32 0.0, %v282
    %v284 = vpop.f32.mrf.mxu0
    %v285 = vpop.f32.mrf.mxu0
    %v286 = vadd.f32 0.0, %v285
    %v287 = vpop.f32.mrf.mxu0
    %288 = vdwg.mxu0
    %s289 = scalar_lea.vmem [#allocation2], 32
    %v290 = vld [vmem:[%s289] sm:$0xf]
    %v291 = vld [vmem:[%s289 + $0x4] sm:$0xf]
    %v292 = vld [vmem:[%s289 + $0x8] sm:$0xf]
    %v293 = vld [vmem:[%s289 + $0xc] sm:$0xf]
    %v298 = vunpack.c.l.b16 %v290
    %v299 = vunpack.c.l.b16 %v291
    %v300 = vunpack.c.l.b16 %v292
    %v301 = vunpack.c.l.b16 %v293
    %v302 = vpack.c.b16 %v299, %v298
    %v303 = vpack.c.b16 %v301, %v300
    %306 = vmatprep.subr.bf16.mxu0 0
    %307 = vmatpush1.bf16.msra.mxu0 0
    %308 = vmatprep.subr.bf16.mxu0 0
    %309 = vmatpush1.bf16.msra.mxu0 0
    %310 = vmatprep.subr.bf16.mxu0 0
    %311 = vmatpush1.bf16.msra.mxu0 0
    %312 = vmatprep.subr.bf16.mxu0 0
    %313 = vmatpush1.bf16.msra.mxu0 0
    %314 = vmatprep.subr.bf16.mxu0 0
    %315 = vmatpush1.bf16.msra.mxu0 0
    %316 = vmatprep.subr.bf16.mxu0 0
    %317 = vmatpush1.bf16.msra.mxu0 0
    %318 = vmatprep.subr.bf16.mxu0 0
    %319 = vmatpush1.bf16.msra.mxu0 %v303
    %320 = vmatprep.subr.bf16.mxu0 0
    %321 = vmatpush1.bf16.msra.mxu0 %v302
    %322 = vmatprep.subr.bf16.mxu0 0
    %323 = vmatpush2.bf16.msra.mxu0 0
    %324 = vmatprep.subr.bf16.mxu0 0
    %325 = vmatpush2.bf16.msra.mxu0 0
    %326 = vmatprep.subr.bf16.mxu0 0
    %327 = vmatpush2.bf16.msra.mxu0 0
    %328 = vmatprep.subr.bf16.mxu0 0
    %329 = vmatpush2.bf16.msra.mxu0 0
    %330 = vmatprep.subr.bf16.mxu0 0
    %331 = vmatpush2.bf16.msra.mxu0 0
    %332 = vmatprep.subr.bf16.mxu0 0
    %333 = vmatpush2.bf16.msra.mxu0 0
    %334 = vmatprep.subr.bf16.mxu0 0
    %335 = vmatpush2.bf16.msra.mxu0 0
    %336 = vmatprep.subr.bf16.mxu0 0
    %337 = vmatpush2.bf16.msra.mxu0 0
    %338 = vmatprep.mubr.bf16.mxu0 0
    %339 = vmatmul.mubr.bf16.gmra.mxu0 %v93
    %v340 = vpop.f32.mrf.mxu0
    %v341 = vadd.f32 0.0, %v340
    %v342 = vpop.f32.mrf.mxu0
    %v343 = vpop.f32.mrf.mxu0
    %v344 = vadd.f32 0.0, %v343
    %v345 = vpop.f32.mrf.mxu0
    %346 = vmatprep.mubr.bf16.mxu0 0
    %347 = vmatmul.mubr.bf16.gmra.mxu0 %v96
    %v348 = vpop.f32.mrf.mxu0
    %v349 = vadd.f32 0.0, %v348
    %v350 = vpop.f32.mrf.mxu0
    %v351 = vpop.f32.mrf.mxu0
    %v352 = vadd.f32 0.0, %v351
    %v353 = vpop.f32.mrf.mxu0
    %354 = vmatprep.mubr.bf16.mxu0 0
    %355 = vmatmul.mubr.bf16.gmra.mxu0 %v99
    %v356 = vpop.f32.mrf.mxu0
    %v357 = vadd.f32 0.0, %v356
    %v358 = vpop.f32.mrf.mxu0
    %v359 = vpop.f32.mrf.mxu0
    %v360 = vadd.f32 0.0, %v359
    %v361 = vpop.f32.mrf.mxu0
    %362 = vmatprep.mubr.bf16.mxu0 0
    %363 = vmatmul.mubr.bf16.gmra.mxu0 %v102
    %v364 = vpop.f32.mrf.mxu0
    %v365 = vadd.f32 0.0, %v364
    %v366 = vpop.f32.mrf.mxu0
    %v367 = vpop.f32.mrf.mxu0
    %v368 = vadd.f32 0.0, %v367
    %v369 = vpop.f32.mrf.mxu0
    %370 = vmatprep.mubr.bf16.mxu0 0
    %371 = vmatmul.mubr.bf16.gmra.mxu0 %v105
    %v372 = vpop.f32.mrf.mxu0
    %v373 = vadd.f32 0.0, %v372
    %v374 = vpop.f32.mrf.mxu0
    %v375 = vpop.f32.mrf.mxu0
    %v376 = vadd.f32 0.0, %v375
    %v377 = vpop.f32.mrf.mxu0
    %378 = vmatprep.mubr.bf16.mxu0 0
    %379 = vmatmul.mubr.bf16.gmra.mxu0 %v108
    %v380 = vpop.f32.mrf.mxu0
    %v381 = vadd.f32 0.0, %v380
    %v382 = vpop.f32.mrf.mxu0
    %v383 = vpop.f32.mrf.mxu0
    %v384 = vadd.f32 0.0, %v383
    %v385 = vpop.f32.mrf.mxu0
    %386 = vdwg.mxu0
    %s387 = scalar_lea.vmem [#allocation2], 48
    %v388 = vld [vmem:[%s387] sm:$0xf]
    %v389 = vld [vmem:[%s387 + $0x4] sm:$0xf]
    %v390 = vld [vmem:[%s387 + $0x8] sm:$0xf]
    %v391 = vld [vmem:[%s387 + $0xc] sm:$0xf]
    %v396 = vunpack.c.l.b16 %v388
    %v397 = vunpack.c.l.b16 %v389
    %v398 = vunpack.c.l.b16 %v390
    %v399 = vunpack.c.l.b16 %v391
    %v400 = vpack.c.b16 %v397, %v396
    %v401 = vpack.c.b16 %v399, %v398
    %404 = vmatprep.subr.bf16.mxu0 0
    %405 = vmatpush1.bf16.msra.mxu0 0
    %406 = vmatprep.subr.bf16.mxu0 0
    %407 = vmatpush1.bf16.msra.mxu0 0
    %408 = vmatprep.subr.bf16.mxu0 0
    %409 = vmatpush1.bf16.msra.mxu0 0
    %410 = vmatprep.subr.bf16.mxu0 0
    %411 = vmatpush1.bf16.msra.mxu0 0
    %412 = vmatprep.subr.bf16.mxu0 0
    %413 = vmatpush1.bf16.msra.mxu0 0
    %414 = vmatprep.subr.bf16.mxu0 0
    %415 = vmatpush1.bf16.msra.mxu0 0
    %416 = vmatprep.subr.bf16.mxu0 0
    %417 = vmatpush1.bf16.msra.mxu0 %v401
    %418 = vmatprep.subr.bf16.mxu0 0
    %419 = vmatpush1.bf16.msra.mxu0 %v400
    %420 = vmatprep.subr.bf16.mxu0 0
    %421 = vmatpush2.bf16.msra.mxu0 0
    %422 = vmatprep.subr.bf16.mxu0 0
    %423 = vmatpush2.bf16.msra.mxu0 0
    %424 = vmatprep.subr.bf16.mxu0 0
    %425 = vmatpush2.bf16.msra.mxu0 0
    %426 = vmatprep.subr.bf16.mxu0 0
    %427 = vmatpush2.bf16.msra.mxu0 0
    %428 = vmatprep.subr.bf16.mxu0 0
    %429 = vmatpush2.bf16.msra.mxu0 0
    %430 = vmatprep.subr.bf16.mxu0 0
    %431 = vmatpush2.bf16.msra.mxu0 0
    %432 = vmatprep.subr.bf16.mxu0 0
    %433 = vmatpush2.bf16.msra.mxu0 0
    %434 = vmatprep.subr.bf16.mxu0 0
    %435 = vmatpush2.bf16.msra.mxu0 0
    %436 = vmatprep.mubr.bf16.mxu0 0
    %437 = vmatmul.mubr.bf16.gmra.mxu0 %v93
    %v438 = vpop.f32.mrf.mxu0
    %v439 = vadd.f32 0.0, %v438
    %v440 = vpop.f32.mrf.mxu0
    %v441 = vpop.f32.mrf.mxu0
    %v442 = vadd.f32 0.0, %v441
    %v443 = vpop.f32.mrf.mxu0
    %444 = vmatprep.mubr.bf16.mxu0 0
    %445 = vmatmul.mubr.bf16.gmra.mxu0 %v96
    %v446 = vpop.f32.mrf.mxu0
    %v447 = vadd.f32 0.0, %v446
    %v448 = vpop.f32.mrf.mxu0
    %v449 = vpop.f32.mrf.mxu0
    %v450 = vadd.f32 0.0, %v449
    %v451 = vpop.f32.mrf.mxu0
    %452 = vmatprep.mubr.bf16.mxu0 0
    %453 = vmatmul.mubr.bf16.gmra.mxu0 %v99
    %v454 = vpop.f32.mrf.mxu0
    %v455 = vadd.f32 0.0, %v454
    %v456 = vpop.f32.mrf.mxu0
    %v457 = vpop.f32.mrf.mxu0
    %v458 = vadd.f32 0.0, %v457
    %v459 = vpop.f32.mrf.mxu0
    %460 = vmatprep.mubr.bf16.mxu0 0
    %461 = vmatmul.mubr.bf16.gmra.mxu0 %v102
    %v462 = vpop.f32.mrf.mxu0
    %v463 = vadd.f32 0.0, %v462
    %v464 = vpop.f32.mrf.mxu0
    %v465 = vpop.f32.mrf.mxu0
    %v466 = vadd.f32 0.0, %v465
    %v467 = vpop.f32.mrf.mxu0
    %468 = vmatprep.mubr.bf16.mxu0 0
    %469 = vmatmul.mubr.bf16.gmra.mxu0 %v105
    %v470 = vpop.f32.mrf.mxu0
    %v471 = vadd.f32 0.0, %v470
    %v472 = vpop.f32.mrf.mxu0
    %v473 = vpop.f32.mrf.mxu0
    %v474 = vadd.f32 0.0, %v473
    %v475 = vpop.f32.mrf.mxu0
    %476 = vmatprep.mubr.bf16.mxu0 0
    %477 = vmatmul.mubr.bf16.gmra.mxu0 %v108
    %v478 = vpop.f32.mrf.mxu0
    %v479 = vadd.f32 0.0, %v478
    %v480 = vpop.f32.mrf.mxu0
    %v481 = vpop.f32.mrf.mxu0
    %v482 = vadd.f32 0.0, %v481
    %v483 = vpop.f32.mrf.mxu0
    %484 = vdwg.mxu0
    %s485 = scalar_lea.vmem [#allocation2], 64
    %v486 = vld [vmem:[%s485] sm:$0xf]
    %v487 = vld [vmem:[%s485 + $0x4] sm:$0xf]
    %v488 = vld [vmem:[%s485 + $0x8] sm:$0xf]
    %v489 = vld [vmem:[%s485 + $0xc] sm:$0xf]
    %v494 = vunpack.c.l.b16 %v486
    %v495 = vunpack.c.l.b16 %v487
    %v496 = vunpack.c.l.b16 %v488
    %v497 = vunpack.c.l.b16 %v489
    %v498 = vpack.c.b16 %v495, %v494
    %v499 = vpack.c.b16 %v497, %v496
    %502 = vmatprep.subr.bf16.mxu0 0
    %503 = vmatpush1.bf16.msra.mxu0 0
    %504 = vmatprep.subr.bf16.mxu0 0
    %505 = vmatpush1.bf16.msra.mxu0 0
    %506 = vmatprep.subr.bf16.mxu0 0
    %507 = vmatpush1.bf16.msra.mxu0 0
    %508 = vmatprep.subr.bf16.mxu0 0
    %509 = vmatpush1.bf16.msra.mxu0 0
    %510 = vmatprep.subr.bf16.mxu0 0
    %511 = vmatpush1.bf16.msra.mxu0 0
    %512 = vmatprep.subr.bf16.mxu0 0
    %513 = vmatpush1.bf16.msra.mxu0 0
    %514 = vmatprep.subr.bf16.mxu0 0
    %515 = vmatpush1.bf16.msra.mxu0 %v499
    %516 = vmatprep.subr.bf16.mxu0 0
    %517 = vmatpush1.bf16.msra.mxu0 %v498
    %518 = vmatprep.subr.bf16.mxu0 0
    %519 = vmatpush2.bf16.msra.mxu0 0
    %520 = vmatprep.subr.bf16.mxu0 0
    %521 = vmatpush2.bf16.msra.mxu0 0
    %522 = vmatprep.subr.bf16.mxu0 0
    %523 = vmatpush2.bf16.msra.mxu0 0
    %524 = vmatprep.subr.bf16.mxu0 0
    %525 = vmatpush2.bf16.msra.mxu0 0
    %526 = vmatprep.subr.bf16.mxu0 0
    %527 = vmatpush2.bf16.msra.mxu0 0
    %528 = vmatprep.subr.bf16.mxu0 0
    %529 = vmatpush2.bf16.msra.mxu0 0
    %530 = vmatprep.subr.bf16.mxu0 0
    %531 = vmatpush2.bf16.msra.mxu0 0
    %532 = vmatprep.subr.bf16.mxu0 0
    %533 = vmatpush2.bf16.msra.mxu0 0
    %534 = vmatprep.mubr.bf16.mxu0 0
    %535 = vmatmul.mubr.bf16.gmra.mxu0 %v93
    %v536 = vpop.f32.mrf.mxu0
    %v537 = vadd.f32 0.0, %v536
    %v538 = vpop.f32.mrf.mxu0
    %v539 = vpop.f32.mrf.mxu0
    %v540 = vadd.f32 0.0, %v539
    %v541 = vpop.f32.mrf.mxu0
    %542 = vmatprep.mubr.bf16.mxu0 0
    %543 = vmatmul.mubr.bf16.gmra.mxu0 %v96
    %v544 = vpop.f32.mrf.mxu0
    %v545 = vadd.f32 0.0, %v544
    %v546 = vpop.f32.mrf.mxu0
    %v547 = vpop.f32.mrf.mxu0
    %v548 = vadd.f32 0.0, %v547
    %v549 = vpop.f32.mrf.mxu0
    %550 = vmatprep.mubr.bf16.mxu0 0
    %551 = vmatmul.mubr.bf16.gmra.mxu0 %v99
    %v552 = vpop.f32.mrf.mxu0
    %v553 = vadd.f32 0.0, %v552
    %v554 = vpop.f32.mrf.mxu0
    %v555 = vpop.f32.mrf.mxu0
    %v556 = vadd.f32 0.0, %v555
    %v557 = vpop.f32.mrf.mxu0
    %558 = vmatprep.mubr.bf16.mxu0 0
    %559 = vmatmul.mubr.bf16.gmra.mxu0 %v102
    %v560 = vpop.f32.mrf.mxu0
    %v561 = vadd.f32 0.0, %v560
    %v562 = vpop.f32.mrf.mxu0
    %v563 = vpop.f32.mrf.mxu0
    %v564 = vadd.f32 0.0, %v563
    %v565 = vpop.f32.mrf.mxu0
    %566 = vmatprep.mubr.bf16.mxu0 0
    %567 = vmatmul.mubr.bf16.gmra.mxu0 %v105
    %v568 = vpop.f32.mrf.mxu0
    %v569 = vadd.f32 0.0, %v568
    %v570 = vpop.f32.mrf.mxu0
    %v571 = vpop.f32.mrf.mxu0
    %v572 = vadd.f32 0.0, %v571
    %v573 = vpop.f32.mrf.mxu0
    %574 = vmatprep.mubr.bf16.mxu0 0
    %575 = vmatmul.mubr.bf16.gmra.mxu0 %v108
    %v576 = vpop.f32.mrf.mxu0
    %v577 = vadd.f32 0.0, %v576
    %v578 = vpop.f32.mrf.mxu0
    %v579 = vpop.f32.mrf.mxu0
    %v580 = vadd.f32 0.0, %v579
    %v581 = vpop.f32.mrf.mxu0
    %582 = vdwg.mxu0
    %s583 = scalar_lea.vmem [#allocation2], 80
    %v584 = vld [vmem:[%s583] sm:$0xf]
    %v585 = vld [vmem:[%s583 + $0x4] sm:$0xf]
    %v586 = vld [vmem:[%s583 + $0x8] sm:$0xf]
    %v587 = vld [vmem:[%s583 + $0xc] sm:$0xf]
    %v592 = vunpack.c.l.b16 %v584
    %v593 = vunpack.c.l.b16 %v585
    %v594 = vunpack.c.l.b16 %v586
    %v595 = vunpack.c.l.b16 %v587
    %v596 = vpack.c.b16 %v593, %v592
    %v597 = vpack.c.b16 %v595, %v594
    %600 = vmatprep.subr.bf16.mxu0 0
    %601 = vmatpush1.bf16.msra.mxu0 0
    %602 = vmatprep.subr.bf16.mxu0 0
    %603 = vmatpush1.bf16.msra.mxu0 0
    %604 = vmatprep.subr.bf16.mxu0 0
    %605 = vmatpush1.bf16.msra.mxu0 0
    %606 = vmatprep.subr.bf16.mxu0 0
    %607 = vmatpush1.bf16.msra.mxu0 0
    %608 = vmatprep.subr.bf16.mxu0 0
    %609 = vmatpush1.bf16.msra.mxu0 0
    %610 = vmatprep.subr.bf16.mxu0 0
    %611 = vmatpush1.bf16.msra.mxu0 0
    %612 = vmatprep.subr.bf16.mxu0 0
    %613 = vmatpush1.bf16.msra.mxu0 %v597
    %614 = vmatprep.subr.bf16.mxu0 0
    %615 = vmatpush1.bf16.msra.mxu0 %v596
    %616 = vmatprep.subr.bf16.mxu0 0
    %617 = vmatpush2.bf16.msra.mxu0 0
    %618 = vmatprep.subr.bf16.mxu0 0
    %619 = vmatpush2.bf16.msra.mxu0 0
    %620 = vmatprep.subr.bf16.mxu0 0
    %621 = vmatpush2.bf16.msra.mxu0 0
    %622 = vmatprep.subr.bf16.mxu0 0
    %623 = vmatpush2.bf16.msra.mxu0 0
    %624 = vmatprep.subr.bf16.mxu0 0
    %625 = vmatpush2.bf16.msra.mxu0 0
    %626 = vmatprep.subr.bf16.mxu0 0
    %627 = vmatpush2.bf16.msra.mxu0 0
    %628 = vmatprep.subr.bf16.mxu0 0
    %629 = vmatpush2.bf16.msra.mxu0 0
    %630 = vmatprep.subr.bf16.mxu0 0
    %631 = vmatpush2.bf16.msra.mxu0 0
    %632 = vmatprep.mubr.bf16.mxu0 0
    %633 = vmatmul.mubr.bf16.gmra.mxu0 %v93
    %v634 = vpop.f32.mrf.mxu0
    %v635 = vadd.f32 0.0, %v634
    %v636 = vpop.f32.mrf.mxu0
    %v637 = vpop.f32.mrf.mxu0
    %v638 = vadd.f32 0.0, %v637
    %v639 = vpop.f32.mrf.mxu0
    %640 = vmatprep.mubr.bf16.mxu0 0
    %641 = vmatmul.mubr.bf16.gmra.mxu0 %v96
    %v642 = vpop.f32.mrf.mxu0
    %v643 = vadd.f32 0.0, %v642
    %v644 = vpop.f32.mrf.mxu0
    %v645 = vpop.f32.mrf.mxu0
    %v646 = vadd.f32 0.0, %v645
    %v647 = vpop.f32.mrf.mxu0
    %648 = vmatprep.mubr.bf16.mxu0 0
    %649 = vmatmul.mubr.bf16.gmra.mxu0 %v99
    %v650 = vpop.f32.mrf.mxu0
    %v651 = vadd.f32 0.0, %v650
    %v652 = vpop.f32.mrf.mxu0
    %v653 = vpop.f32.mrf.mxu0
    %v654 = vadd.f32 0.0, %v653
    %v655 = vpop.f32.mrf.mxu0
    %656 = vmatprep.mubr.bf16.mxu0 0
    %657 = vmatmul.mubr.bf16.gmra.mxu0 %v102
    %v658 = vpop.f32.mrf.mxu0
    %v659 = vadd.f32 0.0, %v658
    %v660 = vpop.f32.mrf.mxu0
    %v661 = vpop.f32.mrf.mxu0
    %v662 = vadd.f32 0.0, %v661
    %v663 = vpop.f32.mrf.mxu0
    %664 = vmatprep.mubr.bf16.mxu0 0
    %665 = vmatmul.mubr.bf16.gmra.mxu0 %v105
    %v666 = vpop.f32.mrf.mxu0
    %v667 = vadd.f32 0.0, %v666
    %v668 = vpop.f32.mrf.mxu0
    %v669 = vpop.f32.mrf.mxu0
    %v670 = vadd.f32 0.0, %v669
    %v671 = vpop.f32.mrf.mxu0
    %672 = vmatprep.mubr.bf16.mxu0 0
    %673 = vmatmul.mubr.bf16.gmra.mxu0 %v108
    %v674 = vpop.f32.mrf.mxu0
    %v675 = vadd.f32 0.0, %v674
    %v676 = vpop.f32.mrf.mxu0
    %v677 = vpop.f32.mrf.mxu0
    %v678 = vadd.f32 0.0, %v677
    %v679 = vpop.f32.mrf.mxu0
    %680 = vdwg.mxu0
    %s681 = scalar_lea.vmem [#allocation2], 96
    %v682 = vld [vmem:[%s681] sm:$0xf]
    %v683 = vld [vmem:[%s681 + $0x4] sm:$0xf]
    %v684 = vld [vmem:[%s681 + $0x8] sm:$0xf]
    %v685 = vld [vmem:[%s681 + $0xc] sm:$0xf]
    %v690 = vunpack.c.l.b16 %v682
    %v691 = vunpack.c.l.b16 %v683
    %v692 = vunpack.c.l.b16 %v684
    %v693 = vunpack.c.l.b16 %v685
    %v694 = vpack.c.b16 %v691, %v690
    %v695 = vpack.c.b16 %v693, %v692
    %698 = vmatprep.subr.bf16.mxu0 0
    %699 = vmatpush1.bf16.msra.mxu0 0
    %700 = vmatprep.subr.bf16.mxu0 0
    %701 = vmatpush1.bf16.msra.mxu0 0
    %702 = vmatprep.subr.bf16.mxu0 0
    %703 = vmatpush1.bf16.msra.mxu0 0
    %704 = vmatprep.subr.bf16.mxu0 0
    %705 = vmatpush1.bf16.msra.mxu0 0
    %706 = vmatprep.subr.bf16.mxu0 0
    %707 = vmatpush1.bf16.msra.mxu0 0
    %708 = vmatprep.subr.bf16.mxu0 0
    %709 = vmatpush1.bf16.msra.mxu0 0
    %710 = vmatprep.subr.bf16.mxu0 0
    %711 = vmatpush1.bf16.msra.mxu0 %v695
    %712 = vmatprep.subr.bf16.mxu0 0
    %713 = vmatpush1.bf16.msra.mxu0 %v694
    %714 = vmatprep.subr.bf16.mxu0 0
    %715 = vmatpush2.bf16.msra.mxu0 0
    %716 = vmatprep.subr.bf16.mxu0 0
    %717 = vmatpush2.bf16.msra.mxu0 0
    %718 = vmatprep.subr.bf16.mxu0 0
    %719 = vmatpush2.bf16.msra.mxu0 0
    %720 = vmatprep.subr.bf16.mxu0 0
    %721 = vmatpush2.bf16.msra.mxu0 0
    %722 = vmatprep.subr.bf16.mxu0 0
    %723 = vmatpush2.bf16.msra.mxu0 0
    %724 = vmatprep.subr.bf16.mxu0 0
    %725 = vmatpush2.bf16.msra.mxu0 0
    %726 = vmatprep.subr.bf16.mxu0 0
    %727 = vmatpush2.bf16.msra.mxu0 0
    %728 = vmatprep.subr.bf16.mxu0 0
    %729 = vmatpush2.bf16.msra.mxu0 0
    %730 = vmatprep.mubr.bf16.mxu0 0
    %731 = vmatmul.mubr.bf16.gmra.mxu0 %v93
    %v732 = vpop.f32.mrf.mxu0
    %v733 = vadd.f32 0.0, %v732
    %v734 = vpop.f32.mrf.mxu0
    %v735 = vpop.f32.mrf.mxu0
    %v736 = vadd.f32 0.0, %v735
    %v737 = vpop.f32.mrf.mxu0
    %738 = vmatprep.mubr.bf16.mxu0 0
    %739 = vmatmul.mubr.bf16.gmra.mxu0 %v96
    %v740 = vpop.f32.mrf.mxu0
    %v741 = vadd.f32 0.0, %v740
    %v742 = vpop.f32.mrf.mxu0
    %v743 = vpop.f32.mrf.mxu0
    %v744 = vadd.f32 0.0, %v743
    %v745 = vpop.f32.mrf.mxu0
    %746 = vmatprep.mubr.bf16.mxu0 0
    %747 = vmatmul.mubr.bf16.gmra.mxu0 %v99
    %v748 = vpop.f32.mrf.mxu0
    %v749 = vadd.f32 0.0, %v748
    %v750 = vpop.f32.mrf.mxu0
    %v751 = vpop.f32.mrf.mxu0
    %v752 = vadd.f32 0.0, %v751
    %v753 = vpop.f32.mrf.mxu0
    %754 = vmatprep.mubr.bf16.mxu0 0
    %755 = vmatmul.mubr.bf16.gmra.mxu0 %v102
    %v756 = vpop.f32.mrf.mxu0
    %v757 = vadd.f32 0.0, %v756
    %v758 = vpop.f32.mrf.mxu0
    %v759 = vpop.f32.mrf.mxu0
    %v760 = vadd.f32 0.0, %v759
    %v761 = vpop.f32.mrf.mxu0
    %762 = vmatprep.mubr.bf16.mxu0 0
    %763 = vmatmul.mubr.bf16.gmra.mxu0 %v105
    %v764 = vpop.f32.mrf.mxu0
    %v765 = vadd.f32 0.0, %v764
    %v766 = vpop.f32.mrf.mxu0
    %v767 = vpop.f32.mrf.mxu0
    %v768 = vadd.f32 0.0, %v767
    %v769 = vpop.f32.mrf.mxu0
    %770 = vmatprep.mubr.bf16.mxu0 0
    %771 = vmatmul.mubr.bf16.gmra.mxu0 %v108
    %v772 = vpop.f32.mrf.mxu0
    %v773 = vadd.f32 0.0, %v772
    %v774 = vpop.f32.mrf.mxu0
    %v775 = vpop.f32.mrf.mxu0
    %v776 = vadd.f32 0.0, %v775
    %v777 = vpop.f32.mrf.mxu0
    %778 = vdwg.mxu0
    %s779 = scalar_lea.vmem [#allocation2], 112
    %v780 = vld [vmem:[%s779] sm:$0xf]
    %v781 = vld [vmem:[%s779 + $0x4] sm:$0xf]
    %v782 = vld [vmem:[%s779 + $0x8] sm:$0xf]
    %v783 = vld [vmem:[%s779 + $0xc] sm:$0xf]
    %v788 = vunpack.c.l.b16 %v780
    %v789 = vunpack.c.l.b16 %v781
    %v790 = vunpack.c.l.b16 %v782
    %v791 = vunpack.c.l.b16 %v783
    %v792 = vpack.c.b16 %v789, %v788
    %v793 = vpack.c.b16 %v791, %v790
    %796 = vmatprep.subr.bf16.mxu0 0
    %797 = vmatpush1.bf16.msra.mxu0 0
    %798 = vmatprep.subr.bf16.mxu0 0
    %799 = vmatpush1.bf16.msra.mxu0 0
    %800 = vmatprep.subr.bf16.mxu0 0
    %801 = vmatpush1.bf16.msra.mxu0 0
    %802 = vmatprep.subr.bf16.mxu0 0
    %803 = vmatpush1.bf16.msra.mxu0 0
    %804 = vmatprep.subr.bf16.mxu0 0
    %805 = vmatpush1.bf16.msra.mxu0 0
    %806 = vmatprep.subr.bf16.mxu0 0
    %807 = vmatpush1.bf16.msra.mxu0 0
    %808 = vmatprep.subr.bf16.mxu0 0
    %809 = vmatpush1.bf16.msra.mxu0 %v793
    %810 = vmatprep.subr.bf16.mxu0 0
    %811 = vmatpush1.bf16.msra.mxu0 %v792
    %812 = vmatprep.subr.bf16.mxu0 0
    %813 = vmatpush2.bf16.msra.mxu0 0
    %814 = vmatprep.subr.bf16.mxu0 0
    %815 = vmatpush2.bf16.msra.mxu0 0
    %816 = vmatprep.subr.bf16.mxu0 0
    %817 = vmatpush2.bf16.msra.mxu0 0
    %818 = vmatprep.subr.bf16.mxu0 0
    %819 = vmatpush2.bf16.msra.mxu0 0
    %820 = vmatprep.subr.bf16.mxu0 0
    %821 = vmatpush2.bf16.msra.mxu0 0
    %822 = vmatprep.subr.bf16.mxu0 0
    %823 = vmatpush2.bf16.msra.mxu0 0
    %824 = vmatprep.subr.bf16.mxu0 0
    %825 = vmatpush2.bf16.msra.mxu0 0
    %826 = vmatprep.subr.bf16.mxu0 0
    %827 = vmatpush2.bf16.msra.mxu0 0
    %828 = vmatprep.mubr.bf16.mxu0 0
    %829 = vmatmul.mubr.bf16.gmra.mxu0 %v93
    %v830 = vpop.f32.mrf.mxu0
    %v831 = vadd.f32 0.0, %v830
    %v832 = vpop.f32.mrf.mxu0
    %v833 = vpop.f32.mrf.mxu0
    %v834 = vadd.f32 0.0, %v833
    %v835 = vpop.f32.mrf.mxu0
    %836 = vmatprep.mubr.bf16.mxu0 0
    %837 = vmatmul.mubr.bf16.gmra.mxu0 %v96
    %v838 = vpop.f32.mrf.mxu0
    %v839 = vadd.f32 0.0, %v838
    %v840 = vpop.f32.mrf.mxu0
    %v841 = vpop.f32.mrf.mxu0
    %v842 = vadd.f32 0.0, %v841
    %v843 = vpop.f32.mrf.mxu0
    %844 = vmatprep.mubr.bf16.mxu0 0
    %845 = vmatmul.mubr.bf16.gmra.mxu0 %v99
    %v846 = vpop.f32.mrf.mxu0
    %v847 = vadd.f32 0.0, %v846
    %v848 = vpop.f32.mrf.mxu0
    %v849 = vpop.f32.mrf.mxu0
    %v850 = vadd.f32 0.0, %v849
    %v851 = vpop.f32.mrf.mxu0
    %852 = vmatprep.mubr.bf16.mxu0 0
    %853 = vmatmul.mubr.bf16.gmra.mxu0 %v102
    %v854 = vpop.f32.mrf.mxu0
    %v855 = vadd.f32 0.0, %v854
    %v856 = vpop.f32.mrf.mxu0
    %v857 = vpop.f32.mrf.mxu0
    %v858 = vadd.f32 0.0, %v857
    %v859 = vpop.f32.mrf.mxu0
    %860 = vmatprep.mubr.bf16.mxu0 0
    %861 = vmatmul.mubr.bf16.gmra.mxu0 %v105
    %v862 = vpop.f32.mrf.mxu0
    %v863 = vadd.f32 0.0, %v862
    %v864 = vpop.f32.mrf.mxu0
    %v865 = vpop.f32.mrf.mxu0
    %v866 = vadd.f32 0.0, %v865
    %v867 = vpop.f32.mrf.mxu0
    %868 = vmatprep.mubr.bf16.mxu0 0
    %869 = vmatmul.mubr.bf16.gmra.mxu0 %v108
    %v870 = vpop.f32.mrf.mxu0
    %v871 = vadd.f32 0.0, %v870
    %v872 = vpop.f32.mrf.mxu0
    %v873 = vpop.f32.mrf.mxu0
    %v874 = vadd.f32 0.0, %v873
    %v875 = vpop.f32.mrf.mxu0
    %876 = vdwg.mxu0
    %v877 = vlaneseq
    %v878 = vshrl.u32 %v877, 7
    %vm879 = vcmp.le.s32.totalorder %v878, 0
    %vm880 = vcmp.le.s32.totalorder %v878, 1
    %vm881 = vcmp.le.s32.totalorder %v878, 2
    %vm882 = vcmp.le.s32.totalorder %v878, 3
    %vm883 = vcmp.le.s32.totalorder %v878, 4
    %vm884 = vcmp.le.s32.totalorder %v878, 5
    %vm885 = vcmp.le.s32.totalorder %v878, 6
    %vm886 = vcmp.le.s32.totalorder %v878, 7
    %v887 = vmul.f32 %v145, %v161
    %v888 = vmul.f32 %v145, %v259
    %v889 = vmul.f32 %v145, %v357
    %v890 = vmul.f32 %v145, %v455
    %v891 = vmul.f32 %v145, %v553
    %v892 = vmul.f32 %v145, %v651
    %v893 = vmul.f32 %v145, %v749
    %v894 = vmul.f32 %v145, %v847
    %v895 = vmul.f32 %v243, %v161
    %v896 = vmul.f32 %v243, %v259
    %v897 = vmul.f32 %v243, %v357
    %v898 = vmul.f32 %v243, %v455
    %v899 = vmul.f32 %v243, %v553
    %v900 = vmul.f32 %v243, %v651
    %v901 = vmul.f32 %v243, %v749
    %v902 = vmul.f32 %v243, %v847
    %v903 = vmul.f32 %v341, %v161
    %v904 = vmul.f32 %v341, %v259
    %v905 = vmul.f32 %v341, %v357
    %v906 = vmul.f32 %v341, %v455
    %v907 = vmul.f32 %v341, %v553
    %v908 = vmul.f32 %v341, %v651
    %v909 = vmul.f32 %v341, %v749
    %v910 = vmul.f32 %v341, %v847
    %v911 = vmul.f32 %v439, %v161
    %v912 = vmul.f32 %v439, %v259
    %v913 = vmul.f32 %v439, %v357
    %v914 = vmul.f32 %v439, %v455
    %v915 = vmul.f32 %v439, %v553
    %v916 = vmul.f32 %v439, %v651
    %v917 = vmul.f32 %v439, %v749
    %v918 = vmul.f32 %v439, %v847
    %v919 = vmul.f32 %v537, %v161
    %v920 = vmul.f32 %v537, %v259
    %v921 = vmul.f32 %v537, %v357
    %v922 = vmul.f32 %v537, %v455
    %v923 = vmul.f32 %v537, %v553
    %v924 = vmul.f32 %v537, %v651
    %v925 = vmul.f32 %v537, %v749
    %v926 = vmul.f32 %v537, %v847
    %v927 = vmul.f32 %v635, %v161
    %v928 = vmul.f32 %v635, %v259
    %v929 = vmul.f32 %v635, %v357
    %v930 = vmul.f32 %v635, %v455
    %v931 = vmul.f32 %v635, %v553
    %v932 = vmul.f32 %v635, %v651
    %v933 = vmul.f32 %v635, %v749
    %v934 = vmul.f32 %v635, %v847
    %v935 = vmul.f32 %v733, %v161
    %v936 = vmul.f32 %v733, %v259
    %v937 = vmul.f32 %v733, %v357
    %v938 = vmul.f32 %v733, %v455
    %v939 = vmul.f32 %v733, %v553
    %v940 = vmul.f32 %v733, %v651
    %v941 = vmul.f32 %v733, %v749
    %v942 = vmul.f32 %v733, %v847
    %v943 = vmul.f32 %v831, %v161
    %v944 = vmul.f32 %v831, %v259
    %v945 = vmul.f32 %v831, %v357
    %v946 = vmul.f32 %v831, %v455
    %v947 = vmul.f32 %v831, %v553
    %v948 = vmul.f32 %v831, %v651
    %v949 = vmul.f32 %v831, %v749
    %v950 = vmul.f32 %v831, %v847
    %v951 = vrot.slane %v887, 4
    %v952 = vadd.f32 %v887, %v951
    %v953 = vrot.slane %v952, 2
    %v954 = vadd.f32 %v952, %v953
    %v955 = vrot.slane %v954, 1
    %v956 = vadd.f32 %v954, %v955
    %v957 = vrot.slane %v888, 4
    %v958 = vadd.f32 %v888, %v957
    %v959 = vrot.slane %v958, 2
    %v960 = vadd.f32 %v958, %v959
    %v961 = vrot.slane %v960, 1
    %v962 = vadd.f32 %v960, %v961
    %v963 = vrot.slane %v889, 4
    %v964 = vadd.f32 %v889, %v963
    %v965 = vrot.slane %v964, 2
    %v966 = vadd.f32 %v964, %v965
    %v967 = vrot.slane %v966, 1
    %v968 = vadd.f32 %v966, %v967
    %v969 = vrot.slane %v890, 4
    %v970 = vadd.f32 %v890, %v969
    %v971 = vrot.slane %v970, 2
    %v972 = vadd.f32 %v970, %v971
    %v973 = vrot.slane %v972, 1
    %v974 = vadd.f32 %v972, %v973
    %v975 = vrot.slane %v891, 4
    %v976 = vadd.f32 %v891, %v975
    %v977 = vrot.slane %v976, 2
    %v978 = vadd.f32 %v976, %v977
    %v979 = vrot.slane %v978, 1
    %v980 = vadd.f32 %v978, %v979
    %v981 = vrot.slane %v892, 4
    %v982 = vadd.f32 %v892, %v981
    %v983 = vrot.slane %v982, 2
    %v984 = vadd.f32 %v982, %v983
    %v985 = vrot.slane %v984, 1
    %v986 = vadd.f32 %v984, %v985
    %v987 = vrot.slane %v893, 4
    %v988 = vadd.f32 %v893, %v987
    %v989 = vrot.slane %v988, 2
    %v990 = vadd.f32 %v988, %v989
    %v991 = vrot.slane %v990, 1
    %v992 = vadd.f32 %v990, %v991
    %v993 = vrot.slane %v894, 4
    %v994 = vadd.f32 %v894, %v993
    %v995 = vrot.slane %v994, 2
    %v996 = vadd.f32 %v994, %v995
    %v997 = vrot.slane %v996, 1
    %v998 = vadd.f32 %v996, %v997
    %v999 = vrot.slane %v895, 4
    %v1000 = vadd.f32 %v895, %v999
    %v1001 = vrot.slane %v1000, 2
    %v1002 = vadd.f32 %v1000, %v1001
    %v1003 = vrot.slane %v1002, 1
    %v1004 = vadd.f32 %v1002, %v1003
    %v1005 = vrot.slane %v896, 4
    %v1006 = vadd.f32 %v896, %v1005
    %v1007 = vrot.slane %v1006, 2
    %v1008 = vadd.f32 %v1006, %v1007
    %v1009 = vrot.slane %v1008, 1
    %v1010 = vadd.f32 %v1008, %v1009
    %v1011 = vrot.slane %v897, 4
    %v1012 = vadd.f32 %v897, %v1011
    %v1013 = vrot.slane %v1012, 2
    %v1014 = vadd.f32 %v1012, %v1013
    %v1015 = vrot.slane %v1014, 1
    %v1016 = vadd.f32 %v1014, %v1015
    %v1017 = vrot.slane %v898, 4
    %v1018 = vadd.f32 %v898, %v1017
    %v1019 = vrot.slane %v1018, 2
    %v1020 = vadd.f32 %v1018, %v1019
    %v1021 = vrot.slane %v1020, 1
    %v1022 = vadd.f32 %v1020, %v1021
    %v1023 = vrot.slane %v899, 4
    %v1024 = vadd.f32 %v899, %v1023
    %v1025 = vrot.slane %v1024, 2
    %v1026 = vadd.f32 %v1024, %v1025
    %v1027 = vrot.slane %v1026, 1
    %v1028 = vadd.f32 %v1026, %v1027
    %v1029 = vrot.slane %v900, 4
    %v1030 = vadd.f32 %v900, %v1029
    %v1031 = vrot.slane %v1030, 2
    %v1032 = vadd.f32 %v1030, %v1031
    %v1033 = vrot.slane %v1032, 1
    %v1034 = vadd.f32 %v1032, %v1033
    %v1035 = vrot.slane %v901, 4
    %v1036 = vadd.f32 %v901, %v1035
    %v1037 = vrot.slane %v1036, 2
    %v1038 = vadd.f32 %v1036, %v1037
    %v1039 = vrot.slane %v1038, 1
    %v1040 = vadd.f32 %v1038, %v1039
    %v1041 = vrot.slane %v902, 4
    %v1042 = vadd.f32 %v902, %v1041
    %v1043 = vrot.slane %v1042, 2
    %v1044 = vadd.f32 %v1042, %v1043
    %v1045 = vrot.slane %v1044, 1
    %v1046 = vadd.f32 %v1044, %v1045
    %v1047 = vrot.slane %v903, 4
    %v1048 = vadd.f32 %v903, %v1047
    %v1049 = vrot.slane %v1048, 2
    %v1050 = vadd.f32 %v1048, %v1049
    %v1051 = vrot.slane %v1050, 1
    %v1052 = vadd.f32 %v1050, %v1051
    %v1053 = vrot.slane %v904, 4
    %v1054 = vadd.f32 %v904, %v1053
    %v1055 = vrot.slane %v1054, 2
    %v1056 = vadd.f32 %v1054, %v1055
    %v1057 = vrot.slane %v1056, 1
    %v1058 = vadd.f32 %v1056, %v1057
    %v1059 = vrot.slane %v905, 4
    %v1060 = vadd.f32 %v905, %v1059
    %v1061 = vrot.slane %v1060, 2
    %v1062 = vadd.f32 %v1060, %v1061
    %v1063 = vrot.slane %v1062, 1
    %v1064 = vadd.f32 %v1062, %v1063
    %v1065 = vrot.slane %v906, 4
    %v1066 = vadd.f32 %v906, %v1065
    %v1067 = vrot.slane %v1066, 2
    %v1068 = vadd.f32 %v1066, %v1067
    %v1069 = vrot.slane %v1068, 1
    %v1070 = vadd.f32 %v1068, %v1069
    %v1071 = vrot.slane %v907, 4
    %v1072 = vadd.f32 %v907, %v1071
    %v1073 = vrot.slane %v1072, 2
    %v1074 = vadd.f32 %v1072, %v1073
    %v1075 = vrot.slane %v1074, 1
    %v1076 = vadd.f32 %v1074, %v1075
    %v1077 = vrot.slane %v908, 4
    %v1078 = vadd.f32 %v908, %v1077
    %v1079 = vrot.slane %v1078, 2
    %v1080 = vadd.f32 %v1078, %v1079
    %v1081 = vrot.slane %v1080, 1
    %v1082 = vadd.f32 %v1080, %v1081
    %v1083 = vrot.slane %v909, 4
    %v1084 = vadd.f32 %v909, %v1083
    %v1085 = vrot.slane %v1084, 2
    %v1086 = vadd.f32 %v1084, %v1085
    %v1087 = vrot.slane %v1086, 1
    %v1088 = vadd.f32 %v1086, %v1087
    %v1089 = vrot.slane %v910, 4
    %v1090 = vadd.f32 %v910, %v1089
    %v1091 = vrot.slane %v1090, 2
    %v1092 = vadd.f32 %v1090, %v1091
    %v1093 = vrot.slane %v1092, 1
    %v1094 = vadd.f32 %v1092, %v1093
    %v1095 = vrot.slane %v911, 4
    %v1096 = vadd.f32 %v911, %v1095
    %v1097 = vrot.slane %v1096, 2
    %v1098 = vadd.f32 %v1096, %v1097
    %v1099 = vrot.slane %v1098, 1
    %v1100 = vadd.f32 %v1098, %v1099
    %v1101 = vrot.slane %v912, 4
    %v1102 = vadd.f32 %v912, %v1101
    %v1103 = vrot.slane %v1102, 2
    %v1104 = vadd.f32 %v1102, %v1103
    %v1105 = vrot.slane %v1104, 1
    %v1106 = vadd.f32 %v1104, %v1105
    %v1107 = vrot.slane %v913, 4
    %v1108 = vadd.f32 %v913, %v1107
    %v1109 = vrot.slane %v1108, 2
    %v1110 = vadd.f32 %v1108, %v1109
    %v1111 = vrot.slane %v1110, 1
    %v1112 = vadd.f32 %v1110, %v1111
    %v1113 = vrot.slane %v914, 4
    %v1114 = vadd.f32 %v914, %v1113
    %v1115 = vrot.slane %v1114, 2
    %v1116 = vadd.f32 %v1114, %v1115
    %v1117 = vrot.slane %v1116, 1
    %v1118 = vadd.f32 %v1116, %v1117
    %v1119 = vrot.slane %v915, 4
    %v1120 = vadd.f32 %v915, %v1119
    %v1121 = vrot.slane %v1120, 2
    %v1122 = vadd.f32 %v1120, %v1121
    %v1123 = vrot.slane %v1122, 1
    %v1124 = vadd.f32 %v1122, %v1123
    %v1125 = vrot.slane %v916, 4
    %v1126 = vadd.f32 %v916, %v1125
    %v1127 = vrot.slane %v1126, 2
    %v1128 = vadd.f32 %v1126, %v1127
    %v1129 = vrot.slane %v1128, 1
    %v1130 = vadd.f32 %v1128, %v1129
    %v1131 = vrot.slane %v917, 4
    %v1132 = vadd.f32 %v917, %v1131
    %v1133 = vrot.slane %v1132, 2
    %v1134 = vadd.f32 %v1132, %v1133
    %v1135 = vrot.slane %v1134, 1
    %v1136 = vadd.f32 %v1134, %v1135
    %v1137 = vrot.slane %v918, 4
    %v1138 = vadd.f32 %v918, %v1137
    %v1139 = vrot.slane %v1138, 2
    %v1140 = vadd.f32 %v1138, %v1139
    %v1141 = vrot.slane %v1140, 1
    %v1142 = vadd.f32 %v1140, %v1141
    %v1143 = vrot.slane %v919, 4
    %v1144 = vadd.f32 %v919, %v1143
    %v1145 = vrot.slane %v1144, 2
    %v1146 = vadd.f32 %v1144, %v1145
    %v1147 = vrot.slane %v1146, 1
    %v1148 = vadd.f32 %v1146, %v1147
    %v1149 = vrot.slane %v920, 4
    %v1150 = vadd.f32 %v920, %v1149
    %v1151 = vrot.slane %v1150, 2
    %v1152 = vadd.f32 %v1150, %v1151
    %v1153 = vrot.slane %v1152, 1
    %v1154 = vadd.f32 %v1152, %v1153
    %v1155 = vrot.slane %v921, 4
    %v1156 = vadd.f32 %v921, %v1155
    %v1157 = vrot.slane %v1156, 2
    %v1158 = vadd.f32 %v1156, %v1157
    %v1159 = vrot.slane %v1158, 1
    %v1160 = vadd.f32 %v1158, %v1159
    %v1161 = vrot.slane %v922, 4
    %v1162 = vadd.f32 %v922, %v1161
    %v1163 = vrot.slane %v1162, 2
    %v1164 = vadd.f32 %v1162, %v1163
    %v1165 = vrot.slane %v1164, 1
    %v1166 = vadd.f32 %v1164, %v1165
    %v1167 = vrot.slane %v923, 4
    %v1168 = vadd.f32 %v923, %v1167
    %v1169 = vrot.slane %v1168, 2
    %v1170 = vadd.f32 %v1168, %v1169
    %v1171 = vrot.slane %v1170, 1
    %v1172 = vadd.f32 %v1170, %v1171
    %v1173 = vrot.slane %v924, 4
    %v1174 = vadd.f32 %v924, %v1173
    %v1175 = vrot.slane %v1174, 2
    %v1176 = vadd.f32 %v1174, %v1175
    %v1177 = vrot.slane %v1176, 1
    %v1178 = vadd.f32 %v1176, %v1177
    %v1179 = vrot.slane %v925, 4
    %v1180 = vadd.f32 %v925, %v1179
    %v1181 = vrot.slane %v1180, 2
    %v1182 = vadd.f32 %v1180, %v1181
    %v1183 = vrot.slane %v1182, 1
    %v1184 = vadd.f32 %v1182, %v1183
    %v1185 = vrot.slane %v926, 4
    %v1186 = vadd.f32 %v926, %v1185
    %v1187 = vrot.slane %v1186, 2
    %v1188 = vadd.f32 %v1186, %v1187
    %v1189 = vrot.slane %v1188, 1
    %v1190 = vadd.f32 %v1188, %v1189
    %v1191 = vrot.slane %v927, 4
    %v1192 = vadd.f32 %v927, %v1191
    %v1193 = vrot.slane %v1192, 2
    %v1194 = vadd.f32 %v1192, %v1193
    %v1195 = vrot.slane %v1194, 1
    %v1196 = vadd.f32 %v1194, %v1195
    %v1197 = vrot.slane %v928, 4
    %v1198 = vadd.f32 %v928, %v1197
    %v1199 = vrot.slane %v1198, 2
    %v1200 = vadd.f32 %v1198, %v1199
    %v1201 = vrot.slane %v1200, 1
    %v1202 = vadd.f32 %v1200, %v1201
    %v1203 = vrot.slane %v929, 4
    %v1204 = vadd.f32 %v929, %v1203
    %v1205 = vrot.slane %v1204, 2
    %v1206 = vadd.f32 %v1204, %v1205
    %v1207 = vrot.slane %v1206, 1
    %v1208 = vadd.f32 %v1206, %v1207
    %v1209 = vrot.slane %v930, 4
    %v1210 = vadd.f32 %v930, %v1209
    %v1211 = vrot.slane %v1210, 2
    %v1212 = vadd.f32 %v1210, %v1211
    %v1213 = vrot.slane %v1212, 1
    %v1214 = vadd.f32 %v1212, %v1213
    %v1215 = vrot.slane %v931, 4
    %v1216 = vadd.f32 %v931, %v1215
    %v1217 = vrot.slane %v1216, 2
    %v1218 = vadd.f32 %v1216, %v1217
    %v1219 = vrot.slane %v1218, 1
    %v1220 = vadd.f32 %v1218, %v1219
    %v1221 = vrot.slane %v932, 4
    %v1222 = vadd.f32 %v932, %v1221
    %v1223 = vrot.slane %v1222, 2
    %v1224 = vadd.f32 %v1222, %v1223
    %v1225 = vrot.slane %v1224, 1
    %v1226 = vadd.f32 %v1224, %v1225
    %v1227 = vrot.slane %v933, 4
    %v1228 = vadd.f32 %v933, %v1227
    %v1229 = vrot.slane %v1228, 2
    %v1230 = vadd.f32 %v1228, %v1229
    %v1231 = vrot.slane %v1230, 1
    %v1232 = vadd.f32 %v1230, %v1231
    %v1233 = vrot.slane %v934, 4
    %v1234 = vadd.f32 %v934, %v1233
    %v1235 = vrot.slane %v1234, 2
    %v1236 = vadd.f32 %v1234, %v1235
    %v1237 = vrot.slane %v1236, 1
    %v1238 = vadd.f32 %v1236, %v1237
    %v1239 = vrot.slane %v935, 4
    %v1240 = vadd.f32 %v935, %v1239
    %v1241 = vrot.slane %v1240, 2
    %v1242 = vadd.f32 %v1240, %v1241
    %v1243 = vrot.slane %v1242, 1
    %v1244 = vadd.f32 %v1242, %v1243
    %v1245 = vrot.slane %v936, 4
    %v1246 = vadd.f32 %v936, %v1245
    %v1247 = vrot.slane %v1246, 2
    %v1248 = vadd.f32 %v1246, %v1247
    %v1249 = vrot.slane %v1248, 1
    %v1250 = vadd.f32 %v1248, %v1249
    %v1251 = vrot.slane %v937, 4
    %v1252 = vadd.f32 %v937, %v1251
    %v1253 = vrot.slane %v1252, 2
    %v1254 = vadd.f32 %v1252, %v1253
    %v1255 = vrot.slane %v1254, 1
    %v1256 = vadd.f32 %v1254, %v1255
    %v1257 = vrot.slane %v938, 4
    %v1258 = vadd.f32 %v938, %v1257
    %v1259 = vrot.slane %v1258, 2
    %v1260 = vadd.f32 %v1258, %v1259
    %v1261 = vrot.slane %v1260, 1
    %v1262 = vadd.f32 %v1260, %v1261
    %v1263 = vrot.slane %v939, 4
    %v1264 = vadd.f32 %v939, %v1263
    %v1265 = vrot.slane %v1264, 2
    %v1266 = vadd.f32 %v1264, %v1265
    %v1267 = vrot.slane %v1266, 1
    %v1268 = vadd.f32 %v1266, %v1267
    %v1269 = vrot.slane %v940, 4
    %v1270 = vadd.f32 %v940, %v1269
    %v1271 = vrot.slane %v1270, 2
    %v1272 = vadd.f32 %v1270, %v1271
    %v1273 = vrot.slane %v1272, 1
    %v1274 = vadd.f32 %v1272, %v1273
    %v1275 = vrot.slane %v941, 4
    %v1276 = vadd.f32 %v941, %v1275
    %v1277 = vrot.slane %v1276, 2
    %v1278 = vadd.f32 %v1276, %v1277
    %v1279 = vrot.slane %v1278, 1
    %v1280 = vadd.f32 %v1278, %v1279
    %v1281 = vrot.slane %v942, 4
    %v1282 = vadd.f32 %v942, %v1281
    %v1283 = vrot.slane %v1282, 2
    %v1284 = vadd.f32 %v1282, %v1283
    %v1285 = vrot.slane %v1284, 1
    %v1286 = vadd.f32 %v1284, %v1285
    %v1287 = vrot.slane %v943, 4
    %v1288 = vadd.f32 %v943, %v1287
    %v1289 = vrot.slane %v1288, 2
    %v1290 = vadd.f32 %v1288, %v1289
    %v1291 = vrot.slane %v1290, 1
    %v1292 = vadd.f32 %v1290, %v1291
    %v1293 = vrot.slane %v944, 4
    %v1294 = vadd.f32 %v944, %v1293
    %v1295 = vrot.slane %v1294, 2
    %v1296 = vadd.f32 %v1294, %v1295
    %v1297 = vrot.slane %v1296, 1
    %v1298 = vadd.f32 %v1296, %v1297
    %v1299 = vrot.slane %v945, 4
    %v1300 = vadd.f32 %v945, %v1299
    %v1301 = vrot.slane %v1300, 2
    %v1302 = vadd.f32 %v1300, %v1301
    %v1303 = vrot.slane %v1302, 1
    %v1304 = vadd.f32 %v1302, %v1303
    %v1305 = vrot.slane %v946, 4
    %v1306 = vadd.f32 %v946, %v1305
    %v1307 = vrot.slane %v1306, 2
    %v1308 = vadd.f32 %v1306, %v1307
    %v1309 = vrot.slane %v1308, 1
    %v1310 = vadd.f32 %v1308, %v1309
    %v1311 = vrot.slane %v947, 4
    %v1312 = vadd.f32 %v947, %v1311
    %v1313 = vrot.slane %v1312, 2
    %v1314 = vadd.f32 %v1312, %v1313
    %v1315 = vrot.slane %v1314, 1
    %v1316 = vadd.f32 %v1314, %v1315
    %v1317 = vrot.slane %v948, 4
    %v1318 = vadd.f32 %v948, %v1317
    %v1319 = vrot.slane %v1318, 2
    %v1320 = vadd.f32 %v1318, %v1319
    %v1321 = vrot.slane %v1320, 1
    %v1322 = vadd.f32 %v1320, %v1321
    %v1323 = vrot.slane %v949, 4
    %v1324 = vadd.f32 %v949, %v1323
    %v1325 = vrot.slane %v1324, 2
    %v1326 = vadd.f32 %v1324, %v1325
    %v1327 = vrot.slane %v1326, 1
    %v1328 = vadd.f32 %v1326, %v1327
    %v1329 = vrot.slane %v950, 4
    %v1330 = vadd.f32 %v950, %v1329
    %v1331 = vrot.slane %v1330, 2
    %v1332 = vadd.f32 %v1330, %v1331
    %v1333 = vrot.slane %v1332, 1
    %v1334 = vadd.f32 %v1332, %v1333
    %v1335 = vsel %vm879, 1, 0
    %v1336 = vsel %vm880, 1, 0
    %v1337 = vsel %vm881, 1, 0
    %v1338 = vsel %vm882, 1, 0
    %v1339 = vsel %vm883, 1, 0
    %v1340 = vsel %vm884, 1, 0
    %v1341 = vsel %vm885, 1, 0
    %v1342 = vsel %vm886, 1, 0
    %vm1343 = vcmp.eq.s32.totalorder %v1335, 1
    %vm1344 = vcmp.eq.s32.totalorder %v1336, 1
    %vm1345 = vcmp.eq.s32.totalorder %v1337, 1
    %vm1346 = vcmp.eq.s32.totalorder %v1338, 1
    %vm1347 = vcmp.eq.s32.totalorder %v1339, 1
    %vm1348 = vcmp.eq.s32.totalorder %v1340, 1
    %vm1349 = vcmp.eq.s32.totalorder %v1341, 1
    %vm1350 = vcmp.eq.s32.totalorder %v1342, 1
    %vm1415 = vcmask 1041409
    %v1416 = vsel %vm1415, %v962, %v956
    %vm1417 = vcmask 1042434
    %v1418 = vsel %vm1417, %v968, %v1416
    %vm1419 = vcmask 1043459
    %v1420 = vsel %vm1419, %v974, %v1418
    %vm1421 = vcmask 1044484
    %v1422 = vsel %vm1421, %v980, %v1420
    %vm1423 = vcmask 1045509
    %v1424 = vsel %vm1423, %v986, %v1422
    %vm1425 = vcmask 1046534
    %v1426 = vsel %vm1425, %v992, %v1424
    %vm1427 = vcmask 1047559
    %v1428 = vsel %vm1427, %v998, %v1426
    %v1429 = vsel %vm1415, %v1010, %v1004
    %v1430 = vsel %vm1417, %v1016, %v1429
    %v1431 = vsel %vm1419, %v1022, %v1430
    %v1432 = vsel %vm1421, %v1028, %v1431
    %v1433 = vsel %vm1423, %v1034, %v1432
    %v1434 = vsel %vm1425, %v1040, %v1433
    %v1435 = vsel %vm1427, %v1046, %v1434
    %v1436 = vsel %vm1415, %v1058, %v1052
    %v1437 = vsel %vm1417, %v1064, %v1436
    %v1438 = vsel %vm1419, %v1070, %v1437
    %v1439 = vsel %vm1421, %v1076, %v1438
    %v1440 = vsel %vm1423, %v1082, %v1439
    %v1441 = vsel %vm1425, %v1088, %v1440
    %v1442 = vsel %vm1427, %v1094, %v1441
    %v1443 = vsel %vm1415, %v1106, %v1100
    %v1444 = vsel %vm1417, %v1112, %v1443
    %v1445 = vsel %vm1419, %v1118, %v1444
    %v1446 = vsel %vm1421, %v1124, %v1445
    %v1447 = vsel %vm1423, %v1130, %v1446
    %v1448 = vsel %vm1425, %v1136, %v1447
    %v1449 = vsel %vm1427, %v1142, %v1448
    %v1450 = vsel %vm1415, %v1154, %v1148
    %v1451 = vsel %vm1417, %v1160, %v1450
    %v1452 = vsel %vm1419, %v1166, %v1451
    %v1453 = vsel %vm1421, %v1172, %v1452
    %v1454 = vsel %vm1423, %v1178, %v1453
    %v1455 = vsel %vm1425, %v1184, %v1454
    %v1456 = vsel %vm1427, %v1190, %v1455
    %v1457 = vsel %vm1415, %v1202, %v1196
    %v1458 = vsel %vm1417, %v1208, %v1457
    %v1459 = vsel %vm1419, %v1214, %v1458
    %v1460 = vsel %vm1421, %v1220, %v1459
    %v1461 = vsel %vm1423, %v1226, %v1460
    %v1462 = vsel %vm1425, %v1232, %v1461
    %v1463 = vsel %vm1427, %v1238, %v1462
    %v1464 = vsel %vm1415, %v1250, %v1244
    %v1465 = vsel %vm1417, %v1256, %v1464
    %v1466 = vsel %vm1419, %v1262, %v1465
    %v1467 = vsel %vm1421, %v1268, %v1466
    %v1468 = vsel %vm1423, %v1274, %v1467
    %v1469 = vsel %vm1425, %v1280, %v1468
    %v1470 = vsel %vm1427, %v1286, %v1469
    %v1471 = vsel %vm1415, %v1298, %v1292
    %v1472 = vsel %vm1417, %v1304, %v1471
    %v1473 = vsel %vm1419, %v1310, %v1472
    %v1474 = vsel %vm1421, %v1316, %v1473
    %v1475 = vsel %vm1423, %v1322, %v1474
    %v1476 = vsel %vm1425, %v1328, %v1475
    %v1477 = vsel %vm1427, %v1334, %v1476
    %v1486 = vsel %vm1343, %v1428, -1e+30
    %v1487 = vsel %vm1344, %v1435, -1e+30
    %v1488 = vsel %vm1345, %v1442, -1e+30
    %v1489 = vsel %vm1346, %v1449, -1e+30
    %v1490 = vsel %vm1347, %v1456, -1e+30
    %v1491 = vsel %vm1348, %v1463, -1e+30
    %v1492 = vsel %vm1349, %v1470, -1e+30
    %v1493 = vsel %vm1350, %v1477, -1e+30
    %v1494 = vrot.slane %v1486, 4
    %v1495 = vmax.f32 %v1486, %v1494
    %v1496 = vrot.slane %v1495, 2
    %v1497 = vmax.f32 %v1495, %v1496
    %v1498 = vrot.slane %v1497, 1
    %v1499 = vmax.f32 %v1497, %v1498
    %v1500 = vrot.slane %v1487, 4
    %v1501 = vmax.f32 %v1487, %v1500
    %v1502 = vrot.slane %v1501, 2
    %v1503 = vmax.f32 %v1501, %v1502
    %v1504 = vrot.slane %v1503, 1
    %v1505 = vmax.f32 %v1503, %v1504
    %v1506 = vrot.slane %v1488, 4
    %v1507 = vmax.f32 %v1488, %v1506
    %v1508 = vrot.slane %v1507, 2
    %v1509 = vmax.f32 %v1507, %v1508
    %v1510 = vrot.slane %v1509, 1
    %v1511 = vmax.f32 %v1509, %v1510
    %v1512 = vrot.slane %v1489, 4
    %v1513 = vmax.f32 %v1489, %v1512
    %v1514 = vrot.slane %v1513, 2
    %v1515 = vmax.f32 %v1513, %v1514
    %v1516 = vrot.slane %v1515, 1
    %v1517 = vmax.f32 %v1515, %v1516
    %v1518 = vrot.slane %v1490, 4
    %v1519 = vmax.f32 %v1490, %v1518
    %v1520 = vrot.slane %v1519, 2
    %v1521 = vmax.f32 %v1519, %v1520
    %v1522 = vrot.slane %v1521, 1
    %v1523 = vmax.f32 %v1521, %v1522
    %v1524 = vrot.slane %v1491, 4
    %v1525 = vmax.f32 %v1491, %v1524
    %v1526 = vrot.slane %v1525, 2
    %v1527 = vmax.f32 %v1525, %v1526
    %v1528 = vrot.slane %v1527, 1
    %v1529 = vmax.f32 %v1527, %v1528
    %v1530 = vrot.slane %v1492, 4
    %v1531 = vmax.f32 %v1492, %v1530
    %v1532 = vrot.slane %v1531, 2
    %v1533 = vmax.f32 %v1531, %v1532
    %v1534 = vrot.slane %v1533, 1
    %v1535 = vmax.f32 %v1533, %v1534
    %v1536 = vrot.slane %v1493, 4
    %v1537 = vmax.f32 %v1493, %v1536
    %v1538 = vrot.slane %v1537, 2
    %v1539 = vmax.f32 %v1537, %v1538
    %v1540 = vrot.slane %v1539, 1
    %v1541 = vmax.f32 %v1539, %v1540
    %v1542 = vsub.f32 %v1486, %v1499
    %v1543 = vsub.f32 %v1487, %v1505
    %v1544 = vsub.f32 %v1488, %v1511
    %v1545 = vsub.f32 %v1489, %v1517
    %v1546 = vsub.f32 %v1490, %v1523
    %v1547 = vsub.f32 %v1491, %v1529
    %v1548 = vsub.f32 %v1492, %v1535
    %v1549 = vsub.f32 %v1493, %v1541
    %v1550 = vmul.f32 %v1542, 1.442695
    %v1551 = vpow.pop %v1550
    %v1552 = vmul.f32 %v1543, 1.442695
    %v1553 = vpow.pop %v1552
    %v1554 = vmul.f32 %v1544, 1.442695
    %v1555 = vpow.pop %v1554
    %v1556 = vmul.f32 %v1545, 1.442695
    %v1557 = vpow.pop %v1556
    %v1558 = vmul.f32 %v1546, 1.442695
    %v1559 = vpow.pop %v1558
    %v1560 = vmul.f32 %v1547, 1.442695
    %v1561 = vpow.pop %v1560
    %v1562 = vmul.f32 %v1548, 1.442695
    %v1563 = vpow.pop %v1562
    %v1564 = vmul.f32 %v1549, 1.442695
    %v1565 = vpow.pop %v1564
    %v1566 = vrot.slane %v1551, 4
    %v1567 = vadd.f32 %v1551, %v1566
    %v1568 = vrot.slane %v1567, 2
    %v1569 = vadd.f32 %v1567, %v1568
    %v1570 = vrot.slane %v1569, 1
    %v1571 = vadd.f32 %v1569, %v1570
    %v1572 = vrot.slane %v1553, 4
    %v1573 = vadd.f32 %v1553, %v1572
    %v1574 = vrot.slane %v1573, 2
    %v1575 = vadd.f32 %v1573, %v1574
    %v1576 = vrot.slane %v1575, 1
    %v1577 = vadd.f32 %v1575, %v1576
    %v1578 = vrot.slane %v1555, 4
    %v1579 = vadd.f32 %v1555, %v1578
    %v1580 = vrot.slane %v1579, 2
    %v1581 = vadd.f32 %v1579, %v1580
    %v1582 = vrot.slane %v1581, 1
    %v1583 = vadd.f32 %v1581, %v1582
    %v1584 = vrot.slane %v1557, 4
    %v1585 = vadd.f32 %v1557, %v1584
    %v1586 = vrot.slane %v1585, 2
    %v1587 = vadd.f32 %v1585, %v1586
    %v1588 = vrot.slane %v1587, 1
    %v1589 = vadd.f32 %v1587, %v1588
    %v1590 = vrot.slane %v1559, 4
    %v1591 = vadd.f32 %v1559, %v1590
    %v1592 = vrot.slane %v1591, 2
    %v1593 = vadd.f32 %v1591, %v1592
    %v1594 = vrot.slane %v1593, 1
    %v1595 = vadd.f32 %v1593, %v1594
    %v1596 = vrot.slane %v1561, 4
    %v1597 = vadd.f32 %v1561, %v1596
    %v1598 = vrot.slane %v1597, 2
    %v1599 = vadd.f32 %v1597, %v1598
    %v1600 = vrot.slane %v1599, 1
    %v1601 = vadd.f32 %v1599, %v1600
    %v1602 = vrot.slane %v1563, 4
    %v1603 = vadd.f32 %v1563, %v1602
    %v1604 = vrot.slane %v1603, 2
    %v1605 = vadd.f32 %v1603, %v1604
    %v1606 = vrot.slane %v1605, 1
    %v1607 = vadd.f32 %v1605, %v1606
    %v1608 = vrot.slane %v1565, 4
    %v1609 = vadd.f32 %v1565, %v1608
    %v1610 = vrot.slane %v1609, 2
    %v1611 = vadd.f32 %v1609, %v1610
    %v1612 = vrot.slane %v1611, 1
    %v1613 = vadd.f32 %v1611, %v1612
    %v1614 = vrcp.pop %v1571
    %v1615 = vrcp.pop %v1577
    %v1616 = vrcp.pop %v1583
    %v1617 = vrcp.pop %v1589
    %v1618 = vrcp.pop %v1595
    %v1619 = vrcp.pop %v1601
    %v1620 = vrcp.pop %v1607
    %v1621 = vrcp.pop %v1613
    %v1622 = vmul.f32 %v1551, %v1614
    %v1623 = vmul.f32 %v1553, %v1615
    %v1624 = vmul.f32 %v1555, %v1616
    %v1625 = vmul.f32 %v1557, %v1617
    %v1626 = vmul.f32 %v1559, %v1618
    %v1627 = vmul.f32 %v1561, %v1619
    %v1628 = vmul.f32 %v1563, %v1620
    %v1629 = vmul.f32 %v1565, %v1621
    %v1638 = vcombine.high %v1622, %v1622
    %v1640 = vunpack.c.l.s4 1966171168
    %v1641 = vunpack.c.0.s8 %v1640
    %v1642 = vlaneseq
    %v1643 = vshrl.u32 %v1642, 7
    %v1644 = vsub.s32 %v1641, %v1643
    %v1645 = vrot.slane %v1622, %v1644
    %v1647 = vunpack.c.l.s4 1966171168
    %v1648 = vunpack.c.0.s8 %v1647
    %v1649 = vlaneseq
    %v1650 = vshrl.u32 %v1649, 7
    %v1651 = vsub.s32 %v1648, %v1650
    %v1652 = vrot.slane %v1638, %v1651
    %v1653 = vcombine.high %v1645, %v1645
    %v1654 = vcombine.high %v1652, %v1652
    %v1656 = vunpack.c.l.s4 1966171168
    %v1657 = vunpack.c.0.s8 %v1656
    %v1658 = vlaneseq
    %v1659 = vshrl.u32 %v1658, 7
    %v1660 = vsub.s32 %v1657, %v1659
    %v1661 = vrot.slane %v1645, %v1660
    %v1663 = vunpack.c.l.s4 1966171168
    %v1664 = vunpack.c.0.s8 %v1663
    %v1665 = vlaneseq
    %v1666 = vshrl.u32 %v1665, 7
    %v1667 = vsub.s32 %v1664, %v1666
    %v1668 = vrot.slane %v1652, %v1667
    %v1670 = vunpack.c.l.s4 1966171168
    %v1671 = vunpack.c.0.s8 %v1670
    %v1672 = vlaneseq
    %v1673 = vshrl.u32 %v1672, 7
    %v1674 = vsub.s32 %v1671, %v1673
    %v1675 = vrot.slane %v1653, %v1674
    %v1677 = vunpack.c.l.s4 1966171168
    %v1678 = vunpack.c.0.s8 %v1677
    %v1679 = vlaneseq
    %v1680 = vshrl.u32 %v1679, 7
    %v1681 = vsub.s32 %v1678, %v1680
    %v1682 = vrot.slane %v1654, %v1681
    %v1683 = vcombine.high %v1661, %v1661
    %v1684 = vcombine.high %v1668, %v1668
    %v1685 = vcombine.high %v1675, %v1675
    %v1686 = vcombine.high %v1682, %v1682
    %v1687 = vcombine.high %v1623, %v1623
    %v1689 = vunpack.c.l.s4 1966171168
    %v1690 = vunpack.c.0.s8 %v1689
    %v1691 = vlaneseq
    %v1692 = vshrl.u32 %v1691, 7
    %v1693 = vsub.s32 %v1690, %v1692
    %v1694 = vrot.slane %v1623, %v1693
    %v1696 = vunpack.c.l.s4 1966171168
    %v1697 = vunpack.c.0.s8 %v1696
    %v1698 = vlaneseq
    %v1699 = vshrl.u32 %v1698, 7
    %v1700 = vsub.s32 %v1697, %v1699
    %v1701 = vrot.slane %v1687, %v1700
    %v1702 = vcombine.high %v1694, %v1694
    %v1703 = vcombine.high %v1701, %v1701
    %v1705 = vunpack.c.l.s4 1966171168
    %v1706 = vunpack.c.0.s8 %v1705
    %v1707 = vlaneseq
    %v1708 = vshrl.u32 %v1707, 7
    %v1709 = vsub.s32 %v1706, %v1708
    %v1710 = vrot.slane %v1694, %v1709
    %v1712 = vunpack.c.l.s4 1966171168
    %v1713 = vunpack.c.0.s8 %v1712
    %v1714 = vlaneseq
    %v1715 = vshrl.u32 %v1714, 7
    %v1716 = vsub.s32 %v1713, %v1715
    %v1717 = vrot.slane %v1701, %v1716
    %v1719 = vunpack.c.l.s4 1966171168
    %v1720 = vunpack.c.0.s8 %v1719
    %v1721 = vlaneseq
    %v1722 = vshrl.u32 %v1721, 7
    %v1723 = vsub.s32 %v1720, %v1722
    %v1724 = vrot.slane %v1702, %v1723
    %v1726 = vunpack.c.l.s4 1966171168
    %v1727 = vunpack.c.0.s8 %v1726
    %v1728 = vlaneseq
    %v1729 = vshrl.u32 %v1728, 7
    %v1730 = vsub.s32 %v1727, %v1729
    %v1731 = vrot.slane %v1703, %v1730
    %v1732 = vcombine.high %v1710, %v1710
    %v1733 = vcombine.high %v1717, %v1717
    %v1734 = vcombine.high %v1724, %v1724
    %v1735 = vcombine.high %v1731, %v1731
    %v1736 = vcombine.high %v1624, %v1624
    %v1738 = vunpack.c.l.s4 1966171168
    %v1739 = vunpack.c.0.s8 %v1738
    %v1740 = vlaneseq
    %v1741 = vshrl.u32 %v1740, 7
    %v1742 = vsub.s32 %v1739, %v1741
    %v1743 = vrot.slane %v1624, %v1742
    %v1745 = vunpack.c.l.s4 1966171168
    %v1746 = vunpack.c.0.s8 %v1745
    %v1747 = vlaneseq
    %v1748 = vshrl.u32 %v1747, 7
    %v1749 = vsub.s32 %v1746, %v1748
    %v1750 = vrot.slane %v1736, %v1749
    %v1751 = vcombine.high %v1743, %v1743
    %v1752 = vcombine.high %v1750, %v1750
    %v1754 = vunpack.c.l.s4 1966171168
    %v1755 = vunpack.c.0.s8 %v1754
    %v1756 = vlaneseq
    %v1757 = vshrl.u32 %v1756, 7
    %v1758 = vsub.s32 %v1755, %v1757
    %v1759 = vrot.slane %v1743, %v1758
    %v1761 = vunpack.c.l.s4 1966171168
    %v1762 = vunpack.c.0.s8 %v1761
    %v1763 = vlaneseq
    %v1764 = vshrl.u32 %v1763, 7
    %v1765 = vsub.s32 %v1762, %v1764
    %v1766 = vrot.slane %v1750, %v1765
    %v1768 = vunpack.c.l.s4 1966171168
    %v1769 = vunpack.c.0.s8 %v1768
    %v1770 = vlaneseq
    %v1771 = vshrl.u32 %v1770, 7
    %v1772 = vsub.s32 %v1769, %v1771
    %v1773 = vrot.slane %v1751, %v1772
    %v1775 = vunpack.c.l.s4 1966171168
    %v1776 = vunpack.c.0.s8 %v1775
    %v1777 = vlaneseq
    %v1778 = vshrl.u32 %v1777, 7
    %v1779 = vsub.s32 %v1776, %v1778
    %v1780 = vrot.slane %v1752, %v1779
    %v1781 = vcombine.high %v1759, %v1759
    %v1782 = vcombine.high %v1766, %v1766
    %v1783 = vcombine.high %v1773, %v1773
    %v1784 = vcombine.high %v1780, %v1780
    %v1785 = vcombine.high %v1625, %v1625
    %v1787 = vunpack.c.l.s4 1966171168
    %v1788 = vunpack.c.0.s8 %v1787
    %v1789 = vlaneseq
    %v1790 = vshrl.u32 %v1789, 7
    %v1791 = vsub.s32 %v1788, %v1790
    %v1792 = vrot.slane %v1625, %v1791
    %v1794 = vunpack.c.l.s4 1966171168
    %v1795 = vunpack.c.0.s8 %v1794
    %v1796 = vlaneseq
    %v1797 = vshrl.u32 %v1796, 7
    %v1798 = vsub.s32 %v1795, %v1797
    %v1799 = vrot.slane %v1785, %v1798
    %v1800 = vcombine.high %v1792, %v1792
    %v1801 = vcombine.high %v1799, %v1799
    %v1803 = vunpack.c.l.s4 1966171168
    %v1804 = vunpack.c.0.s8 %v1803
    %v1805 = vlaneseq
    %v1806 = vshrl.u32 %v1805, 7
    %v1807 = vsub.s32 %v1804, %v1806
    %v1808 = vrot.slane %v1792, %v1807
    %v1810 = vunpack.c.l.s4 1966171168
    %v1811 = vunpack.c.0.s8 %v1810
    %v1812 = vlaneseq
    %v1813 = vshrl.u32 %v1812, 7
    %v1814 = vsub.s32 %v1811, %v1813
    %v1815 = vrot.slane %v1799, %v1814
    %v1817 = vunpack.c.l.s4 1966171168
    %v1818 = vunpack.c.0.s8 %v1817
    %v1819 = vlaneseq
    %v1820 = vshrl.u32 %v1819, 7
    %v1821 = vsub.s32 %v1818, %v1820
    %v1822 = vrot.slane %v1800, %v1821
    %v1824 = vunpack.c.l.s4 1966171168
    %v1825 = vunpack.c.0.s8 %v1824
    %v1826 = vlaneseq
    %v1827 = vshrl.u32 %v1826, 7
    %v1828 = vsub.s32 %v1825, %v1827
    %v1829 = vrot.slane %v1801, %v1828
    %v1830 = vcombine.high %v1808, %v1808
    %v1831 = vcombine.high %v1815, %v1815
    %v1832 = vcombine.high %v1822, %v1822
    %v1833 = vcombine.high %v1829, %v1829
    %v1834 = vcombine.high %v1626, %v1626
    %v1836 = vunpack.c.l.s4 1966171168
    %v1837 = vunpack.c.0.s8 %v1836
    %v1838 = vlaneseq
    %v1839 = vshrl.u32 %v1838, 7
    %v1840 = vsub.s32 %v1837, %v1839
    %v1841 = vrot.slane %v1626, %v1840
    %v1843 = vunpack.c.l.s4 1966171168
    %v1844 = vunpack.c.0.s8 %v1843
    %v1845 = vlaneseq
    %v1846 = vshrl.u32 %v1845, 7
    %v1847 = vsub.s32 %v1844, %v1846
    %v1848 = vrot.slane %v1834, %v1847
    %v1849 = vcombine.high %v1841, %v1841
    %v1850 = vcombine.high %v1848, %v1848
    %v1852 = vunpack.c.l.s4 1966171168
    %v1853 = vunpack.c.0.s8 %v1852
    %v1854 = vlaneseq
    %v1855 = vshrl.u32 %v1854, 7
    %v1856 = vsub.s32 %v1853, %v1855
    %v1857 = vrot.slane %v1841, %v1856
    %v1859 = vunpack.c.l.s4 1966171168
    %v1860 = vunpack.c.0.s8 %v1859
    %v1861 = vlaneseq
    %v1862 = vshrl.u32 %v1861, 7
    %v1863 = vsub.s32 %v1860, %v1862
    %v1864 = vrot.slane %v1848, %v1863
    %v1866 = vunpack.c.l.s4 1966171168
    %v1867 = vunpack.c.0.s8 %v1866
    %v1868 = vlaneseq
    %v1869 = vshrl.u32 %v1868, 7
    %v1870 = vsub.s32 %v1867, %v1869
    %v1871 = vrot.slane %v1849, %v1870
    %v1873 = vunpack.c.l.s4 1966171168
    %v1874 = vunpack.c.0.s8 %v1873
    %v1875 = vlaneseq
    %v1876 = vshrl.u32 %v1875, 7
    %v1877 = vsub.s32 %v1874, %v1876
    %v1878 = vrot.slane %v1850, %v1877
    %v1879 = vcombine.high %v1857, %v1857
    %v1880 = vcombine.high %v1864, %v1864
    %v1881 = vcombine.high %v1871, %v1871
    %v1882 = vcombine.high %v1878, %v1878
    %v1883 = vcombine.high %v1627, %v1627
    %v1885 = vunpack.c.l.s4 1966171168
    %v1886 = vunpack.c.0.s8 %v1885
    %v1887 = vlaneseq
    %v1888 = vshrl.u32 %v1887, 7
    %v1889 = vsub.s32 %v1886, %v1888
    %v1890 = vrot.slane %v1627, %v1889
    %v1892 = vunpack.c.l.s4 1966171168
    %v1893 = vunpack.c.0.s8 %v1892
    %v1894 = vlaneseq
    %v1895 = vshrl.u32 %v1894, 7
    %v1896 = vsub.s32 %v1893, %v1895
    %v1897 = vrot.slane %v1883, %v1896
    %v1898 = vcombine.high %v1890, %v1890
    %v1899 = vcombine.high %v1897, %v1897
    %v1901 = vunpack.c.l.s4 1966171168
    %v1902 = vunpack.c.0.s8 %v1901
    %v1903 = vlaneseq
    %v1904 = vshrl.u32 %v1903, 7
    %v1905 = vsub.s32 %v1902, %v1904
    %v1906 = vrot.slane %v1890, %v1905
    %v1908 = vunpack.c.l.s4 1966171168
    %v1909 = vunpack.c.0.s8 %v1908
    %v1910 = vlaneseq
    %v1911 = vshrl.u32 %v1910, 7
    %v1912 = vsub.s32 %v1909, %v1911
    %v1913 = vrot.slane %v1897, %v1912
    %v1915 = vunpack.c.l.s4 1966171168
    %v1916 = vunpack.c.0.s8 %v1915
    %v1917 = vlaneseq
    %v1918 = vshrl.u32 %v1917, 7
    %v1919 = vsub.s32 %v1916, %v1918
    %v1920 = vrot.slane %v1898, %v1919
    %v1922 = vunpack.c.l.s4 1966171168
    %v1923 = vunpack.c.0.s8 %v1922
    %v1924 = vlaneseq
    %v1925 = vshrl.u32 %v1924, 7
    %v1926 = vsub.s32 %v1923, %v1925
    %v1927 = vrot.slane %v1899, %v1926
    %v1928 = vcombine.high %v1906, %v1906
    %v1929 = vcombine.high %v1913, %v1913
    %v1930 = vcombine.high %v1920, %v1920
    %v1931 = vcombine.high %v1927, %v1927
    %v1932 = vcombine.high %v1628, %v1628
    %v1934 = vunpack.c.l.s4 1966171168
    %v1935 = vunpack.c.0.s8 %v1934
    %v1936 = vlaneseq
    %v1937 = vshrl.u32 %v1936, 7
    %v1938 = vsub.s32 %v1935, %v1937
    %v1939 = vrot.slane %v1628, %v1938
    %v1941 = vunpack.c.l.s4 1966171168
    %v1942 = vunpack.c.0.s8 %v1941
    %v1943 = vlaneseq
    %v1944 = vshrl.u32 %v1943, 7
    %v1945 = vsub.s32 %v1942, %v1944
    %v1946 = vrot.slane %v1932, %v1945
    %v1947 = vcombine.high %v1939, %v1939
    %v1948 = vcombine.high %v1946, %v1946
    %v1950 = vunpack.c.l.s4 1966171168
    %v1951 = vunpack.c.0.s8 %v1950
    %v1952 = vlaneseq
    %v1953 = vshrl.u32 %v1952, 7
    %v1954 = vsub.s32 %v1951, %v1953
    %v1955 = vrot.slane %v1939, %v1954
    %v1957 = vunpack.c.l.s4 1966171168
    %v1958 = vunpack.c.0.s8 %v1957
    %v1959 = vlaneseq
    %v1960 = vshrl.u32 %v1959, 7
    %v1961 = vsub.s32 %v1958, %v1960
    %v1962 = vrot.slane %v1946, %v1961
    %v1964 = vunpack.c.l.s4 1966171168
    %v1965 = vunpack.c.0.s8 %v1964
    %v1966 = vlaneseq
    %v1967 = vshrl.u32 %v1966, 7
    %v1968 = vsub.s32 %v1965, %v1967
    %v1969 = vrot.slane %v1947, %v1968
    %v1971 = vunpack.c.l.s4 1966171168
    %v1972 = vunpack.c.0.s8 %v1971
    %v1973 = vlaneseq
    %v1974 = vshrl.u32 %v1973, 7
    %v1975 = vsub.s32 %v1972, %v1974
    %v1976 = vrot.slane %v1948, %v1975
    %v1977 = vcombine.high %v1955, %v1955
    %v1978 = vcombine.high %v1962, %v1962
    %v1979 = vcombine.high %v1969, %v1969
    %v1980 = vcombine.high %v1976, %v1976
    %v1981 = vcombine.high %v1629, %v1629
    %v1983 = vunpack.c.l.s4 1966171168
    %v1984 = vunpack.c.0.s8 %v1983
    %v1985 = vlaneseq
    %v1986 = vshrl.u32 %v1985, 7
    %v1987 = vsub.s32 %v1984, %v1986
    %v1988 = vrot.slane %v1629, %v1987
    %v1990 = vunpack.c.l.s4 1966171168
    %v1991 = vunpack.c.0.s8 %v1990
    %v1992 = vlaneseq
    %v1993 = vshrl.u32 %v1992, 7
    %v1994 = vsub.s32 %v1991, %v1993
    %v1995 = vrot.slane %v1981, %v1994
    %v1996 = vcombine.high %v1988, %v1988
    %v1997 = vcombine.high %v1995, %v1995
    %v1999 = vunpack.c.l.s4 1966171168
    %v2000 = vunpack.c.0.s8 %v1999
    %v2001 = vlaneseq
    %v2002 = vshrl.u32 %v2001, 7
    %v2003 = vsub.s32 %v2000, %v2002
    %v2004 = vrot.slane %v1988, %v2003
    %v2006 = vunpack.c.l.s4 1966171168
    %v2007 = vunpack.c.0.s8 %v2006
    %v2008 = vlaneseq
    %v2009 = vshrl.u32 %v2008, 7
    %v2010 = vsub.s32 %v2007, %v2009
    %v2011 = vrot.slane %v1995, %v2010
    %v2013 = vunpack.c.l.s4 1966171168
    %v2014 = vunpack.c.0.s8 %v2013
    %v2015 = vlaneseq
    %v2016 = vshrl.u32 %v2015, 7
    %v2017 = vsub.s32 %v2014, %v2016
    %v2018 = vrot.slane %v1996, %v2017
    %v2020 = vunpack.c.l.s4 1966171168
    %v2021 = vunpack.c.0.s8 %v2020
    %v2022 = vlaneseq
    %v2023 = vshrl.u32 %v2022, 7
    %v2024 = vsub.s32 %v2021, %v2023
    %v2025 = vrot.slane %v1997, %v2024
    %v2026 = vcombine.high %v2004, %v2004
    %v2027 = vcombine.high %v2011, %v2011
    %v2028 = vcombine.high %v2018, %v2018
    %v2029 = vcombine.high %v2025, %v2025
    %v2030 = vlaneseq
    %v2031 = vshrl.u32 %v2030, 7
    %v2032 = vsub.s32 0, %v2031
    %v2033 = vrot.slane %v1661, %v2032
    %v2034 = vlaneseq
    %v2035 = vshrl.u32 %v2034, 7
    %v2036 = vsub.s32 0, %v2035
    %v2037 = vrot.slane %v1675, %v2036
    %v2038 = vlaneseq
    %v2039 = vshrl.u32 %v2038, 7
    %v2040 = vsub.s32 0, %v2039
    %v2041 = vrot.slane %v1683, %v2040
    %v2042 = vlaneseq
    %v2043 = vshrl.u32 %v2042, 7
    %v2044 = vsub.s32 0, %v2043
    %v2045 = vrot.slane %v1685, %v2044
    %v2046 = vlaneseq
    %v2047 = vshrl.u32 %v2046, 7
    %v2048 = vsub.s32 0, %v2047
    %v2049 = vrot.slane %v1668, %v2048
    %v2050 = vlaneseq
    %v2051 = vshrl.u32 %v2050, 7
    %v2052 = vsub.s32 0, %v2051
    %v2053 = vrot.slane %v1682, %v2052
    %v2054 = vlaneseq
    %v2055 = vshrl.u32 %v2054, 7
    %v2056 = vsub.s32 0, %v2055
    %v2057 = vrot.slane %v1684, %v2056
    %v2058 = vlaneseq
    %v2059 = vshrl.u32 %v2058, 7
    %v2060 = vsub.s32 0, %v2059
    %v2061 = vrot.slane %v1686, %v2060
    %v2062 = vlaneseq
    %v2063 = vshrl.u32 %v2062, 7
    %v2064 = vsub.s32 0, %v2063
    %v2065 = vrot.slane %v1710, %v2064
    %v2066 = vlaneseq
    %v2067 = vshrl.u32 %v2066, 7
    %v2068 = vsub.s32 0, %v2067
    %v2069 = vrot.slane %v1724, %v2068
    %v2070 = vlaneseq
    %v2071 = vshrl.u32 %v2070, 7
    %v2072 = vsub.s32 0, %v2071
    %v2073 = vrot.slane %v1732, %v2072
    %v2074 = vlaneseq
    %v2075 = vshrl.u32 %v2074, 7
    %v2076 = vsub.s32 0, %v2075
    %v2077 = vrot.slane %v1734, %v2076
    %v2078 = vlaneseq
    %v2079 = vshrl.u32 %v2078, 7
    %v2080 = vsub.s32 0, %v2079
    %v2081 = vrot.slane %v1717, %v2080
    %v2082 = vlaneseq
    %v2083 = vshrl.u32 %v2082, 7
    %v2084 = vsub.s32 0, %v2083
    %v2085 = vrot.slane %v1731, %v2084
    %v2086 = vlaneseq
    %v2087 = vshrl.u32 %v2086, 7
    %v2088 = vsub.s32 0, %v2087
    %v2089 = vrot.slane %v1733, %v2088
    %v2090 = vlaneseq
    %v2091 = vshrl.u32 %v2090, 7
    %v2092 = vsub.s32 0, %v2091
    %v2093 = vrot.slane %v1735, %v2092
    %v2094 = vlaneseq
    %v2095 = vshrl.u32 %v2094, 7
    %v2096 = vsub.s32 0, %v2095
    %v2097 = vrot.slane %v1759, %v2096
    %v2098 = vlaneseq
    %v2099 = vshrl.u32 %v2098, 7
    %v2100 = vsub.s32 0, %v2099
    %v2101 = vrot.slane %v1773, %v2100
    %v2102 = vlaneseq
    %v2103 = vshrl.u32 %v2102, 7
    %v2104 = vsub.s32 0, %v2103
    %v2105 = vrot.slane %v1781, %v2104
    %v2106 = vlaneseq
    %v2107 = vshrl.u32 %v2106, 7
    %v2108 = vsub.s32 0, %v2107
    %v2109 = vrot.slane %v1783, %v2108
    %v2110 = vlaneseq
    %v2111 = vshrl.u32 %v2110, 7
    %v2112 = vsub.s32 0, %v2111
    %v2113 = vrot.slane %v1766, %v2112
    %v2114 = vlaneseq
    %v2115 = vshrl.u32 %v2114, 7
    %v2116 = vsub.s32 0, %v2115
    %v2117 = vrot.slane %v1780, %v2116
    %v2118 = vlaneseq
    %v2119 = vshrl.u32 %v2118, 7
    %v2120 = vsub.s32 0, %v2119
    %v2121 = vrot.slane %v1782, %v2120
    %v2122 = vlaneseq
    %v2123 = vshrl.u32 %v2122, 7
    %v2124 = vsub.s32 0, %v2123
    %v2125 = vrot.slane %v1784, %v2124
    %v2126 = vlaneseq
    %v2127 = vshrl.u32 %v2126, 7
    %v2128 = vsub.s32 0, %v2127
    %v2129 = vrot.slane %v1808, %v2128
    %v2130 = vlaneseq
    %v2131 = vshrl.u32 %v2130, 7
    %v2132 = vsub.s32 0, %v2131
    %v2133 = vrot.slane %v1822, %v2132
    %v2134 = vlaneseq
    %v2135 = vshrl.u32 %v2134, 7
    %v2136 = vsub.s32 0, %v2135
    %v2137 = vrot.slane %v1830, %v2136
    %v2138 = vlaneseq
    %v2139 = vshrl.u32 %v2138, 7
    %v2140 = vsub.s32 0, %v2139
    %v2141 = vrot.slane %v1832, %v2140
    %v2142 = vlaneseq
    %v2143 = vshrl.u32 %v2142, 7
    %v2144 = vsub.s32 0, %v2143
    %v2145 = vrot.slane %v1815, %v2144
    %v2146 = vlaneseq
    %v2147 = vshrl.u32 %v2146, 7
    %v2148 = vsub.s32 0, %v2147
    %v2149 = vrot.slane %v1829, %v2148
    %v2150 = vlaneseq
    %v2151 = vshrl.u32 %v2150, 7
    %v2152 = vsub.s32 0, %v2151
    %v2153 = vrot.slane %v1831, %v2152
    %v2154 = vlaneseq
    %v2155 = vshrl.u32 %v2154, 7
    %v2156 = vsub.s32 0, %v2155
    %v2157 = vrot.slane %v1833, %v2156
    %v2158 = vlaneseq
    %v2159 = vshrl.u32 %v2158, 7
    %v2160 = vsub.s32 0, %v2159
    %v2161 = vrot.slane %v1857, %v2160
    %v2162 = vlaneseq
    %v2163 = vshrl.u32 %v2162, 7
    %v2164 = vsub.s32 0, %v2163
    %v2165 = vrot.slane %v1871, %v2164
    %v2166 = vlaneseq
    %v2167 = vshrl.u32 %v2166, 7
    %v2168 = vsub.s32 0, %v2167
    %v2169 = vrot.slane %v1879, %v2168
    %v2170 = vlaneseq
    %v2171 = vshrl.u32 %v2170, 7
    %v2172 = vsub.s32 0, %v2171
    %v2173 = vrot.slane %v1881, %v2172
    %v2174 = vlaneseq
    %v2175 = vshrl.u32 %v2174, 7
    %v2176 = vsub.s32 0, %v2175
    %v2177 = vrot.slane %v1864, %v2176
    %v2178 = vlaneseq
    %v2179 = vshrl.u32 %v2178, 7
    %v2180 = vsub.s32 0, %v2179
    %v2181 = vrot.slane %v1878, %v2180
    %v2182 = vlaneseq
    %v2183 = vshrl.u32 %v2182, 7
    %v2184 = vsub.s32 0, %v2183
    %v2185 = vrot.slane %v1880, %v2184
    %v2186 = vlaneseq
    %v2187 = vshrl.u32 %v2186, 7
    %v2188 = vsub.s32 0, %v2187
    %v2189 = vrot.slane %v1882, %v2188
    %v2190 = vlaneseq
    %v2191 = vshrl.u32 %v2190, 7
    %v2192 = vsub.s32 0, %v2191
    %v2193 = vrot.slane %v1906, %v2192
    %v2194 = vlaneseq
    %v2195 = vshrl.u32 %v2194, 7
    %v2196 = vsub.s32 0, %v2195
    %v2197 = vrot.slane %v1920, %v2196
    %v2198 = vlaneseq
    %v2199 = vshrl.u32 %v2198, 7
    %v2200 = vsub.s32 0, %v2199
    %v2201 = vrot.slane %v1928, %v2200
    %v2202 = vlaneseq
    %v2203 = vshrl.u32 %v2202, 7
    %v2204 = vsub.s32 0, %v2203
    %v2205 = vrot.slane %v1930, %v2204
    %v2206 = vlaneseq
    %v2207 = vshrl.u32 %v2206, 7
    %v2208 = vsub.s32 0, %v2207
    %v2209 = vrot.slane %v1913, %v2208
    %v2210 = vlaneseq
    %v2211 = vshrl.u32 %v2210, 7
    %v2212 = vsub.s32 0, %v2211
    %v2213 = vrot.slane %v1927, %v2212
    %v2214 = vlaneseq
    %v2215 = vshrl.u32 %v2214, 7
    %v2216 = vsub.s32 0, %v2215
    %v2217 = vrot.slane %v1929, %v2216
    %v2218 = vlaneseq
    %v2219 = vshrl.u32 %v2218, 7
    %v2220 = vsub.s32 0, %v2219
    %v2221 = vrot.slane %v1931, %v2220
    %v2222 = vlaneseq
    %v2223 = vshrl.u32 %v2222, 7
    %v2224 = vsub.s32 0, %v2223
    %v2225 = vrot.slane %v1955, %v2224
    %v2226 = vlaneseq
    %v2227 = vshrl.u32 %v2226, 7
    %v2228 = vsub.s32 0, %v2227
    %v2229 = vrot.slane %v1969, %v2228
    %v2230 = vlaneseq
    %v2231 = vshrl.u32 %v2230, 7
    %v2232 = vsub.s32 0, %v2231
    %v2233 = vrot.slane %v1977, %v2232
    %v2234 = vlaneseq
    %v2235 = vshrl.u32 %v2234, 7
    %v2236 = vsub.s32 0, %v2235
    %v2237 = vrot.slane %v1979, %v2236
    %v2238 = vlaneseq
    %v2239 = vshrl.u32 %v2238, 7
    %v2240 = vsub.s32 0, %v2239
    %v2241 = vrot.slane %v1962, %v2240
    %v2242 = vlaneseq
    %v2243 = vshrl.u32 %v2242, 7
    %v2244 = vsub.s32 0, %v2243
    %v2245 = vrot.slane %v1976, %v2244
    %v2246 = vlaneseq
    %v2247 = vshrl.u32 %v2246, 7
    %v2248 = vsub.s32 0, %v2247
    %v2249 = vrot.slane %v1978, %v2248
    %v2250 = vlaneseq
    %v2251 = vshrl.u32 %v2250, 7
    %v2252 = vsub.s32 0, %v2251
    %v2253 = vrot.slane %v1980, %v2252
    %v2254 = vlaneseq
    %v2255 = vshrl.u32 %v2254, 7
    %v2256 = vsub.s32 0, %v2255
    %v2257 = vrot.slane %v2004, %v2256
    %v2258 = vlaneseq
    %v2259 = vshrl.u32 %v2258, 7
    %v2260 = vsub.s32 0, %v2259
    %v2261 = vrot.slane %v2018, %v2260
    %v2262 = vlaneseq
    %v2263 = vshrl.u32 %v2262, 7
    %v2264 = vsub.s32 0, %v2263
    %v2265 = vrot.slane %v2026, %v2264
    %v2266 = vlaneseq
    %v2267 = vshrl.u32 %v2266, 7
    %v2268 = vsub.s32 0, %v2267
    %v2269 = vrot.slane %v2028, %v2268
    %v2270 = vlaneseq
    %v2271 = vshrl.u32 %v2270, 7
    %v2272 = vsub.s32 0, %v2271
    %v2273 = vrot.slane %v2011, %v2272
    %v2274 = vlaneseq
    %v2275 = vshrl.u32 %v2274, 7
    %v2276 = vsub.s32 0, %v2275
    %v2277 = vrot.slane %v2025, %v2276
    %v2278 = vlaneseq
    %v2279 = vshrl.u32 %v2278, 7
    %v2280 = vsub.s32 0, %v2279
    %v2281 = vrot.slane %v2027, %v2280
    %v2282 = vlaneseq
    %v2283 = vshrl.u32 %v2282, 7
    %v2284 = vsub.s32 0, %v2283
    %v2285 = vrot.slane %v2029, %v2284
    %v2350 = vmul.f32 %v2033, %v177
    %v2351 = vmul.f32 %v2037, %v275
    %v2352 = vmul.f32 %v2041, %v373
    %v2353 = vmul.f32 %v2045, %v471
    %v2354 = vmul.f32 %v2049, %v569
    %v2355 = vmul.f32 %v2053, %v667
    %v2356 = vmul.f32 %v2057, %v765
    %v2357 = vmul.f32 %v2061, %v863
    %v2358 = vmul.f32 %v2065, %v177
    %v2359 = vmul.f32 %v2069, %v275
    %v2360 = vmul.f32 %v2073, %v373
    %v2361 = vmul.f32 %v2077, %v471
    %v2362 = vmul.f32 %v2081, %v569
    %v2363 = vmul.f32 %v2085, %v667
    %v2364 = vmul.f32 %v2089, %v765
    %v2365 = vmul.f32 %v2093, %v863
    %v2366 = vmul.f32 %v2097, %v177
    %v2367 = vmul.f32 %v2101, %v275
    %v2368 = vmul.f32 %v2105, %v373
    %v2369 = vmul.f32 %v2109, %v471
    %v2370 = vmul.f32 %v2113, %v569
    %v2371 = vmul.f32 %v2117, %v667
    %v2372 = vmul.f32 %v2121, %v765
    %v2373 = vmul.f32 %v2125, %v863
    %v2374 = vmul.f32 %v2129, %v177
    %v2375 = vmul.f32 %v2133, %v275
    %v2376 = vmul.f32 %v2137, %v373
    %v2377 = vmul.f32 %v2141, %v471
    %v2378 = vmul.f32 %v2145, %v569
    %v2379 = vmul.f32 %v2149, %v667
    %v2380 = vmul.f32 %v2153, %v765
    %v2381 = vmul.f32 %v2157, %v863
    %v2382 = vmul.f32 %v2161, %v177
    %v2383 = vmul.f32 %v2165, %v275
    %v2384 = vmul.f32 %v2169, %v373
    %v2385 = vmul.f32 %v2173, %v471
    %v2386 = vmul.f32 %v2177, %v569
    %v2387 = vmul.f32 %v2181, %v667
    %v2388 = vmul.f32 %v2185, %v765
    %v2389 = vmul.f32 %v2189, %v863
    %v2390 = vmul.f32 %v2193, %v177
    %v2391 = vmul.f32 %v2197, %v275
    %v2392 = vmul.f32 %v2201, %v373
    %v2393 = vmul.f32 %v2205, %v471
    %v2394 = vmul.f32 %v2209, %v569
    %v2395 = vmul.f32 %v2213, %v667
    %v2396 = vmul.f32 %v2217, %v765
    %v2397 = vmul.f32 %v2221, %v863
    %v2398 = vmul.f32 %v2225, %v177
    %v2399 = vmul.f32 %v2229, %v275
    %v2400 = vmul.f32 %v2233, %v373
    %v2401 = vmul.f32 %v2237, %v471
    %v2402 = vmul.f32 %v2241, %v569
    %v2403 = vmul.f32 %v2245, %v667
    %v2404 = vmul.f32 %v2249, %v765
    %v2405 = vmul.f32 %v2253, %v863
    %v2406 = vmul.f32 %v2257, %v177
    %v2407 = vmul.f32 %v2261, %v275
    %v2408 = vmul.f32 %v2265, %v373
    %v2409 = vmul.f32 %v2269, %v471
    %v2410 = vmul.f32 %v2273, %v569
    %v2411 = vmul.f32 %v2277, %v667
    %v2412 = vmul.f32 %v2281, %v765
    %v2413 = vmul.f32 %v2285, %v863
    %v2414 = vadd.f32 %v2350, %v2351
    %v2415 = vadd.f32 %v2414, %v2352
    %v2416 = vadd.f32 %v2415, %v2353
    %v2417 = vadd.f32 %v2416, %v2354
    %v2418 = vadd.f32 %v2417, %v2355
    %v2419 = vadd.f32 %v2418, %v2356
    %v2420 = vadd.f32 %v2419, %v2357
    %v2421 = vadd.f32 %v2358, %v2359
    %v2422 = vadd.f32 %v2421, %v2360
    %v2423 = vadd.f32 %v2422, %v2361
    %v2424 = vadd.f32 %v2423, %v2362
    %v2425 = vadd.f32 %v2424, %v2363
    %v2426 = vadd.f32 %v2425, %v2364
    %v2427 = vadd.f32 %v2426, %v2365
    %v2428 = vadd.f32 %v2366, %v2367
    %v2429 = vadd.f32 %v2428, %v2368
    %v2430 = vadd.f32 %v2429, %v2369
    %v2431 = vadd.f32 %v2430, %v2370
    %v2432 = vadd.f32 %v2431, %v2371
    %v2433 = vadd.f32 %v2432, %v2372
    %v2434 = vadd.f32 %v2433, %v2373
    %v2435 = vadd.f32 %v2374, %v2375
    %v2436 = vadd.f32 %v2435, %v2376
    %v2437 = vadd.f32 %v2436, %v2377
    %v2438 = vadd.f32 %v2437, %v2378
    %v2439 = vadd.f32 %v2438, %v2379
    %v2440 = vadd.f32 %v2439, %v2380
    %v2441 = vadd.f32 %v2440, %v2381
    %v2442 = vadd.f32 %v2382, %v2383
    %v2443 = vadd.f32 %v2442, %v2384
    %v2444 = vadd.f32 %v2443, %v2385
    %v2445 = vadd.f32 %v2444, %v2386
    %v2446 = vadd.f32 %v2445, %v2387
    %v2447 = vadd.f32 %v2446, %v2388
    %v2448 = vadd.f32 %v2447, %v2389
    %v2449 = vadd.f32 %v2390, %v2391
    %v2450 = vadd.f32 %v2449, %v2392
    %v2451 = vadd.f32 %v2450, %v2393
    %v2452 = vadd.f32 %v2451, %v2394
    %v2453 = vadd.f32 %v2452, %v2395
    %v2454 = vadd.f32 %v2453, %v2396
    %v2455 = vadd.f32 %v2454, %v2397
    %v2456 = vadd.f32 %v2398, %v2399
    %v2457 = vadd.f32 %v2456, %v2400
    %v2458 = vadd.f32 %v2457, %v2401
    %v2459 = vadd.f32 %v2458, %v2402
    %v2460 = vadd.f32 %v2459, %v2403
    %v2461 = vadd.f32 %v2460, %v2404
    %v2462 = vadd.f32 %v2461, %v2405
    %v2463 = vadd.f32 %v2406, %v2407
    %v2464 = vadd.f32 %v2463, %v2408
    %v2465 = vadd.f32 %v2464, %v2409
    %v2466 = vadd.f32 %v2465, %v2410
    %v2467 = vadd.f32 %v2466, %v2411
    %v2468 = vadd.f32 %v2467, %v2412
    %v2469 = vadd.f32 %v2468, %v2413
    %v2470 = vmul.f32 %v148, %v164
    %v2471 = vmul.f32 %v148, %v262
    %v2472 = vmul.f32 %v148, %v360
    %v2473 = vmul.f32 %v148, %v458
    %v2474 = vmul.f32 %v148, %v556
    %v2475 = vmul.f32 %v148, %v654
    %v2476 = vmul.f32 %v148, %v752
    %v2477 = vmul.f32 %v148, %v850
    %v2478 = vmul.f32 %v246, %v164
    %v2479 = vmul.f32 %v246, %v262
    %v2480 = vmul.f32 %v246, %v360
    %v2481 = vmul.f32 %v246, %v458
    %v2482 = vmul.f32 %v246, %v556
    %v2483 = vmul.f32 %v246, %v654
    %v2484 = vmul.f32 %v246, %v752
    %v2485 = vmul.f32 %v246, %v850
    %v2486 = vmul.f32 %v344, %v164
    %v2487 = vmul.f32 %v344, %v262
    %v2488 = vmul.f32 %v344, %v360
    %v2489 = vmul.f32 %v344, %v458
    %v2490 = vmul.f32 %v344, %v556
    %v2491 = vmul.f32 %v344, %v654
    %v2492 = vmul.f32 %v344, %v752
    %v2493 = vmul.f32 %v344, %v850
    %v2494 = vmul.f32 %v442, %v164
    %v2495 = vmul.f32 %v442, %v262
    %v2496 = vmul.f32 %v442, %v360
    %v2497 = vmul.f32 %v442, %v458
    %v2498 = vmul.f32 %v442, %v556
    %v2499 = vmul.f32 %v442, %v654
    %v2500 = vmul.f32 %v442, %v752
    %v2501 = vmul.f32 %v442, %v850
    %v2502 = vmul.f32 %v540, %v164
    %v2503 = vmul.f32 %v540, %v262
    %v2504 = vmul.f32 %v540, %v360
    %v2505 = vmul.f32 %v540, %v458
    %v2506 = vmul.f32 %v540, %v556
    %v2507 = vmul.f32 %v540, %v654
    %v2508 = vmul.f32 %v540, %v752
    %v2509 = vmul.f32 %v540, %v850
    %v2510 = vmul.f32 %v638, %v164
    %v2511 = vmul.f32 %v638, %v262
    %v2512 = vmul.f32 %v638, %v360
    %v2513 = vmul.f32 %v638, %v458
    %v2514 = vmul.f32 %v638, %v556
    %v2515 = vmul.f32 %v638, %v654
    %v2516 = vmul.f32 %v638, %v752
    %v2517 = vmul.f32 %v638, %v850
    %v2518 = vmul.f32 %v736, %v164
    %v2519 = vmul.f32 %v736, %v262
    %v2520 = vmul.f32 %v736, %v360
    %v2521 = vmul.f32 %v736, %v458
    %v2522 = vmul.f32 %v736, %v556
    %v2523 = vmul.f32 %v736, %v654
    %v2524 = vmul.f32 %v736, %v752
    %v2525 = vmul.f32 %v736, %v850
    %v2526 = vmul.f32 %v834, %v164
    %v2527 = vmul.f32 %v834, %v262
    %v2528 = vmul.f32 %v834, %v360
    %v2529 = vmul.f32 %v834, %v458
    %v2530 = vmul.f32 %v834, %v556
    %v2531 = vmul.f32 %v834, %v654
    %v2532 = vmul.f32 %v834, %v752
    %v2533 = vmul.f32 %v834, %v850
    %v2534 = vrot.slane %v2470, 4
    %v2535 = vadd.f32 %v2470, %v2534
    %v2536 = vrot.slane %v2535, 2
    %v2537 = vadd.f32 %v2535, %v2536
    %v2538 = vrot.slane %v2537, 1
    %v2539 = vadd.f32 %v2537, %v2538
    %v2540 = vrot.slane %v2471, 4
    %v2541 = vadd.f32 %v2471, %v2540
    %v2542 = vrot.slane %v2541, 2
    %v2543 = vadd.f32 %v2541, %v2542
    %v2544 = vrot.slane %v2543, 1
    %v2545 = vadd.f32 %v2543, %v2544
    %v2546 = vrot.slane %v2472, 4
    %v2547 = vadd.f32 %v2472, %v2546
    %v2548 = vrot.slane %v2547, 2
    %v2549 = vadd.f32 %v2547, %v2548
    %v2550 = vrot.slane %v2549, 1
    %v2551 = vadd.f32 %v2549, %v2550
    %v2552 = vrot.slane %v2473, 4
    %v2553 = vadd.f32 %v2473, %v2552
    %v2554 = vrot.slane %v2553, 2
    %v2555 = vadd.f32 %v2553, %v2554
    %v2556 = vrot.slane %v2555, 1
    %v2557 = vadd.f32 %v2555, %v2556
    %v2558 = vrot.slane %v2474, 4
    %v2559 = vadd.f32 %v2474, %v2558
    %v2560 = vrot.slane %v2559, 2
    %v2561 = vadd.f32 %v2559, %v2560
    %v2562 = vrot.slane %v2561, 1
    %v2563 = vadd.f32 %v2561, %v2562
    %v2564 = vrot.slane %v2475, 4
    %v2565 = vadd.f32 %v2475, %v2564
    %v2566 = vrot.slane %v2565, 2
    %v2567 = vadd.f32 %v2565, %v2566
    %v2568 = vrot.slane %v2567, 1
    %v2569 = vadd.f32 %v2567, %v2568
    %v2570 = vrot.slane %v2476, 4
    %v2571 = vadd.f32 %v2476, %v2570
    %v2572 = vrot.slane %v2571, 2
    %v2573 = vadd.f32 %v2571, %v2572
    %v2574 = vrot.slane %v2573, 1
    %v2575 = vadd.f32 %v2573, %v2574
    %v2576 = vrot.slane %v2477, 4
    %v2577 = vadd.f32 %v2477, %v2576
    %v2578 = vrot.slane %v2577, 2
    %v2579 = vadd.f32 %v2577, %v2578
    %v2580 = vrot.slane %v2579, 1
    %v2581 = vadd.f32 %v2579, %v2580
    %v2582 = vrot.slane %v2478, 4
    %v2583 = vadd.f32 %v2478, %v2582
    %v2584 = vrot.slane %v2583, 2
    %v2585 = vadd.f32 %v2583, %v2584
    %v2586 = vrot.slane %v2585, 1
    %v2587 = vadd.f32 %v2585, %v2586
    %v2588 = vrot.slane %v2479, 4
    %v2589 = vadd.f32 %v2479, %v2588
    %v2590 = vrot.slane %v2589, 2
    %v2591 = vadd.f32 %v2589, %v2590
    %v2592 = vrot.slane %v2591, 1
    %v2593 = vadd.f32 %v2591, %v2592
    %v2594 = vrot.slane %v2480, 4
    %v2595 = vadd.f32 %v2480, %v2594
    %v2596 = vrot.slane %v2595, 2
    %v2597 = vadd.f32 %v2595, %v2596
    %v2598 = vrot.slane %v2597, 1
    %v2599 = vadd.f32 %v2597, %v2598
    %v2600 = vrot.slane %v2481, 4
    %v2601 = vadd.f32 %v2481, %v2600
    %v2602 = vrot.slane %v2601, 2
    %v2603 = vadd.f32 %v2601, %v2602
    %v2604 = vrot.slane %v2603, 1
    %v2605 = vadd.f32 %v2603, %v2604
    %v2606 = vrot.slane %v2482, 4
    %v2607 = vadd.f32 %v2482, %v2606
    %v2608 = vrot.slane %v2607, 2
    %v2609 = vadd.f32 %v2607, %v2608
    %v2610 = vrot.slane %v2609, 1
    %v2611 = vadd.f32 %v2609, %v2610
    %v2612 = vrot.slane %v2483, 4
    %v2613 = vadd.f32 %v2483, %v2612
    %v2614 = vrot.slane %v2613, 2
    %v2615 = vadd.f32 %v2613, %v2614
    %v2616 = vrot.slane %v2615, 1
    %v2617 = vadd.f32 %v2615, %v2616
    %v2618 = vrot.slane %v2484, 4
    %v2619 = vadd.f32 %v2484, %v2618
    %v2620 = vrot.slane %v2619, 2
    %v2621 = vadd.f32 %v2619, %v2620
    %v2622 = vrot.slane %v2621, 1
    %v2623 = vadd.f32 %v2621, %v2622
    %v2624 = vrot.slane %v2485, 4
    %v2625 = vadd.f32 %v2485, %v2624
    %v2626 = vrot.slane %v2625, 2
    %v2627 = vadd.f32 %v2625, %v2626
    %v2628 = vrot.slane %v2627, 1
    %v2629 = vadd.f32 %v2627, %v2628
    %v2630 = vrot.slane %v2486, 4
    %v2631 = vadd.f32 %v2486, %v2630
    %v2632 = vrot.slane %v2631, 2
    %v2633 = vadd.f32 %v2631, %v2632
    %v2634 = vrot.slane %v2633, 1
    %v2635 = vadd.f32 %v2633, %v2634
    %v2636 = vrot.slane %v2487, 4
    %v2637 = vadd.f32 %v2487, %v2636
    %v2638 = vrot.slane %v2637, 2
    %v2639 = vadd.f32 %v2637, %v2638
    %v2640 = vrot.slane %v2639, 1
    %v2641 = vadd.f32 %v2639, %v2640
    %v2642 = vrot.slane %v2488, 4
    %v2643 = vadd.f32 %v2488, %v2642
    %v2644 = vrot.slane %v2643, 2
    %v2645 = vadd.f32 %v2643, %v2644
    %v2646 = vrot.slane %v2645, 1
    %v2647 = vadd.f32 %v2645, %v2646
    %v2648 = vrot.slane %v2489, 4
    %v2649 = vadd.f32 %v2489, %v2648
    %v2650 = vrot.slane %v2649, 2
    %v2651 = vadd.f32 %v2649, %v2650
    %v2652 = vrot.slane %v2651, 1
    %v2653 = vadd.f32 %v2651, %v2652
    %v2654 = vrot.slane %v2490, 4
    %v2655 = vadd.f32 %v2490, %v2654
    %v2656 = vrot.slane %v2655, 2
    %v2657 = vadd.f32 %v2655, %v2656
    %v2658 = vrot.slane %v2657, 1
    %v2659 = vadd.f32 %v2657, %v2658
    %v2660 = vrot.slane %v2491, 4
    %v2661 = vadd.f32 %v2491, %v2660
    %v2662 = vrot.slane %v2661, 2
    %v2663 = vadd.f32 %v2661, %v2662
    %v2664 = vrot.slane %v2663, 1
    %v2665 = vadd.f32 %v2663, %v2664
    %v2666 = vrot.slane %v2492, 4
    %v2667 = vadd.f32 %v2492, %v2666
    %v2668 = vrot.slane %v2667, 2
    %v2669 = vadd.f32 %v2667, %v2668
    %v2670 = vrot.slane %v2669, 1
    %v2671 = vadd.f32 %v2669, %v2670
    %v2672 = vrot.slane %v2493, 4
    %v2673 = vadd.f32 %v2493, %v2672
    %v2674 = vrot.slane %v2673, 2
    %v2675 = vadd.f32 %v2673, %v2674
    %v2676 = vrot.slane %v2675, 1
    %v2677 = vadd.f32 %v2675, %v2676
    %v2678 = vrot.slane %v2494, 4
    %v2679 = vadd.f32 %v2494, %v2678
    %v2680 = vrot.slane %v2679, 2
    %v2681 = vadd.f32 %v2679, %v2680
    %v2682 = vrot.slane %v2681, 1
    %v2683 = vadd.f32 %v2681, %v2682
    %v2684 = vrot.slane %v2495, 4
    %v2685 = vadd.f32 %v2495, %v2684
    %v2686 = vrot.slane %v2685, 2
    %v2687 = vadd.f32 %v2685, %v2686
    %v2688 = vrot.slane %v2687, 1
    %v2689 = vadd.f32 %v2687, %v2688
    %v2690 = vrot.slane %v2496, 4
    %v2691 = vadd.f32 %v2496, %v2690
    %v2692 = vrot.slane %v2691, 2
    %v2693 = vadd.f32 %v2691, %v2692
    %v2694 = vrot.slane %v2693, 1
    %v2695 = vadd.f32 %v2693, %v2694
    %v2696 = vrot.slane %v2497, 4
    %v2697 = vadd.f32 %v2497, %v2696
    %v2698 = vrot.slane %v2697, 2
    %v2699 = vadd.f32 %v2697, %v2698
    %v2700 = vrot.slane %v2699, 1
    %v2701 = vadd.f32 %v2699, %v2700
    %v2702 = vrot.slane %v2498, 4
    %v2703 = vadd.f32 %v2498, %v2702
    %v2704 = vrot.slane %v2703, 2
    %v2705 = vadd.f32 %v2703, %v2704
    %v2706 = vrot.slane %v2705, 1
    %v2707 = vadd.f32 %v2705, %v2706
    %v2708 = vrot.slane %v2499, 4
    %v2709 = vadd.f32 %v2499, %v2708
    %v2710 = vrot.slane %v2709, 2
    %v2711 = vadd.f32 %v2709, %v2710
    %v2712 = vrot.slane %v2711, 1
    %v2713 = vadd.f32 %v2711, %v2712
    %v2714 = vrot.slane %v2500, 4
    %v2715 = vadd.f32 %v2500, %v2714
    %v2716 = vrot.slane %v2715, 2
    %v2717 = vadd.f32 %v2715, %v2716
    %v2718 = vrot.slane %v2717, 1
    %v2719 = vadd.f32 %v2717, %v2718
    %v2720 = vrot.slane %v2501, 4
    %v2721 = vadd.f32 %v2501, %v2720
    %v2722 = vrot.slane %v2721, 2
    %v2723 = vadd.f32 %v2721, %v2722
    %v2724 = vrot.slane %v2723, 1
    %v2725 = vadd.f32 %v2723, %v2724
    %v2726 = vrot.slane %v2502, 4
    %v2727 = vadd.f32 %v2502, %v2726
    %v2728 = vrot.slane %v2727, 2
    %v2729 = vadd.f32 %v2727, %v2728
    %v2730 = vrot.slane %v2729, 1
    %v2731 = vadd.f32 %v2729, %v2730
    %v2732 = vrot.slane %v2503, 4
    %v2733 = vadd.f32 %v2503, %v2732
    %v2734 = vrot.slane %v2733, 2
    %v2735 = vadd.f32 %v2733, %v2734
    %v2736 = vrot.slane %v2735, 1
    %v2737 = vadd.f32 %v2735, %v2736
    %v2738 = vrot.slane %v2504, 4
    %v2739 = vadd.f32 %v2504, %v2738
    %v2740 = vrot.slane %v2739, 2
    %v2741 = vadd.f32 %v2739, %v2740
    %v2742 = vrot.slane %v2741, 1
    %v2743 = vadd.f32 %v2741, %v2742
    %v2744 = vrot.slane %v2505, 4
    %v2745 = vadd.f32 %v2505, %v2744
    %v2746 = vrot.slane %v2745, 2
    %v2747 = vadd.f32 %v2745, %v2746
    %v2748 = vrot.slane %v2747, 1
    %v2749 = vadd.f32 %v2747, %v2748
    %v2750 = vrot.slane %v2506, 4
    %v2751 = vadd.f32 %v2506, %v2750
    %v2752 = vrot.slane %v2751, 2
    %v2753 = vadd.f32 %v2751, %v2752
    %v2754 = vrot.slane %v2753, 1
    %v2755 = vadd.f32 %v2753, %v2754
    %v2756 = vrot.slane %v2507, 4
    %v2757 = vadd.f32 %v2507, %v2756
    %v2758 = vrot.slane %v2757, 2
    %v2759 = vadd.f32 %v2757, %v2758
    %v2760 = vrot.slane %v2759, 1
    %v2761 = vadd.f32 %v2759, %v2760
    %v2762 = vrot.slane %v2508, 4
    %v2763 = vadd.f32 %v2508, %v2762
    %v2764 = vrot.slane %v2763, 2
    %v2765 = vadd.f32 %v2763, %v2764
    %v2766 = vrot.slane %v2765, 1
    %v2767 = vadd.f32 %v2765, %v2766
    %v2768 = vrot.slane %v2509, 4
    %v2769 = vadd.f32 %v2509, %v2768
    %v2770 = vrot.slane %v2769, 2
    %v2771 = vadd.f32 %v2769, %v2770
    %v2772 = vrot.slane %v2771, 1
    %v2773 = vadd.f32 %v2771, %v2772
    %v2774 = vrot.slane %v2510, 4
    %v2775 = vadd.f32 %v2510, %v2774
    %v2776 = vrot.slane %v2775, 2
    %v2777 = vadd.f32 %v2775, %v2776
    %v2778 = vrot.slane %v2777, 1
    %v2779 = vadd.f32 %v2777, %v2778
    %v2780 = vrot.slane %v2511, 4
    %v2781 = vadd.f32 %v2511, %v2780
    %v2782 = vrot.slane %v2781, 2
    %v2783 = vadd.f32 %v2781, %v2782
    %v2784 = vrot.slane %v2783, 1
    %v2785 = vadd.f32 %v2783, %v2784
    %v2786 = vrot.slane %v2512, 4
    %v2787 = vadd.f32 %v2512, %v2786
    %v2788 = vrot.slane %v2787, 2
    %v2789 = vadd.f32 %v2787, %v2788
    %v2790 = vrot.slane %v2789, 1
    %v2791 = vadd.f32 %v2789, %v2790
    %v2792 = vrot.slane %v2513, 4
    %v2793 = vadd.f32 %v2513, %v2792
    %v2794 = vrot.slane %v2793, 2
    %v2795 = vadd.f32 %v2793, %v2794
    %v2796 = vrot.slane %v2795, 1
    %v2797 = vadd.f32 %v2795, %v2796
    %v2798 = vrot.slane %v2514, 4
    %v2799 = vadd.f32 %v2514, %v2798
    %v2800 = vrot.slane %v2799, 2
    %v2801 = vadd.f32 %v2799, %v2800
    %v2802 = vrot.slane %v2801, 1
    %v2803 = vadd.f32 %v2801, %v2802
    %v2804 = vrot.slane %v2515, 4
    %v2805 = vadd.f32 %v2515, %v2804
    %v2806 = vrot.slane %v2805, 2
    %v2807 = vadd.f32 %v2805, %v2806
    %v2808 = vrot.slane %v2807, 1
    %v2809 = vadd.f32 %v2807, %v2808
    %v2810 = vrot.slane %v2516, 4
    %v2811 = vadd.f32 %v2516, %v2810
    %v2812 = vrot.slane %v2811, 2
    %v2813 = vadd.f32 %v2811, %v2812
    %v2814 = vrot.slane %v2813, 1
    %v2815 = vadd.f32 %v2813, %v2814
    %v2816 = vrot.slane %v2517, 4
    %v2817 = vadd.f32 %v2517, %v2816
    %v2818 = vrot.slane %v2817, 2
    %v2819 = vadd.f32 %v2817, %v2818
    %v2820 = vrot.slane %v2819, 1
    %v2821 = vadd.f32 %v2819, %v2820
    %v2822 = vrot.slane %v2518, 4
    %v2823 = vadd.f32 %v2518, %v2822
    %v2824 = vrot.slane %v2823, 2
    %v2825 = vadd.f32 %v2823, %v2824
    %v2826 = vrot.slane %v2825, 1
    %v2827 = vadd.f32 %v2825, %v2826
    %v2828 = vrot.slane %v2519, 4
    %v2829 = vadd.f32 %v2519, %v2828
    %v2830 = vrot.slane %v2829, 2
    %v2831 = vadd.f32 %v2829, %v2830
    %v2832 = vrot.slane %v2831, 1
    %v2833 = vadd.f32 %v2831, %v2832
    %v2834 = vrot.slane %v2520, 4
    %v2835 = vadd.f32 %v2520, %v2834
    %v2836 = vrot.slane %v2835, 2
    %v2837 = vadd.f32 %v2835, %v2836
    %v2838 = vrot.slane %v2837, 1
    %v2839 = vadd.f32 %v2837, %v2838
    %v2840 = vrot.slane %v2521, 4
    %v2841 = vadd.f32 %v2521, %v2840
    %v2842 = vrot.slane %v2841, 2
    %v2843 = vadd.f32 %v2841, %v2842
    %v2844 = vrot.slane %v2843, 1
    %v2845 = vadd.f32 %v2843, %v2844
    %v2846 = vrot.slane %v2522, 4
    %v2847 = vadd.f32 %v2522, %v2846
    %v2848 = vrot.slane %v2847, 2
    %v2849 = vadd.f32 %v2847, %v2848
    %v2850 = vrot.slane %v2849, 1
    %v2851 = vadd.f32 %v2849, %v2850
    %v2852 = vrot.slane %v2523, 4
    %v2853 = vadd.f32 %v2523, %v2852
    %v2854 = vrot.slane %v2853, 2
    %v2855 = vadd.f32 %v2853, %v2854
    %v2856 = vrot.slane %v2855, 1
    %v2857 = vadd.f32 %v2855, %v2856
    %v2858 = vrot.slane %v2524, 4
    %v2859 = vadd.f32 %v2524, %v2858
    %v2860 = vrot.slane %v2859, 2
    %v2861 = vadd.f32 %v2859, %v2860
    %v2862 = vrot.slane %v2861, 1
    %v2863 = vadd.f32 %v2861, %v2862
    %v2864 = vrot.slane %v2525, 4
    %v2865 = vadd.f32 %v2525, %v2864
    %v2866 = vrot.slane %v2865, 2
    %v2867 = vadd.f32 %v2865, %v2866
    %v2868 = vrot.slane %v2867, 1
    %v2869 = vadd.f32 %v2867, %v2868
    %v2870 = vrot.slane %v2526, 4
    %v2871 = vadd.f32 %v2526, %v2870
    %v2872 = vrot.slane %v2871, 2
    %v2873 = vadd.f32 %v2871, %v2872
    %v2874 = vrot.slane %v2873, 1
    %v2875 = vadd.f32 %v2873, %v2874
    %v2876 = vrot.slane %v2527, 4
    %v2877 = vadd.f32 %v2527, %v2876
    %v2878 = vrot.slane %v2877, 2
    %v2879 = vadd.f32 %v2877, %v2878
    %v2880 = vrot.slane %v2879, 1
    %v2881 = vadd.f32 %v2879, %v2880
    %v2882 = vrot.slane %v2528, 4
    %v2883 = vadd.f32 %v2528, %v2882
    %v2884 = vrot.slane %v2883, 2
    %v2885 = vadd.f32 %v2883, %v2884
    %v2886 = vrot.slane %v2885, 1
    %v2887 = vadd.f32 %v2885, %v2886
    %v2888 = vrot.slane %v2529, 4
    %v2889 = vadd.f32 %v2529, %v2888
    %v2890 = vrot.slane %v2889, 2
    %v2891 = vadd.f32 %v2889, %v2890
    %v2892 = vrot.slane %v2891, 1
    %v2893 = vadd.f32 %v2891, %v2892
    %v2894 = vrot.slane %v2530, 4
    %v2895 = vadd.f32 %v2530, %v2894
    %v2896 = vrot.slane %v2895, 2
    %v2897 = vadd.f32 %v2895, %v2896
    %v2898 = vrot.slane %v2897, 1
    %v2899 = vadd.f32 %v2897, %v2898
    %v2900 = vrot.slane %v2531, 4
    %v2901 = vadd.f32 %v2531, %v2900
    %v2902 = vrot.slane %v2901, 2
    %v2903 = vadd.f32 %v2901, %v2902
    %v2904 = vrot.slane %v2903, 1
    %v2905 = vadd.f32 %v2903, %v2904
    %v2906 = vrot.slane %v2532, 4
    %v2907 = vadd.f32 %v2532, %v2906
    %v2908 = vrot.slane %v2907, 2
    %v2909 = vadd.f32 %v2907, %v2908
    %v2910 = vrot.slane %v2909, 1
    %v2911 = vadd.f32 %v2909, %v2910
    %v2912 = vrot.slane %v2533, 4
    %v2913 = vadd.f32 %v2533, %v2912
    %v2914 = vrot.slane %v2913, 2
    %v2915 = vadd.f32 %v2913, %v2914
    %v2916 = vrot.slane %v2915, 1
    %v2917 = vadd.f32 %v2915, %v2916
    %v2982 = vsel %vm1415, %v2545, %v2539
    %v2983 = vsel %vm1417, %v2551, %v2982
    %v2984 = vsel %vm1419, %v2557, %v2983
    %v2985 = vsel %vm1421, %v2563, %v2984
    %v2986 = vsel %vm1423, %v2569, %v2985
    %v2987 = vsel %vm1425, %v2575, %v2986
    %v2988 = vsel %vm1427, %v2581, %v2987
    %v2989 = vsel %vm1415, %v2593, %v2587
    %v2990 = vsel %vm1417, %v2599, %v2989
    %v2991 = vsel %vm1419, %v2605, %v2990
    %v2992 = vsel %vm1421, %v2611, %v2991
    %v2993 = vsel %vm1423, %v2617, %v2992
    %v2994 = vsel %vm1425, %v2623, %v2993
    %v2995 = vsel %vm1427, %v2629, %v2994
    %v2996 = vsel %vm1415, %v2641, %v2635
    %v2997 = vsel %vm1417, %v2647, %v2996
    %v2998 = vsel %vm1419, %v2653, %v2997
    %v2999 = vsel %vm1421, %v2659, %v2998
    %v3000 = vsel %vm1423, %v2665, %v2999
    %v3001 = vsel %vm1425, %v2671, %v3000
    %v3002 = vsel %vm1427, %v2677, %v3001
    %v3003 = vsel %vm1415, %v2689, %v2683
    %v3004 = vsel %vm1417, %v2695, %v3003
    %v3005 = vsel %vm1419, %v2701, %v3004
    %v3006 = vsel %vm1421, %v2707, %v3005
    %v3007 = vsel %vm1423, %v2713, %v3006
    %v3008 = vsel %vm1425, %v2719, %v3007
    %v3009 = vsel %vm1427, %v2725, %v3008
    %v3010 = vsel %vm1415, %v2737, %v2731
    %v3011 = vsel %vm1417, %v2743, %v3010
    %v3012 = vsel %vm1419, %v2749, %v3011
    %v3013 = vsel %vm1421, %v2755, %v3012
    %v3014 = vsel %vm1423, %v2761, %v3013
    %v3015 = vsel %vm1425, %v2767, %v3014
    %v3016 = vsel %vm1427, %v2773, %v3015
    %v3017 = vsel %vm1415, %v2785, %v2779
    %v3018 = vsel %vm1417, %v2791, %v3017
    %v3019 = vsel %vm1419, %v2797, %v3018
    %v3020 = vsel %vm1421, %v2803, %v3019
    %v3021 = vsel %vm1423, %v2809, %v3020
    %v3022 = vsel %vm1425, %v2815, %v3021
    %v3023 = vsel %vm1427, %v2821, %v3022
    %v3024 = vsel %vm1415, %v2833, %v2827
    %v3025 = vsel %vm1417, %v2839, %v3024
    %v3026 = vsel %vm1419, %v2845, %v3025
    %v3027 = vsel %vm1421, %v2851, %v3026
    %v3028 = vsel %vm1423, %v2857, %v3027
    %v3029 = vsel %vm1425, %v2863, %v3028
    %v3030 = vsel %vm1427, %v2869, %v3029
    %v3031 = vsel %vm1415, %v2881, %v2875
    %v3032 = vsel %vm1417, %v2887, %v3031
    %v3033 = vsel %vm1419, %v2893, %v3032
    %v3034 = vsel %vm1421, %v2899, %v3033
    %v3035 = vsel %vm1423, %v2905, %v3034
    %v3036 = vsel %vm1425, %v2911, %v3035
    %v3037 = vsel %vm1427, %v2917, %v3036
    %v3046 = vsel %vm1343, %v2988, -1e+30
    %v3047 = vsel %vm1344, %v2995, -1e+30
    %v3048 = vsel %vm1345, %v3002, -1e+30
    %v3049 = vsel %vm1346, %v3009, -1e+30
    %v3050 = vsel %vm1347, %v3016, -1e+30
    %v3051 = vsel %vm1348, %v3023, -1e+30
    %v3052 = vsel %vm1349, %v3030, -1e+30
    %v3053 = vsel %vm1350, %v3037, -1e+30
    %v3054 = vrot.slane %v3046, 4
    %v3055 = vmax.f32 %v3046, %v3054
    %v3056 = vrot.slane %v3055, 2
    %v3057 = vmax.f32 %v3055, %v3056
    %v3058 = vrot.slane %v3057, 1
    %v3059 = vmax.f32 %v3057, %v3058
    %v3060 = vrot.slane %v3047, 4
    %v3061 = vmax.f32 %v3047, %v3060
    %v3062 = vrot.slane %v3061, 2
    %v3063 = vmax.f32 %v3061, %v3062
    %v3064 = vrot.slane %v3063, 1
    %v3065 = vmax.f32 %v3063, %v3064
    %v3066 = vrot.slane %v3048, 4
    %v3067 = vmax.f32 %v3048, %v3066
    %v3068 = vrot.slane %v3067, 2
    %v3069 = vmax.f32 %v3067, %v3068
    %v3070 = vrot.slane %v3069, 1
    %v3071 = vmax.f32 %v3069, %v3070
    %v3072 = vrot.slane %v3049, 4
    %v3073 = vmax.f32 %v3049, %v3072
    %v3074 = vrot.slane %v3073, 2
    %v3075 = vmax.f32 %v3073, %v3074
    %v3076 = vrot.slane %v3075, 1
    %v3077 = vmax.f32 %v3075, %v3076
    %v3078 = vrot.slane %v3050, 4
    %v3079 = vmax.f32 %v3050, %v3078
    %v3080 = vrot.slane %v3079, 2
    %v3081 = vmax.f32 %v3079, %v3080
    %v3082 = vrot.slane %v3081, 1
    %v3083 = vmax.f32 %v3081, %v3082
    %v3084 = vrot.slane %v3051, 4
    %v3085 = vmax.f32 %v3051, %v3084
    %v3086 = vrot.slane %v3085, 2
    %v3087 = vmax.f32 %v3085, %v3086
    %v3088 = vrot.slane %v3087, 1
    %v3089 = vmax.f32 %v3087, %v3088
    %v3090 = vrot.slane %v3052, 4
    %v3091 = vmax.f32 %v3052, %v3090
    %v3092 = vrot.slane %v3091, 2
    %v3093 = vmax.f32 %v3091, %v3092
    %v3094 = vrot.slane %v3093, 1
    %v3095 = vmax.f32 %v3093, %v3094
    %v3096 = vrot.slane %v3053, 4
    %v3097 = vmax.f32 %v3053, %v3096
    %v3098 = vrot.slane %v3097, 2
    %v3099 = vmax.f32 %v3097, %v3098
    %v3100 = vrot.slane %v3099, 1
    %v3101 = vmax.f32 %v3099, %v3100
    %v3102 = vsub.f32 %v3046, %v3059
    %v3103 = vsub.f32 %v3047, %v3065
    %v3104 = vsub.f32 %v3048, %v3071
    %v3105 = vsub.f32 %v3049, %v3077
    %v3106 = vsub.f32 %v3050, %v3083
    %v3107 = vsub.f32 %v3051, %v3089
    %v3108 = vsub.f32 %v3052, %v3095
    %v3109 = vsub.f32 %v3053, %v3101
    %v3110 = vmul.f32 %v3102, 1.442695
    %v3111 = vpow.pop %v3110
    %v3112 = vmul.f32 %v3103, 1.442695
    %v3113 = vpow.pop %v3112
    %v3114 = vmul.f32 %v3104, 1.442695
    %v3115 = vpow.pop %v3114
    %v3116 = vmul.f32 %v3105, 1.442695
    %v3117 = vpow.pop %v3116
    %v3118 = vmul.f32 %v3106, 1.442695
    %v3119 = vpow.pop %v3118
    %v3120 = vmul.f32 %v3107, 1.442695
    %v3121 = vpow.pop %v3120
    %v3122 = vmul.f32 %v3108, 1.442695
    %v3123 = vpow.pop %v3122
    %v3124 = vmul.f32 %v3109, 1.442695
    %v3125 = vpow.pop %v3124
    %v3126 = vrot.slane %v3111, 4
    %v3127 = vadd.f32 %v3111, %v3126
    %v3128 = vrot.slane %v3127, 2
    %v3129 = vadd.f32 %v3127, %v3128
    %v3130 = vrot.slane %v3129, 1
    %v3131 = vadd.f32 %v3129, %v3130
    %v3132 = vrot.slane %v3113, 4
    %v3133 = vadd.f32 %v3113, %v3132
    %v3134 = vrot.slane %v3133, 2
    %v3135 = vadd.f32 %v3133, %v3134
    %v3136 = vrot.slane %v3135, 1
    %v3137 = vadd.f32 %v3135, %v3136
    %v3138 = vrot.slane %v3115, 4
    %v3139 = vadd.f32 %v3115, %v3138
    %v3140 = vrot.slane %v3139, 2
    %v3141 = vadd.f32 %v3139, %v3140
    %v3142 = vrot.slane %v3141, 1
    %v3143 = vadd.f32 %v3141, %v3142
    %v3144 = vrot.slane %v3117, 4
    %v3145 = vadd.f32 %v3117, %v3144
    %v3146 = vrot.slane %v3145, 2
    %v3147 = vadd.f32 %v3145, %v3146
    %v3148 = vrot.slane %v3147, 1
    %v3149 = vadd.f32 %v3147, %v3148
    %v3150 = vrot.slane %v3119, 4
    %v3151 = vadd.f32 %v3119, %v3150
    %v3152 = vrot.slane %v3151, 2
    %v3153 = vadd.f32 %v3151, %v3152
    %v3154 = vrot.slane %v3153, 1
    %v3155 = vadd.f32 %v3153, %v3154
    %v3156 = vrot.slane %v3121, 4
    %v3157 = vadd.f32 %v3121, %v3156
    %v3158 = vrot.slane %v3157, 2
    %v3159 = vadd.f32 %v3157, %v3158
    %v3160 = vrot.slane %v3159, 1
    %v3161 = vadd.f32 %v3159, %v3160
    %v3162 = vrot.slane %v3123, 4
    %v3163 = vadd.f32 %v3123, %v3162
    %v3164 = vrot.slane %v3163, 2
    %v3165 = vadd.f32 %v3163, %v3164
    %v3166 = vrot.slane %v3165, 1
    %v3167 = vadd.f32 %v3165, %v3166
    %v3168 = vrot.slane %v3125, 4
    %v3169 = vadd.f32 %v3125, %v3168
    %v3170 = vrot.slane %v3169, 2
    %v3171 = vadd.f32 %v3169, %v3170
    %v3172 = vrot.slane %v3171, 1
    %v3173 = vadd.f32 %v3171, %v3172
    %v3174 = vrcp.pop %v3131
    %v3175 = vrcp.pop %v3137
    %v3176 = vrcp.pop %v3143
    %v3177 = vrcp.pop %v3149
    %v3178 = vrcp.pop %v3155
    %v3179 = vrcp.pop %v3161
    %v3180 = vrcp.pop %v3167
    %v3181 = vrcp.pop %v3173
    %v3182 = vmul.f32 %v3111, %v3174
    %v3183 = vmul.f32 %v3113, %v3175
    %v3184 = vmul.f32 %v3115, %v3176
    %v3185 = vmul.f32 %v3117, %v3177
    %v3186 = vmul.f32 %v3119, %v3178
    %v3187 = vmul.f32 %v3121, %v3179
    %v3188 = vmul.f32 %v3123, %v3180
    %v3189 = vmul.f32 %v3125, %v3181
    %v3198 = vcombine.high %v3182, %v3182
    %v3200 = vunpack.c.l.s4 1966171168
    %v3201 = vunpack.c.0.s8 %v3200
    %v3202 = vlaneseq
    %v3203 = vshrl.u32 %v3202, 7
    %v3204 = vsub.s32 %v3201, %v3203
    %v3205 = vrot.slane %v3182, %v3204
    %v3207 = vunpack.c.l.s4 1966171168
    %v3208 = vunpack.c.0.s8 %v3207
    %v3209 = vlaneseq
    %v3210 = vshrl.u32 %v3209, 7
    %v3211 = vsub.s32 %v3208, %v3210
    %v3212 = vrot.slane %v3198, %v3211
    %v3213 = vcombine.high %v3205, %v3205
    %v3214 = vcombine.high %v3212, %v3212
    %v3216 = vunpack.c.l.s4 1966171168
    %v3217 = vunpack.c.0.s8 %v3216
    %v3218 = vlaneseq
    %v3219 = vshrl.u32 %v3218, 7
    %v3220 = vsub.s32 %v3217, %v3219
    %v3221 = vrot.slane %v3205, %v3220
    %v3223 = vunpack.c.l.s4 1966171168
    %v3224 = vunpack.c.0.s8 %v3223
    %v3225 = vlaneseq
    %v3226 = vshrl.u32 %v3225, 7
    %v3227 = vsub.s32 %v3224, %v3226
    %v3228 = vrot.slane %v3212, %v3227
    %v3230 = vunpack.c.l.s4 1966171168
    %v3231 = vunpack.c.0.s8 %v3230
    %v3232 = vlaneseq
    %v3233 = vshrl.u32 %v3232, 7
    %v3234 = vsub.s32 %v3231, %v3233
    %v3235 = vrot.slane %v3213, %v3234
    %v3237 = vunpack.c.l.s4 1966171168
    %v3238 = vunpack.c.0.s8 %v3237
    %v3239 = vlaneseq
    %v3240 = vshrl.u32 %v3239, 7
    %v3241 = vsub.s32 %v3238, %v3240
    %v3242 = vrot.slane %v3214, %v3241
    %v3243 = vcombine.high %v3221, %v3221
    %v3244 = vcombine.high %v3228, %v3228
    %v3245 = vcombine.high %v3235, %v3235
    %v3246 = vcombine.high %v3242, %v3242
    %v3247 = vcombine.high %v3183, %v3183
    %v3249 = vunpack.c.l.s4 1966171168
    %v3250 = vunpack.c.0.s8 %v3249
    %v3251 = vlaneseq
    %v3252 = vshrl.u32 %v3251, 7
    %v3253 = vsub.s32 %v3250, %v3252
    %v3254 = vrot.slane %v3183, %v3253
    %v3256 = vunpack.c.l.s4 1966171168
    %v3257 = vunpack.c.0.s8 %v3256
    %v3258 = vlaneseq
    %v3259 = vshrl.u32 %v3258, 7
    %v3260 = vsub.s32 %v3257, %v3259
    %v3261 = vrot.slane %v3247, %v3260
    %v3262 = vcombine.high %v3254, %v3254
    %v3263 = vcombine.high %v3261, %v3261
    %v3265 = vunpack.c.l.s4 1966171168
    %v3266 = vunpack.c.0.s8 %v3265
    %v3267 = vlaneseq
    %v3268 = vshrl.u32 %v3267, 7
    %v3269 = vsub.s32 %v3266, %v3268
    %v3270 = vrot.slane %v3254, %v3269
    %v3272 = vunpack.c.l.s4 1966171168
    %v3273 = vunpack.c.0.s8 %v3272
    %v3274 = vlaneseq
    %v3275 = vshrl.u32 %v3274, 7
    %v3276 = vsub.s32 %v3273, %v3275
    %v3277 = vrot.slane %v3261, %v3276
    %v3279 = vunpack.c.l.s4 1966171168
    %v3280 = vunpack.c.0.s8 %v3279
    %v3281 = vlaneseq
    %v3282 = vshrl.u32 %v3281, 7
    %v3283 = vsub.s32 %v3280, %v3282
    %v3284 = vrot.slane %v3262, %v3283
    %v3286 = vunpack.c.l.s4 1966171168
    %v3287 = vunpack.c.0.s8 %v3286
    %v3288 = vlaneseq
    %v3289 = vshrl.u32 %v3288, 7
    %v3290 = vsub.s32 %v3287, %v3289
    %v3291 = vrot.slane %v3263, %v3290
    %v3292 = vcombine.high %v3270, %v3270
    %v3293 = vcombine.high %v3277, %v3277
    %v3294 = vcombine.high %v3284, %v3284
    %v3295 = vcombine.high %v3291, %v3291
    %v3296 = vcombine.high %v3184, %v3184
    %v3298 = vunpack.c.l.s4 1966171168
    %v3299 = vunpack.c.0.s8 %v3298
    %v3300 = vlaneseq
    %v3301 = vshrl.u32 %v3300, 7
    %v3302 = vsub.s32 %v3299, %v3301
    %v3303 = vrot.slane %v3184, %v3302
    %v3305 = vunpack.c.l.s4 1966171168
    %v3306 = vunpack.c.0.s8 %v3305
    %v3307 = vlaneseq
    %v3308 = vshrl.u32 %v3307, 7
    %v3309 = vsub.s32 %v3306, %v3308
    %v3310 = vrot.slane %v3296, %v3309
    %v3311 = vcombine.high %v3303, %v3303
    %v3312 = vcombine.high %v3310, %v3310
    %v3314 = vunpack.c.l.s4 1966171168
    %v3315 = vunpack.c.0.s8 %v3314
    %v3316 = vlaneseq
    %v3317 = vshrl.u32 %v3316, 7
    %v3318 = vsub.s32 %v3315, %v3317
    %v3319 = vrot.slane %v3303, %v3318
    %v3321 = vunpack.c.l.s4 1966171168
    %v3322 = vunpack.c.0.s8 %v3321
    %v3323 = vlaneseq
    %v3324 = vshrl.u32 %v3323, 7
    %v3325 = vsub.s32 %v3322, %v3324
    %v3326 = vrot.slane %v3310, %v3325
    %v3328 = vunpack.c.l.s4 1966171168
    %v3329 = vunpack.c.0.s8 %v3328
    %v3330 = vlaneseq
    %v3331 = vshrl.u32 %v3330, 7
    %v3332 = vsub.s32 %v3329, %v3331
    %v3333 = vrot.slane %v3311, %v3332
    %v3335 = vunpack.c.l.s4 1966171168
    %v3336 = vunpack.c.0.s8 %v3335
    %v3337 = vlaneseq
    %v3338 = vshrl.u32 %v3337, 7
    %v3339 = vsub.s32 %v3336, %v3338
    %v3340 = vrot.slane %v3312, %v3339
    %v3341 = vcombine.high %v3319, %v3319
    %v3342 = vcombine.high %v3326, %v3326
    %v3343 = vcombine.high %v3333, %v3333
    %v3344 = vcombine.high %v3340, %v3340
    %v3345 = vcombine.high %v3185, %v3185
    %v3347 = vunpack.c.l.s4 1966171168
    %v3348 = vunpack.c.0.s8 %v3347
    %v3349 = vlaneseq
    %v3350 = vshrl.u32 %v3349, 7
    %v3351 = vsub.s32 %v3348, %v3350
    %v3352 = vrot.slane %v3185, %v3351
    %v3354 = vunpack.c.l.s4 1966171168
    %v3355 = vunpack.c.0.s8 %v3354
    %v3356 = vlaneseq
    %v3357 = vshrl.u32 %v3356, 7
    %v3358 = vsub.s32 %v3355, %v3357
    %v3359 = vrot.slane %v3345, %v3358
    %v3360 = vcombine.high %v3352, %v3352
    %v3361 = vcombine.high %v3359, %v3359
    %v3363 = vunpack.c.l.s4 1966171168
    %v3364 = vunpack.c.0.s8 %v3363
    %v3365 = vlaneseq
    %v3366 = vshrl.u32 %v3365, 7
    %v3367 = vsub.s32 %v3364, %v3366
    %v3368 = vrot.slane %v3352, %v3367
    %v3370 = vunpack.c.l.s4 1966171168
    %v3371 = vunpack.c.0.s8 %v3370
    %v3372 = vlaneseq
    %v3373 = vshrl.u32 %v3372, 7
    %v3374 = vsub.s32 %v3371, %v3373
    %v3375 = vrot.slane %v3359, %v3374
    %v3377 = vunpack.c.l.s4 1966171168
    %v3378 = vunpack.c.0.s8 %v3377
    %v3379 = vlaneseq
    %v3380 = vshrl.u32 %v3379, 7
    %v3381 = vsub.s32 %v3378, %v3380
    %v3382 = vrot.slane %v3360, %v3381
    %v3384 = vunpack.c.l.s4 1966171168
    %v3385 = vunpack.c.0.s8 %v3384
    %v3386 = vlaneseq
    %v3387 = vshrl.u32 %v3386, 7
    %v3388 = vsub.s32 %v3385, %v3387
    %v3389 = vrot.slane %v3361, %v3388
    %v3390 = vcombine.high %v3368, %v3368
    %v3391 = vcombine.high %v3375, %v3375
    %v3392 = vcombine.high %v3382, %v3382
    %v3393 = vcombine.high %v3389, %v3389
    %v3394 = vcombine.high %v3186, %v3186
    %v3396 = vunpack.c.l.s4 1966171168
    %v3397 = vunpack.c.0.s8 %v3396
    %v3398 = vlaneseq
    %v3399 = vshrl.u32 %v3398, 7
    %v3400 = vsub.s32 %v3397, %v3399
    %v3401 = vrot.slane %v3186, %v3400
    %v3403 = vunpack.c.l.s4 1966171168
    %v3404 = vunpack.c.0.s8 %v3403
    %v3405 = vlaneseq
    %v3406 = vshrl.u32 %v3405, 7
    %v3407 = vsub.s32 %v3404, %v3406
    %v3408 = vrot.slane %v3394, %v3407
    %v3409 = vcombine.high %v3401, %v3401
    %v3410 = vcombine.high %v3408, %v3408
    %v3412 = vunpack.c.l.s4 1966171168
    %v3413 = vunpack.c.0.s8 %v3412
    %v3414 = vlaneseq
    %v3415 = vshrl.u32 %v3414, 7
    %v3416 = vsub.s32 %v3413, %v3415
    %v3417 = vrot.slane %v3401, %v3416
    %v3419 = vunpack.c.l.s4 1966171168
    %v3420 = vunpack.c.0.s8 %v3419
    %v3421 = vlaneseq
    %v3422 = vshrl.u32 %v3421, 7
    %v3423 = vsub.s32 %v3420, %v3422
    %v3424 = vrot.slane %v3408, %v3423
    %v3426 = vunpack.c.l.s4 1966171168
    %v3427 = vunpack.c.0.s8 %v3426
    %v3428 = vlaneseq
    %v3429 = vshrl.u32 %v3428, 7
    %v3430 = vsub.s32 %v3427, %v3429
    %v3431 = vrot.slane %v3409, %v3430
    %v3433 = vunpack.c.l.s4 1966171168
    %v3434 = vunpack.c.0.s8 %v3433
    %v3435 = vlaneseq
    %v3436 = vshrl.u32 %v3435, 7
    %v3437 = vsub.s32 %v3434, %v3436
    %v3438 = vrot.slane %v3410, %v3437
    %v3439 = vcombine.high %v3417, %v3417
    %v3440 = vcombine.high %v3424, %v3424
    %v3441 = vcombine.high %v3431, %v3431
    %v3442 = vcombine.high %v3438, %v3438
    %v3443 = vcombine.high %v3187, %v3187
    %v3445 = vunpack.c.l.s4 1966171168
    %v3446 = vunpack.c.0.s8 %v3445
    %v3447 = vlaneseq
    %v3448 = vshrl.u32 %v3447, 7
    %v3449 = vsub.s32 %v3446, %v3448
    %v3450 = vrot.slane %v3187, %v3449
    %v3452 = vunpack.c.l.s4 1966171168
    %v3453 = vunpack.c.0.s8 %v3452
    %v3454 = vlaneseq
    %v3455 = vshrl.u32 %v3454, 7
    %v3456 = vsub.s32 %v3453, %v3455
    %v3457 = vrot.slane %v3443, %v3456
    %v3458 = vcombine.high %v3450, %v3450
    %v3459 = vcombine.high %v3457, %v3457
    %v3461 = vunpack.c.l.s4 1966171168
    %v3462 = vunpack.c.0.s8 %v3461
    %v3463 = vlaneseq
    %v3464 = vshrl.u32 %v3463, 7
    %v3465 = vsub.s32 %v3462, %v3464
    %v3466 = vrot.slane %v3450, %v3465
    %v3468 = vunpack.c.l.s4 1966171168
    %v3469 = vunpack.c.0.s8 %v3468
    %v3470 = vlaneseq
    %v3471 = vshrl.u32 %v3470, 7
    %v3472 = vsub.s32 %v3469, %v3471
    %v3473 = vrot.slane %v3457, %v3472
    %v3475 = vunpack.c.l.s4 1966171168
    %v3476 = vunpack.c.0.s8 %v3475
    %v3477 = vlaneseq
    %v3478 = vshrl.u32 %v3477, 7
    %v3479 = vsub.s32 %v3476, %v3478
    %v3480 = vrot.slane %v3458, %v3479
    %v3482 = vunpack.c.l.s4 1966171168
    %v3483 = vunpack.c.0.s8 %v3482
    %v3484 = vlaneseq
    %v3485 = vshrl.u32 %v3484, 7
    %v3486 = vsub.s32 %v3483, %v3485
    %v3487 = vrot.slane %v3459, %v3486
    %v3488 = vcombine.high %v3466, %v3466
    %v3489 = vcombine.high %v3473, %v3473
    %v3490 = vcombine.high %v3480, %v3480
    %v3491 = vcombine.high %v3487, %v3487
    %v3492 = vcombine.high %v3188, %v3188
    %v3494 = vunpack.c.l.s4 1966171168
    %v3495 = vunpack.c.0.s8 %v3494
    %v3496 = vlaneseq
    %v3497 = vshrl.u32 %v3496, 7
    %v3498 = vsub.s32 %v3495, %v3497
    %v3499 = vrot.slane %v3188, %v3498
    %v3501 = vunpack.c.l.s4 1966171168
    %v3502 = vunpack.c.0.s8 %v3501
    %v3503 = vlaneseq
    %v3504 = vshrl.u32 %v3503, 7
    %v3505 = vsub.s32 %v3502, %v3504
    %v3506 = vrot.slane %v3492, %v3505
    %v3507 = vcombine.high %v3499, %v3499
    %v3508 = vcombine.high %v3506, %v3506
    %v3510 = vunpack.c.l.s4 1966171168
    %v3511 = vunpack.c.0.s8 %v3510
    %v3512 = vlaneseq
    %v3513 = vshrl.u32 %v3512, 7
    %v3514 = vsub.s32 %v3511, %v3513
    %v3515 = vrot.slane %v3499, %v3514
    %v3517 = vunpack.c.l.s4 1966171168
    %v3518 = vunpack.c.0.s8 %v3517
    %v3519 = vlaneseq
    %v3520 = vshrl.u32 %v3519, 7
    %v3521 = vsub.s32 %v3518, %v3520
    %v3522 = vrot.slane %v3506, %v3521
    %v3524 = vunpack.c.l.s4 1966171168
    %v3525 = vunpack.c.0.s8 %v3524
    %v3526 = vlaneseq
    %v3527 = vshrl.u32 %v3526, 7
    %v3528 = vsub.s32 %v3525, %v3527
    %v3529 = vrot.slane %v3507, %v3528
    %v3531 = vunpack.c.l.s4 1966171168
    %v3532 = vunpack.c.0.s8 %v3531
    %v3533 = vlaneseq
    %v3534 = vshrl.u32 %v3533, 7
    %v3535 = vsub.s32 %v3532, %v3534
    %v3536 = vrot.slane %v3508, %v3535
    %v3537 = vcombine.high %v3515, %v3515
    %v3538 = vcombine.high %v3522, %v3522
    %v3539 = vcombine.high %v3529, %v3529
    %v3540 = vcombine.high %v3536, %v3536
    %v3541 = vcombine.high %v3189, %v3189
    %v3543 = vunpack.c.l.s4 1966171168
    %v3544 = vunpack.c.0.s8 %v3543
    %v3545 = vlaneseq
    %v3546 = vshrl.u32 %v3545, 7
    %v3547 = vsub.s32 %v3544, %v3546
    %v3548 = vrot.slane %v3189, %v3547
    %v3550 = vunpack.c.l.s4 1966171168
    %v3551 = vunpack.c.0.s8 %v3550
    %v3552 = vlaneseq
    %v3553 = vshrl.u32 %v3552, 7
    %v3554 = vsub.s32 %v3551, %v3553
    %v3555 = vrot.slane %v3541, %v3554
    %v3556 = vcombine.high %v3548, %v3548
    %v3557 = vcombine.high %v3555, %v3555
    %v3559 = vunpack.c.l.s4 1966171168
    %v3560 = vunpack.c.0.s8 %v3559
    %v3561 = vlaneseq
    %v3562 = vshrl.u32 %v3561, 7
    %v3563 = vsub.s32 %v3560, %v3562
    %v3564 = vrot.slane %v3548, %v3563
    %v3566 = vunpack.c.l.s4 1966171168
    %v3567 = vunpack.c.0.s8 %v3566
    %v3568 = vlaneseq
    %v3569 = vshrl.u32 %v3568, 7
    %v3570 = vsub.s32 %v3567, %v3569
    %v3571 = vrot.slane %v3555, %v3570
    %v3573 = vunpack.c.l.s4 1966171168
    %v3574 = vunpack.c.0.s8 %v3573
    %v3575 = vlaneseq
    %v3576 = vshrl.u32 %v3575, 7
    %v3577 = vsub.s32 %v3574, %v3576
    %v3578 = vrot.slane %v3556, %v3577
    %v3580 = vunpack.c.l.s4 1966171168
    %v3581 = vunpack.c.0.s8 %v3580
    %v3582 = vlaneseq
    %v3583 = vshrl.u32 %v3582, 7
    %v3584 = vsub.s32 %v3581, %v3583
    %v3585 = vrot.slane %v3557, %v3584
    %v3586 = vcombine.high %v3564, %v3564
    %v3587 = vcombine.high %v3571, %v3571
    %v3588 = vcombine.high %v3578, %v3578
    %v3589 = vcombine.high %v3585, %v3585
    %v3590 = vlaneseq
    %v3591 = vshrl.u32 %v3590, 7
    %v3592 = vsub.s32 0, %v3591
    %v3593 = vrot.slane %v3221, %v3592
    %v3594 = vlaneseq
    %v3595 = vshrl.u32 %v3594, 7
    %v3596 = vsub.s32 0, %v3595
    %v3597 = vrot.slane %v3235, %v3596
    %v3598 = vlaneseq
    %v3599 = vshrl.u32 %v3598, 7
    %v3600 = vsub.s32 0, %v3599
    %v3601 = vrot.slane %v3243, %v3600
    %v3602 = vlaneseq
    %v3603 = vshrl.u32 %v3602, 7
    %v3604 = vsub.s32 0, %v3603
    %v3605 = vrot.slane %v3245, %v3604
    %v3606 = vlaneseq
    %v3607 = vshrl.u32 %v3606, 7
    %v3608 = vsub.s32 0, %v3607
    %v3609 = vrot.slane %v3228, %v3608
    %v3610 = vlaneseq
    %v3611 = vshrl.u32 %v3610, 7
    %v3612 = vsub.s32 0, %v3611
    %v3613 = vrot.slane %v3242, %v3612
    %v3614 = vlaneseq
    %v3615 = vshrl.u32 %v3614, 7
    %v3616 = vsub.s32 0, %v3615
    %v3617 = vrot.slane %v3244, %v3616
    %v3618 = vlaneseq
    %v3619 = vshrl.u32 %v3618, 7
    %v3620 = vsub.s32 0, %v3619
    %v3621 = vrot.slane %v3246, %v3620
    %v3622 = vlaneseq
    %v3623 = vshrl.u32 %v3622, 7
    %v3624 = vsub.s32 0, %v3623
    %v3625 = vrot.slane %v3270, %v3624
    %v3626 = vlaneseq
    %v3627 = vshrl.u32 %v3626, 7
    %v3628 = vsub.s32 0, %v3627
    %v3629 = vrot.slane %v3284, %v3628
    %v3630 = vlaneseq
    %v3631 = vshrl.u32 %v3630, 7
    %v3632 = vsub.s32 0, %v3631
    %v3633 = vrot.slane %v3292, %v3632
    %v3634 = vlaneseq
    %v3635 = vshrl.u32 %v3634, 7
    %v3636 = vsub.s32 0, %v3635
    %v3637 = vrot.slane %v3294, %v3636
    %v3638 = vlaneseq
    %v3639 = vshrl.u32 %v3638, 7
    %v3640 = vsub.s32 0, %v3639
    %v3641 = vrot.slane %v3277, %v3640
    %v3642 = vlaneseq
    %v3643 = vshrl.u32 %v3642, 7
    %v3644 = vsub.s32 0, %v3643
    %v3645 = vrot.slane %v3291, %v3644
    %v3646 = vlaneseq
    %v3647 = vshrl.u32 %v3646, 7
    %v3648 = vsub.s32 0, %v3647
    %v3649 = vrot.slane %v3293, %v3648
    %v3650 = vlaneseq
    %v3651 = vshrl.u32 %v3650, 7
    %v3652 = vsub.s32 0, %v3651
    %v3653 = vrot.slane %v3295, %v3652
    %v3654 = vlaneseq
    %v3655 = vshrl.u32 %v3654, 7
    %v3656 = vsub.s32 0, %v3655
    %v3657 = vrot.slane %v3319, %v3656
    %v3658 = vlaneseq
    %v3659 = vshrl.u32 %v3658, 7
    %v3660 = vsub.s32 0, %v3659
    %v3661 = vrot.slane %v3333, %v3660
    %v3662 = vlaneseq
    %v3663 = vshrl.u32 %v3662, 7
    %v3664 = vsub.s32 0, %v3663
    %v3665 = vrot.slane %v3341, %v3664
    %v3666 = vlaneseq
    %v3667 = vshrl.u32 %v3666, 7
    %v3668 = vsub.s32 0, %v3667
    %v3669 = vrot.slane %v3343, %v3668
    %v3670 = vlaneseq
    %v3671 = vshrl.u32 %v3670, 7
    %v3672 = vsub.s32 0, %v3671
    %v3673 = vrot.slane %v3326, %v3672
    %v3674 = vlaneseq
    %v3675 = vshrl.u32 %v3674, 7
    %v3676 = vsub.s32 0, %v3675
    %v3677 = vrot.slane %v3340, %v3676
    %v3678 = vlaneseq
    %v3679 = vshrl.u32 %v3678, 7
    %v3680 = vsub.s32 0, %v3679
    %v3681 = vrot.slane %v3342, %v3680
    %v3682 = vlaneseq
    %v3683 = vshrl.u32 %v3682, 7
    %v3684 = vsub.s32 0, %v3683
    %v3685 = vrot.slane %v3344, %v3684
    %v3686 = vlaneseq
    %v3687 = vshrl.u32 %v3686, 7
    %v3688 = vsub.s32 0, %v3687
    %v3689 = vrot.slane %v3368, %v3688
    %v3690 = vlaneseq
    %v3691 = vshrl.u32 %v3690, 7
    %v3692 = vsub.s32 0, %v3691
    %v3693 = vrot.slane %v3382, %v3692
    %v3694 = vlaneseq
    %v3695 = vshrl.u32 %v3694, 7
    %v3696 = vsub.s32 0, %v3695
    %v3697 = vrot.slane %v3390, %v3696
    %v3698 = vlaneseq
    %v3699 = vshrl.u32 %v3698, 7
    %v3700 = vsub.s32 0, %v3699
    %v3701 = vrot.slane %v3392, %v3700
    %v3702 = vlaneseq
    %v3703 = vshrl.u32 %v3702, 7
    %v3704 = vsub.s32 0, %v3703
    %v3705 = vrot.slane %v3375, %v3704
    %v3706 = vlaneseq
    %v3707 = vshrl.u32 %v3706, 7
    %v3708 = vsub.s32 0, %v3707
    %v3709 = vrot.slane %v3389, %v3708
    %v3710 = vlaneseq
    %v3711 = vshrl.u32 %v3710, 7
    %v3712 = vsub.s32 0, %v3711
    %v3713 = vrot.slane %v3391, %v3712
    %v3714 = vlaneseq
    %v3715 = vshrl.u32 %v3714, 7
    %v3716 = vsub.s32 0, %v3715
    %v3717 = vrot.slane %v3393, %v3716
    %v3718 = vlaneseq
    %v3719 = vshrl.u32 %v3718, 7
    %v3720 = vsub.s32 0, %v3719
    %v3721 = vrot.slane %v3417, %v3720
    %v3722 = vlaneseq
    %v3723 = vshrl.u32 %v3722, 7
    %v3724 = vsub.s32 0, %v3723
    %v3725 = vrot.slane %v3431, %v3724
    %v3726 = vlaneseq
    %v3727 = vshrl.u32 %v3726, 7
    %v3728 = vsub.s32 0, %v3727
    %v3729 = vrot.slane %v3439, %v3728
    %v3730 = vlaneseq
    %v3731 = vshrl.u32 %v3730, 7
    %v3732 = vsub.s32 0, %v3731
    %v3733 = vrot.slane %v3441, %v3732
    %v3734 = vlaneseq
    %v3735 = vshrl.u32 %v3734, 7
    %v3736 = vsub.s32 0, %v3735
    %v3737 = vrot.slane %v3424, %v3736
    %v3738 = vlaneseq
    %v3739 = vshrl.u32 %v3738, 7
    %v3740 = vsub.s32 0, %v3739
    %v3741 = vrot.slane %v3438, %v3740
    %v3742 = vlaneseq
    %v3743 = vshrl.u32 %v3742, 7
    %v3744 = vsub.s32 0, %v3743
    %v3745 = vrot.slane %v3440, %v3744
    %v3746 = vlaneseq
    %v3747 = vshrl.u32 %v3746, 7
    %v3748 = vsub.s32 0, %v3747
    %v3749 = vrot.slane %v3442, %v3748
    %v3750 = vlaneseq
    %v3751 = vshrl.u32 %v3750, 7
    %v3752 = vsub.s32 0, %v3751
    %v3753 = vrot.slane %v3466, %v3752
    %v3754 = vlaneseq
    %v3755 = vshrl.u32 %v3754, 7
    %v3756 = vsub.s32 0, %v3755
    %v3757 = vrot.slane %v3480, %v3756
    %v3758 = vlaneseq
    %v3759 = vshrl.u32 %v3758, 7
    %v3760 = vsub.s32 0, %v3759
    %v3761 = vrot.slane %v3488, %v3760
    %v3762 = vlaneseq
    %v3763 = vshrl.u32 %v3762, 7
    %v3764 = vsub.s32 0, %v3763
    %v3765 = vrot.slane %v3490, %v3764
    %v3766 = vlaneseq
    %v3767 = vshrl.u32 %v3766, 7
    %v3768 = vsub.s32 0, %v3767
    %v3769 = vrot.slane %v3473, %v3768
    %v3770 = vlaneseq
    %v3771 = vshrl.u32 %v3770, 7
    %v3772 = vsub.s32 0, %v3771
    %v3773 = vrot.slane %v3487, %v3772
    %v3774 = vlaneseq
    %v3775 = vshrl.u32 %v3774, 7
    %v3776 = vsub.s32 0, %v3775
    %v3777 = vrot.slane %v3489, %v3776
    %v3778 = vlaneseq
    %v3779 = vshrl.u32 %v3778, 7
    %v3780 = vsub.s32 0, %v3779
    %v3781 = vrot.slane %v3491, %v3780
    %v3782 = vlaneseq
    %v3783 = vshrl.u32 %v3782, 7
    %v3784 = vsub.s32 0, %v3783
    %v3785 = vrot.slane %v3515, %v3784
    %v3786 = vlaneseq
    %v3787 = vshrl.u32 %v3786, 7
    %v3788 = vsub.s32 0, %v3787
    %v3789 = vrot.slane %v3529, %v3788
    %v3790 = vlaneseq
    %v3791 = vshrl.u32 %v3790, 7
    %v3792 = vsub.s32 0, %v3791
    %v3793 = vrot.slane %v3537, %v3792
    %v3794 = vlaneseq
    %v3795 = vshrl.u32 %v3794, 7
    %v3796 = vsub.s32 0, %v3795
    %v3797 = vrot.slane %v3539, %v3796
    %v3798 = vlaneseq
    %v3799 = vshrl.u32 %v3798, 7
    %v3800 = vsub.s32 0, %v3799
    %v3801 = vrot.slane %v3522, %v3800
    %v3802 = vlaneseq
    %v3803 = vshrl.u32 %v3802, 7
    %v3804 = vsub.s32 0, %v3803
    %v3805 = vrot.slane %v3536, %v3804
    %v3806 = vlaneseq
    %v3807 = vshrl.u32 %v3806, 7
    %v3808 = vsub.s32 0, %v3807
    %v3809 = vrot.slane %v3538, %v3808
    %v3810 = vlaneseq
    %v3811 = vshrl.u32 %v3810, 7
    %v3812 = vsub.s32 0, %v3811
    %v3813 = vrot.slane %v3540, %v3812
    %v3814 = vlaneseq
    %v3815 = vshrl.u32 %v3814, 7
    %v3816 = vsub.s32 0, %v3815
    %v3817 = vrot.slane %v3564, %v3816
    %v3818 = vlaneseq
    %v3819 = vshrl.u32 %v3818, 7
    %v3820 = vsub.s32 0, %v3819
    %v3821 = vrot.slane %v3578, %v3820
    %v3822 = vlaneseq
    %v3823 = vshrl.u32 %v3822, 7
    %v3824 = vsub.s32 0, %v3823
    %v3825 = vrot.slane %v3586, %v3824
    %v3826 = vlaneseq
    %v3827 = vshrl.u32 %v3826, 7
    %v3828 = vsub.s32 0, %v3827
    %v3829 = vrot.slane %v3588, %v3828
    %v3830 = vlaneseq
    %v3831 = vshrl.u32 %v3830, 7
    %v3832 = vsub.s32 0, %v3831
    %v3833 = vrot.slane %v3571, %v3832
    %v3834 = vlaneseq
    %v3835 = vshrl.u32 %v3834, 7
    %v3836 = vsub.s32 0, %v3835
    %v3837 = vrot.slane %v3585, %v3836
    %v3838 = vlaneseq
    %v3839 = vshrl.u32 %v3838, 7
    %v3840 = vsub.s32 0, %v3839
    %v3841 = vrot.slane %v3587, %v3840
    %v3842 = vlaneseq
    %v3843 = vshrl.u32 %v3842, 7
    %v3844 = vsub.s32 0, %v3843
    %v3845 = vrot.slane %v3589, %v3844
    %v3910 = vmul.f32 %v3593, %v180
    %v3911 = vmul.f32 %v3597, %v278
    %v3912 = vmul.f32 %v3601, %v376
    %v3913 = vmul.f32 %v3605, %v474
    %v3914 = vmul.f32 %v3609, %v572
    %v3915 = vmul.f32 %v3613, %v670
    %v3916 = vmul.f32 %v3617, %v768
    %v3917 = vmul.f32 %v3621, %v866
    %v3918 = vmul.f32 %v3625, %v180
    %v3919 = vmul.f32 %v3629, %v278
    %v3920 = vmul.f32 %v3633, %v376
    %v3921 = vmul.f32 %v3637, %v474
    %v3922 = vmul.f32 %v3641, %v572
    %v3923 = vmul.f32 %v3645, %v670
    %v3924 = vmul.f32 %v3649, %v768
    %v3925 = vmul.f32 %v3653, %v866
    %v3926 = vmul.f32 %v3657, %v180
    %v3927 = vmul.f32 %v3661, %v278
    %v3928 = vmul.f32 %v3665, %v376
    %v3929 = vmul.f32 %v3669, %v474
    %v3930 = vmul.f32 %v3673, %v572
    %v3931 = vmul.f32 %v3677, %v670
    %v3932 = vmul.f32 %v3681, %v768
    %v3933 = vmul.f32 %v3685, %v866
    %v3934 = vmul.f32 %v3689, %v180
    %v3935 = vmul.f32 %v3693, %v278
    %v3936 = vmul.f32 %v3697, %v376
    %v3937 = vmul.f32 %v3701, %v474
    %v3938 = vmul.f32 %v3705, %v572
    %v3939 = vmul.f32 %v3709, %v670
    %v3940 = vmul.f32 %v3713, %v768
    %v3941 = vmul.f32 %v3717, %v866
    %v3942 = vmul.f32 %v3721, %v180
    %v3943 = vmul.f32 %v3725, %v278
    %v3944 = vmul.f32 %v3729, %v376
    %v3945 = vmul.f32 %v3733, %v474
    %v3946 = vmul.f32 %v3737, %v572
    %v3947 = vmul.f32 %v3741, %v670
    %v3948 = vmul.f32 %v3745, %v768
    %v3949 = vmul.f32 %v3749, %v866
    %v3950 = vmul.f32 %v3753, %v180
    %v3951 = vmul.f32 %v3757, %v278
    %v3952 = vmul.f32 %v3761, %v376
    %v3953 = vmul.f32 %v3765, %v474
    %v3954 = vmul.f32 %v3769, %v572
    %v3955 = vmul.f32 %v3773, %v670
    %v3956 = vmul.f32 %v3777, %v768
    %v3957 = vmul.f32 %v3781, %v866
    %v3958 = vmul.f32 %v3785, %v180
    %v3959 = vmul.f32 %v3789, %v278
    %v3960 = vmul.f32 %v3793, %v376
    %v3961 = vmul.f32 %v3797, %v474
    %v3962 = vmul.f32 %v3801, %v572
    %v3963 = vmul.f32 %v3805, %v670
    %v3964 = vmul.f32 %v3809, %v768
    %v3965 = vmul.f32 %v3813, %v866
    %v3966 = vmul.f32 %v3817, %v180
    %v3967 = vmul.f32 %v3821, %v278
    %v3968 = vmul.f32 %v3825, %v376
    %v3969 = vmul.f32 %v3829, %v474
    %v3970 = vmul.f32 %v3833, %v572
    %v3971 = vmul.f32 %v3837, %v670
    %v3972 = vmul.f32 %v3841, %v768
    %v3973 = vmul.f32 %v3845, %v866
    %v3974 = vadd.f32 %v3910, %v3911
    %v3975 = vadd.f32 %v3974, %v3912
    %v3976 = vadd.f32 %v3975, %v3913
    %v3977 = vadd.f32 %v3976, %v3914
    %v3978 = vadd.f32 %v3977, %v3915
    %v3979 = vadd.f32 %v3978, %v3916
    %v3980 = vadd.f32 %v3979, %v3917
    %v3981 = vadd.f32 %v3918, %v3919
    %v3982 = vadd.f32 %v3981, %v3920
    %v3983 = vadd.f32 %v3982, %v3921
    %v3984 = vadd.f32 %v3983, %v3922
    %v3985 = vadd.f32 %v3984, %v3923
    %v3986 = vadd.f32 %v3985, %v3924
    %v3987 = vadd.f32 %v3986, %v3925
    %v3988 = vadd.f32 %v3926, %v3927
    %v3989 = vadd.f32 %v3988, %v3928
    %v3990 = vadd.f32 %v3989, %v3929
    %v3991 = vadd.f32 %v3990, %v3930
    %v3992 = vadd.f32 %v3991, %v3931
    %v3993 = vadd.f32 %v3992, %v3932
    %v3994 = vadd.f32 %v3993, %v3933
    %v3995 = vadd.f32 %v3934, %v3935
    %v3996 = vadd.f32 %v3995, %v3936
    %v3997 = vadd.f32 %v3996, %v3937
    %v3998 = vadd.f32 %v3997, %v3938
    %v3999 = vadd.f32 %v3998, %v3939
    %v4000 = vadd.f32 %v3999, %v3940
    %v4001 = vadd.f32 %v4000, %v3941
    %v4002 = vadd.f32 %v3942, %v3943
    %v4003 = vadd.f32 %v4002, %v3944
    %v4004 = vadd.f32 %v4003, %v3945
    %v4005 = vadd.f32 %v4004, %v3946
    %v4006 = vadd.f32 %v4005, %v3947
    %v4007 = vadd.f32 %v4006, %v3948
    %v4008 = vadd.f32 %v4007, %v3949
    %v4009 = vadd.f32 %v3950, %v3951
    %v4010 = vadd.f32 %v4009, %v3952
    %v4011 = vadd.f32 %v4010, %v3953
    %v4012 = vadd.f32 %v4011, %v3954
    %v4013 = vadd.f32 %v4012, %v3955
    %v4014 = vadd.f32 %v4013, %v3956
    %v4015 = vadd.f32 %v4014, %v3957
    %v4016 = vadd.f32 %v3958, %v3959
    %v4017 = vadd.f32 %v4016, %v3960
    %v4018 = vadd.f32 %v4017, %v3961
    %v4019 = vadd.f32 %v4018, %v3962
    %v4020 = vadd.f32 %v4019, %v3963
    %v4021 = vadd.f32 %v4020, %v3964
    %v4022 = vadd.f32 %v4021, %v3965
    %v4023 = vadd.f32 %v3966, %v3967
    %v4024 = vadd.f32 %v4023, %v3968
    %v4025 = vadd.f32 %v4024, %v3969
    %v4026 = vadd.f32 %v4025, %v3970
    %v4027 = vadd.f32 %v4026, %v3971
    %v4028 = vadd.f32 %v4027, %v3972
    %v4029 = vadd.f32 %v4028, %v3973
    %v4030 = vmul.f32 %v153, %v169
    %v4031 = vmul.f32 %v153, %v267
    %v4032 = vmul.f32 %v153, %v365
    %v4033 = vmul.f32 %v153, %v463
    %v4034 = vmul.f32 %v153, %v561
    %v4035 = vmul.f32 %v153, %v659
    %v4036 = vmul.f32 %v153, %v757
    %v4037 = vmul.f32 %v153, %v855
    %v4038 = vmul.f32 %v251, %v169
    %v4039 = vmul.f32 %v251, %v267
    %v4040 = vmul.f32 %v251, %v365
    %v4041 = vmul.f32 %v251, %v463
    %v4042 = vmul.f32 %v251, %v561
    %v4043 = vmul.f32 %v251, %v659
    %v4044 = vmul.f32 %v251, %v757
    %v4045 = vmul.f32 %v251, %v855
    %v4046 = vmul.f32 %v349, %v169
    %v4047 = vmul.f32 %v349, %v267
    %v4048 = vmul.f32 %v349, %v365
    %v4049 = vmul.f32 %v349, %v463
    %v4050 = vmul.f32 %v349, %v561
    %v4051 = vmul.f32 %v349, %v659
    %v4052 = vmul.f32 %v349, %v757
    %v4053 = vmul.f32 %v349, %v855
    %v4054 = vmul.f32 %v447, %v169
    %v4055 = vmul.f32 %v447, %v267
    %v4056 = vmul.f32 %v447, %v365
    %v4057 = vmul.f32 %v447, %v463
    %v4058 = vmul.f32 %v447, %v561
    %v4059 = vmul.f32 %v447, %v659
    %v4060 = vmul.f32 %v447, %v757
    %v4061 = vmul.f32 %v447, %v855
    %v4062 = vmul.f32 %v545, %v169
    %v4063 = vmul.f32 %v545, %v267
    %v4064 = vmul.f32 %v545, %v365
    %v4065 = vmul.f32 %v545, %v463
    %v4066 = vmul.f32 %v545, %v561
    %v4067 = vmul.f32 %v545, %v659
    %v4068 = vmul.f32 %v545, %v757
    %v4069 = vmul.f32 %v545, %v855
    %v4070 = vmul.f32 %v643, %v169
    %v4071 = vmul.f32 %v643, %v267
    %v4072 = vmul.f32 %v643, %v365
    %v4073 = vmul.f32 %v643, %v463
    %v4074 = vmul.f32 %v643, %v561
    %v4075 = vmul.f32 %v643, %v659
    %v4076 = vmul.f32 %v643, %v757
    %v4077 = vmul.f32 %v643, %v855
    %v4078 = vmul.f32 %v741, %v169
    %v4079 = vmul.f32 %v741, %v267
    %v4080 = vmul.f32 %v741, %v365
    %v4081 = vmul.f32 %v741, %v463
    %v4082 = vmul.f32 %v741, %v561
    %v4083 = vmul.f32 %v741, %v659
    %v4084 = vmul.f32 %v741, %v757
    %v4085 = vmul.f32 %v741, %v855
    %v4086 = vmul.f32 %v839, %v169
    %v4087 = vmul.f32 %v839, %v267
    %v4088 = vmul.f32 %v839, %v365
    %v4089 = vmul.f32 %v839, %v463
    %v4090 = vmul.f32 %v839, %v561
    %v4091 = vmul.f32 %v839, %v659
    %v4092 = vmul.f32 %v839, %v757
    %v4093 = vmul.f32 %v839, %v855
    %v4094 = vrot.slane %v4030, 4
    %v4095 = vadd.f32 %v4030, %v4094
    %v4096 = vrot.slane %v4095, 2
    %v4097 = vadd.f32 %v4095, %v4096
    %v4098 = vrot.slane %v4097, 1
    %v4099 = vadd.f32 %v4097, %v4098
    %v4100 = vrot.slane %v4031, 4
    %v4101 = vadd.f32 %v4031, %v4100
    %v4102 = vrot.slane %v4101, 2
    %v4103 = vadd.f32 %v4101, %v4102
    %v4104 = vrot.slane %v4103, 1
    %v4105 = vadd.f32 %v4103, %v4104
    %v4106 = vrot.slane %v4032, 4
    %v4107 = vadd.f32 %v4032, %v4106
    %v4108 = vrot.slane %v4107, 2
    %v4109 = vadd.f32 %v4107, %v4108
    %v4110 = vrot.slane %v4109, 1
    %v4111 = vadd.f32 %v4109, %v4110
    %v4112 = vrot.slane %v4033, 4
    %v4113 = vadd.f32 %v4033, %v4112
    %v4114 = vrot.slane %v4113, 2
    %v4115 = vadd.f32 %v4113, %v4114
    %v4116 = vrot.slane %v4115, 1
    %v4117 = vadd.f32 %v4115, %v4116
    %v4118 = vrot.slane %v4034, 4
    %v4119 = vadd.f32 %v4034, %v4118
    %v4120 = vrot.slane %v4119, 2
    %v4121 = vadd.f32 %v4119, %v4120
    %v4122 = vrot.slane %v4121, 1
    %v4123 = vadd.f32 %v4121, %v4122
    %v4124 = vrot.slane %v4035, 4
    %v4125 = vadd.f32 %v4035, %v4124
    %v4126 = vrot.slane %v4125, 2
    %v4127 = vadd.f32 %v4125, %v4126
    %v4128 = vrot.slane %v4127, 1
    %v4129 = vadd.f32 %v4127, %v4128
    %v4130 = vrot.slane %v4036, 4
    %v4131 = vadd.f32 %v4036, %v4130
    %v4132 = vrot.slane %v4131, 2
    %v4133 = vadd.f32 %v4131, %v4132
    %v4134 = vrot.slane %v4133, 1
    %v4135 = vadd.f32 %v4133, %v4134
    %v4136 = vrot.slane %v4037, 4
    %v4137 = vadd.f32 %v4037, %v4136
    %v4138 = vrot.slane %v4137, 2
    %v4139 = vadd.f32 %v4137, %v4138
    %v4140 = vrot.slane %v4139, 1
    %v4141 = vadd.f32 %v4139, %v4140
    %v4142 = vrot.slane %v4038, 4
    %v4143 = vadd.f32 %v4038, %v4142
    %v4144 = vrot.slane %v4143, 2
    %v4145 = vadd.f32 %v4143, %v4144
    %v4146 = vrot.slane %v4145, 1
    %v4147 = vadd.f32 %v4145, %v4146
    %v4148 = vrot.slane %v4039, 4
    %v4149 = vadd.f32 %v4039, %v4148
    %v4150 = vrot.slane %v4149, 2
    %v4151 = vadd.f32 %v4149, %v4150
    %v4152 = vrot.slane %v4151, 1
    %v4153 = vadd.f32 %v4151, %v4152
    %v4154 = vrot.slane %v4040, 4
    %v4155 = vadd.f32 %v4040, %v4154
    %v4156 = vrot.slane %v4155, 2
    %v4157 = vadd.f32 %v4155, %v4156
    %v4158 = vrot.slane %v4157, 1
    %v4159 = vadd.f32 %v4157, %v4158
    %v4160 = vrot.slane %v4041, 4
    %v4161 = vadd.f32 %v4041, %v4160
    %v4162 = vrot.slane %v4161, 2
    %v4163 = vadd.f32 %v4161, %v4162
    %v4164 = vrot.slane %v4163, 1
    %v4165 = vadd.f32 %v4163, %v4164
    %v4166 = vrot.slane %v4042, 4
    %v4167 = vadd.f32 %v4042, %v4166
    %v4168 = vrot.slane %v4167, 2
    %v4169 = vadd.f32 %v4167, %v4168
    %v4170 = vrot.slane %v4169, 1
    %v4171 = vadd.f32 %v4169, %v4170
    %v4172 = vrot.slane %v4043, 4
    %v4173 = vadd.f32 %v4043, %v4172
    %v4174 = vrot.slane %v4173, 2
    %v4175 = vadd.f32 %v4173, %v4174
    %v4176 = vrot.slane %v4175, 1
    %v4177 = vadd.f32 %v4175, %v4176
    %v4178 = vrot.slane %v4044, 4
    %v4179 = vadd.f32 %v4044, %v4178
    %v4180 = vrot.slane %v4179, 2
    %v4181 = vadd.f32 %v4179, %v4180
    %v4182 = vrot.slane %v4181, 1
    %v4183 = vadd.f32 %v4181, %v4182
    %v4184 = vrot.slane %v4045, 4
    %v4185 = vadd.f32 %v4045, %v4184
    %v4186 = vrot.slane %v4185, 2
    %v4187 = vadd.f32 %v4185, %v4186
    %v4188 = vrot.slane %v4187, 1
    %v4189 = vadd.f32 %v4187, %v4188
    %v4190 = vrot.slane %v4046, 4
    %v4191 = vadd.f32 %v4046, %v4190
    %v4192 = vrot.slane %v4191, 2
    %v4193 = vadd.f32 %v4191, %v4192
    %v4194 = vrot.slane %v4193, 1
    %v4195 = vadd.f32 %v4193, %v4194
    %v4196 = vrot.slane %v4047, 4
    %v4197 = vadd.f32 %v4047, %v4196
    %v4198 = vrot.slane %v4197, 2
    %v4199 = vadd.f32 %v4197, %v4198
    %v4200 = vrot.slane %v4199, 1
    %v4201 = vadd.f32 %v4199, %v4200
    %v4202 = vrot.slane %v4048, 4
    %v4203 = vadd.f32 %v4048, %v4202
    %v4204 = vrot.slane %v4203, 2
    %v4205 = vadd.f32 %v4203, %v4204
    %v4206 = vrot.slane %v4205, 1
    %v4207 = vadd.f32 %v4205, %v4206
    %v4208 = vrot.slane %v4049, 4
    %v4209 = vadd.f32 %v4049, %v4208
    %v4210 = vrot.slane %v4209, 2
    %v4211 = vadd.f32 %v4209, %v4210
    %v4212 = vrot.slane %v4211, 1
    %v4213 = vadd.f32 %v4211, %v4212
    %v4214 = vrot.slane %v4050, 4
    %v4215 = vadd.f32 %v4050, %v4214
    %v4216 = vrot.slane %v4215, 2
    %v4217 = vadd.f32 %v4215, %v4216
    %v4218 = vrot.slane %v4217, 1
    %v4219 = vadd.f32 %v4217, %v4218
    %v4220 = vrot.slane %v4051, 4
    %v4221 = vadd.f32 %v4051, %v4220
    %v4222 = vrot.slane %v4221, 2
    %v4223 = vadd.f32 %v4221, %v4222
    %v4224 = vrot.slane %v4223, 1
    %v4225 = vadd.f32 %v4223, %v4224
    %v4226 = vrot.slane %v4052, 4
    %v4227 = vadd.f32 %v4052, %v4226
    %v4228 = vrot.slane %v4227, 2
    %v4229 = vadd.f32 %v4227, %v4228
    %v4230 = vrot.slane %v4229, 1
    %v4231 = vadd.f32 %v4229, %v4230
    %v4232 = vrot.slane %v4053, 4
    %v4233 = vadd.f32 %v4053, %v4232
    %v4234 = vrot.slane %v4233, 2
    %v4235 = vadd.f32 %v4233, %v4234
    %v4236 = vrot.slane %v4235, 1
    %v4237 = vadd.f32 %v4235, %v4236
    %v4238 = vrot.slane %v4054, 4
    %v4239 = vadd.f32 %v4054, %v4238
    %v4240 = vrot.slane %v4239, 2
    %v4241 = vadd.f32 %v4239, %v4240
    %v4242 = vrot.slane %v4241, 1
    %v4243 = vadd.f32 %v4241, %v4242
    %v4244 = vrot.slane %v4055, 4
    %v4245 = vadd.f32 %v4055, %v4244
    %v4246 = vrot.slane %v4245, 2
    %v4247 = vadd.f32 %v4245, %v4246
    %v4248 = vrot.slane %v4247, 1
    %v4249 = vadd.f32 %v4247, %v4248
    %v4250 = vrot.slane %v4056, 4
    %v4251 = vadd.f32 %v4056, %v4250
    %v4252 = vrot.slane %v4251, 2
    %v4253 = vadd.f32 %v4251, %v4252
    %v4254 = vrot.slane %v4253, 1
    %v4255 = vadd.f32 %v4253, %v4254
    %v4256 = vrot.slane %v4057, 4
    %v4257 = vadd.f32 %v4057, %v4256
    %v4258 = vrot.slane %v4257, 2
    %v4259 = vadd.f32 %v4257, %v4258
    %v4260 = vrot.slane %v4259, 1
    %v4261 = vadd.f32 %v4259, %v4260
    %v4262 = vrot.slane %v4058, 4
    %v4263 = vadd.f32 %v4058, %v4262
    %v4264 = vrot.slane %v4263, 2
    %v4265 = vadd.f32 %v4263, %v4264
    %v4266 = vrot.slane %v4265, 1
    %v4267 = vadd.f32 %v4265, %v4266
    %v4268 = vrot.slane %v4059, 4
    %v4269 = vadd.f32 %v4059, %v4268
    %v4270 = vrot.slane %v4269, 2
    %v4271 = vadd.f32 %v4269, %v4270
    %v4272 = vrot.slane %v4271, 1
    %v4273 = vadd.f32 %v4271, %v4272
    %v4274 = vrot.slane %v4060, 4
    %v4275 = vadd.f32 %v4060, %v4274
    %v4276 = vrot.slane %v4275, 2
    %v4277 = vadd.f32 %v4275, %v4276
    %v4278 = vrot.slane %v4277, 1
    %v4279 = vadd.f32 %v4277, %v4278
    %v4280 = vrot.slane %v4061, 4
    %v4281 = vadd.f32 %v4061, %v4280
    %v4282 = vrot.slane %v4281, 2
    %v4283 = vadd.f32 %v4281, %v4282
    %v4284 = vrot.slane %v4283, 1
    %v4285 = vadd.f32 %v4283, %v4284
    %v4286 = vrot.slane %v4062, 4
    %v4287 = vadd.f32 %v4062, %v4286
    %v4288 = vrot.slane %v4287, 2
    %v4289 = vadd.f32 %v4287, %v4288
    %v4290 = vrot.slane %v4289, 1
    %v4291 = vadd.f32 %v4289, %v4290
    %v4292 = vrot.slane %v4063, 4
    %v4293 = vadd.f32 %v4063, %v4292
    %v4294 = vrot.slane %v4293, 2
    %v4295 = vadd.f32 %v4293, %v4294
    %v4296 = vrot.slane %v4295, 1
    %v4297 = vadd.f32 %v4295, %v4296
    %v4298 = vrot.slane %v4064, 4
    %v4299 = vadd.f32 %v4064, %v4298
    %v4300 = vrot.slane %v4299, 2
    %v4301 = vadd.f32 %v4299, %v4300
    %v4302 = vrot.slane %v4301, 1
    %v4303 = vadd.f32 %v4301, %v4302
    %v4304 = vrot.slane %v4065, 4
    %v4305 = vadd.f32 %v4065, %v4304
    %v4306 = vrot.slane %v4305, 2
    %v4307 = vadd.f32 %v4305, %v4306
    %v4308 = vrot.slane %v4307, 1
    %v4309 = vadd.f32 %v4307, %v4308
    %v4310 = vrot.slane %v4066, 4
    %v4311 = vadd.f32 %v4066, %v4310
    %v4312 = vrot.slane %v4311, 2
    %v4313 = vadd.f32 %v4311, %v4312
    %v4314 = vrot.slane %v4313, 1
    %v4315 = vadd.f32 %v4313, %v4314
    %v4316 = vrot.slane %v4067, 4
    %v4317 = vadd.f32 %v4067, %v4316
    %v4318 = vrot.slane %v4317, 2
    %v4319 = vadd.f32 %v4317, %v4318
    %v4320 = vrot.slane %v4319, 1
    %v4321 = vadd.f32 %v4319, %v4320
    %v4322 = vrot.slane %v4068, 4
    %v4323 = vadd.f32 %v4068, %v4322
    %v4324 = vrot.slane %v4323, 2
    %v4325 = vadd.f32 %v4323, %v4324
    %v4326 = vrot.slane %v4325, 1
    %v4327 = vadd.f32 %v4325, %v4326
    %v4328 = vrot.slane %v4069, 4
    %v4329 = vadd.f32 %v4069, %v4328
    %v4330 = vrot.slane %v4329, 2
    %v4331 = vadd.f32 %v4329, %v4330
    %v4332 = vrot.slane %v4331, 1
    %v4333 = vadd.f32 %v4331, %v4332
    %v4334 = vrot.slane %v4070, 4
    %v4335 = vadd.f32 %v4070, %v4334
    %v4336 = vrot.slane %v4335, 2
    %v4337 = vadd.f32 %v4335, %v4336
    %v4338 = vrot.slane %v4337, 1
    %v4339 = vadd.f32 %v4337, %v4338
    %v4340 = vrot.slane %v4071, 4
    %v4341 = vadd.f32 %v4071, %v4340
    %v4342 = vrot.slane %v4341, 2
    %v4343 = vadd.f32 %v4341, %v4342
    %v4344 = vrot.slane %v4343, 1
    %v4345 = vadd.f32 %v4343, %v4344
    %v4346 = vrot.slane %v4072, 4
    %v4347 = vadd.f32 %v4072, %v4346
    %v4348 = vrot.slane %v4347, 2
    %v4349 = vadd.f32 %v4347, %v4348
    %v4350 = vrot.slane %v4349, 1
    %v4351 = vadd.f32 %v4349, %v4350
    %v4352 = vrot.slane %v4073, 4
    %v4353 = vadd.f32 %v4073, %v4352
    %v4354 = vrot.slane %v4353, 2
    %v4355 = vadd.f32 %v4353, %v4354
    %v4356 = vrot.slane %v4355, 1
    %v4357 = vadd.f32 %v4355, %v4356
    %v4358 = vrot.slane %v4074, 4
    %v4359 = vadd.f32 %v4074, %v4358
    %v4360 = vrot.slane %v4359, 2
    %v4361 = vadd.f32 %v4359, %v4360
    %v4362 = vrot.slane %v4361, 1
    %v4363 = vadd.f32 %v4361, %v4362
    %v4364 = vrot.slane %v4075, 4
    %v4365 = vadd.f32 %v4075, %v4364
    %v4366 = vrot.slane %v4365, 2
    %v4367 = vadd.f32 %v4365, %v4366
    %v4368 = vrot.slane %v4367, 1
    %v4369 = vadd.f32 %v4367, %v4368
    %v4370 = vrot.slane %v4076, 4
    %v4371 = vadd.f32 %v4076, %v4370
    %v4372 = vrot.slane %v4371, 2
    %v4373 = vadd.f32 %v4371, %v4372
    %v4374 = vrot.slane %v4373, 1
    %v4375 = vadd.f32 %v4373, %v4374
    %v4376 = vrot.slane %v4077, 4
    %v4377 = vadd.f32 %v4077, %v4376
    %v4378 = vrot.slane %v4377, 2
    %v4379 = vadd.f32 %v4377, %v4378
    %v4380 = vrot.slane %v4379, 1
    %v4381 = vadd.f32 %v4379, %v4380
    %v4382 = vrot.slane %v4078, 4
    %v4383 = vadd.f32 %v4078, %v4382
    %v4384 = vrot.slane %v4383, 2
    %v4385 = vadd.f32 %v4383, %v4384
    %v4386 = vrot.slane %v4385, 1
    %v4387 = vadd.f32 %v4385, %v4386
    %v4388 = vrot.slane %v4079, 4
    %v4389 = vadd.f32 %v4079, %v4388
    %v4390 = vrot.slane %v4389, 2
    %v4391 = vadd.f32 %v4389, %v4390
    %v4392 = vrot.slane %v4391, 1
    %v4393 = vadd.f32 %v4391, %v4392
    %v4394 = vrot.slane %v4080, 4
    %v4395 = vadd.f32 %v4080, %v4394
    %v4396 = vrot.slane %v4395, 2
    %v4397 = vadd.f32 %v4395, %v4396
    %v4398 = vrot.slane %v4397, 1
    %v4399 = vadd.f32 %v4397, %v4398
    %v4400 = vrot.slane %v4081, 4
    %v4401 = vadd.f32 %v4081, %v4400
    %v4402 = vrot.slane %v4401, 2
    %v4403 = vadd.f32 %v4401, %v4402
    %v4404 = vrot.slane %v4403, 1
    %v4405 = vadd.f32 %v4403, %v4404
    %v4406 = vrot.slane %v4082, 4
    %v4407 = vadd.f32 %v4082, %v4406
    %v4408 = vrot.slane %v4407, 2
    %v4409 = vadd.f32 %v4407, %v4408
    %v4410 = vrot.slane %v4409, 1
    %v4411 = vadd.f32 %v4409, %v4410
    %v4412 = vrot.slane %v4083, 4
    %v4413 = vadd.f32 %v4083, %v4412
    %v4414 = vrot.slane %v4413, 2
    %v4415 = vadd.f32 %v4413, %v4414
    %v4416 = vrot.slane %v4415, 1
    %v4417 = vadd.f32 %v4415, %v4416
    %v4418 = vrot.slane %v4084, 4
    %v4419 = vadd.f32 %v4084, %v4418
    %v4420 = vrot.slane %v4419, 2
    %v4421 = vadd.f32 %v4419, %v4420
    %v4422 = vrot.slane %v4421, 1
    %v4423 = vadd.f32 %v4421, %v4422
    %v4424 = vrot.slane %v4085, 4
    %v4425 = vadd.f32 %v4085, %v4424
    %v4426 = vrot.slane %v4425, 2
    %v4427 = vadd.f32 %v4425, %v4426
    %v4428 = vrot.slane %v4427, 1
    %v4429 = vadd.f32 %v4427, %v4428
    %v4430 = vrot.slane %v4086, 4
    %v4431 = vadd.f32 %v4086, %v4430
    %v4432 = vrot.slane %v4431, 2
    %v4433 = vadd.f32 %v4431, %v4432
    %v4434 = vrot.slane %v4433, 1
    %v4435 = vadd.f32 %v4433, %v4434
    %v4436 = vrot.slane %v4087, 4
    %v4437 = vadd.f32 %v4087, %v4436
    %v4438 = vrot.slane %v4437, 2
    %v4439 = vadd.f32 %v4437, %v4438
    %v4440 = vrot.slane %v4439, 1
    %v4441 = vadd.f32 %v4439, %v4440
    %v4442 = vrot.slane %v4088, 4
    %v4443 = vadd.f32 %v4088, %v4442
    %v4444 = vrot.slane %v4443, 2
    %v4445 = vadd.f32 %v4443, %v4444
    %v4446 = vrot.slane %v4445, 1
    %v4447 = vadd.f32 %v4445, %v4446
    %v4448 = vrot.slane %v4089, 4
    %v4449 = vadd.f32 %v4089, %v4448
    %v4450 = vrot.slane %v4449, 2
    %v4451 = vadd.f32 %v4449, %v4450
    %v4452 = vrot.slane %v4451, 1
    %v4453 = vadd.f32 %v4451, %v4452
    %v4454 = vrot.slane %v4090, 4
    %v4455 = vadd.f32 %v4090, %v4454
    %v4456 = vrot.slane %v4455, 2
    %v4457 = vadd.f32 %v4455, %v4456
    %v4458 = vrot.slane %v4457, 1
    %v4459 = vadd.f32 %v4457, %v4458
    %v4460 = vrot.slane %v4091, 4
    %v4461 = vadd.f32 %v4091, %v4460
    %v4462 = vrot.slane %v4461, 2
    %v4463 = vadd.f32 %v4461, %v4462
    %v4464 = vrot.slane %v4463, 1
    %v4465 = vadd.f32 %v4463, %v4464
    %v4466 = vrot.slane %v4092, 4
    %v4467 = vadd.f32 %v4092, %v4466
    %v4468 = vrot.slane %v4467, 2
    %v4469 = vadd.f32 %v4467, %v4468
    %v4470 = vrot.slane %v4469, 1
    %v4471 = vadd.f32 %v4469, %v4470
    %v4472 = vrot.slane %v4093, 4
    %v4473 = vadd.f32 %v4093, %v4472
    %v4474 = vrot.slane %v4473, 2
    %v4475 = vadd.f32 %v4473, %v4474
    %v4476 = vrot.slane %v4475, 1
    %v4477 = vadd.f32 %v4475, %v4476
    %v4542 = vsel %vm1415, %v4105, %v4099
    %v4543 = vsel %vm1417, %v4111, %v4542
    %v4544 = vsel %vm1419, %v4117, %v4543
    %v4545 = vsel %vm1421, %v4123, %v4544
    %v4546 = vsel %vm1423, %v4129, %v4545
    %v4547 = vsel %vm1425, %v4135, %v4546
    %v4548 = vsel %vm1427, %v4141, %v4547
    %v4549 = vsel %vm1415, %v4153, %v4147
    %v4550 = vsel %vm1417, %v4159, %v4549
    %v4551 = vsel %vm1419, %v4165, %v4550
    %v4552 = vsel %vm1421, %v4171, %v4551
    %v4553 = vsel %vm1423, %v4177, %v4552
    %v4554 = vsel %vm1425, %v4183, %v4553
    %v4555 = vsel %vm1427, %v4189, %v4554
    %v4556 = vsel %vm1415, %v4201, %v4195
    %v4557 = vsel %vm1417, %v4207, %v4556
    %v4558 = vsel %vm1419, %v4213, %v4557
    %v4559 = vsel %vm1421, %v4219, %v4558
    %v4560 = vsel %vm1423, %v4225, %v4559
    %v4561 = vsel %vm1425, %v4231, %v4560
    %v4562 = vsel %vm1427, %v4237, %v4561
    %v4563 = vsel %vm1415, %v4249, %v4243
    %v4564 = vsel %vm1417, %v4255, %v4563
    %v4565 = vsel %vm1419, %v4261, %v4564
    %v4566 = vsel %vm1421, %v4267, %v4565
    %v4567 = vsel %vm1423, %v4273, %v4566
    %v4568 = vsel %vm1425, %v4279, %v4567
    %v4569 = vsel %vm1427, %v4285, %v4568
    %v4570 = vsel %vm1415, %v4297, %v4291
    %v4571 = vsel %vm1417, %v4303, %v4570
    %v4572 = vsel %vm1419, %v4309, %v4571
    %v4573 = vsel %vm1421, %v4315, %v4572
    %v4574 = vsel %vm1423, %v4321, %v4573
    %v4575 = vsel %vm1425, %v4327, %v4574
    %v4576 = vsel %vm1427, %v4333, %v4575
    %v4577 = vsel %vm1415, %v4345, %v4339
    %v4578 = vsel %vm1417, %v4351, %v4577
    %v4579 = vsel %vm1419, %v4357, %v4578
    %v4580 = vsel %vm1421, %v4363, %v4579
    %v4581 = vsel %vm1423, %v4369, %v4580
    %v4582 = vsel %vm1425, %v4375, %v4581
    %v4583 = vsel %vm1427, %v4381, %v4582
    %v4584 = vsel %vm1415, %v4393, %v4387
    %v4585 = vsel %vm1417, %v4399, %v4584
    %v4586 = vsel %vm1419, %v4405, %v4585
    %v4587 = vsel %vm1421, %v4411, %v4586
    %v4588 = vsel %vm1423, %v4417, %v4587
    %v4589 = vsel %vm1425, %v4423, %v4588
    %v4590 = vsel %vm1427, %v4429, %v4589
    %v4591 = vsel %vm1415, %v4441, %v4435
    %v4592 = vsel %vm1417, %v4447, %v4591
    %v4593 = vsel %vm1419, %v4453, %v4592
    %v4594 = vsel %vm1421, %v4459, %v4593
    %v4595 = vsel %vm1423, %v4465, %v4594
    %v4596 = vsel %vm1425, %v4471, %v4595
    %v4597 = vsel %vm1427, %v4477, %v4596
    %v4606 = vsel %vm1343, %v4548, -1e+30
    %v4607 = vsel %vm1344, %v4555, -1e+30
    %v4608 = vsel %vm1345, %v4562, -1e+30
    %v4609 = vsel %vm1346, %v4569, -1e+30
    %v4610 = vsel %vm1347, %v4576, -1e+30
    %v4611 = vsel %vm1348, %v4583, -1e+30
    %v4612 = vsel %vm1349, %v4590, -1e+30
    %v4613 = vsel %vm1350, %v4597, -1e+30
    %v4614 = vrot.slane %v4606, 4
    %v4615 = vmax.f32 %v4606, %v4614
    %v4616 = vrot.slane %v4615, 2
    %v4617 = vmax.f32 %v4615, %v4616
    %v4618 = vrot.slane %v4617, 1
    %v4619 = vmax.f32 %v4617, %v4618
    %v4620 = vrot.slane %v4607, 4
    %v4621 = vmax.f32 %v4607, %v4620
    %v4622 = vrot.slane %v4621, 2
    %v4623 = vmax.f32 %v4621, %v4622
    %v4624 = vrot.slane %v4623, 1
    %v4625 = vmax.f32 %v4623, %v4624
    %v4626 = vrot.slane %v4608, 4
    %v4627 = vmax.f32 %v4608, %v4626
    %v4628 = vrot.slane %v4627, 2
    %v4629 = vmax.f32 %v4627, %v4628
    %v4630 = vrot.slane %v4629, 1
    %v4631 = vmax.f32 %v4629, %v4630
    %v4632 = vrot.slane %v4609, 4
    %v4633 = vmax.f32 %v4609, %v4632
    %v4634 = vrot.slane %v4633, 2
    %v4635 = vmax.f32 %v4633, %v4634
    %v4636 = vrot.slane %v4635, 1
    %v4637 = vmax.f32 %v4635, %v4636
    %v4638 = vrot.slane %v4610, 4
    %v4639 = vmax.f32 %v4610, %v4638
    %v4640 = vrot.slane %v4639, 2
    %v4641 = vmax.f32 %v4639, %v4640
    %v4642 = vrot.slane %v4641, 1
    %v4643 = vmax.f32 %v4641, %v4642
    %v4644 = vrot.slane %v4611, 4
    %v4645 = vmax.f32 %v4611, %v4644
    %v4646 = vrot.slane %v4645, 2
    %v4647 = vmax.f32 %v4645, %v4646
    %v4648 = vrot.slane %v4647, 1
    %v4649 = vmax.f32 %v4647, %v4648
    %v4650 = vrot.slane %v4612, 4
    %v4651 = vmax.f32 %v4612, %v4650
    %v4652 = vrot.slane %v4651, 2
    %v4653 = vmax.f32 %v4651, %v4652
    %v4654 = vrot.slane %v4653, 1
    %v4655 = vmax.f32 %v4653, %v4654
    %v4656 = vrot.slane %v4613, 4
    %v4657 = vmax.f32 %v4613, %v4656
    %v4658 = vrot.slane %v4657, 2
    %v4659 = vmax.f32 %v4657, %v4658
    %v4660 = vrot.slane %v4659, 1
    %v4661 = vmax.f32 %v4659, %v4660
    %v4662 = vsub.f32 %v4606, %v4619
    %v4663 = vsub.f32 %v4607, %v4625
    %v4664 = vsub.f32 %v4608, %v4631
    %v4665 = vsub.f32 %v4609, %v4637
    %v4666 = vsub.f32 %v4610, %v4643
    %v4667 = vsub.f32 %v4611, %v4649
    %v4668 = vsub.f32 %v4612, %v4655
    %v4669 = vsub.f32 %v4613, %v4661
    %v4670 = vmul.f32 %v4662, 1.442695
    %v4671 = vpow.pop %v4670
    %v4672 = vmul.f32 %v4663, 1.442695
    %v4673 = vpow.pop %v4672
    %v4674 = vmul.f32 %v4664, 1.442695
    %v4675 = vpow.pop %v4674
    %v4676 = vmul.f32 %v4665, 1.442695
    %v4677 = vpow.pop %v4676
    %v4678 = vmul.f32 %v4666, 1.442695
    %v4679 = vpow.pop %v4678
    %v4680 = vmul.f32 %v4667, 1.442695
    %v4681 = vpow.pop %v4680
    %v4682 = vmul.f32 %v4668, 1.442695
    %v4683 = vpow.pop %v4682
    %v4684 = vmul.f32 %v4669, 1.442695
    %v4685 = vpow.pop %v4684
    %v4686 = vrot.slane %v4671, 4
    %v4687 = vadd.f32 %v4671, %v4686
    %v4688 = vrot.slane %v4687, 2
    %v4689 = vadd.f32 %v4687, %v4688
    %v4690 = vrot.slane %v4689, 1
    %v4691 = vadd.f32 %v4689, %v4690
    %v4692 = vrot.slane %v4673, 4
    %v4693 = vadd.f32 %v4673, %v4692
    %v4694 = vrot.slane %v4693, 2
    %v4695 = vadd.f32 %v4693, %v4694
    %v4696 = vrot.slane %v4695, 1
    %v4697 = vadd.f32 %v4695, %v4696
    %v4698 = vrot.slane %v4675, 4
    %v4699 = vadd.f32 %v4675, %v4698
    %v4700 = vrot.slane %v4699, 2
    %v4701 = vadd.f32 %v4699, %v4700
    %v4702 = vrot.slane %v4701, 1
    %v4703 = vadd.f32 %v4701, %v4702
    %v4704 = vrot.slane %v4677, 4
    %v4705 = vadd.f32 %v4677, %v4704
    %v4706 = vrot.slane %v4705, 2
    %v4707 = vadd.f32 %v4705, %v4706
    %v4708 = vrot.slane %v4707, 1
    %v4709 = vadd.f32 %v4707, %v4708
    %v4710 = vrot.slane %v4679, 4
    %v4711 = vadd.f32 %v4679, %v4710
    %v4712 = vrot.slane %v4711, 2
    %v4713 = vadd.f32 %v4711, %v4712
    %v4714 = vrot.slane %v4713, 1
    %v4715 = vadd.f32 %v4713, %v4714
    %v4716 = vrot.slane %v4681, 4
    %v4717 = vadd.f32 %v4681, %v4716
    %v4718 = vrot.slane %v4717, 2
    %v4719 = vadd.f32 %v4717, %v4718
    %v4720 = vrot.slane %v4719, 1
    %v4721 = vadd.f32 %v4719, %v4720
    %v4722 = vrot.slane %v4683, 4
    %v4723 = vadd.f32 %v4683, %v4722
    %v4724 = vrot.slane %v4723, 2
    %v4725 = vadd.f32 %v4723, %v4724
    %v4726 = vrot.slane %v4725, 1
    %v4727 = vadd.f32 %v4725, %v4726
    %v4728 = vrot.slane %v4685, 4
    %v4729 = vadd.f32 %v4685, %v4728
    %v4730 = vrot.slane %v4729, 2
    %v4731 = vadd.f32 %v4729, %v4730
    %v4732 = vrot.slane %v4731, 1
    %v4733 = vadd.f32 %v4731, %v4732
    %v4734 = vrcp.pop %v4691
    %v4735 = vrcp.pop %v4697
    %v4736 = vrcp.pop %v4703
    %v4737 = vrcp.pop %v4709
    %v4738 = vrcp.pop %v4715
    %v4739 = vrcp.pop %v4721
    %v4740 = vrcp.pop %v4727
    %v4741 = vrcp.pop %v4733
    %v4742 = vmul.f32 %v4671, %v4734
    %v4743 = vmul.f32 %v4673, %v4735
    %v4744 = vmul.f32 %v4675, %v4736
    %v4745 = vmul.f32 %v4677, %v4737
    %v4746 = vmul.f32 %v4679, %v4738
    %v4747 = vmul.f32 %v4681, %v4739
    %v4748 = vmul.f32 %v4683, %v4740
    %v4749 = vmul.f32 %v4685, %v4741
    %v4758 = vcombine.high %v4742, %v4742
    %v4760 = vunpack.c.l.s4 1966171168
    %v4761 = vunpack.c.0.s8 %v4760
    %v4762 = vlaneseq
    %v4763 = vshrl.u32 %v4762, 7
    %v4764 = vsub.s32 %v4761, %v4763
    %v4765 = vrot.slane %v4742, %v4764
    %v4767 = vunpack.c.l.s4 1966171168
    %v4768 = vunpack.c.0.s8 %v4767
    %v4769 = vlaneseq
    %v4770 = vshrl.u32 %v4769, 7
    %v4771 = vsub.s32 %v4768, %v4770
    %v4772 = vrot.slane %v4758, %v4771
    %v4773 = vcombine.high %v4765, %v4765
    %v4774 = vcombine.high %v4772, %v4772
    %v4776 = vunpack.c.l.s4 1966171168
    %v4777 = vunpack.c.0.s8 %v4776
    %v4778 = vlaneseq
    %v4779 = vshrl.u32 %v4778, 7
    %v4780 = vsub.s32 %v4777, %v4779
    %v4781 = vrot.slane %v4765, %v4780
    %v4783 = vunpack.c.l.s4 1966171168
    %v4784 = vunpack.c.0.s8 %v4783
    %v4785 = vlaneseq
    %v4786 = vshrl.u32 %v4785, 7
    %v4787 = vsub.s32 %v4784, %v4786
    %v4788 = vrot.slane %v4772, %v4787
    %v4790 = vunpack.c.l.s4 1966171168
    %v4791 = vunpack.c.0.s8 %v4790
    %v4792 = vlaneseq
    %v4793 = vshrl.u32 %v4792, 7
    %v4794 = vsub.s32 %v4791, %v4793
    %v4795 = vrot.slane %v4773, %v4794
    %v4797 = vunpack.c.l.s4 1966171168
    %v4798 = vunpack.c.0.s8 %v4797
    %v4799 = vlaneseq
    %v4800 = vshrl.u32 %v4799, 7
    %v4801 = vsub.s32 %v4798, %v4800
    %v4802 = vrot.slane %v4774, %v4801
    %v4803 = vcombine.high %v4781, %v4781
    %v4804 = vcombine.high %v4788, %v4788
    %v4805 = vcombine.high %v4795, %v4795
    %v4806 = vcombine.high %v4802, %v4802
    %v4807 = vcombine.high %v4743, %v4743
    %v4809 = vunpack.c.l.s4 1966171168
    %v4810 = vunpack.c.0.s8 %v4809
    %v4811 = vlaneseq
    %v4812 = vshrl.u32 %v4811, 7
    %v4813 = vsub.s32 %v4810, %v4812
    %v4814 = vrot.slane %v4743, %v4813
    %v4816 = vunpack.c.l.s4 1966171168
    %v4817 = vunpack.c.0.s8 %v4816
    %v4818 = vlaneseq
    %v4819 = vshrl.u32 %v4818, 7
    %v4820 = vsub.s32 %v4817, %v4819
    %v4821 = vrot.slane %v4807, %v4820
    %v4822 = vcombine.high %v4814, %v4814
    %v4823 = vcombine.high %v4821, %v4821
    %v4825 = vunpack.c.l.s4 1966171168
    %v4826 = vunpack.c.0.s8 %v4825
    %v4827 = vlaneseq
    %v4828 = vshrl.u32 %v4827, 7
    %v4829 = vsub.s32 %v4826, %v4828
    %v4830 = vrot.slane %v4814, %v4829
    %v4832 = vunpack.c.l.s4 1966171168
    %v4833 = vunpack.c.0.s8 %v4832
    %v4834 = vlaneseq
    %v4835 = vshrl.u32 %v4834, 7
    %v4836 = vsub.s32 %v4833, %v4835
    %v4837 = vrot.slane %v4821, %v4836
    %v4839 = vunpack.c.l.s4 1966171168
    %v4840 = vunpack.c.0.s8 %v4839
    %v4841 = vlaneseq
    %v4842 = vshrl.u32 %v4841, 7
    %v4843 = vsub.s32 %v4840, %v4842
    %v4844 = vrot.slane %v4822, %v4843
    %v4846 = vunpack.c.l.s4 1966171168
    %v4847 = vunpack.c.0.s8 %v4846
    %v4848 = vlaneseq
    %v4849 = vshrl.u32 %v4848, 7
    %v4850 = vsub.s32 %v4847, %v4849
    %v4851 = vrot.slane %v4823, %v4850
    %v4852 = vcombine.high %v4830, %v4830
    %v4853 = vcombine.high %v4837, %v4837
    %v4854 = vcombine.high %v4844, %v4844
    %v4855 = vcombine.high %v4851, %v4851
    %v4856 = vcombine.high %v4744, %v4744
    %v4858 = vunpack.c.l.s4 1966171168
    %v4859 = vunpack.c.0.s8 %v4858
    %v4860 = vlaneseq
    %v4861 = vshrl.u32 %v4860, 7
    %v4862 = vsub.s32 %v4859, %v4861
    %v4863 = vrot.slane %v4744, %v4862
    %v4865 = vunpack.c.l.s4 1966171168
    %v4866 = vunpack.c.0.s8 %v4865
    %v4867 = vlaneseq
    %v4868 = vshrl.u32 %v4867, 7
    %v4869 = vsub.s32 %v4866, %v4868
    %v4870 = vrot.slane %v4856, %v4869
    %v4871 = vcombine.high %v4863, %v4863
    %v4872 = vcombine.high %v4870, %v4870
    %v4874 = vunpack.c.l.s4 1966171168
    %v4875 = vunpack.c.0.s8 %v4874
    %v4876 = vlaneseq
    %v4877 = vshrl.u32 %v4876, 7
    %v4878 = vsub.s32 %v4875, %v4877
    %v4879 = vrot.slane %v4863, %v4878
    %v4881 = vunpack.c.l.s4 1966171168
    %v4882 = vunpack.c.0.s8 %v4881
    %v4883 = vlaneseq
    %v4884 = vshrl.u32 %v4883, 7
    %v4885 = vsub.s32 %v4882, %v4884
    %v4886 = vrot.slane %v4870, %v4885
    %v4888 = vunpack.c.l.s4 1966171168
    %v4889 = vunpack.c.0.s8 %v4888
    %v4890 = vlaneseq
    %v4891 = vshrl.u32 %v4890, 7
    %v4892 = vsub.s32 %v4889, %v4891
    %v4893 = vrot.slane %v4871, %v4892
    %v4895 = vunpack.c.l.s4 1966171168
    %v4896 = vunpack.c.0.s8 %v4895
    %v4897 = vlaneseq
    %v4898 = vshrl.u32 %v4897, 7
    %v4899 = vsub.s32 %v4896, %v4898
    %v4900 = vrot.slane %v4872, %v4899
    %v4901 = vcombine.high %v4879, %v4879
    %v4902 = vcombine.high %v4886, %v4886
    %v4903 = vcombine.high %v4893, %v4893
    %v4904 = vcombine.high %v4900, %v4900
    %v4905 = vcombine.high %v4745, %v4745
    %v4907 = vunpack.c.l.s4 1966171168
    %v4908 = vunpack.c.0.s8 %v4907
    %v4909 = vlaneseq
    %v4910 = vshrl.u32 %v4909, 7
    %v4911 = vsub.s32 %v4908, %v4910
    %v4912 = vrot.slane %v4745, %v4911
    %v4914 = vunpack.c.l.s4 1966171168
    %v4915 = vunpack.c.0.s8 %v4914
    %v4916 = vlaneseq
    %v4917 = vshrl.u32 %v4916, 7
    %v4918 = vsub.s32 %v4915, %v4917
    %v4919 = vrot.slane %v4905, %v4918
    %v4920 = vcombine.high %v4912, %v4912
    %v4921 = vcombine.high %v4919, %v4919
    %v4923 = vunpack.c.l.s4 1966171168
    %v4924 = vunpack.c.0.s8 %v4923
    %v4925 = vlaneseq
    %v4926 = vshrl.u32 %v4925, 7
    %v4927 = vsub.s32 %v4924, %v4926
    %v4928 = vrot.slane %v4912, %v4927
    %v4930 = vunpack.c.l.s4 1966171168
    %v4931 = vunpack.c.0.s8 %v4930
    %v4932 = vlaneseq
    %v4933 = vshrl.u32 %v4932, 7
    %v4934 = vsub.s32 %v4931, %v4933
    %v4935 = vrot.slane %v4919, %v4934
    %v4937 = vunpack.c.l.s4 1966171168
    %v4938 = vunpack.c.0.s8 %v4937
    %v4939 = vlaneseq
    %v4940 = vshrl.u32 %v4939, 7
    %v4941 = vsub.s32 %v4938, %v4940
    %v4942 = vrot.slane %v4920, %v4941
    %v4944 = vunpack.c.l.s4 1966171168
    %v4945 = vunpack.c.0.s8 %v4944
    %v4946 = vlaneseq
    %v4947 = vshrl.u32 %v4946, 7
    %v4948 = vsub.s32 %v4945, %v4947
    %v4949 = vrot.slane %v4921, %v4948
    %v4950 = vcombine.high %v4928, %v4928
    %v4951 = vcombine.high %v4935, %v4935
    %v4952 = vcombine.high %v4942, %v4942
    %v4953 = vcombine.high %v4949, %v4949
    %v4954 = vcombine.high %v4746, %v4746
    %v4956 = vunpack.c.l.s4 1966171168
    %v4957 = vunpack.c.0.s8 %v4956
    %v4958 = vlaneseq
    %v4959 = vshrl.u32 %v4958, 7
    %v4960 = vsub.s32 %v4957, %v4959
    %v4961 = vrot.slane %v4746, %v4960
    %v4963 = vunpack.c.l.s4 1966171168
    %v4964 = vunpack.c.0.s8 %v4963
    %v4965 = vlaneseq
    %v4966 = vshrl.u32 %v4965, 7
    %v4967 = vsub.s32 %v4964, %v4966
    %v4968 = vrot.slane %v4954, %v4967
    %v4969 = vcombine.high %v4961, %v4961
    %v4970 = vcombine.high %v4968, %v4968
    %v4972 = vunpack.c.l.s4 1966171168
    %v4973 = vunpack.c.0.s8 %v4972
    %v4974 = vlaneseq
    %v4975 = vshrl.u32 %v4974, 7
    %v4976 = vsub.s32 %v4973, %v4975
    %v4977 = vrot.slane %v4961, %v4976
    %v4979 = vunpack.c.l.s4 1966171168
    %v4980 = vunpack.c.0.s8 %v4979
    %v4981 = vlaneseq
    %v4982 = vshrl.u32 %v4981, 7
    %v4983 = vsub.s32 %v4980, %v4982
    %v4984 = vrot.slane %v4968, %v4983
    %v4986 = vunpack.c.l.s4 1966171168
    %v4987 = vunpack.c.0.s8 %v4986
    %v4988 = vlaneseq
    %v4989 = vshrl.u32 %v4988, 7
    %v4990 = vsub.s32 %v4987, %v4989
    %v4991 = vrot.slane %v4969, %v4990
    %v4993 = vunpack.c.l.s4 1966171168
    %v4994 = vunpack.c.0.s8 %v4993
    %v4995 = vlaneseq
    %v4996 = vshrl.u32 %v4995, 7
    %v4997 = vsub.s32 %v4994, %v4996
    %v4998 = vrot.slane %v4970, %v4997
    %v4999 = vcombine.high %v4977, %v4977
    %v5000 = vcombine.high %v4984, %v4984
    %v5001 = vcombine.high %v4991, %v4991
    %v5002 = vcombine.high %v4998, %v4998
    %v5003 = vcombine.high %v4747, %v4747
    %v5005 = vunpack.c.l.s4 1966171168
    %v5006 = vunpack.c.0.s8 %v5005
    %v5007 = vlaneseq
    %v5008 = vshrl.u32 %v5007, 7
    %v5009 = vsub.s32 %v5006, %v5008
    %v5010 = vrot.slane %v4747, %v5009
    %v5012 = vunpack.c.l.s4 1966171168
    %v5013 = vunpack.c.0.s8 %v5012
    %v5014 = vlaneseq
    %v5015 = vshrl.u32 %v5014, 7
    %v5016 = vsub.s32 %v5013, %v5015
    %v5017 = vrot.slane %v5003, %v5016
    %v5018 = vcombine.high %v5010, %v5010
    %v5019 = vcombine.high %v5017, %v5017
    %v5021 = vunpack.c.l.s4 1966171168
    %v5022 = vunpack.c.0.s8 %v5021
    %v5023 = vlaneseq
    %v5024 = vshrl.u32 %v5023, 7
    %v5025 = vsub.s32 %v5022, %v5024
    %v5026 = vrot.slane %v5010, %v5025
    %v5028 = vunpack.c.l.s4 1966171168
    %v5029 = vunpack.c.0.s8 %v5028
    %v5030 = vlaneseq
    %v5031 = vshrl.u32 %v5030, 7
    %v5032 = vsub.s32 %v5029, %v5031
    %v5033 = vrot.slane %v5017, %v5032
    %v5035 = vunpack.c.l.s4 1966171168
    %v5036 = vunpack.c.0.s8 %v5035
    %v5037 = vlaneseq
    %v5038 = vshrl.u32 %v5037, 7
    %v5039 = vsub.s32 %v5036, %v5038
    %v5040 = vrot.slane %v5018, %v5039
    %v5042 = vunpack.c.l.s4 1966171168
    %v5043 = vunpack.c.0.s8 %v5042
    %v5044 = vlaneseq
    %v5045 = vshrl.u32 %v5044, 7
    %v5046 = vsub.s32 %v5043, %v5045
    %v5047 = vrot.slane %v5019, %v5046
    %v5048 = vcombine.high %v5026, %v5026
    %v5049 = vcombine.high %v5033, %v5033
    %v5050 = vcombine.high %v5040, %v5040
    %v5051 = vcombine.high %v5047, %v5047
    %v5052 = vcombine.high %v4748, %v4748
    %v5054 = vunpack.c.l.s4 1966171168
    %v5055 = vunpack.c.0.s8 %v5054
    %v5056 = vlaneseq
    %v5057 = vshrl.u32 %v5056, 7
    %v5058 = vsub.s32 %v5055, %v5057
    %v5059 = vrot.slane %v4748, %v5058
    %v5061 = vunpack.c.l.s4 1966171168
    %v5062 = vunpack.c.0.s8 %v5061
    %v5063 = vlaneseq
    %v5064 = vshrl.u32 %v5063, 7
    %v5065 = vsub.s32 %v5062, %v5064
    %v5066 = vrot.slane %v5052, %v5065
    %v5067 = vcombine.high %v5059, %v5059
    %v5068 = vcombine.high %v5066, %v5066
    %v5070 = vunpack.c.l.s4 1966171168
    %v5071 = vunpack.c.0.s8 %v5070
    %v5072 = vlaneseq
    %v5073 = vshrl.u32 %v5072, 7
    %v5074 = vsub.s32 %v5071, %v5073
    %v5075 = vrot.slane %v5059, %v5074
    %v5077 = vunpack.c.l.s4 1966171168
    %v5078 = vunpack.c.0.s8 %v5077
    %v5079 = vlaneseq
    %v5080 = vshrl.u32 %v5079, 7
    %v5081 = vsub.s32 %v5078, %v5080
    %v5082 = vrot.slane %v5066, %v5081
    %v5084 = vunpack.c.l.s4 1966171168
    %v5085 = vunpack.c.0.s8 %v5084
    %v5086 = vlaneseq
    %v5087 = vshrl.u32 %v5086, 7
    %v5088 = vsub.s32 %v5085, %v5087
    %v5089 = vrot.slane %v5067, %v5088
    %v5091 = vunpack.c.l.s4 1966171168
    %v5092 = vunpack.c.0.s8 %v5091
    %v5093 = vlaneseq
    %v5094 = vshrl.u32 %v5093, 7
    %v5095 = vsub.s32 %v5092, %v5094
    %v5096 = vrot.slane %v5068, %v5095
    %v5097 = vcombine.high %v5075, %v5075
    %v5098 = vcombine.high %v5082, %v5082
    %v5099 = vcombine.high %v5089, %v5089
    %v5100 = vcombine.high %v5096, %v5096
    %v5101 = vcombine.high %v4749, %v4749
    %v5103 = vunpack.c.l.s4 1966171168
    %v5104 = vunpack.c.0.s8 %v5103
    %v5105 = vlaneseq
    %v5106 = vshrl.u32 %v5105, 7
    %v5107 = vsub.s32 %v5104, %v5106
    %v5108 = vrot.slane %v4749, %v5107
    %v5110 = vunpack.c.l.s4 1966171168
    %v5111 = vunpack.c.0.s8 %v5110
    %v5112 = vlaneseq
    %v5113 = vshrl.u32 %v5112, 7
    %v5114 = vsub.s32 %v5111, %v5113
    %v5115 = vrot.slane %v5101, %v5114
    %v5116 = vcombine.high %v5108, %v5108
    %v5117 = vcombine.high %v5115, %v5115
    %v5119 = vunpack.c.l.s4 1966171168
    %v5120 = vunpack.c.0.s8 %v5119
    %v5121 = vlaneseq
    %v5122 = vshrl.u32 %v5121, 7
    %v5123 = vsub.s32 %v5120, %v5122
    %v5124 = vrot.slane %v5108, %v5123
    %v5126 = vunpack.c.l.s4 1966171168
    %v5127 = vunpack.c.0.s8 %v5126
    %v5128 = vlaneseq
    %v5129 = vshrl.u32 %v5128, 7
    %v5130 = vsub.s32 %v5127, %v5129
    %v5131 = vrot.slane %v5115, %v5130
    %v5133 = vunpack.c.l.s4 1966171168
    %v5134 = vunpack.c.0.s8 %v5133
    %v5135 = vlaneseq
    %v5136 = vshrl.u32 %v5135, 7
    %v5137 = vsub.s32 %v5134, %v5136
    %v5138 = vrot.slane %v5116, %v5137
    %v5140 = vunpack.c.l.s4 1966171168
    %v5141 = vunpack.c.0.s8 %v5140
    %v5142 = vlaneseq
    %v5143 = vshrl.u32 %v5142, 7
    %v5144 = vsub.s32 %v5141, %v5143
    %v5145 = vrot.slane %v5117, %v5144
    %v5146 = vcombine.high %v5124, %v5124
    %v5147 = vcombine.high %v5131, %v5131
    %v5148 = vcombine.high %v5138, %v5138
    %v5149 = vcombine.high %v5145, %v5145
    %v5150 = vlaneseq
    %v5151 = vshrl.u32 %v5150, 7
    %v5152 = vsub.s32 0, %v5151
    %v5153 = vrot.slane %v4781, %v5152
    %v5154 = vlaneseq
    %v5155 = vshrl.u32 %v5154, 7
    %v5156 = vsub.s32 0, %v5155
    %v5157 = vrot.slane %v4795, %v5156
    %v5158 = vlaneseq
    %v5159 = vshrl.u32 %v5158, 7
    %v5160 = vsub.s32 0, %v5159
    %v5161 = vrot.slane %v4803, %v5160
    %v5162 = vlaneseq
    %v5163 = vshrl.u32 %v5162, 7
    %v5164 = vsub.s32 0, %v5163
    %v5165 = vrot.slane %v4805, %v5164
    %v5166 = vlaneseq
    %v5167 = vshrl.u32 %v5166, 7
    %v5168 = vsub.s32 0, %v5167
    %v5169 = vrot.slane %v4788, %v5168
    %v5170 = vlaneseq
    %v5171 = vshrl.u32 %v5170, 7
    %v5172 = vsub.s32 0, %v5171
    %v5173 = vrot.slane %v4802, %v5172
    %v5174 = vlaneseq
    %v5175 = vshrl.u32 %v5174, 7
    %v5176 = vsub.s32 0, %v5175
    %v5177 = vrot.slane %v4804, %v5176
    %v5178 = vlaneseq
    %v5179 = vshrl.u32 %v5178, 7
    %v5180 = vsub.s32 0, %v5179
    %v5181 = vrot.slane %v4806, %v5180
    %v5182 = vlaneseq
    %v5183 = vshrl.u32 %v5182, 7
    %v5184 = vsub.s32 0, %v5183
    %v5185 = vrot.slane %v4830, %v5184
    %v5186 = vlaneseq
    %v5187 = vshrl.u32 %v5186, 7
    %v5188 = vsub.s32 0, %v5187
    %v5189 = vrot.slane %v4844, %v5188
    %v5190 = vlaneseq
    %v5191 = vshrl.u32 %v5190, 7
    %v5192 = vsub.s32 0, %v5191
    %v5193 = vrot.slane %v4852, %v5192
    %v5194 = vlaneseq
    %v5195 = vshrl.u32 %v5194, 7
    %v5196 = vsub.s32 0, %v5195
    %v5197 = vrot.slane %v4854, %v5196
    %v5198 = vlaneseq
    %v5199 = vshrl.u32 %v5198, 7
    %v5200 = vsub.s32 0, %v5199
    %v5201 = vrot.slane %v4837, %v5200
    %v5202 = vlaneseq
    %v5203 = vshrl.u32 %v5202, 7
    %v5204 = vsub.s32 0, %v5203
    %v5205 = vrot.slane %v4851, %v5204
    %v5206 = vlaneseq
    %v5207 = vshrl.u32 %v5206, 7
    %v5208 = vsub.s32 0, %v5207
    %v5209 = vrot.slane %v4853, %v5208
    %v5210 = vlaneseq
    %v5211 = vshrl.u32 %v5210, 7
    %v5212 = vsub.s32 0, %v5211
    %v5213 = vrot.slane %v4855, %v5212
    %v5214 = vlaneseq
    %v5215 = vshrl.u32 %v5214, 7
    %v5216 = vsub.s32 0, %v5215
    %v5217 = vrot.slane %v4879, %v5216
    %v5218 = vlaneseq
    %v5219 = vshrl.u32 %v5218, 7
    %v5220 = vsub.s32 0, %v5219
    %v5221 = vrot.slane %v4893, %v5220
    %v5222 = vlaneseq
    %v5223 = vshrl.u32 %v5222, 7
    %v5224 = vsub.s32 0, %v5223
    %v5225 = vrot.slane %v4901, %v5224
    %v5226 = vlaneseq
    %v5227 = vshrl.u32 %v5226, 7
    %v5228 = vsub.s32 0, %v5227
    %v5229 = vrot.slane %v4903, %v5228
    %v5230 = vlaneseq
    %v5231 = vshrl.u32 %v5230, 7
    %v5232 = vsub.s32 0, %v5231
    %v5233 = vrot.slane %v4886, %v5232
    %v5234 = vlaneseq
    %v5235 = vshrl.u32 %v5234, 7
    %v5236 = vsub.s32 0, %v5235
    %v5237 = vrot.slane %v4900, %v5236
    %v5238 = vlaneseq
    %v5239 = vshrl.u32 %v5238, 7
    %v5240 = vsub.s32 0, %v5239
    %v5241 = vrot.slane %v4902, %v5240
    %v5242 = vlaneseq
    %v5243 = vshrl.u32 %v5242, 7
    %v5244 = vsub.s32 0, %v5243
    %v5245 = vrot.slane %v4904, %v5244
    %v5246 = vlaneseq
    %v5247 = vshrl.u32 %v5246, 7
    %v5248 = vsub.s32 0, %v5247
    %v5249 = vrot.slane %v4928, %v5248
    %v5250 = vlaneseq
    %v5251 = vshrl.u32 %v5250, 7
    %v5252 = vsub.s32 0, %v5251
    %v5253 = vrot.slane %v4942, %v5252
    %v5254 = vlaneseq
    %v5255 = vshrl.u32 %v5254, 7
    %v5256 = vsub.s32 0, %v5255
    %v5257 = vrot.slane %v4950, %v5256
    %v5258 = vlaneseq
    %v5259 = vshrl.u32 %v5258, 7
    %v5260 = vsub.s32 0, %v5259
    %v5261 = vrot.slane %v4952, %v5260
    %v5262 = vlaneseq
    %v5263 = vshrl.u32 %v5262, 7
    %v5264 = vsub.s32 0, %v5263
    %v5265 = vrot.slane %v4935, %v5264
    %v5266 = vlaneseq
    %v5267 = vshrl.u32 %v5266, 7
    %v5268 = vsub.s32 0, %v5267
    %v5269 = vrot.slane %v4949, %v5268
    %v5270 = vlaneseq
    %v5271 = vshrl.u32 %v5270, 7
    %v5272 = vsub.s32 0, %v5271
    %v5273 = vrot.slane %v4951, %v5272
    %v5274 = vlaneseq
    %v5275 = vshrl.u32 %v5274, 7
    %v5276 = vsub.s32 0, %v5275
    %v5277 = vrot.slane %v4953, %v5276
    %v5278 = vlaneseq
    %v5279 = vshrl.u32 %v5278, 7
    %v5280 = vsub.s32 0, %v5279
    %v5281 = vrot.slane %v4977, %v5280
    %v5282 = vlaneseq
    %v5283 = vshrl.u32 %v5282, 7
    %v5284 = vsub.s32 0, %v5283
    %v5285 = vrot.slane %v4991, %v5284
    %v5286 = vlaneseq
    %v5287 = vshrl.u32 %v5286, 7
    %v5288 = vsub.s32 0, %v5287
    %v5289 = vrot.slane %v4999, %v5288
    %v5290 = vlaneseq
    %v5291 = vshrl.u32 %v5290, 7
    %v5292 = vsub.s32 0, %v5291
    %v5293 = vrot.slane %v5001, %v5292
    %v5294 = vlaneseq
    %v5295 = vshrl.u32 %v5294, 7
    %v5296 = vsub.s32 0, %v5295
    %v5297 = vrot.slane %v4984, %v5296
    %v5298 = vlaneseq
    %v5299 = vshrl.u32 %v5298, 7
    %v5300 = vsub.s32 0, %v5299
    %v5301 = vrot.slane %v4998, %v5300
    %v5302 = vlaneseq
    %v5303 = vshrl.u32 %v5302, 7
    %v5304 = vsub.s32 0, %v5303
    %v5305 = vrot.slane %v5000, %v5304
    %v5306 = vlaneseq
    %v5307 = vshrl.u32 %v5306, 7
    %v5308 = vsub.s32 0, %v5307
    %v5309 = vrot.slane %v5002, %v5308
    %v5310 = vlaneseq
    %v5311 = vshrl.u32 %v5310, 7
    %v5312 = vsub.s32 0, %v5311
    %v5313 = vrot.slane %v5026, %v5312
    %v5314 = vlaneseq
    %v5315 = vshrl.u32 %v5314, 7
    %v5316 = vsub.s32 0, %v5315
    %v5317 = vrot.slane %v5040, %v5316
    %v5318 = vlaneseq
    %v5319 = vshrl.u32 %v5318, 7
    %v5320 = vsub.s32 0, %v5319
    %v5321 = vrot.slane %v5048, %v5320
    %v5322 = vlaneseq
    %v5323 = vshrl.u32 %v5322, 7
    %v5324 = vsub.s32 0, %v5323
    %v5325 = vrot.slane %v5050, %v5324
    %v5326 = vlaneseq
    %v5327 = vshrl.u32 %v5326, 7
    %v5328 = vsub.s32 0, %v5327
    %v5329 = vrot.slane %v5033, %v5328
    %v5330 = vlaneseq
    %v5331 = vshrl.u32 %v5330, 7
    %v5332 = vsub.s32 0, %v5331
    %v5333 = vrot.slane %v5047, %v5332
    %v5334 = vlaneseq
    %v5335 = vshrl.u32 %v5334, 7
    %v5336 = vsub.s32 0, %v5335
    %v5337 = vrot.slane %v5049, %v5336
    %v5338 = vlaneseq
    %v5339 = vshrl.u32 %v5338, 7
    %v5340 = vsub.s32 0, %v5339
    %v5341 = vrot.slane %v5051, %v5340
    %v5342 = vlaneseq
    %v5343 = vshrl.u32 %v5342, 7
    %v5344 = vsub.s32 0, %v5343
    %v5345 = vrot.slane %v5075, %v5344
    %v5346 = vlaneseq
    %v5347 = vshrl.u32 %v5346, 7
    %v5348 = vsub.s32 0, %v5347
    %v5349 = vrot.slane %v5089, %v5348
    %v5350 = vlaneseq
    %v5351 = vshrl.u32 %v5350, 7
    %v5352 = vsub.s32 0, %v5351
    %v5353 = vrot.slane %v5097, %v5352
    %v5354 = vlaneseq
    %v5355 = vshrl.u32 %v5354, 7
    %v5356 = vsub.s32 0, %v5355
    %v5357 = vrot.slane %v5099, %v5356
    %v5358 = vlaneseq
    %v5359 = vshrl.u32 %v5358, 7
    %v5360 = vsub.s32 0, %v5359
    %v5361 = vrot.slane %v5082, %v5360
    %v5362 = vlaneseq
    %v5363 = vshrl.u32 %v5362, 7
    %v5364 = vsub.s32 0, %v5363
    %v5365 = vrot.slane %v5096, %v5364
    %v5366 = vlaneseq
    %v5367 = vshrl.u32 %v5366, 7
    %v5368 = vsub.s32 0, %v5367
    %v5369 = vrot.slane %v5098, %v5368
    %v5370 = vlaneseq
    %v5371 = vshrl.u32 %v5370, 7
    %v5372 = vsub.s32 0, %v5371
    %v5373 = vrot.slane %v5100, %v5372
    %v5374 = vlaneseq
    %v5375 = vshrl.u32 %v5374, 7
    %v5376 = vsub.s32 0, %v5375
    %v5377 = vrot.slane %v5124, %v5376
    %v5378 = vlaneseq
    %v5379 = vshrl.u32 %v5378, 7
    %v5380 = vsub.s32 0, %v5379
    %v5381 = vrot.slane %v5138, %v5380
    %v5382 = vlaneseq
    %v5383 = vshrl.u32 %v5382, 7
    %v5384 = vsub.s32 0, %v5383
    %v5385 = vrot.slane %v5146, %v5384
    %v5386 = vlaneseq
    %v5387 = vshrl.u32 %v5386, 7
    %v5388 = vsub.s32 0, %v5387
    %v5389 = vrot.slane %v5148, %v5388
    %v5390 = vlaneseq
    %v5391 = vshrl.u32 %v5390, 7
    %v5392 = vsub.s32 0, %v5391
    %v5393 = vrot.slane %v5131, %v5392
    %v5394 = vlaneseq
    %v5395 = vshrl.u32 %v5394, 7
    %v5396 = vsub.s32 0, %v5395
    %v5397 = vrot.slane %v5145, %v5396
    %v5398 = vlaneseq
    %v5399 = vshrl.u32 %v5398, 7
    %v5400 = vsub.s32 0, %v5399
    %v5401 = vrot.slane %v5147, %v5400
    %v5402 = vlaneseq
    %v5403 = vshrl.u32 %v5402, 7
    %v5404 = vsub.s32 0, %v5403
    %v5405 = vrot.slane %v5149, %v5404
    %v5470 = vmul.f32 %v5153, %v185
    %v5471 = vmul.f32 %v5157, %v283
    %v5472 = vmul.f32 %v5161, %v381
    %v5473 = vmul.f32 %v5165, %v479
    %v5474 = vmul.f32 %v5169, %v577
    %v5475 = vmul.f32 %v5173, %v675
    %v5476 = vmul.f32 %v5177, %v773
    %v5477 = vmul.f32 %v5181, %v871
    %v5478 = vmul.f32 %v5185, %v185
    %v5479 = vmul.f32 %v5189, %v283
    %v5480 = vmul.f32 %v5193, %v381
    %v5481 = vmul.f32 %v5197, %v479
    %v5482 = vmul.f32 %v5201, %v577
    %v5483 = vmul.f32 %v5205, %v675
    %v5484 = vmul.f32 %v5209, %v773
    %v5485 = vmul.f32 %v5213, %v871
    %v5486 = vmul.f32 %v5217, %v185
    %v5487 = vmul.f32 %v5221, %v283
    %v5488 = vmul.f32 %v5225, %v381
    %v5489 = vmul.f32 %v5229, %v479
    %v5490 = vmul.f32 %v5233, %v577
    %v5491 = vmul.f32 %v5237, %v675
    %v5492 = vmul.f32 %v5241, %v773
    %v5493 = vmul.f32 %v5245, %v871
    %v5494 = vmul.f32 %v5249, %v185
    %v5495 = vmul.f32 %v5253, %v283
    %v5496 = vmul.f32 %v5257, %v381
    %v5497 = vmul.f32 %v5261, %v479
    %v5498 = vmul.f32 %v5265, %v577
    %v5499 = vmul.f32 %v5269, %v675
    %v5500 = vmul.f32 %v5273, %v773
    %v5501 = vmul.f32 %v5277, %v871
    %v5502 = vmul.f32 %v5281, %v185
    %v5503 = vmul.f32 %v5285, %v283
    %v5504 = vmul.f32 %v5289, %v381
    %v5505 = vmul.f32 %v5293, %v479
    %v5506 = vmul.f32 %v5297, %v577
    %v5507 = vmul.f32 %v5301, %v675
    %v5508 = vmul.f32 %v5305, %v773
    %v5509 = vmul.f32 %v5309, %v871
    %v5510 = vmul.f32 %v5313, %v185
    %v5511 = vmul.f32 %v5317, %v283
    %v5512 = vmul.f32 %v5321, %v381
    %v5513 = vmul.f32 %v5325, %v479
    %v5514 = vmul.f32 %v5329, %v577
    %v5515 = vmul.f32 %v5333, %v675
    %v5516 = vmul.f32 %v5337, %v773
    %v5517 = vmul.f32 %v5341, %v871
    %v5518 = vmul.f32 %v5345, %v185
    %v5519 = vmul.f32 %v5349, %v283
    %v5520 = vmul.f32 %v5353, %v381
    %v5521 = vmul.f32 %v5357, %v479
    %v5522 = vmul.f32 %v5361, %v577
    %v5523 = vmul.f32 %v5365, %v675
    %v5524 = vmul.f32 %v5369, %v773
    %v5525 = vmul.f32 %v5373, %v871
    %v5526 = vmul.f32 %v5377, %v185
    %v5527 = vmul.f32 %v5381, %v283
    %v5528 = vmul.f32 %v5385, %v381
    %v5529 = vmul.f32 %v5389, %v479
    %v5530 = vmul.f32 %v5393, %v577
    %v5531 = vmul.f32 %v5397, %v675
    %v5532 = vmul.f32 %v5401, %v773
    %v5533 = vmul.f32 %v5405, %v871
    %v5534 = vadd.f32 %v5470, %v5471
    %v5535 = vadd.f32 %v5534, %v5472
    %v5536 = vadd.f32 %v5535, %v5473
    %v5537 = vadd.f32 %v5536, %v5474
    %v5538 = vadd.f32 %v5537, %v5475
    %v5539 = vadd.f32 %v5538, %v5476
    %v5540 = vadd.f32 %v5539, %v5477
    %v5541 = vadd.f32 %v5478, %v5479
    %v5542 = vadd.f32 %v5541, %v5480
    %v5543 = vadd.f32 %v5542, %v5481
    %v5544 = vadd.f32 %v5543, %v5482
    %v5545 = vadd.f32 %v5544, %v5483
    %v5546 = vadd.f32 %v5545, %v5484
    %v5547 = vadd.f32 %v5546, %v5485
    %v5548 = vadd.f32 %v5486, %v5487
    %v5549 = vadd.f32 %v5548, %v5488
    %v5550 = vadd.f32 %v5549, %v5489
    %v5551 = vadd.f32 %v5550, %v5490
    %v5552 = vadd.f32 %v5551, %v5491
    %v5553 = vadd.f32 %v5552, %v5492
    %v5554 = vadd.f32 %v5553, %v5493
    %v5555 = vadd.f32 %v5494, %v5495
    %v5556 = vadd.f32 %v5555, %v5496
    %v5557 = vadd.f32 %v5556, %v5497
    %v5558 = vadd.f32 %v5557, %v5498
    %v5559 = vadd.f32 %v5558, %v5499
    %v5560 = vadd.f32 %v5559, %v5500
    %v5561 = vadd.f32 %v5560, %v5501
    %v5562 = vadd.f32 %v5502, %v5503
    %v5563 = vadd.f32 %v5562, %v5504
    %v5564 = vadd.f32 %v5563, %v5505
    %v5565 = vadd.f32 %v5564, %v5506
    %v5566 = vadd.f32 %v5565, %v5507
    %v5567 = vadd.f32 %v5566, %v5508
    %v5568 = vadd.f32 %v5567, %v5509
    %v5569 = vadd.f32 %v5510, %v5511
    %v5570 = vadd.f32 %v5569, %v5512
    %v5571 = vadd.f32 %v5570, %v5513
    %v5572 = vadd.f32 %v5571, %v5514
    %v5573 = vadd.f32 %v5572, %v5515
    %v5574 = vadd.f32 %v5573, %v5516
    %v5575 = vadd.f32 %v5574, %v5517
    %v5576 = vadd.f32 %v5518, %v5519
    %v5577 = vadd.f32 %v5576, %v5520
    %v5578 = vadd.f32 %v5577, %v5521
    %v5579 = vadd.f32 %v5578, %v5522
    %v5580 = vadd.f32 %v5579, %v5523
    %v5581 = vadd.f32 %v5580, %v5524
    %v5582 = vadd.f32 %v5581, %v5525
    %v5583 = vadd.f32 %v5526, %v5527
    %v5584 = vadd.f32 %v5583, %v5528
    %v5585 = vadd.f32 %v5584, %v5529
    %v5586 = vadd.f32 %v5585, %v5530
    %v5587 = vadd.f32 %v5586, %v5531
    %v5588 = vadd.f32 %v5587, %v5532
    %v5589 = vadd.f32 %v5588, %v5533
    %v5590 = vmul.f32 %v156, %v172
    %v5591 = vmul.f32 %v156, %v270
    %v5592 = vmul.f32 %v156, %v368
    %v5593 = vmul.f32 %v156, %v466
    %v5594 = vmul.f32 %v156, %v564
    %v5595 = vmul.f32 %v156, %v662
    %v5596 = vmul.f32 %v156, %v760
    %v5597 = vmul.f32 %v156, %v858
    %v5598 = vmul.f32 %v254, %v172
    %v5599 = vmul.f32 %v254, %v270
    %v5600 = vmul.f32 %v254, %v368
    %v5601 = vmul.f32 %v254, %v466
    %v5602 = vmul.f32 %v254, %v564
    %v5603 = vmul.f32 %v254, %v662
    %v5604 = vmul.f32 %v254, %v760
    %v5605 = vmul.f32 %v254, %v858
    %v5606 = vmul.f32 %v352, %v172
    %v5607 = vmul.f32 %v352, %v270
    %v5608 = vmul.f32 %v352, %v368
    %v5609 = vmul.f32 %v352, %v466
    %v5610 = vmul.f32 %v352, %v564
    %v5611 = vmul.f32 %v352, %v662
    %v5612 = vmul.f32 %v352, %v760
    %v5613 = vmul.f32 %v352, %v858
    %v5614 = vmul.f32 %v450, %v172
    %v5615 = vmul.f32 %v450, %v270
    %v5616 = vmul.f32 %v450, %v368
    %v5617 = vmul.f32 %v450, %v466
    %v5618 = vmul.f32 %v450, %v564
    %v5619 = vmul.f32 %v450, %v662
    %v5620 = vmul.f32 %v450, %v760
    %v5621 = vmul.f32 %v450, %v858
    %v5622 = vmul.f32 %v548, %v172
    %v5623 = vmul.f32 %v548, %v270
    %v5624 = vmul.f32 %v548, %v368
    %v5625 = vmul.f32 %v548, %v466
    %v5626 = vmul.f32 %v548, %v564
    %v5627 = vmul.f32 %v548, %v662
    %v5628 = vmul.f32 %v548, %v760
    %v5629 = vmul.f32 %v548, %v858
    %v5630 = vmul.f32 %v646, %v172
    %v5631 = vmul.f32 %v646, %v270
    %v5632 = vmul.f32 %v646, %v368
    %v5633 = vmul.f32 %v646, %v466
    %v5634 = vmul.f32 %v646, %v564
    %v5635 = vmul.f32 %v646, %v662
    %v5636 = vmul.f32 %v646, %v760
    %v5637 = vmul.f32 %v646, %v858
    %v5638 = vmul.f32 %v744, %v172
    %v5639 = vmul.f32 %v744, %v270
    %v5640 = vmul.f32 %v744, %v368
    %v5641 = vmul.f32 %v744, %v466
    %v5642 = vmul.f32 %v744, %v564
    %v5643 = vmul.f32 %v744, %v662
    %v5644 = vmul.f32 %v744, %v760
    %v5645 = vmul.f32 %v744, %v858
    %v5646 = vmul.f32 %v842, %v172
    %v5647 = vmul.f32 %v842, %v270
    %v5648 = vmul.f32 %v842, %v368
    %v5649 = vmul.f32 %v842, %v466
    %v5650 = vmul.f32 %v842, %v564
    %v5651 = vmul.f32 %v842, %v662
    %v5652 = vmul.f32 %v842, %v760
    %v5653 = vmul.f32 %v842, %v858
    %v5654 = vrot.slane %v5590, 4
    %v5655 = vadd.f32 %v5590, %v5654
    %v5656 = vrot.slane %v5655, 2
    %v5657 = vadd.f32 %v5655, %v5656
    %v5658 = vrot.slane %v5657, 1
    %v5659 = vadd.f32 %v5657, %v5658
    %v5660 = vrot.slane %v5591, 4
    %v5661 = vadd.f32 %v5591, %v5660
    %v5662 = vrot.slane %v5661, 2
    %v5663 = vadd.f32 %v5661, %v5662
    %v5664 = vrot.slane %v5663, 1
    %v5665 = vadd.f32 %v5663, %v5664
    %v5666 = vrot.slane %v5592, 4
    %v5667 = vadd.f32 %v5592, %v5666
    %v5668 = vrot.slane %v5667, 2
    %v5669 = vadd.f32 %v5667, %v5668
    %v5670 = vrot.slane %v5669, 1
    %v5671 = vadd.f32 %v5669, %v5670
    %v5672 = vrot.slane %v5593, 4
    %v5673 = vadd.f32 %v5593, %v5672
    %v5674 = vrot.slane %v5673, 2
    %v5675 = vadd.f32 %v5673, %v5674
    %v5676 = vrot.slane %v5675, 1
    %v5677 = vadd.f32 %v5675, %v5676
    %v5678 = vrot.slane %v5594, 4
    %v5679 = vadd.f32 %v5594, %v5678
    %v5680 = vrot.slane %v5679, 2
    %v5681 = vadd.f32 %v5679, %v5680
    %v5682 = vrot.slane %v5681, 1
    %v5683 = vadd.f32 %v5681, %v5682
    %v5684 = vrot.slane %v5595, 4
    %v5685 = vadd.f32 %v5595, %v5684
    %v5686 = vrot.slane %v5685, 2
    %v5687 = vadd.f32 %v5685, %v5686
    %v5688 = vrot.slane %v5687, 1
    %v5689 = vadd.f32 %v5687, %v5688
    %v5690 = vrot.slane %v5596, 4
    %v5691 = vadd.f32 %v5596, %v5690
    %v5692 = vrot.slane %v5691, 2
    %v5693 = vadd.f32 %v5691, %v5692
    %v5694 = vrot.slane %v5693, 1
    %v5695 = vadd.f32 %v5693, %v5694
    %v5696 = vrot.slane %v5597, 4
    %v5697 = vadd.f32 %v5597, %v5696
    %v5698 = vrot.slane %v5697, 2
    %v5699 = vadd.f32 %v5697, %v5698
    %v5700 = vrot.slane %v5699, 1
    %v5701 = vadd.f32 %v5699, %v5700
    %v5702 = vrot.slane %v5598, 4
    %v5703 = vadd.f32 %v5598, %v5702
    %v5704 = vrot.slane %v5703, 2
    %v5705 = vadd.f32 %v5703, %v5704
    %v5706 = vrot.slane %v5705, 1
    %v5707 = vadd.f32 %v5705, %v5706
    %v5708 = vrot.slane %v5599, 4
    %v5709 = vadd.f32 %v5599, %v5708
    %v5710 = vrot.slane %v5709, 2
    %v5711 = vadd.f32 %v5709, %v5710
    %v5712 = vrot.slane %v5711, 1
    %v5713 = vadd.f32 %v5711, %v5712
    %v5714 = vrot.slane %v5600, 4
    %v5715 = vadd.f32 %v5600, %v5714
    %v5716 = vrot.slane %v5715, 2
    %v5717 = vadd.f32 %v5715, %v5716
    %v5718 = vrot.slane %v5717, 1
    %v5719 = vadd.f32 %v5717, %v5718
    %v5720 = vrot.slane %v5601, 4
    %v5721 = vadd.f32 %v5601, %v5720
    %v5722 = vrot.slane %v5721, 2
    %v5723 = vadd.f32 %v5721, %v5722
    %v5724 = vrot.slane %v5723, 1
    %v5725 = vadd.f32 %v5723, %v5724
    %v5726 = vrot.slane %v5602, 4
    %v5727 = vadd.f32 %v5602, %v5726
    %v5728 = vrot.slane %v5727, 2
    %v5729 = vadd.f32 %v5727, %v5728
    %v5730 = vrot.slane %v5729, 1
    %v5731 = vadd.f32 %v5729, %v5730
    %v5732 = vrot.slane %v5603, 4
    %v5733 = vadd.f32 %v5603, %v5732
    %v5734 = vrot.slane %v5733, 2
    %v5735 = vadd.f32 %v5733, %v5734
    %v5736 = vrot.slane %v5735, 1
    %v5737 = vadd.f32 %v5735, %v5736
    %v5738 = vrot.slane %v5604, 4
    %v5739 = vadd.f32 %v5604, %v5738
    %v5740 = vrot.slane %v5739, 2
    %v5741 = vadd.f32 %v5739, %v5740
    %v5742 = vrot.slane %v5741, 1
    %v5743 = vadd.f32 %v5741, %v5742
    %v5744 = vrot.slane %v5605, 4
    %v5745 = vadd.f32 %v5605, %v5744
    %v5746 = vrot.slane %v5745, 2
    %v5747 = vadd.f32 %v5745, %v5746
    %v5748 = vrot.slane %v5747, 1
    %v5749 = vadd.f32 %v5747, %v5748
    %v5750 = vrot.slane %v5606, 4
    %v5751 = vadd.f32 %v5606, %v5750
    %v5752 = vrot.slane %v5751, 2
    %v5753 = vadd.f32 %v5751, %v5752
    %v5754 = vrot.slane %v5753, 1
    %v5755 = vadd.f32 %v5753, %v5754
    %v5756 = vrot.slane %v5607, 4
    %v5757 = vadd.f32 %v5607, %v5756
    %v5758 = vrot.slane %v5757, 2
    %v5759 = vadd.f32 %v5757, %v5758
    %v5760 = vrot.slane %v5759, 1
    %v5761 = vadd.f32 %v5759, %v5760
    %v5762 = vrot.slane %v5608, 4
    %v5763 = vadd.f32 %v5608, %v5762
    %v5764 = vrot.slane %v5763, 2
    %v5765 = vadd.f32 %v5763, %v5764
    %v5766 = vrot.slane %v5765, 1
    %v5767 = vadd.f32 %v5765, %v5766
    %v5768 = vrot.slane %v5609, 4
    %v5769 = vadd.f32 %v5609, %v5768
    %v5770 = vrot.slane %v5769, 2
    %v5771 = vadd.f32 %v5769, %v5770
    %v5772 = vrot.slane %v5771, 1
    %v5773 = vadd.f32 %v5771, %v5772
    %v5774 = vrot.slane %v5610, 4
    %v5775 = vadd.f32 %v5610, %v5774
    %v5776 = vrot.slane %v5775, 2
    %v5777 = vadd.f32 %v5775, %v5776
    %v5778 = vrot.slane %v5777, 1
    %v5779 = vadd.f32 %v5777, %v5778
    %v5780 = vrot.slane %v5611, 4
    %v5781 = vadd.f32 %v5611, %v5780
    %v5782 = vrot.slane %v5781, 2
    %v5783 = vadd.f32 %v5781, %v5782
    %v5784 = vrot.slane %v5783, 1
    %v5785 = vadd.f32 %v5783, %v5784
    %v5786 = vrot.slane %v5612, 4
    %v5787 = vadd.f32 %v5612, %v5786
    %v5788 = vrot.slane %v5787, 2
    %v5789 = vadd.f32 %v5787, %v5788
    %v5790 = vrot.slane %v5789, 1
    %v5791 = vadd.f32 %v5789, %v5790
    %v5792 = vrot.slane %v5613, 4
    %v5793 = vadd.f32 %v5613, %v5792
    %v5794 = vrot.slane %v5793, 2
    %v5795 = vadd.f32 %v5793, %v5794
    %v5796 = vrot.slane %v5795, 1
    %v5797 = vadd.f32 %v5795, %v5796
    %v5798 = vrot.slane %v5614, 4
    %v5799 = vadd.f32 %v5614, %v5798
    %v5800 = vrot.slane %v5799, 2
    %v5801 = vadd.f32 %v5799, %v5800
    %v5802 = vrot.slane %v5801, 1
    %v5803 = vadd.f32 %v5801, %v5802
    %v5804 = vrot.slane %v5615, 4
    %v5805 = vadd.f32 %v5615, %v5804
    %v5806 = vrot.slane %v5805, 2
    %v5807 = vadd.f32 %v5805, %v5806
    %v5808 = vrot.slane %v5807, 1
    %v5809 = vadd.f32 %v5807, %v5808
    %v5810 = vrot.slane %v5616, 4
    %v5811 = vadd.f32 %v5616, %v5810
    %v5812 = vrot.slane %v5811, 2
    %v5813 = vadd.f32 %v5811, %v5812
    %v5814 = vrot.slane %v5813, 1
    %v5815 = vadd.f32 %v5813, %v5814
    %v5816 = vrot.slane %v5617, 4
    %v5817 = vadd.f32 %v5617, %v5816
    %v5818 = vrot.slane %v5817, 2
    %v5819 = vadd.f32 %v5817, %v5818
    %v5820 = vrot.slane %v5819, 1
    %v5821 = vadd.f32 %v5819, %v5820
    %v5822 = vrot.slane %v5618, 4
    %v5823 = vadd.f32 %v5618, %v5822
    %v5824 = vrot.slane %v5823, 2
    %v5825 = vadd.f32 %v5823, %v5824
    %v5826 = vrot.slane %v5825, 1
    %v5827 = vadd.f32 %v5825, %v5826
    %v5828 = vrot.slane %v5619, 4
    %v5829 = vadd.f32 %v5619, %v5828
    %v5830 = vrot.slane %v5829, 2
    %v5831 = vadd.f32 %v5829, %v5830
    %v5832 = vrot.slane %v5831, 1
    %v5833 = vadd.f32 %v5831, %v5832
    %v5834 = vrot.slane %v5620, 4
    %v5835 = vadd.f32 %v5620, %v5834
    %v5836 = vrot.slane %v5835, 2
    %v5837 = vadd.f32 %v5835, %v5836
    %v5838 = vrot.slane %v5837, 1
    %v5839 = vadd.f32 %v5837, %v5838
    %v5840 = vrot.slane %v5621, 4
    %v5841 = vadd.f32 %v5621, %v5840
    %v5842 = vrot.slane %v5841, 2
    %v5843 = vadd.f32 %v5841, %v5842
    %v5844 = vrot.slane %v5843, 1
    %v5845 = vadd.f32 %v5843, %v5844
    %v5846 = vrot.slane %v5622, 4
    %v5847 = vadd.f32 %v5622, %v5846
    %v5848 = vrot.slane %v5847, 2
    %v5849 = vadd.f32 %v5847, %v5848
    %v5850 = vrot.slane %v5849, 1
    %v5851 = vadd.f32 %v5849, %v5850
    %v5852 = vrot.slane %v5623, 4
    %v5853 = vadd.f32 %v5623, %v5852
    %v5854 = vrot.slane %v5853, 2
    %v5855 = vadd.f32 %v5853, %v5854
    %v5856 = vrot.slane %v5855, 1
    %v5857 = vadd.f32 %v5855, %v5856
    %v5858 = vrot.slane %v5624, 4
    %v5859 = vadd.f32 %v5624, %v5858
    %v5860 = vrot.slane %v5859, 2
    %v5861 = vadd.f32 %v5859, %v5860
    %v5862 = vrot.slane %v5861, 1
    %v5863 = vadd.f32 %v5861, %v5862
    %v5864 = vrot.slane %v5625, 4
    %v5865 = vadd.f32 %v5625, %v5864
    %v5866 = vrot.slane %v5865, 2
    %v5867 = vadd.f32 %v5865, %v5866
    %v5868 = vrot.slane %v5867, 1
    %v5869 = vadd.f32 %v5867, %v5868
    %v5870 = vrot.slane %v5626, 4
    %v5871 = vadd.f32 %v5626, %v5870
    %v5872 = vrot.slane %v5871, 2
    %v5873 = vadd.f32 %v5871, %v5872
    %v5874 = vrot.slane %v5873, 1
    %v5875 = vadd.f32 %v5873, %v5874
    %v5876 = vrot.slane %v5627, 4
    %v5877 = vadd.f32 %v5627, %v5876
    %v5878 = vrot.slane %v5877, 2
    %v5879 = vadd.f32 %v5877, %v5878
    %v5880 = vrot.slane %v5879, 1
    %v5881 = vadd.f32 %v5879, %v5880
    %v5882 = vrot.slane %v5628, 4
    %v5883 = vadd.f32 %v5628, %v5882
    %v5884 = vrot.slane %v5883, 2
    %v5885 = vadd.f32 %v5883, %v5884
    %v5886 = vrot.slane %v5885, 1
    %v5887 = vadd.f32 %v5885, %v5886
    %v5888 = vrot.slane %v5629, 4
    %v5889 = vadd.f32 %v5629, %v5888
    %v5890 = vrot.slane %v5889, 2
    %v5891 = vadd.f32 %v5889, %v5890
    %v5892 = vrot.slane %v5891, 1
    %v5893 = vadd.f32 %v5891, %v5892
    %v5894 = vrot.slane %v5630, 4
    %v5895 = vadd.f32 %v5630, %v5894
    %v5896 = vrot.slane %v5895, 2
    %v5897 = vadd.f32 %v5895, %v5896
    %v5898 = vrot.slane %v5897, 1
    %v5899 = vadd.f32 %v5897, %v5898
    %v5900 = vrot.slane %v5631, 4
    %v5901 = vadd.f32 %v5631, %v5900
    %v5902 = vrot.slane %v5901, 2
    %v5903 = vadd.f32 %v5901, %v5902
    %v5904 = vrot.slane %v5903, 1
    %v5905 = vadd.f32 %v5903, %v5904
    %v5906 = vrot.slane %v5632, 4
    %v5907 = vadd.f32 %v5632, %v5906
    %v5908 = vrot.slane %v5907, 2
    %v5909 = vadd.f32 %v5907, %v5908
    %v5910 = vrot.slane %v5909, 1
    %v5911 = vadd.f32 %v5909, %v5910
    %v5912 = vrot.slane %v5633, 4
    %v5913 = vadd.f32 %v5633, %v5912
    %v5914 = vrot.slane %v5913, 2
    %v5915 = vadd.f32 %v5913, %v5914
    %v5916 = vrot.slane %v5915, 1
    %v5917 = vadd.f32 %v5915, %v5916
    %v5918 = vrot.slane %v5634, 4
    %v5919 = vadd.f32 %v5634, %v5918
    %v5920 = vrot.slane %v5919, 2
    %v5921 = vadd.f32 %v5919, %v5920
    %v5922 = vrot.slane %v5921, 1
    %v5923 = vadd.f32 %v5921, %v5922
    %v5924 = vrot.slane %v5635, 4
    %v5925 = vadd.f32 %v5635, %v5924
    %v5926 = vrot.slane %v5925, 2
    %v5927 = vadd.f32 %v5925, %v5926
    %v5928 = vrot.slane %v5927, 1
    %v5929 = vadd.f32 %v5927, %v5928
    %v5930 = vrot.slane %v5636, 4
    %v5931 = vadd.f32 %v5636, %v5930
    %v5932 = vrot.slane %v5931, 2
    %v5933 = vadd.f32 %v5931, %v5932
    %v5934 = vrot.slane %v5933, 1
    %v5935 = vadd.f32 %v5933, %v5934
    %v5936 = vrot.slane %v5637, 4
    %v5937 = vadd.f32 %v5637, %v5936
    %v5938 = vrot.slane %v5937, 2
    %v5939 = vadd.f32 %v5937, %v5938
    %v5940 = vrot.slane %v5939, 1
    %v5941 = vadd.f32 %v5939, %v5940
    %v5942 = vrot.slane %v5638, 4
    %v5943 = vadd.f32 %v5638, %v5942
    %v5944 = vrot.slane %v5943, 2
    %v5945 = vadd.f32 %v5943, %v5944
    %v5946 = vrot.slane %v5945, 1
    %v5947 = vadd.f32 %v5945, %v5946
    %v5948 = vrot.slane %v5639, 4
    %v5949 = vadd.f32 %v5639, %v5948
    %v5950 = vrot.slane %v5949, 2
    %v5951 = vadd.f32 %v5949, %v5950
    %v5952 = vrot.slane %v5951, 1
    %v5953 = vadd.f32 %v5951, %v5952
    %v5954 = vrot.slane %v5640, 4
    %v5955 = vadd.f32 %v5640, %v5954
    %v5956 = vrot.slane %v5955, 2
    %v5957 = vadd.f32 %v5955, %v5956
    %v5958 = vrot.slane %v5957, 1
    %v5959 = vadd.f32 %v5957, %v5958
    %v5960 = vrot.slane %v5641, 4
    %v5961 = vadd.f32 %v5641, %v5960
    %v5962 = vrot.slane %v5961, 2
    %v5963 = vadd.f32 %v5961, %v5962
    %v5964 = vrot.slane %v5963, 1
    %v5965 = vadd.f32 %v5963, %v5964
    %v5966 = vrot.slane %v5642, 4
    %v5967 = vadd.f32 %v5642, %v5966
    %v5968 = vrot.slane %v5967, 2
    %v5969 = vadd.f32 %v5967, %v5968
    %v5970 = vrot.slane %v5969, 1
    %v5971 = vadd.f32 %v5969, %v5970
    %v5972 = vrot.slane %v5643, 4
    %v5973 = vadd.f32 %v5643, %v5972
    %v5974 = vrot.slane %v5973, 2
    %v5975 = vadd.f32 %v5973, %v5974
    %v5976 = vrot.slane %v5975, 1
    %v5977 = vadd.f32 %v5975, %v5976
    %v5978 = vrot.slane %v5644, 4
    %v5979 = vadd.f32 %v5644, %v5978
    %v5980 = vrot.slane %v5979, 2
    %v5981 = vadd.f32 %v5979, %v5980
    %v5982 = vrot.slane %v5981, 1
    %v5983 = vadd.f32 %v5981, %v5982
    %v5984 = vrot.slane %v5645, 4
    %v5985 = vadd.f32 %v5645, %v5984
    %v5986 = vrot.slane %v5985, 2
    %v5987 = vadd.f32 %v5985, %v5986
    %v5988 = vrot.slane %v5987, 1
    %v5989 = vadd.f32 %v5987, %v5988
    %v5990 = vrot.slane %v5646, 4
    %v5991 = vadd.f32 %v5646, %v5990
    %v5992 = vrot.slane %v5991, 2
    %v5993 = vadd.f32 %v5991, %v5992
    %v5994 = vrot.slane %v5993, 1
    %v5995 = vadd.f32 %v5993, %v5994
    %v5996 = vrot.slane %v5647, 4
    %v5997 = vadd.f32 %v5647, %v5996
    %v5998 = vrot.slane %v5997, 2
    %v5999 = vadd.f32 %v5997, %v5998
    %v6000 = vrot.slane %v5999, 1
    %v6001 = vadd.f32 %v5999, %v6000
    %v6002 = vrot.slane %v5648, 4
    %v6003 = vadd.f32 %v5648, %v6002
    %v6004 = vrot.slane %v6003, 2
    %v6005 = vadd.f32 %v6003, %v6004
    %v6006 = vrot.slane %v6005, 1
    %v6007 = vadd.f32 %v6005, %v6006
    %v6008 = vrot.slane %v5649, 4
    %v6009 = vadd.f32 %v5649, %v6008
    %v6010 = vrot.slane %v6009, 2
    %v6011 = vadd.f32 %v6009, %v6010
    %v6012 = vrot.slane %v6011, 1
    %v6013 = vadd.f32 %v6011, %v6012
    %v6014 = vrot.slane %v5650, 4
    %v6015 = vadd.f32 %v5650, %v6014
    %v6016 = vrot.slane %v6015, 2
    %v6017 = vadd.f32 %v6015, %v6016
    %v6018 = vrot.slane %v6017, 1
    %v6019 = vadd.f32 %v6017, %v6018
    %v6020 = vrot.slane %v5651, 4
    %v6021 = vadd.f32 %v5651, %v6020
    %v6022 = vrot.slane %v6021, 2
    %v6023 = vadd.f32 %v6021, %v6022
    %v6024 = vrot.slane %v6023, 1
    %v6025 = vadd.f32 %v6023, %v6024
    %v6026 = vrot.slane %v5652, 4
    %v6027 = vadd.f32 %v5652, %v6026
    %v6028 = vrot.slane %v6027, 2
    %v6029 = vadd.f32 %v6027, %v6028
    %v6030 = vrot.slane %v6029, 1
    %v6031 = vadd.f32 %v6029, %v6030
    %v6032 = vrot.slane %v5653, 4
    %v6033 = vadd.f32 %v5653, %v6032
    %v6034 = vrot.slane %v6033, 2
    %v6035 = vadd.f32 %v6033, %v6034
    %v6036 = vrot.slane %v6035, 1
    %v6037 = vadd.f32 %v6035, %v6036
    %v6102 = vsel %vm1415, %v5665, %v5659
    %v6103 = vsel %vm1417, %v5671, %v6102
    %v6104 = vsel %vm1419, %v5677, %v6103
    %v6105 = vsel %vm1421, %v5683, %v6104
    %v6106 = vsel %vm1423, %v5689, %v6105
    %v6107 = vsel %vm1425, %v5695, %v6106
    %v6108 = vsel %vm1427, %v5701, %v6107
    %v6109 = vsel %vm1415, %v5713, %v5707
    %v6110 = vsel %vm1417, %v5719, %v6109
    %v6111 = vsel %vm1419, %v5725, %v6110
    %v6112 = vsel %vm1421, %v5731, %v6111
    %v6113 = vsel %vm1423, %v5737, %v6112
    %v6114 = vsel %vm1425, %v5743, %v6113
    %v6115 = vsel %vm1427, %v5749, %v6114
    %v6116 = vsel %vm1415, %v5761, %v5755
    %v6117 = vsel %vm1417, %v5767, %v6116
    %v6118 = vsel %vm1419, %v5773, %v6117
    %v6119 = vsel %vm1421, %v5779, %v6118
    %v6120 = vsel %vm1423, %v5785, %v6119
    %v6121 = vsel %vm1425, %v5791, %v6120
    %v6122 = vsel %vm1427, %v5797, %v6121
    %v6123 = vsel %vm1415, %v5809, %v5803
    %v6124 = vsel %vm1417, %v5815, %v6123
    %v6125 = vsel %vm1419, %v5821, %v6124
    %v6126 = vsel %vm1421, %v5827, %v6125
    %v6127 = vsel %vm1423, %v5833, %v6126
    %v6128 = vsel %vm1425, %v5839, %v6127
    %v6129 = vsel %vm1427, %v5845, %v6128
    %v6130 = vsel %vm1415, %v5857, %v5851
    %v6131 = vsel %vm1417, %v5863, %v6130
    %v6132 = vsel %vm1419, %v5869, %v6131
    %v6133 = vsel %vm1421, %v5875, %v6132
    %v6134 = vsel %vm1423, %v5881, %v6133
    %v6135 = vsel %vm1425, %v5887, %v6134
    %v6136 = vsel %vm1427, %v5893, %v6135
    %v6137 = vsel %vm1415, %v5905, %v5899
    %v6138 = vsel %vm1417, %v5911, %v6137
    %v6139 = vsel %vm1419, %v5917, %v6138
    %v6140 = vsel %vm1421, %v5923, %v6139
    %v6141 = vsel %vm1423, %v5929, %v6140
    %v6142 = vsel %vm1425, %v5935, %v6141
    %v6143 = vsel %vm1427, %v5941, %v6142
    %v6144 = vsel %vm1415, %v5953, %v5947
    %v6145 = vsel %vm1417, %v5959, %v6144
    %v6146 = vsel %vm1419, %v5965, %v6145
    %v6147 = vsel %vm1421, %v5971, %v6146
    %v6148 = vsel %vm1423, %v5977, %v6147
    %v6149 = vsel %vm1425, %v5983, %v6148
    %v6150 = vsel %vm1427, %v5989, %v6149
    %v6151 = vsel %vm1415, %v6001, %v5995
    %v6152 = vsel %vm1417, %v6007, %v6151
    %v6153 = vsel %vm1419, %v6013, %v6152
    %v6154 = vsel %vm1421, %v6019, %v6153
    %v6155 = vsel %vm1423, %v6025, %v6154
    %v6156 = vsel %vm1425, %v6031, %v6155
    %v6157 = vsel %vm1427, %v6037, %v6156
    %v6166 = vsel %vm1343, %v6108, -1e+30
    %v6167 = vsel %vm1344, %v6115, -1e+30
    %v6168 = vsel %vm1345, %v6122, -1e+30
    %v6169 = vsel %vm1346, %v6129, -1e+30
    %v6170 = vsel %vm1347, %v6136, -1e+30
    %v6171 = vsel %vm1348, %v6143, -1e+30
    %v6172 = vsel %vm1349, %v6150, -1e+30
    %v6173 = vsel %vm1350, %v6157, -1e+30
    %v6174 = vrot.slane %v6166, 4
    %v6175 = vmax.f32 %v6166, %v6174
    %v6176 = vrot.slane %v6175, 2
    %v6177 = vmax.f32 %v6175, %v6176
    %v6178 = vrot.slane %v6177, 1
    %v6179 = vmax.f32 %v6177, %v6178
    %v6180 = vrot.slane %v6167, 4
    %v6181 = vmax.f32 %v6167, %v6180
    %v6182 = vrot.slane %v6181, 2
    %v6183 = vmax.f32 %v6181, %v6182
    %v6184 = vrot.slane %v6183, 1
    %v6185 = vmax.f32 %v6183, %v6184
    %v6186 = vrot.slane %v6168, 4
    %v6187 = vmax.f32 %v6168, %v6186
    %v6188 = vrot.slane %v6187, 2
    %v6189 = vmax.f32 %v6187, %v6188
    %v6190 = vrot.slane %v6189, 1
    %v6191 = vmax.f32 %v6189, %v6190
    %v6192 = vrot.slane %v6169, 4
    %v6193 = vmax.f32 %v6169, %v6192
    %v6194 = vrot.slane %v6193, 2
    %v6195 = vmax.f32 %v6193, %v6194
    %v6196 = vrot.slane %v6195, 1
    %v6197 = vmax.f32 %v6195, %v6196
    %v6198 = vrot.slane %v6170, 4
    %v6199 = vmax.f32 %v6170, %v6198
    %v6200 = vrot.slane %v6199, 2
    %v6201 = vmax.f32 %v6199, %v6200
    %v6202 = vrot.slane %v6201, 1
    %v6203 = vmax.f32 %v6201, %v6202
    %v6204 = vrot.slane %v6171, 4
    %v6205 = vmax.f32 %v6171, %v6204
    %v6206 = vrot.slane %v6205, 2
    %v6207 = vmax.f32 %v6205, %v6206
    %v6208 = vrot.slane %v6207, 1
    %v6209 = vmax.f32 %v6207, %v6208
    %v6210 = vrot.slane %v6172, 4
    %v6211 = vmax.f32 %v6172, %v6210
    %v6212 = vrot.slane %v6211, 2
    %v6213 = vmax.f32 %v6211, %v6212
    %v6214 = vrot.slane %v6213, 1
    %v6215 = vmax.f32 %v6213, %v6214
    %v6216 = vrot.slane %v6173, 4
    %v6217 = vmax.f32 %v6173, %v6216
    %v6218 = vrot.slane %v6217, 2
    %v6219 = vmax.f32 %v6217, %v6218
    %v6220 = vrot.slane %v6219, 1
    %v6221 = vmax.f32 %v6219, %v6220
    %v6222 = vsub.f32 %v6166, %v6179
    %v6223 = vsub.f32 %v6167, %v6185
    %v6224 = vsub.f32 %v6168, %v6191
    %v6225 = vsub.f32 %v6169, %v6197
    %v6226 = vsub.f32 %v6170, %v6203
    %v6227 = vsub.f32 %v6171, %v6209
    %v6228 = vsub.f32 %v6172, %v6215
    %v6229 = vsub.f32 %v6173, %v6221
    %v6230 = vmul.f32 %v6222, 1.442695
    %v6231 = vpow.pop %v6230
    %v6232 = vmul.f32 %v6223, 1.442695
    %v6233 = vpow.pop %v6232
    %v6234 = vmul.f32 %v6224, 1.442695
    %v6235 = vpow.pop %v6234
    %v6236 = vmul.f32 %v6225, 1.442695
    %v6237 = vpow.pop %v6236
    %v6238 = vmul.f32 %v6226, 1.442695
    %v6239 = vpow.pop %v6238
    %v6240 = vmul.f32 %v6227, 1.442695
    %v6241 = vpow.pop %v6240
    %v6242 = vmul.f32 %v6228, 1.442695
    %v6243 = vpow.pop %v6242
    %v6244 = vmul.f32 %v6229, 1.442695
    %v6245 = vpow.pop %v6244
    %v6246 = vrot.slane %v6231, 4
    %v6247 = vadd.f32 %v6231, %v6246
    %v6248 = vrot.slane %v6247, 2
    %v6249 = vadd.f32 %v6247, %v6248
    %v6250 = vrot.slane %v6249, 1
    %v6251 = vadd.f32 %v6249, %v6250
    %v6252 = vrot.slane %v6233, 4
    %v6253 = vadd.f32 %v6233, %v6252
    %v6254 = vrot.slane %v6253, 2
    %v6255 = vadd.f32 %v6253, %v6254
    %v6256 = vrot.slane %v6255, 1
    %v6257 = vadd.f32 %v6255, %v6256
    %v6258 = vrot.slane %v6235, 4
    %v6259 = vadd.f32 %v6235, %v6258
    %v6260 = vrot.slane %v6259, 2
    %v6261 = vadd.f32 %v6259, %v6260
    %v6262 = vrot.slane %v6261, 1
    %v6263 = vadd.f32 %v6261, %v6262
    %v6264 = vrot.slane %v6237, 4
    %v6265 = vadd.f32 %v6237, %v6264
    %v6266 = vrot.slane %v6265, 2
    %v6267 = vadd.f32 %v6265, %v6266
    %v6268 = vrot.slane %v6267, 1
    %v6269 = vadd.f32 %v6267, %v6268
    %v6270 = vrot.slane %v6239, 4
    %v6271 = vadd.f32 %v6239, %v6270
    %v6272 = vrot.slane %v6271, 2
    %v6273 = vadd.f32 %v6271, %v6272
    %v6274 = vrot.slane %v6273, 1
    %v6275 = vadd.f32 %v6273, %v6274
    %v6276 = vrot.slane %v6241, 4
    %v6277 = vadd.f32 %v6241, %v6276
    %v6278 = vrot.slane %v6277, 2
    %v6279 = vadd.f32 %v6277, %v6278
    %v6280 = vrot.slane %v6279, 1
    %v6281 = vadd.f32 %v6279, %v6280
    %v6282 = vrot.slane %v6243, 4
    %v6283 = vadd.f32 %v6243, %v6282
    %v6284 = vrot.slane %v6283, 2
    %v6285 = vadd.f32 %v6283, %v6284
    %v6286 = vrot.slane %v6285, 1
    %v6287 = vadd.f32 %v6285, %v6286
    %v6288 = vrot.slane %v6245, 4
    %v6289 = vadd.f32 %v6245, %v6288
    %v6290 = vrot.slane %v6289, 2
    %v6291 = vadd.f32 %v6289, %v6290
    %v6292 = vrot.slane %v6291, 1
    %v6293 = vadd.f32 %v6291, %v6292
    %v6294 = vrcp.pop %v6251
    %v6295 = vrcp.pop %v6257
    %v6296 = vrcp.pop %v6263
    %v6297 = vrcp.pop %v6269
    %v6298 = vrcp.pop %v6275
    %v6299 = vrcp.pop %v6281
    %v6300 = vrcp.pop %v6287
    %v6301 = vrcp.pop %v6293
    %v6302 = vmul.f32 %v6231, %v6294
    %v6303 = vmul.f32 %v6233, %v6295
    %v6304 = vmul.f32 %v6235, %v6296
    %v6305 = vmul.f32 %v6237, %v6297
    %v6306 = vmul.f32 %v6239, %v6298
    %v6307 = vmul.f32 %v6241, %v6299
    %v6308 = vmul.f32 %v6243, %v6300
    %v6309 = vmul.f32 %v6245, %v6301
    %v6318 = vcombine.high %v6302, %v6302
    %v6320 = vunpack.c.l.s4 1966171168
    %v6321 = vunpack.c.0.s8 %v6320
    %v6322 = vlaneseq
    %v6323 = vshrl.u32 %v6322, 7
    %v6324 = vsub.s32 %v6321, %v6323
    %v6325 = vrot.slane %v6302, %v6324
    %v6327 = vunpack.c.l.s4 1966171168
    %v6328 = vunpack.c.0.s8 %v6327
    %v6329 = vlaneseq
    %v6330 = vshrl.u32 %v6329, 7
    %v6331 = vsub.s32 %v6328, %v6330
    %v6332 = vrot.slane %v6318, %v6331
    %v6333 = vcombine.high %v6325, %v6325
    %v6334 = vcombine.high %v6332, %v6332
    %v6336 = vunpack.c.l.s4 1966171168
    %v6337 = vunpack.c.0.s8 %v6336
    %v6338 = vlaneseq
    %v6339 = vshrl.u32 %v6338, 7
    %v6340 = vsub.s32 %v6337, %v6339
    %v6341 = vrot.slane %v6325, %v6340
    %v6343 = vunpack.c.l.s4 1966171168
    %v6344 = vunpack.c.0.s8 %v6343
    %v6345 = vlaneseq
    %v6346 = vshrl.u32 %v6345, 7
    %v6347 = vsub.s32 %v6344, %v6346
    %v6348 = vrot.slane %v6332, %v6347
    %v6350 = vunpack.c.l.s4 1966171168
    %v6351 = vunpack.c.0.s8 %v6350
    %v6352 = vlaneseq
    %v6353 = vshrl.u32 %v6352, 7
    %v6354 = vsub.s32 %v6351, %v6353
    %v6355 = vrot.slane %v6333, %v6354
    %v6357 = vunpack.c.l.s4 1966171168
    %v6358 = vunpack.c.0.s8 %v6357
    %v6359 = vlaneseq
    %v6360 = vshrl.u32 %v6359, 7
    %v6361 = vsub.s32 %v6358, %v6360
    %v6362 = vrot.slane %v6334, %v6361
    %v6363 = vcombine.high %v6341, %v6341
    %v6364 = vcombine.high %v6348, %v6348
    %v6365 = vcombine.high %v6355, %v6355
    %v6366 = vcombine.high %v6362, %v6362
    %v6367 = vcombine.high %v6303, %v6303
    %v6369 = vunpack.c.l.s4 1966171168
    %v6370 = vunpack.c.0.s8 %v6369
    %v6371 = vlaneseq
    %v6372 = vshrl.u32 %v6371, 7
    %v6373 = vsub.s32 %v6370, %v6372
    %v6374 = vrot.slane %v6303, %v6373
    %v6376 = vunpack.c.l.s4 1966171168
    %v6377 = vunpack.c.0.s8 %v6376
    %v6378 = vlaneseq
    %v6379 = vshrl.u32 %v6378, 7
    %v6380 = vsub.s32 %v6377, %v6379
    %v6381 = vrot.slane %v6367, %v6380
    %v6382 = vcombine.high %v6374, %v6374
    %v6383 = vcombine.high %v6381, %v6381
    %v6385 = vunpack.c.l.s4 1966171168
    %v6386 = vunpack.c.0.s8 %v6385
    %v6387 = vlaneseq
    %v6388 = vshrl.u32 %v6387, 7
    %v6389 = vsub.s32 %v6386, %v6388
    %v6390 = vrot.slane %v6374, %v6389
    %v6392 = vunpack.c.l.s4 1966171168
    %v6393 = vunpack.c.0.s8 %v6392
    %v6394 = vlaneseq
    %v6395 = vshrl.u32 %v6394, 7
    %v6396 = vsub.s32 %v6393, %v6395
    %v6397 = vrot.slane %v6381, %v6396
    %v6399 = vunpack.c.l.s4 1966171168
    %v6400 = vunpack.c.0.s8 %v6399
    %v6401 = vlaneseq
    %v6402 = vshrl.u32 %v6401, 7
    %v6403 = vsub.s32 %v6400, %v6402
    %v6404 = vrot.slane %v6382, %v6403
    %v6406 = vunpack.c.l.s4 1966171168
    %v6407 = vunpack.c.0.s8 %v6406
    %v6408 = vlaneseq
    %v6409 = vshrl.u32 %v6408, 7
    %v6410 = vsub.s32 %v6407, %v6409
    %v6411 = vrot.slane %v6383, %v6410
    %v6412 = vcombine.high %v6390, %v6390
    %v6413 = vcombine.high %v6397, %v6397
    %v6414 = vcombine.high %v6404, %v6404
    %v6415 = vcombine.high %v6411, %v6411
    %v6416 = vcombine.high %v6304, %v6304
    %v6418 = vunpack.c.l.s4 1966171168
    %v6419 = vunpack.c.0.s8 %v6418
    %v6420 = vlaneseq
    %v6421 = vshrl.u32 %v6420, 7
    %v6422 = vsub.s32 %v6419, %v6421
    %v6423 = vrot.slane %v6304, %v6422
    %v6425 = vunpack.c.l.s4 1966171168
    %v6426 = vunpack.c.0.s8 %v6425
    %v6427 = vlaneseq
    %v6428 = vshrl.u32 %v6427, 7
    %v6429 = vsub.s32 %v6426, %v6428
    %v6430 = vrot.slane %v6416, %v6429
    %v6431 = vcombine.high %v6423, %v6423
    %v6432 = vcombine.high %v6430, %v6430
    %v6434 = vunpack.c.l.s4 1966171168
    %v6435 = vunpack.c.0.s8 %v6434
    %v6436 = vlaneseq
    %v6437 = vshrl.u32 %v6436, 7
    %v6438 = vsub.s32 %v6435, %v6437
    %v6439 = vrot.slane %v6423, %v6438
    %v6441 = vunpack.c.l.s4 1966171168
    %v6442 = vunpack.c.0.s8 %v6441
    %v6443 = vlaneseq
    %v6444 = vshrl.u32 %v6443, 7
    %v6445 = vsub.s32 %v6442, %v6444
    %v6446 = vrot.slane %v6430, %v6445
    %v6448 = vunpack.c.l.s4 1966171168
    %v6449 = vunpack.c.0.s8 %v6448
    %v6450 = vlaneseq
    %v6451 = vshrl.u32 %v6450, 7
    %v6452 = vsub.s32 %v6449, %v6451
    %v6453 = vrot.slane %v6431, %v6452
    %v6455 = vunpack.c.l.s4 1966171168
    %v6456 = vunpack.c.0.s8 %v6455
    %v6457 = vlaneseq
    %v6458 = vshrl.u32 %v6457, 7
    %v6459 = vsub.s32 %v6456, %v6458
    %v6460 = vrot.slane %v6432, %v6459
    %v6461 = vcombine.high %v6439, %v6439
    %v6462 = vcombine.high %v6446, %v6446
    %v6463 = vcombine.high %v6453, %v6453
    %v6464 = vcombine.high %v6460, %v6460
    %v6465 = vcombine.high %v6305, %v6305
    %v6467 = vunpack.c.l.s4 1966171168
    %v6468 = vunpack.c.0.s8 %v6467
    %v6469 = vlaneseq
    %v6470 = vshrl.u32 %v6469, 7
    %v6471 = vsub.s32 %v6468, %v6470
    %v6472 = vrot.slane %v6305, %v6471
    %v6474 = vunpack.c.l.s4 1966171168
    %v6475 = vunpack.c.0.s8 %v6474
    %v6476 = vlaneseq
    %v6477 = vshrl.u32 %v6476, 7
    %v6478 = vsub.s32 %v6475, %v6477
    %v6479 = vrot.slane %v6465, %v6478
    %v6480 = vcombine.high %v6472, %v6472
    %v6481 = vcombine.high %v6479, %v6479
    %v6483 = vunpack.c.l.s4 1966171168
    %v6484 = vunpack.c.0.s8 %v6483
    %v6485 = vlaneseq
    %v6486 = vshrl.u32 %v6485, 7
    %v6487 = vsub.s32 %v6484, %v6486
    %v6488 = vrot.slane %v6472, %v6487
    %v6490 = vunpack.c.l.s4 1966171168
    %v6491 = vunpack.c.0.s8 %v6490
    %v6492 = vlaneseq
    %v6493 = vshrl.u32 %v6492, 7
    %v6494 = vsub.s32 %v6491, %v6493
    %v6495 = vrot.slane %v6479, %v6494
    %v6497 = vunpack.c.l.s4 1966171168
    %v6498 = vunpack.c.0.s8 %v6497
    %v6499 = vlaneseq
    %v6500 = vshrl.u32 %v6499, 7
    %v6501 = vsub.s32 %v6498, %v6500
    %v6502 = vrot.slane %v6480, %v6501
    %v6504 = vunpack.c.l.s4 1966171168
    %v6505 = vunpack.c.0.s8 %v6504
    %v6506 = vlaneseq
    %v6507 = vshrl.u32 %v6506, 7
    %v6508 = vsub.s32 %v6505, %v6507
    %v6509 = vrot.slane %v6481, %v6508
    %v6510 = vcombine.high %v6488, %v6488
    %v6511 = vcombine.high %v6495, %v6495
    %v6512 = vcombine.high %v6502, %v6502
    %v6513 = vcombine.high %v6509, %v6509
    %v6514 = vcombine.high %v6306, %v6306
    %v6516 = vunpack.c.l.s4 1966171168
    %v6517 = vunpack.c.0.s8 %v6516
    %v6518 = vlaneseq
    %v6519 = vshrl.u32 %v6518, 7
    %v6520 = vsub.s32 %v6517, %v6519
    %v6521 = vrot.slane %v6306, %v6520
    %v6523 = vunpack.c.l.s4 1966171168
    %v6524 = vunpack.c.0.s8 %v6523
    %v6525 = vlaneseq
    %v6526 = vshrl.u32 %v6525, 7
    %v6527 = vsub.s32 %v6524, %v6526
    %v6528 = vrot.slane %v6514, %v6527
    %v6529 = vcombine.high %v6521, %v6521
    %v6530 = vcombine.high %v6528, %v6528
    %v6532 = vunpack.c.l.s4 1966171168
    %v6533 = vunpack.c.0.s8 %v6532
    %v6534 = vlaneseq
    %v6535 = vshrl.u32 %v6534, 7
    %v6536 = vsub.s32 %v6533, %v6535
    %v6537 = vrot.slane %v6521, %v6536
    %v6539 = vunpack.c.l.s4 1966171168
    %v6540 = vunpack.c.0.s8 %v6539
    %v6541 = vlaneseq
    %v6542 = vshrl.u32 %v6541, 7
    %v6543 = vsub.s32 %v6540, %v6542
    %v6544 = vrot.slane %v6528, %v6543
    %v6546 = vunpack.c.l.s4 1966171168
    %v6547 = vunpack.c.0.s8 %v6546
    %v6548 = vlaneseq
    %v6549 = vshrl.u32 %v6548, 7
    %v6550 = vsub.s32 %v6547, %v6549
    %v6551 = vrot.slane %v6529, %v6550
    %v6553 = vunpack.c.l.s4 1966171168
    %v6554 = vunpack.c.0.s8 %v6553
    %v6555 = vlaneseq
    %v6556 = vshrl.u32 %v6555, 7
    %v6557 = vsub.s32 %v6554, %v6556
    %v6558 = vrot.slane %v6530, %v6557
    %v6559 = vcombine.high %v6537, %v6537
    %v6560 = vcombine.high %v6544, %v6544
    %v6561 = vcombine.high %v6551, %v6551
    %v6562 = vcombine.high %v6558, %v6558
    %v6563 = vcombine.high %v6307, %v6307
    %v6565 = vunpack.c.l.s4 1966171168
    %v6566 = vunpack.c.0.s8 %v6565
    %v6567 = vlaneseq
    %v6568 = vshrl.u32 %v6567, 7
    %v6569 = vsub.s32 %v6566, %v6568
    %v6570 = vrot.slane %v6307, %v6569
    %v6572 = vunpack.c.l.s4 1966171168
    %v6573 = vunpack.c.0.s8 %v6572
    %v6574 = vlaneseq
    %v6575 = vshrl.u32 %v6574, 7
    %v6576 = vsub.s32 %v6573, %v6575
    %v6577 = vrot.slane %v6563, %v6576
    %v6578 = vcombine.high %v6570, %v6570
    %v6579 = vcombine.high %v6577, %v6577
    %v6581 = vunpack.c.l.s4 1966171168
    %v6582 = vunpack.c.0.s8 %v6581
    %v6583 = vlaneseq
    %v6584 = vshrl.u32 %v6583, 7
    %v6585 = vsub.s32 %v6582, %v6584
    %v6586 = vrot.slane %v6570, %v6585
    %v6588 = vunpack.c.l.s4 1966171168
    %v6589 = vunpack.c.0.s8 %v6588
    %v6590 = vlaneseq
    %v6591 = vshrl.u32 %v6590, 7
    %v6592 = vsub.s32 %v6589, %v6591
    %v6593 = vrot.slane %v6577, %v6592
    %v6595 = vunpack.c.l.s4 1966171168
    %v6596 = vunpack.c.0.s8 %v6595
    %v6597 = vlaneseq
    %v6598 = vshrl.u32 %v6597, 7
    %v6599 = vsub.s32 %v6596, %v6598
    %v6600 = vrot.slane %v6578, %v6599
    %v6602 = vunpack.c.l.s4 1966171168
    %v6603 = vunpack.c.0.s8 %v6602
    %v6604 = vlaneseq
    %v6605 = vshrl.u32 %v6604, 7
    %v6606 = vsub.s32 %v6603, %v6605
    %v6607 = vrot.slane %v6579, %v6606
    %v6608 = vcombine.high %v6586, %v6586
    %v6609 = vcombine.high %v6593, %v6593
    %v6610 = vcombine.high %v6600, %v6600
    %v6611 = vcombine.high %v6607, %v6607
    %v6612 = vcombine.high %v6308, %v6308
    %v6614 = vunpack.c.l.s4 1966171168
    %v6615 = vunpack.c.0.s8 %v6614
    %v6616 = vlaneseq
    %v6617 = vshrl.u32 %v6616, 7
    %v6618 = vsub.s32 %v6615, %v6617
    %v6619 = vrot.slane %v6308, %v6618
    %v6621 = vunpack.c.l.s4 1966171168
    %v6622 = vunpack.c.0.s8 %v6621
    %v6623 = vlaneseq
    %v6624 = vshrl.u32 %v6623, 7
    %v6625 = vsub.s32 %v6622, %v6624
    %v6626 = vrot.slane %v6612, %v6625
    %v6627 = vcombine.high %v6619, %v6619
    %v6628 = vcombine.high %v6626, %v6626
    %v6630 = vunpack.c.l.s4 1966171168
    %v6631 = vunpack.c.0.s8 %v6630
    %v6632 = vlaneseq
    %v6633 = vshrl.u32 %v6632, 7
    %v6634 = vsub.s32 %v6631, %v6633
    %v6635 = vrot.slane %v6619, %v6634
    %v6637 = vunpack.c.l.s4 1966171168
    %v6638 = vunpack.c.0.s8 %v6637
    %v6639 = vlaneseq
    %v6640 = vshrl.u32 %v6639, 7
    %v6641 = vsub.s32 %v6638, %v6640
    %v6642 = vrot.slane %v6626, %v6641
    %v6644 = vunpack.c.l.s4 1966171168
    %v6645 = vunpack.c.0.s8 %v6644
    %v6646 = vlaneseq
    %v6647 = vshrl.u32 %v6646, 7
    %v6648 = vsub.s32 %v6645, %v6647
    %v6649 = vrot.slane %v6627, %v6648
    %v6651 = vunpack.c.l.s4 1966171168
    %v6652 = vunpack.c.0.s8 %v6651
    %v6653 = vlaneseq
    %v6654 = vshrl.u32 %v6653, 7
    %v6655 = vsub.s32 %v6652, %v6654
    %v6656 = vrot.slane %v6628, %v6655
    %v6657 = vcombine.high %v6635, %v6635
    %v6658 = vcombine.high %v6642, %v6642
    %v6659 = vcombine.high %v6649, %v6649
    %v6660 = vcombine.high %v6656, %v6656
    %v6661 = vcombine.high %v6309, %v6309
    %v6663 = vunpack.c.l.s4 1966171168
    %v6664 = vunpack.c.0.s8 %v6663
    %v6665 = vlaneseq
    %v6666 = vshrl.u32 %v6665, 7
    %v6667 = vsub.s32 %v6664, %v6666
    %v6668 = vrot.slane %v6309, %v6667
    %v6670 = vunpack.c.l.s4 1966171168
    %v6671 = vunpack.c.0.s8 %v6670
    %v6672 = vlaneseq
    %v6673 = vshrl.u32 %v6672, 7
    %v6674 = vsub.s32 %v6671, %v6673
    %v6675 = vrot.slane %v6661, %v6674
    %v6676 = vcombine.high %v6668, %v6668
    %v6677 = vcombine.high %v6675, %v6675
    %v6679 = vunpack.c.l.s4 1966171168
    %v6680 = vunpack.c.0.s8 %v6679
    %v6681 = vlaneseq
    %v6682 = vshrl.u32 %v6681, 7
    %v6683 = vsub.s32 %v6680, %v6682
    %v6684 = vrot.slane %v6668, %v6683
    %v6686 = vunpack.c.l.s4 1966171168
    %v6687 = vunpack.c.0.s8 %v6686
    %v6688 = vlaneseq
    %v6689 = vshrl.u32 %v6688, 7
    %v6690 = vsub.s32 %v6687, %v6689
    %v6691 = vrot.slane %v6675, %v6690
    %v6693 = vunpack.c.l.s4 1966171168
    %v6694 = vunpack.c.0.s8 %v6693
    %v6695 = vlaneseq
    %v6696 = vshrl.u32 %v6695, 7
    %v6697 = vsub.s32 %v6694, %v6696
    %v6698 = vrot.slane %v6676, %v6697
    %v6700 = vunpack.c.l.s4 1966171168
    %v6701 = vunpack.c.0.s8 %v6700
    %v6702 = vlaneseq
    %v6703 = vshrl.u32 %v6702, 7
    %v6704 = vsub.s32 %v6701, %v6703
    %v6705 = vrot.slane %v6677, %v6704
    %v6706 = vcombine.high %v6684, %v6684
    %v6707 = vcombine.high %v6691, %v6691
    %v6708 = vcombine.high %v6698, %v6698
    %v6709 = vcombine.high %v6705, %v6705
    %v6710 = vlaneseq
    %v6711 = vshrl.u32 %v6710, 7
    %v6712 = vsub.s32 0, %v6711
    %v6713 = vrot.slane %v6341, %v6712
    %v6714 = vlaneseq
    %v6715 = vshrl.u32 %v6714, 7
    %v6716 = vsub.s32 0, %v6715
    %v6717 = vrot.slane %v6355, %v6716
    %v6718 = vlaneseq
    %v6719 = vshrl.u32 %v6718, 7
    %v6720 = vsub.s32 0, %v6719
    %v6721 = vrot.slane %v6363, %v6720
    %v6722 = vlaneseq
    %v6723 = vshrl.u32 %v6722, 7
    %v6724 = vsub.s32 0, %v6723
    %v6725 = vrot.slane %v6365, %v6724
    %v6726 = vlaneseq
    %v6727 = vshrl.u32 %v6726, 7
    %v6728 = vsub.s32 0, %v6727
    %v6729 = vrot.slane %v6348, %v6728
    %v6730 = vlaneseq
    %v6731 = vshrl.u32 %v6730, 7
    %v6732 = vsub.s32 0, %v6731
    %v6733 = vrot.slane %v6362, %v6732
    %v6734 = vlaneseq
    %v6735 = vshrl.u32 %v6734, 7
    %v6736 = vsub.s32 0, %v6735
    %v6737 = vrot.slane %v6364, %v6736
    %v6738 = vlaneseq
    %v6739 = vshrl.u32 %v6738, 7
    %v6740 = vsub.s32 0, %v6739
    %v6741 = vrot.slane %v6366, %v6740
    %v6742 = vlaneseq
    %v6743 = vshrl.u32 %v6742, 7
    %v6744 = vsub.s32 0, %v6743
    %v6745 = vrot.slane %v6390, %v6744
    %v6746 = vlaneseq
    %v6747 = vshrl.u32 %v6746, 7
    %v6748 = vsub.s32 0, %v6747
    %v6749 = vrot.slane %v6404, %v6748
    %v6750 = vlaneseq
    %v6751 = vshrl.u32 %v6750, 7
    %v6752 = vsub.s32 0, %v6751
    %v6753 = vrot.slane %v6412, %v6752
    %v6754 = vlaneseq
    %v6755 = vshrl.u32 %v6754, 7
    %v6756 = vsub.s32 0, %v6755
    %v6757 = vrot.slane %v6414, %v6756
    %v6758 = vlaneseq
    %v6759 = vshrl.u32 %v6758, 7
    %v6760 = vsub.s32 0, %v6759
    %v6761 = vrot.slane %v6397, %v6760
    %v6762 = vlaneseq
    %v6763 = vshrl.u32 %v6762, 7
    %v6764 = vsub.s32 0, %v6763
    %v6765 = vrot.slane %v6411, %v6764
    %v6766 = vlaneseq
    %v6767 = vshrl.u32 %v6766, 7
    %v6768 = vsub.s32 0, %v6767
    %v6769 = vrot.slane %v6413, %v6768
    %v6770 = vlaneseq
    %v6771 = vshrl.u32 %v6770, 7
    %v6772 = vsub.s32 0, %v6771
    %v6773 = vrot.slane %v6415, %v6772
    %v6774 = vlaneseq
    %v6775 = vshrl.u32 %v6774, 7
    %v6776 = vsub.s32 0, %v6775
    %v6777 = vrot.slane %v6439, %v6776
    %v6778 = vlaneseq
    %v6779 = vshrl.u32 %v6778, 7
    %v6780 = vsub.s32 0, %v6779
    %v6781 = vrot.slane %v6453, %v6780
    %v6782 = vlaneseq
    %v6783 = vshrl.u32 %v6782, 7
    %v6784 = vsub.s32 0, %v6783
    %v6785 = vrot.slane %v6461, %v6784
    %v6786 = vlaneseq
    %v6787 = vshrl.u32 %v6786, 7
    %v6788 = vsub.s32 0, %v6787
    %v6789 = vrot.slane %v6463, %v6788
    %v6790 = vlaneseq
    %v6791 = vshrl.u32 %v6790, 7
    %v6792 = vsub.s32 0, %v6791
    %v6793 = vrot.slane %v6446, %v6792
    %v6794 = vlaneseq
    %v6795 = vshrl.u32 %v6794, 7
    %v6796 = vsub.s32 0, %v6795
    %v6797 = vrot.slane %v6460, %v6796
    %v6798 = vlaneseq
    %v6799 = vshrl.u32 %v6798, 7
    %v6800 = vsub.s32 0, %v6799
    %v6801 = vrot.slane %v6462, %v6800
    %v6802 = vlaneseq
    %v6803 = vshrl.u32 %v6802, 7
    %v6804 = vsub.s32 0, %v6803
    %v6805 = vrot.slane %v6464, %v6804
    %v6806 = vlaneseq
    %v6807 = vshrl.u32 %v6806, 7
    %v6808 = vsub.s32 0, %v6807
    %v6809 = vrot.slane %v6488, %v6808
    %v6810 = vlaneseq
    %v6811 = vshrl.u32 %v6810, 7
    %v6812 = vsub.s32 0, %v6811
    %v6813 = vrot.slane %v6502, %v6812
    %v6814 = vlaneseq
    %v6815 = vshrl.u32 %v6814, 7
    %v6816 = vsub.s32 0, %v6815
    %v6817 = vrot.slane %v6510, %v6816
    %v6818 = vlaneseq
    %v6819 = vshrl.u32 %v6818, 7
    %v6820 = vsub.s32 0, %v6819
    %v6821 = vrot.slane %v6512, %v6820
    %v6822 = vlaneseq
    %v6823 = vshrl.u32 %v6822, 7
    %v6824 = vsub.s32 0, %v6823
    %v6825 = vrot.slane %v6495, %v6824
    %v6826 = vlaneseq
    %v6827 = vshrl.u32 %v6826, 7
    %v6828 = vsub.s32 0, %v6827
    %v6829 = vrot.slane %v6509, %v6828
    %v6830 = vlaneseq
    %v6831 = vshrl.u32 %v6830, 7
    %v6832 = vsub.s32 0, %v6831
    %v6833 = vrot.slane %v6511, %v6832
    %v6834 = vlaneseq
    %v6835 = vshrl.u32 %v6834, 7
    %v6836 = vsub.s32 0, %v6835
    %v6837 = vrot.slane %v6513, %v6836
    %v6838 = vlaneseq
    %v6839 = vshrl.u32 %v6838, 7
    %v6840 = vsub.s32 0, %v6839
    %v6841 = vrot.slane %v6537, %v6840
    %v6842 = vlaneseq
    %v6843 = vshrl.u32 %v6842, 7
    %v6844 = vsub.s32 0, %v6843
    %v6845 = vrot.slane %v6551, %v6844
    %v6846 = vlaneseq
    %v6847 = vshrl.u32 %v6846, 7
    %v6848 = vsub.s32 0, %v6847
    %v6849 = vrot.slane %v6559, %v6848
    %v6850 = vlaneseq
    %v6851 = vshrl.u32 %v6850, 7
    %v6852 = vsub.s32 0, %v6851
    %v6853 = vrot.slane %v6561, %v6852
    %v6854 = vlaneseq
    %v6855 = vshrl.u32 %v6854, 7
    %v6856 = vsub.s32 0, %v6855
    %v6857 = vrot.slane %v6544, %v6856
    %v6858 = vlaneseq
    %v6859 = vshrl.u32 %v6858, 7
    %v6860 = vsub.s32 0, %v6859
    %v6861 = vrot.slane %v6558, %v6860
    %v6862 = vlaneseq
    %v6863 = vshrl.u32 %v6862, 7
    %v6864 = vsub.s32 0, %v6863
    %v6865 = vrot.slane %v6560, %v6864
    %v6866 = vlaneseq
    %v6867 = vshrl.u32 %v6866, 7
    %v6868 = vsub.s32 0, %v6867
    %v6869 = vrot.slane %v6562, %v6868
    %v6870 = vlaneseq
    %v6871 = vshrl.u32 %v6870, 7
    %v6872 = vsub.s32 0, %v6871
    %v6873 = vrot.slane %v6586, %v6872
    %v6874 = vlaneseq
    %v6875 = vshrl.u32 %v6874, 7
    %v6876 = vsub.s32 0, %v6875
    %v6877 = vrot.slane %v6600, %v6876
    %v6878 = vlaneseq
    %v6879 = vshrl.u32 %v6878, 7
    %v6880 = vsub.s32 0, %v6879
    %v6881 = vrot.slane %v6608, %v6880
    %v6882 = vlaneseq
    %v6883 = vshrl.u32 %v6882, 7
    %v6884 = vsub.s32 0, %v6883
    %v6885 = vrot.slane %v6610, %v6884
    %v6886 = vlaneseq
    %v6887 = vshrl.u32 %v6886, 7
    %v6888 = vsub.s32 0, %v6887
    %v6889 = vrot.slane %v6593, %v6888
    %v6890 = vlaneseq
    %v6891 = vshrl.u32 %v6890, 7
    %v6892 = vsub.s32 0, %v6891
    %v6893 = vrot.slane %v6607, %v6892
    %v6894 = vlaneseq
    %v6895 = vshrl.u32 %v6894, 7
    %v6896 = vsub.s32 0, %v6895
    %v6897 = vrot.slane %v6609, %v6896
    %v6898 = vlaneseq
    %v6899 = vshrl.u32 %v6898, 7
    %v6900 = vsub.s32 0, %v6899
    %v6901 = vrot.slane %v6611, %v6900
    %v6902 = vlaneseq
    %v6903 = vshrl.u32 %v6902, 7
    %v6904 = vsub.s32 0, %v6903
    %v6905 = vrot.slane %v6635, %v6904
    %v6906 = vlaneseq
    %v6907 = vshrl.u32 %v6906, 7
    %v6908 = vsub.s32 0, %v6907
    %v6909 = vrot.slane %v6649, %v6908
    %v6910 = vlaneseq
    %v6911 = vshrl.u32 %v6910, 7
    %v6912 = vsub.s32 0, %v6911
    %v6913 = vrot.slane %v6657, %v6912
    %v6914 = vlaneseq
    %v6915 = vshrl.u32 %v6914, 7
    %v6916 = vsub.s32 0, %v6915
    %v6917 = vrot.slane %v6659, %v6916
    %v6918 = vlaneseq
    %v6919 = vshrl.u32 %v6918, 7
    %v6920 = vsub.s32 0, %v6919
    %v6921 = vrot.slane %v6642, %v6920
    %v6922 = vlaneseq
    %v6923 = vshrl.u32 %v6922, 7
    %v6924 = vsub.s32 0, %v6923
    %v6925 = vrot.slane %v6656, %v6924
    %v6926 = vlaneseq
    %v6927 = vshrl.u32 %v6926, 7
    %v6928 = vsub.s32 0, %v6927
    %v6929 = vrot.slane %v6658, %v6928
    %v6930 = vlaneseq
    %v6931 = vshrl.u32 %v6930, 7
    %v6932 = vsub.s32 0, %v6931
    %v6933 = vrot.slane %v6660, %v6932
    %v6934 = vlaneseq
    %v6935 = vshrl.u32 %v6934, 7
    %v6936 = vsub.s32 0, %v6935
    %v6937 = vrot.slane %v6684, %v6936
    %v6938 = vlaneseq
    %v6939 = vshrl.u32 %v6938, 7
    %v6940 = vsub.s32 0, %v6939
    %v6941 = vrot.slane %v6698, %v6940
    %v6942 = vlaneseq
    %v6943 = vshrl.u32 %v6942, 7
    %v6944 = vsub.s32 0, %v6943
    %v6945 = vrot.slane %v6706, %v6944
    %v6946 = vlaneseq
    %v6947 = vshrl.u32 %v6946, 7
    %v6948 = vsub.s32 0, %v6947
    %v6949 = vrot.slane %v6708, %v6948
    %v6950 = vlaneseq
    %v6951 = vshrl.u32 %v6950, 7
    %v6952 = vsub.s32 0, %v6951
    %v6953 = vrot.slane %v6691, %v6952
    %v6954 = vlaneseq
    %v6955 = vshrl.u32 %v6954, 7
    %v6956 = vsub.s32 0, %v6955
    %v6957 = vrot.slane %v6705, %v6956
    %v6958 = vlaneseq
    %v6959 = vshrl.u32 %v6958, 7
    %v6960 = vsub.s32 0, %v6959
    %v6961 = vrot.slane %v6707, %v6960
    %v6962 = vlaneseq
    %v6963 = vshrl.u32 %v6962, 7
    %v6964 = vsub.s32 0, %v6963
    %v6965 = vrot.slane %v6709, %v6964
    %v7030 = vmul.f32 %v6713, %v188
    %v7031 = vmul.f32 %v6717, %v286
    %v7032 = vmul.f32 %v6721, %v384
    %v7033 = vmul.f32 %v6725, %v482
    %v7034 = vmul.f32 %v6729, %v580
    %v7035 = vmul.f32 %v6733, %v678
    %v7036 = vmul.f32 %v6737, %v776
    %v7037 = vmul.f32 %v6741, %v874
    %v7038 = vmul.f32 %v6745, %v188
    %v7039 = vmul.f32 %v6749, %v286
    %v7040 = vmul.f32 %v6753, %v384
    %v7041 = vmul.f32 %v6757, %v482
    %v7042 = vmul.f32 %v6761, %v580
    %v7043 = vmul.f32 %v6765, %v678
    %v7044 = vmul.f32 %v6769, %v776
    %v7045 = vmul.f32 %v6773, %v874
    %v7046 = vmul.f32 %v6777, %v188
    %v7047 = vmul.f32 %v6781, %v286
    %v7048 = vmul.f32 %v6785, %v384
    %v7049 = vmul.f32 %v6789, %v482
    %v7050 = vmul.f32 %v6793, %v580
    %v7051 = vmul.f32 %v6797, %v678
    %v7052 = vmul.f32 %v6801, %v776
    %v7053 = vmul.f32 %v6805, %v874
    %v7054 = vmul.f32 %v6809, %v188
    %v7055 = vmul.f32 %v6813, %v286
    %v7056 = vmul.f32 %v6817, %v384
    %v7057 = vmul.f32 %v6821, %v482
    %v7058 = vmul.f32 %v6825, %v580
    %v7059 = vmul.f32 %v6829, %v678
    %v7060 = vmul.f32 %v6833, %v776
    %v7061 = vmul.f32 %v6837, %v874
    %v7062 = vmul.f32 %v6841, %v188
    %v7063 = vmul.f32 %v6845, %v286
    %v7064 = vmul.f32 %v6849, %v384
    %v7065 = vmul.f32 %v6853, %v482
    %v7066 = vmul.f32 %v6857, %v580
    %v7067 = vmul.f32 %v6861, %v678
    %v7068 = vmul.f32 %v6865, %v776
    %v7069 = vmul.f32 %v6869, %v874
    %v7070 = vmul.f32 %v6873, %v188
    %v7071 = vmul.f32 %v6877, %v286
    %v7072 = vmul.f32 %v6881, %v384
    %v7073 = vmul.f32 %v6885, %v482
    %v7074 = vmul.f32 %v6889, %v580
    %v7075 = vmul.f32 %v6893, %v678
    %v7076 = vmul.f32 %v6897, %v776
    %v7077 = vmul.f32 %v6901, %v874
    %v7078 = vmul.f32 %v6905, %v188
    %v7079 = vmul.f32 %v6909, %v286
    %v7080 = vmul.f32 %v6913, %v384
    %v7081 = vmul.f32 %v6917, %v482
    %v7082 = vmul.f32 %v6921, %v580
    %v7083 = vmul.f32 %v6925, %v678
    %v7084 = vmul.f32 %v6929, %v776
    %v7085 = vmul.f32 %v6933, %v874
    %v7086 = vmul.f32 %v6937, %v188
    %v7087 = vmul.f32 %v6941, %v286
    %v7088 = vmul.f32 %v6945, %v384
    %v7089 = vmul.f32 %v6949, %v482
    %v7090 = vmul.f32 %v6953, %v580
    %v7091 = vmul.f32 %v6957, %v678
    %v7092 = vmul.f32 %v6961, %v776
    %v7093 = vmul.f32 %v6965, %v874
    %v7094 = vadd.f32 %v7030, %v7031
    %v7095 = vadd.f32 %v7094, %v7032
    %v7096 = vadd.f32 %v7095, %v7033
    %v7097 = vadd.f32 %v7096, %v7034
    %v7098 = vadd.f32 %v7097, %v7035
    %v7099 = vadd.f32 %v7098, %v7036
    %v7100 = vadd.f32 %v7099, %v7037
    %v7101 = vadd.f32 %v7038, %v7039
    %v7102 = vadd.f32 %v7101, %v7040
    %v7103 = vadd.f32 %v7102, %v7041
    %v7104 = vadd.f32 %v7103, %v7042
    %v7105 = vadd.f32 %v7104, %v7043
    %v7106 = vadd.f32 %v7105, %v7044
    %v7107 = vadd.f32 %v7106, %v7045
    %v7108 = vadd.f32 %v7046, %v7047
    %v7109 = vadd.f32 %v7108, %v7048
    %v7110 = vadd.f32 %v7109, %v7049
    %v7111 = vadd.f32 %v7110, %v7050
    %v7112 = vadd.f32 %v7111, %v7051
    %v7113 = vadd.f32 %v7112, %v7052
    %v7114 = vadd.f32 %v7113, %v7053
    %v7115 = vadd.f32 %v7054, %v7055
    %v7116 = vadd.f32 %v7115, %v7056
    %v7117 = vadd.f32 %v7116, %v7057
    %v7118 = vadd.f32 %v7117, %v7058
    %v7119 = vadd.f32 %v7118, %v7059
    %v7120 = vadd.f32 %v7119, %v7060
    %v7121 = vadd.f32 %v7120, %v7061
    %v7122 = vadd.f32 %v7062, %v7063
    %v7123 = vadd.f32 %v7122, %v7064
    %v7124 = vadd.f32 %v7123, %v7065
    %v7125 = vadd.f32 %v7124, %v7066
    %v7126 = vadd.f32 %v7125, %v7067
    %v7127 = vadd.f32 %v7126, %v7068
    %v7128 = vadd.f32 %v7127, %v7069
    %v7129 = vadd.f32 %v7070, %v7071
    %v7130 = vadd.f32 %v7129, %v7072
    %v7131 = vadd.f32 %v7130, %v7073
    %v7132 = vadd.f32 %v7131, %v7074
    %v7133 = vadd.f32 %v7132, %v7075
    %v7134 = vadd.f32 %v7133, %v7076
    %v7135 = vadd.f32 %v7134, %v7077
    %v7136 = vadd.f32 %v7078, %v7079
    %v7137 = vadd.f32 %v7136, %v7080
    %v7138 = vadd.f32 %v7137, %v7081
    %v7139 = vadd.f32 %v7138, %v7082
    %v7140 = vadd.f32 %v7139, %v7083
    %v7141 = vadd.f32 %v7140, %v7084
    %v7142 = vadd.f32 %v7141, %v7085
    %v7143 = vadd.f32 %v7086, %v7087
    %v7144 = vadd.f32 %v7143, %v7088
    %v7145 = vadd.f32 %v7144, %v7089
    %v7146 = vadd.f32 %v7145, %v7090
    %v7147 = vadd.f32 %v7146, %v7091
    %v7148 = vadd.f32 %v7147, %v7092
    %v7149 = vadd.f32 %v7148, %v7093
    %v7150 = vpack.c.bf16 %v3980, %v2420
    %v7151 = vpack.c.bf16 %v7100, %v5540
    %v7152 = vpack.c.bf16 %v3987, %v2427
    %v7153 = vpack.c.bf16 %v7107, %v5547
    %v7154 = vpack.c.bf16 %v3994, %v2434
    %v7155 = vpack.c.bf16 %v7114, %v5554
    %v7156 = vpack.c.bf16 %v4001, %v2441
    %v7157 = vpack.c.bf16 %v7121, %v5561
    %v7158 = vpack.c.bf16 %v4008, %v2448
    %v7159 = vpack.c.bf16 %v7128, %v5568
    %v7160 = vpack.c.bf16 %v4015, %v2455
    %v7161 = vpack.c.bf16 %v7135, %v5575
    %v7162 = vpack.c.bf16 %v4022, %v2462
    %v7163 = vpack.c.bf16 %v7142, %v5582
    %v7164 = vpack.c.bf16 %v4029, %v2469
    %v7165 = vpack.c.bf16 %v7149, %v5589
    %v7166 = vld [vmem:[%s2] sm:$0xf]
    %v7167 = vld [vmem:[%s2 + $0x4] sm:$0xf]
    %v7168 = vld [vmem:[%s2 + $0x8] sm:$0xf]
    %v7169 = vld [vmem:[%s2 + $0xc] sm:$0xf]
    %v7170 = vld [vmem:[%s3] sm:$0xff]
    %v7171 = vld [vmem:[%s3 + $0x8] sm:$0xff]
    %v7172 = vld [vmem:[%s3 + $0x10] sm:$0xff]
    %v7173 = vld [vmem:[%s3 + $0x18] sm:$0xff]
    %7175 = vset.pattern.permute.xlu0 0
    %7176 = vperm.xlu0 %7175, %v7170
    %v7177 = vpop.permute.xlu0 %7176
    %7180 = vset.pattern.permute.xlu0 0
    %7181 = vperm.xlu0 %7180, %v7171
    %v7182 = vpop.permute.xlu0 %7181
    %7185 = vset.pattern.permute.xlu0 0
    %7186 = vperm.xlu0 %7185, %v7172
    %v7187 = vpop.permute.xlu0 %7186
    %7190 = vset.pattern.permute.xlu0 0
    %7191 = vperm.xlu0 %7190, %v7173
    %v7192 = vpop.permute.xlu0 %7191
    %v7198 = vunpack.c.l.b16 %v7166
    %v7199 = vunpack.c.l.b16 %v7167
    %v7200 = vunpack.c.l.b16 %v7168
    %v7201 = vunpack.c.l.b16 %v7169
    %v7202 = vpack.c.b16 %v7199, %v7198
    %v7203 = vpack.c.b16 %v7201, %v7200
    %v7205 = vsel %vm91, %v7202, 0
    %v7208 = vsel %vm91, %v7203, 0
    %7210 = vmatprep.subr.bf16.mxu0 0
    %7211 = vmatpush1.bf16.msra.mxu0 0
    %7212 = vmatprep.subr.bf16.mxu0 0
    %7213 = vmatpush1.bf16.msra.mxu0 0
    %7214 = vmatprep.subr.bf16.mxu0 0
    %7215 = vmatpush1.bf16.msra.mxu0 0
    %7216 = vmatprep.subr.bf16.mxu0 0
    %7217 = vmatpush1.bf16.msra.mxu0 0
    %7218 = vmatprep.subr.bf16.mxu0 0
    %7219 = vmatpush1.bf16.msra.mxu0 0
    %7220 = vmatprep.subr.bf16.mxu0 0
    %7221 = vmatpush1.bf16.msra.mxu0 0
    %7222 = vmatprep.subr.bf16.mxu0 0
    %7223 = vmatpush1.bf16.msra.mxu0 %v7151
    %7224 = vmatprep.subr.bf16.mxu0 0
    %7225 = vmatpush1.bf16.msra.mxu0 %v7150
    %7226 = vmatprep.subr.bf16.mxu0 0
    %7227 = vmatpush2.bf16.msra.mxu0 0
    %7228 = vmatprep.subr.bf16.mxu0 0
    %7229 = vmatpush2.bf16.msra.mxu0 0
    %7230 = vmatprep.subr.bf16.mxu0 0
    %7231 = vmatpush2.bf16.msra.mxu0 0
    %7232 = vmatprep.subr.bf16.mxu0 0
    %7233 = vmatpush2.bf16.msra.mxu0 0
    %7234 = vmatprep.subr.bf16.mxu0 0
    %7235 = vmatpush2.bf16.msra.mxu0 0
    %7236 = vmatprep.subr.bf16.mxu0 0
    %7237 = vmatpush2.bf16.msra.mxu0 0
    %7238 = vmatprep.subr.bf16.mxu0 0
    %7239 = vmatpush2.bf16.msra.mxu0 0
    %7240 = vmatprep.subr.bf16.mxu0 0
    %7241 = vmatpush2.bf16.msra.mxu0 0
    %7242 = vmatprep.mubr.bf16.mxu0 0
    %7243 = vmatmul.mubr.bf16.gmra.mxu0 %v7205
    %v7244 = vpop.f32.mrf.mxu0
    %v7245 = vadd.f32 %v7177, %v7244
    %v7246 = vpop.f32.mrf.mxu0
    %v7247 = vpop.f32.mrf.mxu0
    %v7248 = vadd.f32 %v7182, %v7247
    %v7249 = vpop.f32.mrf.mxu0
    %7250 = vmatprep.mubr.bf16.mxu0 0
    %7251 = vmatmul.mubr.bf16.gmra.mxu0 %v7208
    %v7252 = vpop.f32.mrf.mxu0
    %v7253 = vadd.f32 %v7187, %v7252
    %v7254 = vpop.f32.mrf.mxu0
    %v7255 = vpop.f32.mrf.mxu0
    %v7256 = vadd.f32 %v7192, %v7255
    %v7257 = vpop.f32.mrf.mxu0
    %7258 = vdwg.mxu0
    %7259 = vst [vmem:[#allocation5] sm:$0xff] %v7245
    %7260 = vst [vmem:[#allocation5 + $0x8] sm:$0xff] %v7248
    %7261 = vst [vmem:[#allocation5 + $0x10] sm:$0xff] %v7253
    %7262 = vst [vmem:[#allocation5 + $0x18] sm:$0xff] %v7256
    %7263 = vmatprep.subr.bf16.mxu0 0
    %7264 = vmatpush1.bf16.msra.mxu0 0
    %7265 = vmatprep.subr.bf16.mxu0 0
    %7266 = vmatpush1.bf16.msra.mxu0 0
    %7267 = vmatprep.subr.bf16.mxu0 0
    %7268 = vmatpush1.bf16.msra.mxu0 0
    %7269 = vmatprep.subr.bf16.mxu0 0
    %7270 = vmatpush1.bf16.msra.mxu0 0
    %7271 = vmatprep.subr.bf16.mxu0 0
    %7272 = vmatpush1.bf16.msra.mxu0 0
    %7273 = vmatprep.subr.bf16.mxu0 0
    %7274 = vmatpush1.bf16.msra.mxu0 0
    %7275 = vmatprep.subr.bf16.mxu0 0
    %7276 = vmatpush1.bf16.msra.mxu0 %v7153
    %7277 = vmatprep.subr.bf16.mxu0 0
    %7278 = vmatpush1.bf16.msra.mxu0 %v7152
    %7279 = vmatprep.subr.bf16.mxu0 0
    %7280 = vmatpush2.bf16.msra.mxu0 0
    %7281 = vmatprep.subr.bf16.mxu0 0
    %7282 = vmatpush2.bf16.msra.mxu0 0
    %7283 = vmatprep.subr.bf16.mxu0 0
    %7284 = vmatpush2.bf16.msra.mxu0 0
    %7285 = vmatprep.subr.bf16.mxu0 0
    %7286 = vmatpush2.bf16.msra.mxu0 0
    %7287 = vmatprep.subr.bf16.mxu0 0
    %7288 = vmatpush2.bf16.msra.mxu0 0
    %7289 = vmatprep.subr.bf16.mxu0 0
    %7290 = vmatpush2.bf16.msra.mxu0 0
    %7291 = vmatprep.subr.bf16.mxu0 0
    %7292 = vmatpush2.bf16.msra.mxu0 0
    %7293 = vmatprep.subr.bf16.mxu0 0
    %7294 = vmatpush2.bf16.msra.mxu0 0
    %7295 = vmatprep.mubr.bf16.mxu0 0
    %7296 = vmatmul.mubr.bf16.gmra.mxu0 %v7205
    %v7297 = vpop.f32.mrf.mxu0
    %v7298 = vadd.f32 %v7177, %v7297
    %v7299 = vpop.f32.mrf.mxu0
    %v7300 = vpop.f32.mrf.mxu0
    %v7301 = vadd.f32 %v7182, %v7300
    %v7302 = vpop.f32.mrf.mxu0
    %7303 = vmatprep.mubr.bf16.mxu0 0
    %7304 = vmatmul.mubr.bf16.gmra.mxu0 %v7208
    %v7305 = vpop.f32.mrf.mxu0
    %v7306 = vadd.f32 %v7187, %v7305
    %v7307 = vpop.f32.mrf.mxu0
    %v7308 = vpop.f32.mrf.mxu0
    %v7309 = vadd.f32 %v7192, %v7308
    %v7310 = vpop.f32.mrf.mxu0
    %7311 = vdwg.mxu0
    %s7312 = scalar_lea.vmem [#allocation5], 32
    %7313 = vst [vmem:[%s7312] sm:$0xff] %v7298
    %7314 = vst [vmem:[%s7312 + $0x8] sm:$0xff] %v7301
    %7315 = vst [vmem:[%s7312 + $0x10] sm:$0xff] %v7306
    %7316 = vst [vmem:[%s7312 + $0x18] sm:$0xff] %v7309
    %7317 = vmatprep.subr.bf16.mxu0 0
    %7318 = vmatpush1.bf16.msra.mxu0 0
    %7319 = vmatprep.subr.bf16.mxu0 0
    %7320 = vmatpush1.bf16.msra.mxu0 0
    %7321 = vmatprep.subr.bf16.mxu0 0
    %7322 = vmatpush1.bf16.msra.mxu0 0
    %7323 = vmatprep.subr.bf16.mxu0 0
    %7324 = vmatpush1.bf16.msra.mxu0 0
    %7325 = vmatprep.subr.bf16.mxu0 0
    %7326 = vmatpush1.bf16.msra.mxu0 0
    %7327 = vmatprep.subr.bf16.mxu0 0
    %7328 = vmatpush1.bf16.msra.mxu0 0
    %7329 = vmatprep.subr.bf16.mxu0 0
    %7330 = vmatpush1.bf16.msra.mxu0 %v7155
    %7331 = vmatprep.subr.bf16.mxu0 0
    %7332 = vmatpush1.bf16.msra.mxu0 %v7154
    %7333 = vmatprep.subr.bf16.mxu0 0
    %7334 = vmatpush2.bf16.msra.mxu0 0
    %7335 = vmatprep.subr.bf16.mxu0 0
    %7336 = vmatpush2.bf16.msra.mxu0 0
    %7337 = vmatprep.subr.bf16.mxu0 0
    %7338 = vmatpush2.bf16.msra.mxu0 0
    %7339 = vmatprep.subr.bf16.mxu0 0
    %7340 = vmatpush2.bf16.msra.mxu0 0
    %7341 = vmatprep.subr.bf16.mxu0 0
    %7342 = vmatpush2.bf16.msra.mxu0 0
    %7343 = vmatprep.subr.bf16.mxu0 0
    %7344 = vmatpush2.bf16.msra.mxu0 0
    %7345 = vmatprep.subr.bf16.mxu0 0
    %7346 = vmatpush2.bf16.msra.mxu0 0
    %7347 = vmatprep.subr.bf16.mxu0 0
    %7348 = vmatpush2.bf16.msra.mxu0 0
    %7349 = vmatprep.mubr.bf16.mxu0 0
    %7350 = vmatmul.mubr.bf16.gmra.mxu0 %v7205
    %v7351 = vpop.f32.mrf.mxu0
    %v7352 = vadd.f32 %v7177, %v7351
    %v7353 = vpop.f32.mrf.mxu0
    %v7354 = vpop.f32.mrf.mxu0
    %v7355 = vadd.f32 %v7182, %v7354
    %v7356 = vpop.f32.mrf.mxu0
    %7357 = vmatprep.mubr.bf16.mxu0 0
    %7358 = vmatmul.mubr.bf16.gmra.mxu0 %v7208
    %v7359 = vpop.f32.mrf.mxu0
    %v7360 = vadd.f32 %v7187, %v7359
    %v7361 = vpop.f32.mrf.mxu0
    %v7362 = vpop.f32.mrf.mxu0
    %v7363 = vadd.f32 %v7192, %v7362
    %v7364 = vpop.f32.mrf.mxu0
    %7365 = vdwg.mxu0
    %s7366 = scalar_lea.vmem [#allocation5], 64
    %7367 = vst [vmem:[%s7366] sm:$0xff] %v7352
    %7368 = vst [vmem:[%s7366 + $0x8] sm:$0xff] %v7355
    %7369 = vst [vmem:[%s7366 + $0x10] sm:$0xff] %v7360
    %7370 = vst [vmem:[%s7366 + $0x18] sm:$0xff] %v7363
    %7371 = vmatprep.subr.bf16.mxu0 0
    %7372 = vmatpush1.bf16.msra.mxu0 0
    %7373 = vmatprep.subr.bf16.mxu0 0
    %7374 = vmatpush1.bf16.msra.mxu0 0
    %7375 = vmatprep.subr.bf16.mxu0 0
    %7376 = vmatpush1.bf16.msra.mxu0 0
    %7377 = vmatprep.subr.bf16.mxu0 0
    %7378 = vmatpush1.bf16.msra.mxu0 0
    %7379 = vmatprep.subr.bf16.mxu0 0
    %7380 = vmatpush1.bf16.msra.mxu0 0
    %7381 = vmatprep.subr.bf16.mxu0 0
    %7382 = vmatpush1.bf16.msra.mxu0 0
    %7383 = vmatprep.subr.bf16.mxu0 0
    %7384 = vmatpush1.bf16.msra.mxu0 %v7157
    %7385 = vmatprep.subr.bf16.mxu0 0
    %7386 = vmatpush1.bf16.msra.mxu0 %v7156
    %7387 = vmatprep.subr.bf16.mxu0 0
    %7388 = vmatpush2.bf16.msra.mxu0 0
    %7389 = vmatprep.subr.bf16.mxu0 0
    %7390 = vmatpush2.bf16.msra.mxu0 0
    %7391 = vmatprep.subr.bf16.mxu0 0
    %7392 = vmatpush2.bf16.msra.mxu0 0
    %7393 = vmatprep.subr.bf16.mxu0 0
    %7394 = vmatpush2.bf16.msra.mxu0 0
    %7395 = vmatprep.subr.bf16.mxu0 0
    %7396 = vmatpush2.bf16.msra.mxu0 0
    %7397 = vmatprep.subr.bf16.mxu0 0
    %7398 = vmatpush2.bf16.msra.mxu0 0
    %7399 = vmatprep.subr.bf16.mxu0 0
    %7400 = vmatpush2.bf16.msra.mxu0 0
    %7401 = vmatprep.subr.bf16.mxu0 0
    %7402 = vmatpush2.bf16.msra.mxu0 0
    %7403 = vmatprep.mubr.bf16.mxu0 0
    %7404 = vmatmul.mubr.bf16.gmra.mxu0 %v7205
    %v7405 = vpop.f32.mrf.mxu0
    %v7406 = vadd.f32 %v7177, %v7405
    %v7407 = vpop.f32.mrf.mxu0
    %v7408 = vpop.f32.mrf.mxu0
    %v7409 = vadd.f32 %v7182, %v7408
    %v7410 = vpop.f32.mrf.mxu0
    %7411 = vmatprep.mubr.bf16.mxu0 0
    %7412 = vmatmul.mubr.bf16.gmra.mxu0 %v7208
    %v7413 = vpop.f32.mrf.mxu0
    %v7414 = vadd.f32 %v7187, %v7413
    %v7415 = vpop.f32.mrf.mxu0
    %v7416 = vpop.f32.mrf.mxu0
    %v7417 = vadd.f32 %v7192, %v7416
    %v7418 = vpop.f32.mrf.mxu0
    %7419 = vdwg.mxu0
    %s7420 = scalar_lea.vmem [#allocation5], 96
    %7421 = vst [vmem:[%s7420] sm:$0xff] %v7406
    %7422 = vst [vmem:[%s7420 + $0x8] sm:$0xff] %v7409
    %7423 = vst [vmem:[%s7420 + $0x10] sm:$0xff] %v7414
    %7424 = vst [vmem:[%s7420 + $0x18] sm:$0xff] %v7417
    %7425 = vmatprep.subr.bf16.mxu0 0
    %7426 = vmatpush1.bf16.msra.mxu0 0
    %7427 = vmatprep.subr.bf16.mxu0 0
    %7428 = vmatpush1.bf16.msra.mxu0 0
    %7429 = vmatprep.subr.bf16.mxu0 0
    %7430 = vmatpush1.bf16.msra.mxu0 0
    %7431 = vmatprep.subr.bf16.mxu0 0
    %7432 = vmatpush1.bf16.msra.mxu0 0
    %7433 = vmatprep.subr.bf16.mxu0 0
    %7434 = vmatpush1.bf16.msra.mxu0 0
    %7435 = vmatprep.subr.bf16.mxu0 0
    %7436 = vmatpush1.bf16.msra.mxu0 0
    %7437 = vmatprep.subr.bf16.mxu0 0
    %7438 = vmatpush1.bf16.msra.mxu0 %v7159
    %7439 = vmatprep.subr.bf16.mxu0 0
    %7440 = vmatpush1.bf16.msra.mxu0 %v7158
    %7441 = vmatprep.subr.bf16.mxu0 0
    %7442 = vmatpush2.bf16.msra.mxu0 0
    %7443 = vmatprep.subr.bf16.mxu0 0
    %7444 = vmatpush2.bf16.msra.mxu0 0
    %7445 = vmatprep.subr.bf16.mxu0 0
    %7446 = vmatpush2.bf16.msra.mxu0 0
    %7447 = vmatprep.subr.bf16.mxu0 0
    %7448 = vmatpush2.bf16.msra.mxu0 0
    %7449 = vmatprep.subr.bf16.mxu0 0
    %7450 = vmatpush2.bf16.msra.mxu0 0
    %7451 = vmatprep.subr.bf16.mxu0 0
    %7452 = vmatpush2.bf16.msra.mxu0 0
    %7453 = vmatprep.subr.bf16.mxu0 0
    %7454 = vmatpush2.bf16.msra.mxu0 0
    %7455 = vmatprep.subr.bf16.mxu0 0
    %7456 = vmatpush2.bf16.msra.mxu0 0
    %7457 = vmatprep.mubr.bf16.mxu0 0
    %7458 = vmatmul.mubr.bf16.gmra.mxu0 %v7205
    %v7459 = vpop.f32.mrf.mxu0
    %v7460 = vadd.f32 %v7177, %v7459
    %v7461 = vpop.f32.mrf.mxu0
    %v7462 = vpop.f32.mrf.mxu0
    %v7463 = vadd.f32 %v7182, %v7462
    %v7464 = vpop.f32.mrf.mxu0
    %7465 = vmatprep.mubr.bf16.mxu0 0
    %7466 = vmatmul.mubr.bf16.gmra.mxu0 %v7208
    %v7467 = vpop.f32.mrf.mxu0
    %v7468 = vadd.f32 %v7187, %v7467
    %v7469 = vpop.f32.mrf.mxu0
    %v7470 = vpop.f32.mrf.mxu0
    %v7471 = vadd.f32 %v7192, %v7470
    %v7472 = vpop.f32.mrf.mxu0
    %7473 = vdwg.mxu0
    %s7474 = scalar_lea.vmem [#allocation5], 128
    %7475 = vst [vmem:[%s7474] sm:$0xff] %v7460
    %7476 = vst [vmem:[%s7474 + $0x8] sm:$0xff] %v7463
    %7477 = vst [vmem:[%s7474 + $0x10] sm:$0xff] %v7468
    %7478 = vst [vmem:[%s7474 + $0x18] sm:$0xff] %v7471
    %7479 = vmatprep.subr.bf16.mxu0 0
    %7480 = vmatpush1.bf16.msra.mxu0 0
    %7481 = vmatprep.subr.bf16.mxu0 0
    %7482 = vmatpush1.bf16.msra.mxu0 0
    %7483 = vmatprep.subr.bf16.mxu0 0
    %7484 = vmatpush1.bf16.msra.mxu0 0
    %7485 = vmatprep.subr.bf16.mxu0 0
    %7486 = vmatpush1.bf16.msra.mxu0 0
    %7487 = vmatprep.subr.bf16.mxu0 0
    %7488 = vmatpush1.bf16.msra.mxu0 0
    %7489 = vmatprep.subr.bf16.mxu0 0
    %7490 = vmatpush1.bf16.msra.mxu0 0
    %7491 = vmatprep.subr.bf16.mxu0 0
    %7492 = vmatpush1.bf16.msra.mxu0 %v7161
    %7493 = vmatprep.subr.bf16.mxu0 0
    %7494 = vmatpush1.bf16.msra.mxu0 %v7160
    %7495 = vmatprep.subr.bf16.mxu0 0
    %7496 = vmatpush2.bf16.msra.mxu0 0
    %7497 = vmatprep.subr.bf16.mxu0 0
    %7498 = vmatpush2.bf16.msra.mxu0 0
    %7499 = vmatprep.subr.bf16.mxu0 0
    %7500 = vmatpush2.bf16.msra.mxu0 0
    %7501 = vmatprep.subr.bf16.mxu0 0
    %7502 = vmatpush2.bf16.msra.mxu0 0
    %7503 = vmatprep.subr.bf16.mxu0 0
    %7504 = vmatpush2.bf16.msra.mxu0 0
    %7505 = vmatprep.subr.bf16.mxu0 0
    %7506 = vmatpush2.bf16.msra.mxu0 0
    %7507 = vmatprep.subr.bf16.mxu0 0
    %7508 = vmatpush2.bf16.msra.mxu0 0
    %7509 = vmatprep.subr.bf16.mxu0 0
    %7510 = vmatpush2.bf16.msra.mxu0 0
    %7511 = vmatprep.mubr.bf16.mxu0 0
    %7512 = vmatmul.mubr.bf16.gmra.mxu0 %v7205
    %v7513 = vpop.f32.mrf.mxu0
    %v7514 = vadd.f32 %v7177, %v7513
    %v7515 = vpop.f32.mrf.mxu0
    %v7516 = vpop.f32.mrf.mxu0
    %v7517 = vadd.f32 %v7182, %v7516
    %v7518 = vpop.f32.mrf.mxu0
    %7519 = vmatprep.mubr.bf16.mxu0 0
    %7520 = vmatmul.mubr.bf16.gmra.mxu0 %v7208
    %v7521 = vpop.f32.mrf.mxu0
    %v7522 = vadd.f32 %v7187, %v7521
    %v7523 = vpop.f32.mrf.mxu0
    %v7524 = vpop.f32.mrf.mxu0
    %v7525 = vadd.f32 %v7192, %v7524
    %v7526 = vpop.f32.mrf.mxu0
    %7527 = vdwg.mxu0
    %s7528 = scalar_lea.vmem [#allocation5], 160
    %7529 = vst [vmem:[%s7528] sm:$0xff] %v7514
    %7530 = vst [vmem:[%s7528 + $0x8] sm:$0xff] %v7517
    %7531 = vst [vmem:[%s7528 + $0x10] sm:$0xff] %v7522
    %7532 = vst [vmem:[%s7528 + $0x18] sm:$0xff] %v7525
    %7533 = vmatprep.subr.bf16.mxu0 0
    %7534 = vmatpush1.bf16.msra.mxu0 0
    %7535 = vmatprep.subr.bf16.mxu0 0
    %7536 = vmatpush1.bf16.msra.mxu0 0
    %7537 = vmatprep.subr.bf16.mxu0 0
    %7538 = vmatpush1.bf16.msra.mxu0 0
    %7539 = vmatprep.subr.bf16.mxu0 0
    %7540 = vmatpush1.bf16.msra.mxu0 0
    %7541 = vmatprep.subr.bf16.mxu0 0
    %7542 = vmatpush1.bf16.msra.mxu0 0
    %7543 = vmatprep.subr.bf16.mxu0 0
    %7544 = vmatpush1.bf16.msra.mxu0 0
    %7545 = vmatprep.subr.bf16.mxu0 0
    %7546 = vmatpush1.bf16.msra.mxu0 %v7163
    %7547 = vmatprep.subr.bf16.mxu0 0
    %7548 = vmatpush1.bf16.msra.mxu0 %v7162
    %7549 = vmatprep.subr.bf16.mxu0 0
    %7550 = vmatpush2.bf16.msra.mxu0 0
    %7551 = vmatprep.subr.bf16.mxu0 0
    %7552 = vmatpush2.bf16.msra.mxu0 0
    %7553 = vmatprep.subr.bf16.mxu0 0
    %7554 = vmatpush2.bf16.msra.mxu0 0
    %7555 = vmatprep.subr.bf16.mxu0 0
    %7556 = vmatpush2.bf16.msra.mxu0 0
    %7557 = vmatprep.subr.bf16.mxu0 0
    %7558 = vmatpush2.bf16.msra.mxu0 0
    %7559 = vmatprep.subr.bf16.mxu0 0
    %7560 = vmatpush2.bf16.msra.mxu0 0
    %7561 = vmatprep.subr.bf16.mxu0 0
    %7562 = vmatpush2.bf16.msra.mxu0 0
    %7563 = vmatprep.subr.bf16.mxu0 0
    %7564 = vmatpush2.bf16.msra.mxu0 0
    %7565 = vmatprep.mubr.bf16.mxu0 0
    %7566 = vmatmul.mubr.bf16.gmra.mxu0 %v7205
    %v7567 = vpop.f32.mrf.mxu0
    %v7568 = vadd.f32 %v7177, %v7567
    %v7569 = vpop.f32.mrf.mxu0
    %v7570 = vpop.f32.mrf.mxu0
    %v7571 = vadd.f32 %v7182, %v7570
    %v7572 = vpop.f32.mrf.mxu0
    %7573 = vmatprep.mubr.bf16.mxu0 0
    %7574 = vmatmul.mubr.bf16.gmra.mxu0 %v7208
    %v7575 = vpop.f32.mrf.mxu0
    %v7576 = vadd.f32 %v7187, %v7575
    %v7577 = vpop.f32.mrf.mxu0
    %v7578 = vpop.f32.mrf.mxu0
    %v7579 = vadd.f32 %v7192, %v7578
    %v7580 = vpop.f32.mrf.mxu0
    %7581 = vdwg.mxu0
    %s7582 = scalar_lea.vmem [#allocation5], 192
    %7583 = vst [vmem:[%s7582] sm:$0xff] %v7568
    %7584 = vst [vmem:[%s7582 + $0x8] sm:$0xff] %v7571
    %7585 = vst [vmem:[%s7582 + $0x10] sm:$0xff] %v7576
    %7586 = vst [vmem:[%s7582 + $0x18] sm:$0xff] %v7579
    %7587 = vmatprep.subr.bf16.mxu0 0
    %7588 = vmatpush1.bf16.msra.mxu0 0
    %7589 = vmatprep.subr.bf16.mxu0 0
    %7590 = vmatpush1.bf16.msra.mxu0 0
    %7591 = vmatprep.subr.bf16.mxu0 0
    %7592 = vmatpush1.bf16.msra.mxu0 0
    %7593 = vmatprep.subr.bf16.mxu0 0
    %7594 = vmatpush1.bf16.msra.mxu0 0
    %7595 = vmatprep.subr.bf16.mxu0 0
    %7596 = vmatpush1.bf16.msra.mxu0 0
    %7597 = vmatprep.subr.bf16.mxu0 0
    %7598 = vmatpush1.bf16.msra.mxu0 0
    %7599 = vmatprep.subr.bf16.mxu0 0
    %7600 = vmatpush1.bf16.msra.mxu0 %v7165
    %7601 = vmatprep.subr.bf16.mxu0 0
    %7602 = vmatpush1.bf16.msra.mxu0 %v7164
    %7603 = vmatprep.subr.bf16.mxu0 0
    %7604 = vmatpush2.bf16.msra.mxu0 0
    %7605 = vmatprep.subr.bf16.mxu0 0
    %7606 = vmatpush2.bf16.msra.mxu0 0
    %7607 = vmatprep.subr.bf16.mxu0 0
    %7608 = vmatpush2.bf16.msra.mxu0 0
    %7609 = vmatprep.subr.bf16.mxu0 0
    %7610 = vmatpush2.bf16.msra.mxu0 0
    %7611 = vmatprep.subr.bf16.mxu0 0
    %7612 = vmatpush2.bf16.msra.mxu0 0
    %7613 = vmatprep.subr.bf16.mxu0 0
    %7614 = vmatpush2.bf16.msra.mxu0 0
    %7615 = vmatprep.subr.bf16.mxu0 0
    %7616 = vmatpush2.bf16.msra.mxu0 0
    %7617 = vmatprep.subr.bf16.mxu0 0
    %7618 = vmatpush2.bf16.msra.mxu0 0
    %7619 = vmatprep.mubr.bf16.mxu0 0
    %7620 = vmatmul.mubr.bf16.gmra.mxu0 %v7205
    %v7621 = vpop.f32.mrf.mxu0
    %v7622 = vadd.f32 %v7177, %v7621
    %v7623 = vpop.f32.mrf.mxu0
    %v7624 = vpop.f32.mrf.mxu0
    %v7625 = vadd.f32 %v7182, %v7624
    %v7626 = vpop.f32.mrf.mxu0
    %7627 = vmatprep.mubr.bf16.mxu0 0
    %7628 = vmatmul.mubr.bf16.gmra.mxu0 %v7208
    %v7629 = vpop.f32.mrf.mxu0
    %v7630 = vadd.f32 %v7187, %v7629
    %v7631 = vpop.f32.mrf.mxu0
    %v7632 = vpop.f32.mrf.mxu0
    %v7633 = vadd.f32 %v7192, %v7632
    %v7634 = vpop.f32.mrf.mxu0
    %7635 = vdwg.mxu0
    %s7636 = scalar_lea.vmem [#allocation5], 224
    %7637 = vst [vmem:[%s7636] sm:$0xff] %v7622
    %7638 = vst [vmem:[%s7636 + $0x8] sm:$0xff] %v7625
    %7639 = vst [vmem:[%s7636 + $0x10] sm:$0xff] %v7630
    %7640 = vst [vmem:[%s7636 + $0x18] sm:$0xff] %v7633
    // Predicated region
    $region22: #{tpu_custom_call.1} parent=1 // pred_check
      _
    $region23: #{tpu_custom_call.1} parent=1 // pred_check_branch
      %7642 = sbr.rel (0) target = $region25
    $region24: #{tpu_custom_call.1} parent=1 // pred_region
      %s7644 = ssub.s32 4096, 4096
      %7645 = vsyncadd [#allocation4], %s7644
      %s7646 = sshll.u32 [#allocation5], 4
      %s7647 = int_to_ptr.vmem [resolvable:$true] %s7646
      %7652 = dma.vmem_to_hbm [thread:$0]  %s7647, 4096, %s4, [#allocation4], 128, 128, 8
    $region25: #{tpu_custom_call.1} parent=1 // pred_fallthru
      _
    // Predicated region
    $region26: #{tpu_custom_call.1} parent=1 // pred_check
      _
    $region27: #{tpu_custom_call.1} parent=1 // pred_check_branch
      %7654 = sbr.rel (0) target = $region29
    $region28: #{tpu_custom_call.1} parent=1 // pred_region
      %7655 = dma.done [#allocation4], 4096
    $region29: #{tpu_custom_call.1} parent=1 // pred_fallthru
      _
    %7656 = vsyncpa [#allocation3], 1
    %7657 = vsyncpa [#allocation4], 1

</llo_original>
